<compile_context>
chip_gen: v7x
topology: tpu7x:2x2x1
jax: 0.10.0
libtpu: 0.0.40
codegen_flags: <defaults>
</compile_context>

<pallas_src>
import numpy as np
import jax
import jax.numpy as jnp
from jax.experimental import pallas as pl
from jax.experimental.pallas import tpu as pltpu

_NB = 64   # images per grid step (review: 64-128; 64 also respects v5e VMEM)


# ------------------------------ fused kernel --------------------------------

def _lenet_fused_kernel(x_ref, w1_ref, b1_ref, w2_ref, b2_ref, w3_ref, b3_ref,
                        wfc_ref, bfc_ref, o_ref, p1_ref):
    nb = o_ref.shape[0]

    # ---- conv1 (1->6, 5x5) + bias + ReLU + 2x2/2 max-pool -------------------
    # x_ref: (28, nb, 32) f32, lanes = input columns (28 valid).
    # w1_ref[di]: (32, 256), lanes = pj*128 + j12*8 + c  (conv col x24 = 2*j12+pj)
    x = x_ref[...].astype(jnp.bfloat16)
    acc1 = None
    for di in range(5):                    # shift-and-accumulate over kernel rows
        lhs = x[di:di + 24].reshape(24 * nb, 32)
        d = jnp.dot(lhs, w1_ref[di], preferred_element_type=jnp.float32)
        acc1 = d if acc1 is None else acc1 + d
    a1 = jnp.maximum(acc1 + b1_ref[...], 0.0).reshape(12, 2, nb, 256)
    a1 = jnp.maximum(a1[:, 0], a1[:, 1])              # pool over row pairs
    p1 = jnp.maximum(a1[..., :128], a1[..., 128:])    # pool over col parity pj
    p1_ref[...] = p1.astype(jnp.bfloat16)             # (12, nb, 128), lanes=j12*8+c

    # ---- conv2 (6->16, 5x5) + bias + ReLU + 2x2/2 max-pool ------------------
    # w2_ref[di]: (128, 128); rows = j12*8 + c, lanes = qj*64 + u*16 + oc.
    acc2 = None
    for di in range(5):
        lhs = p1_ref[di:di + 8].reshape(8 * nb, 128)
        d = jnp.dot(lhs, w2_ref[di], preferred_element_type=jnp.float32)
        acc2 = d if acc2 is None else acc2 + d
    a2 = jnp.maximum(acc2 + b2_ref[...], 0.0).reshape(4, 2, nb, 128)
    a2 = jnp.maximum(a2[:, 0], a2[:, 1])              # pool over row pairs
    p2 = jnp.maximum(a2[..., :64], a2[..., 64:])      # pool over col parity qj
    # p2: (4, nb, 64), lanes = u*16 + oc

    # ---- conv3 (16->120, 4x4) + bias + ReLU: one (nb,256)x(256,128) dot -----
    feats = jnp.concatenate([p2[0], p2[1], p2[2], p2[3]], axis=-1)   # (nb, 256)
    a3 = jnp.dot(feats.astype(jnp.bfloat16), w3_ref[...],
                 preferred_element_type=jnp.float32)
    a3 = jnp.maximum(a3 + b3_ref[...], 0.0)           # (nb, 128), first 120 valid

    # ---- fc (120->10) + bias + ReLU (the reference module has this ReLU) ----
    logits = jnp.dot(a3.astype(jnp.bfloat16), wfc_ref[...],
                     preferred_element_type=jnp.float32)
    o_ref[...] = jnp.maximum(logits + bfc_ref[...], 0.0)


# --------------------------- weight re-layout --------------------------------

def _build_weights(params):
    f32, bf16 = jnp.float32, jnp.bfloat16

    # conv1 -> W1[di, col, pj*128 + j12*8 + c] = w1[c, 0, di, col - (2*j12+pj)]
    w1 = params["w1"].astype(f32).reshape(6, 5, 5)            # (c, di, dj)
    idx_c = np.zeros((5, 32, 256), np.int32)
    idx_di = np.zeros((5, 32, 256), np.int32)
    idx_dj = np.zeros((5, 32, 256), np.int32)
    ok1 = np.zeros((5, 32, 256), np.bool_)
    for di in range(5):
        for pj in range(2):
            for j12 in range(12):
                x24 = 2 * j12 + pj
                for dj in range(5):
                    col = x24 + dj
                    for c in range(6):
                        lane = pj * 128 + j12 * 8 + c
                        idx_c[di, col, lane] = c
                        idx_di[di, col, lane] = di
                        idx_dj[di, col, lane] = dj
                        ok1[di, col, lane] = True
    W1 = jnp.where(ok1, w1[idx_c, idx_di, idx_dj], 0.0).astype(bf16)

    # conv2 -> W2[di, j12*8 + c, qj*64 + u*16 + oc] = w2[oc, c, di, j12-(2u+qj)]
    w2 = params["w2"].astype(f32)                              # (oc, c, di, dj)
    idx_oc = np.zeros((5, 128, 128), np.int32)
    idx_c2 = np.zeros((5, 128, 128), np.int32)
    idx_di2 = np.zeros((5, 128, 128), np.int32)
    idx_dj2 = np.zeros((5, 128, 128), np.int32)
    ok2 = np.zeros((5, 128, 128), np.bool_)
    for di in range(5):
        for qj in range(2):
            for u in range(4):
                j2 = 2 * u + qj
                for dj in range(5):
                    row_base = (j2 + dj) * 8
                    for c in range(6):
                        for oc in range(16):
                            lane = qj * 64 + u * 16 + oc
                            idx_oc[di, row_base + c, lane] = oc
                            idx_c2[di, row_base + c, lane] = c
                            idx_di2[di, row_base + c, lane] = di
                            idx_dj2[di, row_base + c, lane] = dj
                            ok2[di, row_base + c, lane] = True
    W2 = jnp.where(ok2, w2[idx_oc, idx_c2, idx_di2, idx_dj2], 0.0).astype(bf16)

    # conv3 -> W3[v*64 + u*16 + c2, oc3] = w3[oc3, c2, v, u]
    w3 = params["w3"].astype(f32)                              # (oc3, c2, v, u)
    W3 = jnp.transpose(w3, (2, 3, 1, 0)).reshape(256, 120)
    W3 = jnp.pad(W3, ((0, 0), (0, 8))).astype(bf16)

    # fc -> Wfc[oc3, k] = w_fc[k, oc3]
    Wfc = jnp.pad(params["w_fc"].astype(f32).T, ((0, 8), (0, 118))).astype(bf16)

    # biases broadcast to the lane layouts above (padding lanes stay zero)
    b1 = jnp.pad(params["b1"].astype(f32), (0, 2))             # (8,)
    slot_ok = np.repeat((np.arange(32) % 16 < 12).astype(np.float32), 8)
    B1 = (jnp.tile(b1, 32) * slot_ok).reshape(1, 256)
    B2 = jnp.tile(params["b2"].astype(f32), 8).reshape(1, 128)
    B3 = jnp.pad(params["b3"].astype(f32), (0, 8)).reshape(1, 128)
    Bfc = jnp.pad(params["b_fc"].astype(f32), (0, 118)).reshape(1, 128)
    return W1, B1, W2, B2, W3, B3, Wfc, Bfc


# ------------------------------ host wrapper ---------------------------------

def lenet_variant_forward(x_nchw, params):
    assert x_nchw.shape[1:] == (1, 28, 28), "leNetVariant expects (N,1,28,28)"
    n = x_nchw.shape[0]
    n_pad = pl.cdiv(n, _NB) * _NB
    x = x_nchw.astype(jnp.float32).reshape(n, 28, 28)
    x = jnp.pad(x, ((0, n_pad - n), (0, 0), (0, 0)))
    # (rows, batch, cols): rows are a major dim so in-kernel row shifts are
    # plain slices; cols padded 28 -> 32 (full lane dim of the block).
    x = jnp.pad(jnp.transpose(x, (1, 0, 2)), ((0, 0), (0, 0), (0, 4)))

    W1, B1, W2, B2, W3, B3, Wfc, Bfc = _build_weights(params)

    const2 = lambda b: (0, 0)
    const3 = lambda b: (0, 0, 0)
    out = pl.pallas_call(
        _lenet_fused_kernel,
        out_shape=jax.ShapeDtypeStruct((n_pad, 128), jnp.float32),
        grid_spec=pltpu.PrefetchScalarGridSpec(
            num_scalar_prefetch=0,
            grid=(n_pad // _NB,),
            in_specs=[
                pl.BlockSpec((28, _NB, 32), lambda b: (0, b, 0)),   # x
                pl.BlockSpec((5, 32, 256), const3),                 # W1
                pl.BlockSpec((1, 256), const2),                     # B1
                pl.BlockSpec((5, 128, 128), const3),                # W2
                pl.BlockSpec((1, 128), const2),                     # B2
                pl.BlockSpec((256, 128), const2),                   # W3
                pl.BlockSpec((1, 128), const2),                     # B3
                pl.BlockSpec((128, 128), const2),                   # Wfc
                pl.BlockSpec((1, 128), const2),                     # Bfc
            ],
            out_specs=pl.BlockSpec((_NB, 128), lambda b: (b, 0)),
            scratch_shapes=[pltpu.VMEM((12, _NB, 128), jnp.bfloat16)],  # pool1
        ),
        compiler_params=pltpu.CompilerParams(
            dimension_semantics=("parallel",),
        ),
    )(x, W1, B1, W2, B2, W3, B3, Wfc, Bfc)
    return out[:n, :10]


def init_params(key):
    """Deterministic PyTorch-style uniform(-1/sqrt(fan_in), 1/sqrt(fan_in)) init."""
    ks = jax.random.split(key, 8)

    def u(k, shape, fan_in):
        bound = 1.0 / (fan_in ** 0.5)
        return jax.random.uniform(k, shape, jnp.float32, -bound, bound)

    return {
        "w1": u(ks[0], (6, 1, 5, 5), 1 * 5 * 5),
        "b1": u(ks[1], (6,), 1 * 5 * 5),
        "w2": u(ks[2], (16, 6, 5, 5), 6 * 5 * 5),
        "b2": u(ks[3], (16,), 6 * 5 * 5),
        "w3": u(ks[4], (120, 16, 4, 4), 16 * 4 * 4),
        "b3": u(ks[5], (120,), 16 * 4 * 4),
        "w_fc": u(ks[6], (10, 120), 120),
        "b_fc": u(ks[7], (10,), 120),
    }


if __name__ == "__main__":
    key = jax.random.PRNGKey(0)
    k_x, k_p = jax.random.split(key)
    # 28x28 single-channel input is required by the architecture for the final
    # .view((N, 120)) to be valid; small batch (padded to _NB internally).
    x = jax.random.normal(k_x, (2, 1, 28, 28), dtype=jnp.float32)
    params = init_params(k_p)

    fwd = jax.jit(lenet_variant_forward)
    out = fwd(x, params)
    jax.block_until_ready(out)
    assert out.shape == (2, 10) and out.dtype == jnp.float32
    print("KERNEL_OK")
</pallas_src>

<mosaic_0001>
module attributes {stable_mosaic.version = 11 : i64} {
  func.func @_lenet_fused_kernel(%arg0: i32, %arg1: memref<28x64x32xf32, #tpu.memory_space<vmem>>, %arg2: memref<5x32x256xbf16, #tpu.memory_space<vmem>>, %arg3: memref<1x256xf32, #tpu.memory_space<vmem>>, %arg4: memref<5x128x128xbf16, #tpu.memory_space<vmem>>, %arg5: memref<1x128xf32, #tpu.memory_space<vmem>>, %arg6: memref<256x128xbf16, #tpu.memory_space<vmem>>, %arg7: memref<1x128xf32, #tpu.memory_space<vmem>>, %arg8: memref<128x128xbf16, #tpu.memory_space<vmem>>, %arg9: memref<1x128xf32, #tpu.memory_space<vmem>>, %arg10: memref<64x128xf32, #tpu.memory_space<vmem>>, %arg11: memref<12x64x128xbf16, #tpu.memory_space<vmem>>) attributes {dimension_semantics = [#tpu.dimension_semantics<parallel>], iteration_bounds = array<i64: 1>, scalar_prefetch = 0 : i64, scratch_operands = 1 : i64, tpu.core_type = #tpu.core_type<tc>, window_params = [{transform_indices = @transform_0, window_bounds = array<i64: 28, 64, 32>}, {pipeline_mode = #tpu.pipeline_mode<synchronous>, transform_indices = @transform_1, window_bounds = array<i64: 5, 32, 256>}, {pipeline_mode = #tpu.pipeline_mode<synchronous>, transform_indices = @transform_2, window_bounds = array<i64: 1, 256>}, {pipeline_mode = #tpu.pipeline_mode<synchronous>, transform_indices = @transform_3, window_bounds = array<i64: 5, 128, 128>}, {pipeline_mode = #tpu.pipeline_mode<synchronous>, transform_indices = @transform_4, window_bounds = array<i64: 1, 128>}, {pipeline_mode = #tpu.pipeline_mode<synchronous>, transform_indices = @transform_5, window_bounds = array<i64: 256, 128>}, {pipeline_mode = #tpu.pipeline_mode<synchronous>, transform_indices = @transform_6, window_bounds = array<i64: 1, 128>}, {pipeline_mode = #tpu.pipeline_mode<synchronous>, transform_indices = @transform_7, window_bounds = array<i64: 128, 128>}, {pipeline_mode = #tpu.pipeline_mode<synchronous>, transform_indices = @transform_8, window_bounds = array<i64: 1, 128>}, {transform_indices = @transform_9, window_bounds = array<i64: 64, 128>}]} {
    %c0 = arith.constant 0 : index
    %c0_0 = arith.constant 0 : index
    %c0_1 = arith.constant 0 : index
    %0 = vector.load %arg1[%c0, %c0_0, %c0_1] : memref<28x64x32xf32, #tpu.memory_space<vmem>>, vector<28x64x32xf32>
    %1 = arith.truncf %0 : vector<28x64x32xf32> to vector<28x64x32xbf16>
    %2 = vector.extract_strided_slice %1 {offsets = [0, 0, 0], sizes = [24, 64, 32], strides = [1, 1, 1]} : vector<28x64x32xbf16> to vector<24x64x32xbf16>
    %3 = vector.shape_cast %2 : vector<24x64x32xbf16> to vector<1536x32xbf16>
    %c0_2 = arith.constant 0 : index
    %c0_3 = arith.constant 0 : index
    %c0_4 = arith.constant 0 : index
    %4 = vector.load %arg2[%c0_2, %c0_3, %c0_4] : memref<5x32x256xbf16, #tpu.memory_space<vmem>>, vector<1x32x256xbf16>
    %5 = vector.shape_cast %4 : vector<1x32x256xbf16> to vector<32x256xbf16>
    %cst = arith.constant dense<0.000000e+00> : vector<1536x256xf32>
    %6 = tpu.matmul %3, %5, %cst {dimension_numbers = #tpu.dot_dimension_numbers<[1], [0], [0], [1], [0, 0, 1, 1], [], []>} : vector<1536x32xbf16>, vector<32x256xbf16>, vector<1536x256xf32> -> vector<1536x256xf32>
    %7 = vector.extract_strided_slice %1 {offsets = [1, 0, 0], sizes = [24, 64, 32], strides = [1, 1, 1]} : vector<28x64x32xbf16> to vector<24x64x32xbf16>
    %8 = vector.shape_cast %7 : vector<24x64x32xbf16> to vector<1536x32xbf16>
    %c1 = arith.constant 1 : index
    %c0_5 = arith.constant 0 : index
    %c0_6 = arith.constant 0 : index
    %9 = vector.load %arg2[%c1, %c0_5, %c0_6] : memref<5x32x256xbf16, #tpu.memory_space<vmem>>, vector<1x32x256xbf16>
    %10 = vector.shape_cast %9 : vector<1x32x256xbf16> to vector<32x256xbf16>
    %cst_7 = arith.constant dense<0.000000e+00> : vector<1536x256xf32>
    %11 = tpu.matmul %8, %10, %cst_7 {dimension_numbers = #tpu.dot_dimension_numbers<[1], [0], [0], [1], [0, 0, 1, 1], [], []>} : vector<1536x32xbf16>, vector<32x256xbf16>, vector<1536x256xf32> -> vector<1536x256xf32>
    %12 = arith.addf %6, %11 : vector<1536x256xf32>
    %13 = vector.extract_strided_slice %1 {offsets = [2, 0, 0], sizes = [24, 64, 32], strides = [1, 1, 1]} : vector<28x64x32xbf16> to vector<24x64x32xbf16>
    %14 = vector.shape_cast %13 : vector<24x64x32xbf16> to vector<1536x32xbf16>
    %c2 = arith.constant 2 : index
    %c0_8 = arith.constant 0 : index
    %c0_9 = arith.constant 0 : index
    %15 = vector.load %arg2[%c2, %c0_8, %c0_9] : memref<5x32x256xbf16, #tpu.memory_space<vmem>>, vector<1x32x256xbf16>
    %16 = vector.shape_cast %15 : vector<1x32x256xbf16> to vector<32x256xbf16>
    %cst_10 = arith.constant dense<0.000000e+00> : vector<1536x256xf32>
    %17 = tpu.matmul %14, %16, %cst_10 {dimension_numbers = #tpu.dot_dimension_numbers<[1], [0], [0], [1], [0, 0, 1, 1], [], []>} : vector<1536x32xbf16>, vector<32x256xbf16>, vector<1536x256xf32> -> vector<1536x256xf32>
    %18 = arith.addf %12, %17 : vector<1536x256xf32>
    %19 = vector.extract_strided_slice %1 {offsets = [3, 0, 0], sizes = [24, 64, 32], strides = [1, 1, 1]} : vector<28x64x32xbf16> to vector<24x64x32xbf16>
    %20 = vector.shape_cast %19 : vector<24x64x32xbf16> to vector<1536x32xbf16>
    %c3 = arith.constant 3 : index
    %c0_11 = arith.constant 0 : index
    %c0_12 = arith.constant 0 : index
    %21 = vector.load %arg2[%c3, %c0_11, %c0_12] : memref<5x32x256xbf16, #tpu.memory_space<vmem>>, vector<1x32x256xbf16>
    %22 = vector.shape_cast %21 : vector<1x32x256xbf16> to vector<32x256xbf16>
    %cst_13 = arith.constant dense<0.000000e+00> : vector<1536x256xf32>
    %23 = tpu.matmul %20, %22, %cst_13 {dimension_numbers = #tpu.dot_dimension_numbers<[1], [0], [0], [1], [0, 0, 1, 1], [], []>} : vector<1536x32xbf16>, vector<32x256xbf16>, vector<1536x256xf32> -> vector<1536x256xf32>
    %24 = arith.addf %18, %23 : vector<1536x256xf32>
    %25 = vector.extract_strided_slice %1 {offsets = [4, 0, 0], sizes = [24, 64, 32], strides = [1, 1, 1]} : vector<28x64x32xbf16> to vector<24x64x32xbf16>
    %26 = vector.shape_cast %25 : vector<24x64x32xbf16> to vector<1536x32xbf16>
    %c4 = arith.constant 4 : index
    %c0_14 = arith.constant 0 : index
    %c0_15 = arith.constant 0 : index
    %27 = vector.load %arg2[%c4, %c0_14, %c0_15] : memref<5x32x256xbf16, #tpu.memory_space<vmem>>, vector<1x32x256xbf16>
    %28 = vector.shape_cast %27 : vector<1x32x256xbf16> to vector<32x256xbf16>
    %cst_16 = arith.constant dense<0.000000e+00> : vector<1536x256xf32>
    %29 = tpu.matmul %26, %28, %cst_16 {dimension_numbers = #tpu.dot_dimension_numbers<[1], [0], [0], [1], [0, 0, 1, 1], [], []>} : vector<1536x32xbf16>, vector<32x256xbf16>, vector<1536x256xf32> -> vector<1536x256xf32>
    %30 = arith.addf %24, %29 : vector<1536x256xf32>
    %c0_17 = arith.constant 0 : index
    %c0_18 = arith.constant 0 : index
    %31 = vector.load %arg3[%c0_17, %c0_18] : memref<1x256xf32, #tpu.memory_space<vmem>>, vector<1x256xf32>
    %32 = vector.broadcast %31 : vector<1x256xf32> to vector<1536x256xf32>
    %33 = arith.addf %30, %32 : vector<1536x256xf32>
    %cst_19 = arith.constant 0.000000e+00 : f32
    %34 = vector.broadcast %cst_19 : f32 to vector<1536x256xf32>
    %35 = arith.maximumf %33, %34 : vector<1536x256xf32>
    %36 = vector.shape_cast %35 : vector<1536x256xf32> to vector<12x2x64x256xf32>
    %37 = vector.extract_strided_slice %36 {offsets = [0, 0, 0, 0], sizes = [12, 1, 64, 256], strides = [1, 1, 1, 1]} : vector<12x2x64x256xf32> to vector<12x1x64x256xf32>
    %38 = vector.shape_cast %37 : vector<12x1x64x256xf32> to vector<12x64x256xf32>
    %39 = vector.extract_strided_slice %36 {offsets = [0, 1, 0, 0], sizes = [12, 1, 64, 256], strides = [1, 1, 1, 1]} : vector<12x2x64x256xf32> to vector<12x1x64x256xf32>
    %40 = vector.shape_cast %39 : vector<12x1x64x256xf32> to vector<12x64x256xf32>
    %41 = arith.maximumf %38, %40 : vector<12x64x256xf32>
    %42 = vector.extract_strided_slice %41 {offsets = [0, 0, 0], sizes = [12, 64, 128], strides = [1, 1, 1]} : vector<12x64x256xf32> to vector<12x64x128xf32>
    %43 = vector.extract_strided_slice %41 {offsets = [0, 0, 128], sizes = [12, 64, 128], strides = [1, 1, 1]} : vector<12x64x256xf32> to vector<12x64x128xf32>
    %44 = arith.maximumf %42, %43 : vector<12x64x128xf32>
    %45 = arith.truncf %44 : vector<12x64x128xf32> to vector<12x64x128xbf16>
    %c0_20 = arith.constant 0 : index
    %c0_21 = arith.constant 0 : index
    %c0_22 = arith.constant 0 : index
    %46 = vector.load %arg11[%c0_20, %c0_21, %c0_22] : memref<12x64x128xbf16, #tpu.memory_space<vmem>>, vector<12x64x128xbf16>
    tpu.vector_store %arg11[%c0_20, %c0_21, %c0_22], %45 {strides = array<i32>} : memref<12x64x128xbf16, #tpu.memory_space<vmem>>, vector<12x64x128xbf16>,
    %c0_23 = arith.constant 0 : index
    %c0_24 = arith.constant 0 : index
    %c0_25 = arith.constant 0 : index
    %47 = vector.load %arg11[%c0_23, %c0_24, %c0_25] : memref<12x64x128xbf16, #tpu.memory_space<vmem>>, vector<8x64x128xbf16>
    %48 = vector.shape_cast %47 : vector<8x64x128xbf16> to vector<512x128xbf16>
    %c0_26 = arith.constant 0 : index
    %c0_27 = arith.constant 0 : index
    %c0_28 = arith.constant 0 : index
    %49 = vector.load %arg4[%c0_26, %c0_27, %c0_28] : memref<5x128x128xbf16, #tpu.memory_space<vmem>>, vector<1x128x128xbf16>
    %50 = vector.shape_cast %49 : vector<1x128x128xbf16> to vector<128x128xbf16>
    %cst_29 = arith.constant dense<0.000000e+00> : vector<512x128xf32>
    %51 = tpu.matmul %48, %50, %cst_29 {dimension_numbers = #tpu.dot_dimension_numbers<[1], [0], [0], [1], [0, 0, 1, 1], [], []>} : vector<512x128xbf16>, vector<128x128xbf16>, vector<512x128xf32> -> vector<512x128xf32>
    %c1_30 = arith.constant 1 : index
    %c0_31 = arith.constant 0 : index
    %c0_32 = arith.constant 0 : index
    %52 = vector.load %arg11[%c1_30, %c0_31, %c0_32] : memref<12x64x128xbf16, #tpu.memory_space<vmem>>, vector<8x64x128xbf16>
    %53 = vector.shape_cast %52 : vector<8x64x128xbf16> to vector<512x128xbf16>
    %c1_33 = arith.constant 1 : index
    %c0_34 = arith.constant 0 : index
    %c0_35 = arith.constant 0 : index
    %54 = vector.load %arg4[%c1_33, %c0_34, %c0_35] : memref<5x128x128xbf16, #tpu.memory_space<vmem>>, vector<1x128x128xbf16>
    %55 = vector.shape_cast %54 : vector<1x128x128xbf16> to vector<128x128xbf16>
    %cst_36 = arith.constant dense<0.000000e+00> : vector<512x128xf32>
    %56 = tpu.matmul %53, %55, %cst_36 {dimension_numbers = #tpu.dot_dimension_numbers<[1], [0], [0], [1], [0, 0, 1, 1], [], []>} : vector<512x128xbf16>, vector<128x128xbf16>, vector<512x128xf32> -> vector<512x128xf32>
    %57 = arith.addf %51, %56 : vector<512x128xf32>
    %c2_37 = arith.constant 2 : index
    %c0_38 = arith.constant 0 : index
    %c0_39 = arith.constant 0 : index
    %58 = vector.load %arg11[%c2_37, %c0_38, %c0_39] : memref<12x64x128xbf16, #tpu.memory_space<vmem>>, vector<8x64x128xbf16>
    %59 = vector.shape_cast %58 : vector<8x64x128xbf16> to vector<512x128xbf16>
    %c2_40 = arith.constant 2 : index
    %c0_41 = arith.constant 0 : index
    %c0_42 = arith.constant 0 : index
    %60 = vector.load %arg4[%c2_40, %c0_41, %c0_42] : memref<5x128x128xbf16, #tpu.memory_space<vmem>>, vector<1x128x128xbf16>
    %61 = vector.shape_cast %60 : vector<1x128x128xbf16> to vector<128x128xbf16>
    %cst_43 = arith.constant dense<0.000000e+00> : vector<512x128xf32>
    %62 = tpu.matmul %59, %61, %cst_43 {dimension_numbers = #tpu.dot_dimension_numbers<[1], [0], [0], [1], [0, 0, 1, 1], [], []>} : vector<512x128xbf16>, vector<128x128xbf16>, vector<512x128xf32> -> vector<512x128xf32>
    %63 = arith.addf %57, %62 : vector<512x128xf32>
    %c3_44 = arith.constant 3 : index
    %c0_45 = arith.constant 0 : index
    %c0_46 = arith.constant 0 : index
    %64 = vector.load %arg11[%c3_44, %c0_45, %c0_46] : memref<12x64x128xbf16, #tpu.memory_space<vmem>>, vector<8x64x128xbf16>
    %65 = vector.shape_cast %64 : vector<8x64x128xbf16> to vector<512x128xbf16>
    %c3_47 = arith.constant 3 : index
    %c0_48 = arith.constant 0 : index
    %c0_49 = arith.constant 0 : index
    %66 = vector.load %arg4[%c3_47, %c0_48, %c0_49] : memref<5x128x128xbf16, #tpu.memory_space<vmem>>, vector<1x128x128xbf16>
    %67 = vector.shape_cast %66 : vector<1x128x128xbf16> to vector<128x128xbf16>
    %cst_50 = arith.constant dense<0.000000e+00> : vector<512x128xf32>
    %68 = tpu.matmul %65, %67, %cst_50 {dimension_numbers = #tpu.dot_dimension_numbers<[1], [0], [0], [1], [0, 0, 1, 1], [], []>} : vector<512x128xbf16>, vector<128x128xbf16>, vector<512x128xf32> -> vector<512x128xf32>
    %69 = arith.addf %63, %68 : vector<512x128xf32>
    %c4_51 = arith.constant 4 : index
    %c0_52 = arith.constant 0 : index
    %c0_53 = arith.constant 0 : index
    %70 = vector.load %arg11[%c4_51, %c0_52, %c0_53] : memref<12x64x128xbf16, #tpu.memory_space<vmem>>, vector<8x64x128xbf16>
    %71 = vector.shape_cast %70 : vector<8x64x128xbf16> to vector<512x128xbf16>
    %c4_54 = arith.constant 4 : index
    %c0_55 = arith.constant 0 : index
    %c0_56 = arith.constant 0 : index
    %72 = vector.load %arg4[%c4_54, %c0_55, %c0_56] : memref<5x128x128xbf16, #tpu.memory_space<vmem>>, vector<1x128x128xbf16>
    %73 = vector.shape_cast %72 : vector<1x128x128xbf16> to vector<128x128xbf16>
    %cst_57 = arith.constant dense<0.000000e+00> : vector<512x128xf32>
    %74 = tpu.matmul %71, %73, %cst_57 {dimension_numbers = #tpu.dot_dimension_numbers<[1], [0], [0], [1], [0, 0, 1, 1], [], []>} : vector<512x128xbf16>, vector<128x128xbf16>, vector<512x128xf32> -> vector<512x128xf32>
    %75 = arith.addf %69, %74 : vector<512x128xf32>
    %c0_58 = arith.constant 0 : index
    %c0_59 = arith.constant 0 : index
    %76 = vector.load %arg5[%c0_58, %c0_59] : memref<1x128xf32, #tpu.memory_space<vmem>>, vector<1x128xf32>
    %77 = vector.broadcast %76 : vector<1x128xf32> to vector<512x128xf32>
    %78 = arith.addf %75, %77 : vector<512x128xf32>
    %cst_60 = arith.constant 0.000000e+00 : f32
    %79 = vector.broadcast %cst_60 : f32 to vector<512x128xf32>
    %80 = arith.maximumf %78, %79 : vector<512x128xf32>
    %81 = vector.shape_cast %80 : vector<512x128xf32> to vector<4x2x64x128xf32>
    %82 = vector.extract_strided_slice %81 {offsets = [0, 0, 0, 0], sizes = [4, 1, 64, 128], strides = [1, 1, 1, 1]} : vector<4x2x64x128xf32> to vector<4x1x64x128xf32>
    %83 = vector.shape_cast %82 : vector<4x1x64x128xf32> to vector<4x64x128xf32>
    %84 = vector.extract_strided_slice %81 {offsets = [0, 1, 0, 0], sizes = [4, 1, 64, 128], strides = [1, 1, 1, 1]} : vector<4x2x64x128xf32> to vector<4x1x64x128xf32>
    %85 = vector.shape_cast %84 : vector<4x1x64x128xf32> to vector<4x64x128xf32>
    %86 = arith.maximumf %83, %85 : vector<4x64x128xf32>
    %87 = vector.extract_strided_slice %86 {offsets = [0, 0, 0], sizes = [4, 64, 64], strides = [1, 1, 1]} : vector<4x64x128xf32> to vector<4x64x64xf32>
    %88 = vector.extract_strided_slice %86 {offsets = [0, 0, 64], sizes = [4, 64, 64], strides = [1, 1, 1]} : vector<4x64x128xf32> to vector<4x64x64xf32>
    %89 = arith.maximumf %87, %88 : vector<4x64x64xf32>
    %90 = vector.extract_strided_slice %89 {offsets = [0, 0, 0], sizes = [1, 64, 64], strides = [1, 1, 1]} : vector<4x64x64xf32> to vector<1x64x64xf32>
    %91 = vector.shape_cast %90 : vector<1x64x64xf32> to vector<64x64xf32>
    %92 = vector.extract_strided_slice %89 {offsets = [1, 0, 0], sizes = [1, 64, 64], strides = [1, 1, 1]} : vector<4x64x64xf32> to vector<1x64x64xf32>
    %93 = vector.shape_cast %92 : vector<1x64x64xf32> to vector<64x64xf32>
    %94 = vector.extract_strided_slice %89 {offsets = [2, 0, 0], sizes = [1, 64, 64], strides = [1, 1, 1]} : vector<4x64x64xf32> to vector<1x64x64xf32>
    %95 = vector.shape_cast %94 : vector<1x64x64xf32> to vector<64x64xf32>
    %96 = vector.extract_strided_slice %89 {offsets = [3, 0, 0], sizes = [1, 64, 64], strides = [1, 1, 1]} : vector<4x64x64xf32> to vector<1x64x64xf32>
    %97 = vector.shape_cast %96 : vector<1x64x64xf32> to vector<64x64xf32>
    %98 = tpu.concatenate %91, %93, %95, %97 in 1 : vector<64x64xf32>, vector<64x64xf32>, vector<64x64xf32>, vector<64x64xf32> -> vector<64x256xf32>
    %99 = arith.truncf %98 : vector<64x256xf32> to vector<64x256xbf16>
    %c0_61 = arith.constant 0 : index
    %c0_62 = arith.constant 0 : index
    %100 = vector.load %arg6[%c0_61, %c0_62] : memref<256x128xbf16, #tpu.memory_space<vmem>>, vector<256x128xbf16>
    %cst_63 = arith.constant dense<0.000000e+00> : vector<64x128xf32>
    %101 = tpu.matmul %99, %100, %cst_63 {dimension_numbers = #tpu.dot_dimension_numbers<[1], [0], [0], [1], [0, 0, 1, 1], [], []>} : vector<64x256xbf16>, vector<256x128xbf16>, vector<64x128xf32> -> vector<64x128xf32>
    %c0_64 = arith.constant 0 : index
    %c0_65 = arith.constant 0 : index
    %102 = vector.load %arg7[%c0_64, %c0_65] : memref<1x128xf32, #tpu.memory_space<vmem>>, vector<1x128xf32>
    %103 = vector.broadcast %102 : vector<1x128xf32> to vector<64x128xf32>
    %104 = arith.addf %101, %103 : vector<64x128xf32>
    %cst_66 = arith.constant 0.000000e+00 : f32
    %105 = vector.broadcast %cst_66 : f32 to vector<64x128xf32>
    %106 = arith.maximumf %104, %105 : vector<64x128xf32>
    %107 = arith.truncf %106 : vector<64x128xf32> to vector<64x128xbf16>
    %c0_67 = arith.constant 0 : index
    %c0_68 = arith.constant 0 : index
    %108 = vector.load %arg8[%c0_67, %c0_68] : memref<128x128xbf16, #tpu.memory_space<vmem>>, vector<128x128xbf16>
    %cst_69 = arith.constant dense<0.000000e+00> : vector<64x128xf32>
    %109 = tpu.matmul %107, %108, %cst_69 {dimension_numbers = #tpu.dot_dimension_numbers<[1], [0], [0], [1], [0, 0, 1, 1], [], []>} : vector<64x128xbf16>, vector<128x128xbf16>, vector<64x128xf32> -> vector<64x128xf32>
    %c0_70 = arith.constant 0 : index
    %c0_71 = arith.constant 0 : index
    %110 = vector.load %arg9[%c0_70, %c0_71] : memref<1x128xf32, #tpu.memory_space<vmem>>, vector<1x128xf32>
    %111 = vector.broadcast %110 : vector<1x128xf32> to vector<64x128xf32>
    %112 = arith.addf %109, %111 : vector<64x128xf32>
    %cst_72 = arith.constant 0.000000e+00 : f32
    %113 = vector.broadcast %cst_72 : f32 to vector<64x128xf32>
    %114 = arith.maximumf %112, %113 : vector<64x128xf32>
    %c0_73 = arith.constant 0 : index
    %c0_74 = arith.constant 0 : index
    %115 = vector.load %arg10[%c0_73, %c0_74] : memref<64x128xf32, #tpu.memory_space<vmem>>, vector<64x128xf32>
    tpu.vector_store %arg10[%c0_73, %c0_74], %114 {strides = array<i32>} : memref<64x128xf32, #tpu.memory_space<vmem>>, vector<64x128xf32>,
    return
  }
  func.func @transform_0(%arg0: i32) -> (i32, i32, i32) {
    %c0_i32 = arith.constant 0 : i32
    %c0_i32_0 = arith.constant 0 : i32
    %c0_i32_1 = arith.constant 0 : i32
    return %c0_i32, %arg0, %c0_i32_0 : i32, i32, i32
  }
  func.func @transform_1(%arg0: i32) -> (i32, i32, i32) {
    %c0_i32 = arith.constant 0 : i32
    %c0_i32_0 = arith.constant 0 : i32
    %c0_i32_1 = arith.constant 0 : i32
    %c0_i32_2 = arith.constant 0 : i32
    return %c0_i32, %c0_i32_0, %c0_i32_1 : i32, i32, i32
  }
  func.func @transform_2(%arg0: i32) -> (i32, i32) {
    %c0_i32 = arith.constant 0 : i32
    %c0_i32_0 = arith.constant 0 : i32
    %c0_i32_1 = arith.constant 0 : i32
    return %c0_i32, %c0_i32_0 : i32, i32
  }
  func.func @transform_3(%arg0: i32) -> (i32, i32, i32) {
    %c0_i32 = arith.constant 0 : i32
    %c0_i32_0 = arith.constant 0 : i32
    %c0_i32_1 = arith.constant 0 : i32
    %c0_i32_2 = arith.constant 0 : i32
    return %c0_i32, %c0_i32_0, %c0_i32_1 : i32, i32, i32
  }
  func.func @transform_4(%arg0: i32) -> (i32, i32) {
    %c0_i32 = arith.constant 0 : i32
    %c0_i32_0 = arith.constant 0 : i32
    %c0_i32_1 = arith.constant 0 : i32
    return %c0_i32, %c0_i32_0 : i32, i32
  }
  func.func @transform_5(%arg0: i32) -> (i32, i32) {
    %c0_i32 = arith.constant 0 : i32
    %c0_i32_0 = arith.constant 0 : i32
    %c0_i32_1 = arith.constant 0 : i32
    return %c0_i32, %c0_i32_0 : i32, i32
  }
  func.func @transform_6(%arg0: i32) -> (i32, i32) {
    %c0_i32 = arith.constant 0 : i32
    %c0_i32_0 = arith.constant 0 : i32
    %c0_i32_1 = arith.constant 0 : i32
    return %c0_i32, %c0_i32_0 : i32, i32
  }
  func.func @transform_7(%arg0: i32) -> (i32, i32) {
    %c0_i32 = arith.constant 0 : i32
    %c0_i32_0 = arith.constant 0 : i32
    %c0_i32_1 = arith.constant 0 : i32
    return %c0_i32, %c0_i32_0 : i32, i32
  }
  func.func @transform_8(%arg0: i32) -> (i32, i32) {
    %c0_i32 = arith.constant 0 : i32
    %c0_i32_0 = arith.constant 0 : i32
    %c0_i32_1 = arith.constant 0 : i32
    return %c0_i32, %c0_i32_0 : i32, i32
  }
  func.func @transform_9(%arg0: i32) -> (i32, i32) {
    %c0_i32 = arith.constant 0 : i32
    %c0_i32_0 = arith.constant 0 : i32
    return %arg0, %c0_i32 : i32, i32
  }
}

</mosaic_0001>

<llo_original>
// kernel: tile.18
$region0: #{tile.18}
  #allocation0 [shape = 's32[1]{0}', space=sflag, size = 0x4, scoped, tag = 'scoped memory for tile.18']
  %s0 = inlined_call_operand.vmem [shape: f32[16], index: 0, kind: input, shape index: {}]
  %s1 = inlined_call_operand.vmem [shape: f32[8,16], index: 1, kind: output, shape index: {}]
  // Predicated region
  $region2: #{tile.18} parent=0 // pred_check
    _
  $region3: #{tile.18} parent=0 // pred_check_branch
    %3 = sbr.rel (0) target = $region5
  $region4: #{tile.18} parent=0 // pred_region
    _
  $region5: #{tile.18} parent=0 // pred_fallthru
    _
  %v4 = vld [vmem:[%s0] ss:$0 sm:$0xff]
  %5 = vst [vmem:[%s1] sm:$0xff] %v4

// kernel: tile.19
$region0: #{tile.19}
  %s0 = inlined_call_operand.vmem [shape: f32[8,16], index: 0, kind: input, shape index: {}]
  %s1 = inlined_call_operand.vmem [shape: f32[1,128], index: 1, kind: output, shape index: {}]
  $region1: #{tile.19} parent=0
    #allocation0 [shape = 'u8[4096]{0}', space=vmem, size = 0x1000, scoped, tag = 'scoped mem for output reshape']
    %v2 = vld [vmem:[%s0] sm:$0x1]
    %vm3 = vcmask 130048
    %4 = vst.msk [vmem:[#allocation0] sm:$0x1] %vm3, %v2
    %s5 = scalar_lea.vmem %s0, 7
    %v6 = vld [vmem:[%s5] sm:$0x1]
    %7 = vrot.lane.b32.xlu0 %v6, 112
    %v8 = vpop.permute.xlu0 %7
    %vm9 = vcmask 1048448
    %10 = vst.msk [vmem:[#allocation0] sm:$0x1] %vm9, %v8
    %s11 = scalar_lea.vmem %s0, 6
    %v12 = vld [vmem:[%s11] sm:$0x1]
    %13 = vrot.lane.b32.xlu0 %v12, 96
    %v14 = vpop.permute.xlu0 %13
    %vm15 = vcmask 917248
    %16 = vst.msk [vmem:[#allocation0] sm:$0x1] %vm15, %v14
    %s17 = scalar_lea.vmem %s0, 5
    %v18 = vld [vmem:[%s17] sm:$0x1]
    %19 = vrot.lane.b32.xlu0 %v18, 80
    %v20 = vpop.permute.xlu0 %19
    %vm21 = vcmask 786048
    %22 = vst.msk [vmem:[#allocation0] sm:$0x1] %vm21, %v20
    %s23 = scalar_lea.vmem %s0, 4
    %v24 = vld [vmem:[%s23] sm:$0x1]
    %25 = vrot.lane.b32.xlu0 %v24, 64
    %v26 = vpop.permute.xlu0 %25
    %vm27 = vcmask 654848
    %28 = vst.msk [vmem:[#allocation0] sm:$0x1] %vm27, %v26
    %s29 = scalar_lea.vmem %s0, 3
    %v30 = vld [vmem:[%s29] sm:$0x1]
    %31 = vrot.lane.b32.xlu0 %v30, 48
    %v32 = vpop.permute.xlu0 %31
    %vm33 = vcmask 523648
    %34 = vst.msk [vmem:[#allocation0] sm:$0x1] %vm33, %v32
    %s35 = scalar_lea.vmem %s0, 2
    %v36 = vld [vmem:[%s35] sm:$0x1]
    %37 = vrot.lane.b32.xlu0 %v36, 32
    %v38 = vpop.permute.xlu0 %37
    %vm39 = vcmask 392448
    %40 = vst.msk [vmem:[#allocation0] sm:$0x1] %vm39, %v38
    %s41 = scalar_lea.vmem %s0, 1
    %v42 = vld [vmem:[%s41] sm:$0x1]
    %43 = vrot.lane.b32.xlu0 %v42, 16
    %v44 = vpop.permute.xlu0 %43
    %vm45 = vcmask 261248
    %46 = vst.msk [vmem:[#allocation0] sm:$0x1] %vm45, %v44
    %s48 = sshllo.u32 0, 1
    %v50 = vld [vmem:[#allocation0] sm:%s48]
    %s51 = sshllo.u32 0, 1
    %52 = vst [vmem:[%s1] sm:%s51] %v50

// kernel: lenet_variant_forward.1
$region0: #{lenet_variant_forward.1}
  #allocation0 [shape = 'u32[]', space=smem, size = 0x4, offset = 0x4, fixed_abs, tag = 'smem constant byte address 0x4 - core index']
  #allocation1 [shape = 'u32[144,128]{1,0:T(1,128)}', space=vmem, size = 0x12000, scoped, tag = 'internal scratch']
  #allocation2 [shape = 'bf16[12,64,128]{2,1,0:T(16,128)(2,1)}', space=vmem, size = 0x30000, scoped, tag = 'scratch operand']
  %s0 = inlined_call_operand.vmem [shape: f32[28,64,32], index: 0, kind: input, shape index: {}]
  %s1 = inlined_call_operand.vmem [shape: bf16[5,32,256], index: 1, kind: input, shape index: {}]
  %s2 = inlined_call_operand.vmem [shape: f32[1,256], index: 2, kind: input, shape index: {}]
  %s3 = inlined_call_operand.vmem [shape: bf16[5,128,128], index: 3, kind: input, shape index: {}]
  %s4 = inlined_call_operand.vmem [shape: f32[1,128], index: 4, kind: input, shape index: {}]
  %s5 = inlined_call_operand.vmem [shape: bf16[256,128], index: 5, kind: input, shape index: {}]
  %s6 = inlined_call_operand.vmem [shape: f32[1,128], index: 6, kind: input, shape index: {}]
  %s7 = inlined_call_operand.vmem [shape: bf16[128,128], index: 7, kind: input, shape index: {}]
  %s8 = inlined_call_operand.vmem [shape: f32[1,128], index: 8, kind: input, shape index: {}]
  %s9 = inlined_call_operand.vmem [shape: f32[64,128], index: 9, kind: output, shape index: {}]
  %s10 = sld [smem:[#allocation0]]
  $region46: #{lenet_variant_forward.1} parent=0
    _
  %s12 = ssub.s32 1, %s10
  %s13 = scalar_select 0, %s12, %s10
  // Predicated region
  $region2: #{lenet_variant_forward.1} parent=0 // pred_check
    _
  $region3: #{lenet_variant_forward.1} parent=0 // pred_check_branch
    %15 = sbr.rel (0) target = $region5
  $region4: #{lenet_variant_forward.1} parent=0 // pred_region
    _
  $region5: #{lenet_variant_forward.1} parent=0 // pred_fallthru
    _
  // Predicated region
  $region6: #{lenet_variant_forward.1} parent=0 // pred_check
    _
  $region7: #{lenet_variant_forward.1} parent=0 // pred_check_branch
    %17 = sbr.rel (0) target = $region9
  $region8: #{lenet_variant_forward.1} parent=0 // pred_region
    _
  $region9: #{lenet_variant_forward.1} parent=0 // pred_fallthru
    _
  // Predicated region
  $region10: #{lenet_variant_forward.1} parent=0 // pred_check
    _
  $region11: #{lenet_variant_forward.1} parent=0 // pred_check_branch
    %19 = sbr.rel (0) target = $region13
  $region12: #{lenet_variant_forward.1} parent=0 // pred_region
    _
  $region13: #{lenet_variant_forward.1} parent=0 // pred_fallthru
    _
  // Predicated region
  $region14: #{lenet_variant_forward.1} parent=0 // pred_check
    _
  $region15: #{lenet_variant_forward.1} parent=0 // pred_check_branch
    %21 = sbr.rel (0) target = $region17
  $region16: #{lenet_variant_forward.1} parent=0 // pred_region
    _
  $region17: #{lenet_variant_forward.1} parent=0 // pred_fallthru
    _
  // Predicated region
  $region18: #{lenet_variant_forward.1} parent=0 // pred_check
    _
  $region19: #{lenet_variant_forward.1} parent=0 // pred_check_branch
    %23 = sbr.rel (0) target = $region21
  $region20: #{lenet_variant_forward.1} parent=0 // pred_region
    _
  $region21: #{lenet_variant_forward.1} parent=0 // pred_fallthru
    _
  // Predicated region
  $region22: #{lenet_variant_forward.1} parent=0 // pred_check
    _
  $region23: #{lenet_variant_forward.1} parent=0 // pred_check_branch
    %25 = sbr.rel (0) target = $region25
  $region24: #{lenet_variant_forward.1} parent=0 // pred_region
    _
  $region25: #{lenet_variant_forward.1} parent=0 // pred_fallthru
    _
  // Predicated region
  $region26: #{lenet_variant_forward.1} parent=0 // pred_check
    _
  $region27: #{lenet_variant_forward.1} parent=0 // pred_check_branch
    %27 = sbr.rel (0) target = $region29
  $region28: #{lenet_variant_forward.1} parent=0 // pred_region
    _
  $region29: #{lenet_variant_forward.1} parent=0 // pred_fallthru
    _
  // Predicated region
  $region30: #{lenet_variant_forward.1} parent=0 // pred_check
    _
  $region31: #{lenet_variant_forward.1} parent=0 // pred_check_branch
    %29 = sbr.rel (0) target = $region33
  $region32: #{lenet_variant_forward.1} parent=0 // pred_region
    _
  $region33: #{lenet_variant_forward.1} parent=0 // pred_fallthru
    _
  // Predicated region
  $region34: #{lenet_variant_forward.1} parent=0 // pred_check
    _
  $region35: #{lenet_variant_forward.1} parent=0 // pred_check_branch
    %31 = sbr.rel (0) target = $region37
  $region36: #{lenet_variant_forward.1} parent=0 // pred_region
    _
  $region37: #{lenet_variant_forward.1} parent=0 // pred_fallthru
    _
  %v33 = vld [vmem:[%s0] sm:$0xff]
  %v34 = vld [vmem:[%s0 + $0x8] sm:$0xff]
  %v35 = vld [vmem:[%s0 + $0x10] sm:$0xff]
  %v36 = vld [vmem:[%s0 + $0x18] sm:$0xff]
  %v37 = vld [vmem:[%s0 + $0x20] sm:$0xff]
  %v38 = vld [vmem:[%s0 + $0x28] sm:$0xff]
  %v39 = vld [vmem:[%s0 + $0x30] sm:$0xff]
  %v40 = vld [vmem:[%s0 + $0x38] sm:$0xff]
  %v41 = vld [vmem:[%s0 + $0x40] sm:$0xff]
  %v42 = vld [vmem:[%s0 + $0x48] sm:$0xff]
  %v43 = vld [vmem:[%s0 + $0x50] sm:$0xff]
  %v44 = vld [vmem:[%s0 + $0x58] sm:$0xff]
  %v45 = vld [vmem:[%s0 + $0x60] sm:$0xff]
  %v46 = vld [vmem:[%s0 + $0x68] sm:$0xff]
  %v47 = vld [vmem:[%s0 + $0x70] sm:$0xff]
  %v48 = vld [vmem:[%s0 + $0x78] sm:$0xff]
  %v49 = vld [vmem:[%s0 + $0x80] sm:$0xff]
  %v50 = vld [vmem:[%s0 + $0x88] sm:$0xff]
  %v51 = vld [vmem:[%s0 + $0x90] sm:$0xff]
  %v52 = vld [vmem:[%s0 + $0x98] sm:$0xff]
  %v53 = vld [vmem:[%s0 + $0xa0] sm:$0xff]
  %v54 = vld [vmem:[%s0 + $0xa8] sm:$0xff]
  %v55 = vld [vmem:[%s0 + $0xb0] sm:$0xff]
  %v56 = vld [vmem:[%s0 + $0xb8] sm:$0xff]
  %v57 = vld [vmem:[%s0 + $0xc0] sm:$0xff]
  %v58 = vld [vmem:[%s0 + $0xc8] sm:$0xff]
  %v59 = vld [vmem:[%s0 + $0xd0] sm:$0xff]
  %v60 = vld [vmem:[%s0 + $0xd8] sm:$0xff]
  %v61 = vld [vmem:[%s0 + $0xe0] sm:$0xff]
  %v62 = vld [vmem:[%s0 + $0xe8] sm:$0xff]
  %v63 = vld [vmem:[%s0 + $0xf0] sm:$0xff]
  %v64 = vld [vmem:[%s0 + $0xf8] sm:$0xff]
  %v65 = vld [vmem:[%s0 + $0x100] sm:$0xff]
  %v66 = vld [vmem:[%s0 + $0x108] sm:$0xff]
  %v67 = vld [vmem:[%s0 + $0x110] sm:$0xff]
  %v68 = vld [vmem:[%s0 + $0x118] sm:$0xff]
  %v69 = vld [vmem:[%s0 + $0x120] sm:$0xff]
  %v70 = vld [vmem:[%s0 + $0x128] sm:$0xff]
  %v71 = vld [vmem:[%s0 + $0x130] sm:$0xff]
  %v72 = vld [vmem:[%s0 + $0x138] sm:$0xff]
  %v73 = vld [vmem:[%s0 + $0x140] sm:$0xff]
  %v74 = vld [vmem:[%s0 + $0x148] sm:$0xff]
  %v75 = vld [vmem:[%s0 + $0x150] sm:$0xff]
  %v76 = vld [vmem:[%s0 + $0x158] sm:$0xff]
  %v77 = vld [vmem:[%s0 + $0x160] sm:$0xff]
  %v78 = vld [vmem:[%s0 + $0x168] sm:$0xff]
  %v79 = vld [vmem:[%s0 + $0x170] sm:$0xff]
  %v80 = vld [vmem:[%s0 + $0x178] sm:$0xff]
  %v81 = vld [vmem:[%s0 + $0x180] sm:$0xff]
  %v82 = vld [vmem:[%s0 + $0x188] sm:$0xff]
  %v83 = vld [vmem:[%s0 + $0x190] sm:$0xff]
  %v84 = vld [vmem:[%s0 + $0x198] sm:$0xff]
  %v85 = vld [vmem:[%s0 + $0x1a0] sm:$0xff]
  %v86 = vld [vmem:[%s0 + $0x1a8] sm:$0xff]
  %v87 = vld [vmem:[%s0 + $0x1b0] sm:$0xff]
  %v88 = vld [vmem:[%s0 + $0x1b8] sm:$0xff]
  %v89 = vld [vmem:[%s0 + $0x1c0] sm:$0xff]
  %v90 = vld [vmem:[%s0 + $0x1c8] sm:$0xff]
  %v91 = vld [vmem:[%s0 + $0x1d0] sm:$0xff]
  %v92 = vld [vmem:[%s0 + $0x1d8] sm:$0xff]
  %v93 = vld [vmem:[%s0 + $0x1e0] sm:$0xff]
  %v94 = vld [vmem:[%s0 + $0x1e8] sm:$0xff]
  %v95 = vld [vmem:[%s0 + $0x1f0] sm:$0xff]
  %v96 = vld [vmem:[%s0 + $0x1f8] sm:$0xff]
  %v97 = vld [vmem:[%s0 + $0x200] sm:$0xff]
  %v98 = vld [vmem:[%s0 + $0x208] sm:$0xff]
  %v99 = vld [vmem:[%s0 + $0x210] sm:$0xff]
  %v100 = vld [vmem:[%s0 + $0x218] sm:$0xff]
  %v101 = vld [vmem:[%s0 + $0x220] sm:$0xff]
  %v102 = vld [vmem:[%s0 + $0x228] sm:$0xff]
  %v103 = vld [vmem:[%s0 + $0x230] sm:$0xff]
  %v104 = vld [vmem:[%s0 + $0x238] sm:$0xff]
  %v105 = vld [vmem:[%s0 + $0x240] sm:$0xff]
  %v106 = vld [vmem:[%s0 + $0x248] sm:$0xff]
  %v107 = vld [vmem:[%s0 + $0x250] sm:$0xff]
  %v108 = vld [vmem:[%s0 + $0x258] sm:$0xff]
  %v109 = vld [vmem:[%s0 + $0x260] sm:$0xff]
  %v110 = vld [vmem:[%s0 + $0x268] sm:$0xff]
  %v111 = vld [vmem:[%s0 + $0x270] sm:$0xff]
  %v112 = vld [vmem:[%s0 + $0x278] sm:$0xff]
  %v113 = vld [vmem:[%s0 + $0x280] sm:$0xff]
  %v114 = vld [vmem:[%s0 + $0x288] sm:$0xff]
  %v115 = vld [vmem:[%s0 + $0x290] sm:$0xff]
  %v116 = vld [vmem:[%s0 + $0x298] sm:$0xff]
  %v117 = vld [vmem:[%s0 + $0x2a0] sm:$0xff]
  %v118 = vld [vmem:[%s0 + $0x2a8] sm:$0xff]
  %v119 = vld [vmem:[%s0 + $0x2b0] sm:$0xff]
  %v120 = vld [vmem:[%s0 + $0x2b8] sm:$0xff]
  %v121 = vld [vmem:[%s0 + $0x2c0] sm:$0xff]
  %v122 = vld [vmem:[%s0 + $0x2c8] sm:$0xff]
  %v123 = vld [vmem:[%s0 + $0x2d0] sm:$0xff]
  %v124 = vld [vmem:[%s0 + $0x2d8] sm:$0xff]
  %v125 = vld [vmem:[%s0 + $0x2e0] sm:$0xff]
  %v126 = vld [vmem:[%s0 + $0x2e8] sm:$0xff]
  %v127 = vld [vmem:[%s0 + $0x2f0] sm:$0xff]
  %v128 = vld [vmem:[%s0 + $0x2f8] sm:$0xff]
  %v129 = vld [vmem:[%s0 + $0x300] sm:$0xff]
  %v130 = vld [vmem:[%s0 + $0x308] sm:$0xff]
  %v131 = vld [vmem:[%s0 + $0x310] sm:$0xff]
  %v132 = vld [vmem:[%s0 + $0x318] sm:$0xff]
  %v133 = vld [vmem:[%s0 + $0x320] sm:$0xff]
  %v134 = vld [vmem:[%s0 + $0x328] sm:$0xff]
  %v135 = vld [vmem:[%s0 + $0x330] sm:$0xff]
  %v136 = vld [vmem:[%s0 + $0x338] sm:$0xff]
  %v137 = vld [vmem:[%s0 + $0x340] sm:$0xff]
  %v138 = vld [vmem:[%s0 + $0x348] sm:$0xff]
  %v139 = vld [vmem:[%s0 + $0x350] sm:$0xff]
  %v140 = vld [vmem:[%s0 + $0x358] sm:$0xff]
  %v141 = vld [vmem:[%s0 + $0x360] sm:$0xff]
  %v142 = vld [vmem:[%s0 + $0x368] sm:$0xff]
  %v143 = vld [vmem:[%s0 + $0x370] sm:$0xff]
  %v144 = vld [vmem:[%s0 + $0x378] sm:$0xff]
  %v145 = vld [vmem:[%s0 + $0x380] sm:$0xff]
  %v146 = vld [vmem:[%s0 + $0x388] sm:$0xff]
  %v147 = vld [vmem:[%s0 + $0x390] sm:$0xff]
  %v148 = vld [vmem:[%s0 + $0x398] sm:$0xff]
  %v149 = vld [vmem:[%s0 + $0x3a0] sm:$0xff]
  %v150 = vld [vmem:[%s0 + $0x3a8] sm:$0xff]
  %v151 = vld [vmem:[%s0 + $0x3b0] sm:$0xff]
  %v152 = vld [vmem:[%s0 + $0x3b8] sm:$0xff]
  %v153 = vld [vmem:[%s0 + $0x3c0] sm:$0xff]
  %v154 = vld [vmem:[%s0 + $0x3c8] sm:$0xff]
  %v155 = vld [vmem:[%s0 + $0x3d0] sm:$0xff]
  %v156 = vld [vmem:[%s0 + $0x3d8] sm:$0xff]
  %v157 = vld [vmem:[%s0 + $0x3e0] sm:$0xff]
  %v158 = vld [vmem:[%s0 + $0x3e8] sm:$0xff]
  %v159 = vld [vmem:[%s0 + $0x3f0] sm:$0xff]
  %v160 = vld [vmem:[%s0 + $0x3f8] sm:$0xff]
  %v161 = vld [vmem:[%s0 + $0x400] sm:$0xff]
  %v162 = vld [vmem:[%s0 + $0x408] sm:$0xff]
  %v163 = vld [vmem:[%s0 + $0x410] sm:$0xff]
  %v164 = vld [vmem:[%s0 + $0x418] sm:$0xff]
  %v165 = vld [vmem:[%s0 + $0x420] sm:$0xff]
  %v166 = vld [vmem:[%s0 + $0x428] sm:$0xff]
  %v167 = vld [vmem:[%s0 + $0x430] sm:$0xff]
  %v168 = vld [vmem:[%s0 + $0x438] sm:$0xff]
  %v169 = vld [vmem:[%s0 + $0x440] sm:$0xff]
  %v170 = vld [vmem:[%s0 + $0x448] sm:$0xff]
  %v171 = vld [vmem:[%s0 + $0x450] sm:$0xff]
  %v172 = vld [vmem:[%s0 + $0x458] sm:$0xff]
  %v173 = vld [vmem:[%s0 + $0x460] sm:$0xff]
  %v174 = vld [vmem:[%s0 + $0x468] sm:$0xff]
  %v175 = vld [vmem:[%s0 + $0x470] sm:$0xff]
  %v176 = vld [vmem:[%s0 + $0x478] sm:$0xff]
  %v177 = vld [vmem:[%s0 + $0x480] sm:$0xff]
  %v178 = vld [vmem:[%s0 + $0x488] sm:$0xff]
  %v179 = vld [vmem:[%s0 + $0x490] sm:$0xff]
  %v180 = vld [vmem:[%s0 + $0x498] sm:$0xff]
  %v181 = vld [vmem:[%s0 + $0x4a0] sm:$0xff]
  %v182 = vld [vmem:[%s0 + $0x4a8] sm:$0xff]
  %v183 = vld [vmem:[%s0 + $0x4b0] sm:$0xff]
  %v184 = vld [vmem:[%s0 + $0x4b8] sm:$0xff]
  %v185 = vld [vmem:[%s0 + $0x4c0] sm:$0xff]
  %v186 = vld [vmem:[%s0 + $0x4c8] sm:$0xff]
  %v187 = vld [vmem:[%s0 + $0x4d0] sm:$0xff]
  %v188 = vld [vmem:[%s0 + $0x4d8] sm:$0xff]
  %v189 = vld [vmem:[%s0 + $0x4e0] sm:$0xff]
  %v190 = vld [vmem:[%s0 + $0x4e8] sm:$0xff]
  %v191 = vld [vmem:[%s0 + $0x4f0] sm:$0xff]
  %v192 = vld [vmem:[%s0 + $0x4f8] sm:$0xff]
  %v193 = vld [vmem:[%s0 + $0x500] sm:$0xff]
  %v194 = vld [vmem:[%s0 + $0x508] sm:$0xff]
  %v195 = vld [vmem:[%s0 + $0x510] sm:$0xff]
  %v196 = vld [vmem:[%s0 + $0x518] sm:$0xff]
  %v197 = vld [vmem:[%s0 + $0x520] sm:$0xff]
  %v198 = vld [vmem:[%s0 + $0x528] sm:$0xff]
  %v199 = vld [vmem:[%s0 + $0x530] sm:$0xff]
  %v200 = vld [vmem:[%s0 + $0x538] sm:$0xff]
  %v201 = vld [vmem:[%s0 + $0x540] sm:$0xff]
  %v202 = vld [vmem:[%s0 + $0x548] sm:$0xff]
  %v203 = vld [vmem:[%s0 + $0x550] sm:$0xff]
  %v204 = vld [vmem:[%s0 + $0x558] sm:$0xff]
  %v205 = vld [vmem:[%s0 + $0x560] sm:$0xff]
  %v206 = vld [vmem:[%s0 + $0x568] sm:$0xff]
  %v207 = vld [vmem:[%s0 + $0x570] sm:$0xff]
  %v208 = vld [vmem:[%s0 + $0x578] sm:$0xff]
  %v209 = vld [vmem:[%s0 + $0x580] sm:$0xff]
  %v210 = vld [vmem:[%s0 + $0x588] sm:$0xff]
  %v211 = vld [vmem:[%s0 + $0x590] sm:$0xff]
  %v212 = vld [vmem:[%s0 + $0x598] sm:$0xff]
  %v213 = vld [vmem:[%s0 + $0x5a0] sm:$0xff]
  %v214 = vld [vmem:[%s0 + $0x5a8] sm:$0xff]
  %v215 = vld [vmem:[%s0 + $0x5b0] sm:$0xff]
  %v216 = vld [vmem:[%s0 + $0x5b8] sm:$0xff]
  %v217 = vld [vmem:[%s0 + $0x5c0] sm:$0xff]
  %v218 = vld [vmem:[%s0 + $0x5c8] sm:$0xff]
  %v219 = vld [vmem:[%s0 + $0x5d0] sm:$0xff]
  %v220 = vld [vmem:[%s0 + $0x5d8] sm:$0xff]
  %v221 = vld [vmem:[%s0 + $0x5e0] sm:$0xff]
  %v222 = vld [vmem:[%s0 + $0x5e8] sm:$0xff]
  %v223 = vld [vmem:[%s0 + $0x5f0] sm:$0xff]
  %v224 = vld [vmem:[%s0 + $0x5f8] sm:$0xff]
  %v225 = vld [vmem:[%s0 + $0x600] sm:$0xff]
  %v226 = vld [vmem:[%s0 + $0x608] sm:$0xff]
  %v227 = vld [vmem:[%s0 + $0x610] sm:$0xff]
  %v228 = vld [vmem:[%s0 + $0x618] sm:$0xff]
  %v229 = vld [vmem:[%s0 + $0x620] sm:$0xff]
  %v230 = vld [vmem:[%s0 + $0x628] sm:$0xff]
  %v231 = vld [vmem:[%s0 + $0x630] sm:$0xff]
  %v232 = vld [vmem:[%s0 + $0x638] sm:$0xff]
  %v233 = vld [vmem:[%s0 + $0x640] sm:$0xff]
  %v234 = vld [vmem:[%s0 + $0x648] sm:$0xff]
  %v235 = vld [vmem:[%s0 + $0x650] sm:$0xff]
  %v236 = vld [vmem:[%s0 + $0x658] sm:$0xff]
  %v237 = vld [vmem:[%s0 + $0x660] sm:$0xff]
  %v238 = vld [vmem:[%s0 + $0x668] sm:$0xff]
  %v239 = vld [vmem:[%s0 + $0x670] sm:$0xff]
  %v240 = vld [vmem:[%s0 + $0x678] sm:$0xff]
  %v241 = vld [vmem:[%s0 + $0x680] sm:$0xff]
  %v242 = vld [vmem:[%s0 + $0x688] sm:$0xff]
  %v243 = vld [vmem:[%s0 + $0x690] sm:$0xff]
  %v244 = vld [vmem:[%s0 + $0x698] sm:$0xff]
  %v245 = vld [vmem:[%s0 + $0x6a0] sm:$0xff]
  %v246 = vld [vmem:[%s0 + $0x6a8] sm:$0xff]
  %v247 = vld [vmem:[%s0 + $0x6b0] sm:$0xff]
  %v248 = vld [vmem:[%s0 + $0x6b8] sm:$0xff]
  %v249 = vld [vmem:[%s0 + $0x6c0] sm:$0xff]
  %v250 = vld [vmem:[%s0 + $0x6c8] sm:$0xff]
  %v251 = vld [vmem:[%s0 + $0x6d0] sm:$0xff]
  %v252 = vld [vmem:[%s0 + $0x6d8] sm:$0xff]
  %v253 = vld [vmem:[%s0 + $0x6e0] sm:$0xff]
  %v254 = vld [vmem:[%s0 + $0x6e8] sm:$0xff]
  %v255 = vld [vmem:[%s0 + $0x6f0] sm:$0xff]
  %v256 = vld [vmem:[%s0 + $0x6f8] sm:$0xff]
  %v257 = vpack.c.bf16 %v34, %v33
  %v258 = vpack.c.bf16 %v36, %v35
  %v259 = vpack.c.bf16 %v38, %v37
  %v260 = vpack.c.bf16 %v40, %v39
  %v261 = vpack.c.bf16 %v42, %v41
  %v262 = vpack.c.bf16 %v44, %v43
  %v263 = vpack.c.bf16 %v46, %v45
  %v264 = vpack.c.bf16 %v48, %v47
  %v265 = vpack.c.bf16 %v50, %v49
  %v266 = vpack.c.bf16 %v52, %v51
  %v267 = vpack.c.bf16 %v54, %v53
  %v268 = vpack.c.bf16 %v56, %v55
  %v269 = vpack.c.bf16 %v58, %v57
  %v270 = vpack.c.bf16 %v60, %v59
  %v271 = vpack.c.bf16 %v62, %v61
  %v272 = vpack.c.bf16 %v64, %v63
  %v273 = vpack.c.bf16 %v66, %v65
  %v274 = vpack.c.bf16 %v68, %v67
  %v275 = vpack.c.bf16 %v70, %v69
  %v276 = vpack.c.bf16 %v72, %v71
  %v277 = vpack.c.bf16 %v74, %v73
  %v278 = vpack.c.bf16 %v76, %v75
  %v279 = vpack.c.bf16 %v78, %v77
  %v280 = vpack.c.bf16 %v80, %v79
  %v281 = vpack.c.bf16 %v82, %v81
  %v282 = vpack.c.bf16 %v84, %v83
  %v283 = vpack.c.bf16 %v86, %v85
  %v284 = vpack.c.bf16 %v88, %v87
  %v285 = vpack.c.bf16 %v90, %v89
  %v286 = vpack.c.bf16 %v92, %v91
  %v287 = vpack.c.bf16 %v94, %v93
  %v288 = vpack.c.bf16 %v96, %v95
  %v289 = vpack.c.bf16 %v98, %v97
  %v290 = vpack.c.bf16 %v100, %v99
  %v291 = vpack.c.bf16 %v102, %v101
  %v292 = vpack.c.bf16 %v104, %v103
  %v293 = vpack.c.bf16 %v106, %v105
  %v294 = vpack.c.bf16 %v108, %v107
  %v295 = vpack.c.bf16 %v110, %v109
  %v296 = vpack.c.bf16 %v112, %v111
  %v297 = vpack.c.bf16 %v114, %v113
  %v298 = vpack.c.bf16 %v116, %v115
  %v299 = vpack.c.bf16 %v118, %v117
  %v300 = vpack.c.bf16 %v120, %v119
  %v301 = vpack.c.bf16 %v122, %v121
  %v302 = vpack.c.bf16 %v124, %v123
  %v303 = vpack.c.bf16 %v126, %v125
  %v304 = vpack.c.bf16 %v128, %v127
  %v305 = vpack.c.bf16 %v130, %v129
  %v306 = vpack.c.bf16 %v132, %v131
  %v307 = vpack.c.bf16 %v134, %v133
  %v308 = vpack.c.bf16 %v136, %v135
  %v309 = vpack.c.bf16 %v138, %v137
  %v310 = vpack.c.bf16 %v140, %v139
  %v311 = vpack.c.bf16 %v142, %v141
  %v312 = vpack.c.bf16 %v144, %v143
  %v313 = vpack.c.bf16 %v146, %v145
  %v314 = vpack.c.bf16 %v148, %v147
  %v315 = vpack.c.bf16 %v150, %v149
  %v316 = vpack.c.bf16 %v152, %v151
  %v317 = vpack.c.bf16 %v154, %v153
  %v318 = vpack.c.bf16 %v156, %v155
  %v319 = vpack.c.bf16 %v158, %v157
  %v320 = vpack.c.bf16 %v160, %v159
  %v321 = vpack.c.bf16 %v162, %v161
  %v322 = vpack.c.bf16 %v164, %v163
  %v323 = vpack.c.bf16 %v166, %v165
  %v324 = vpack.c.bf16 %v168, %v167
  %v325 = vpack.c.bf16 %v170, %v169
  %v326 = vpack.c.bf16 %v172, %v171
  %v327 = vpack.c.bf16 %v174, %v173
  %v328 = vpack.c.bf16 %v176, %v175
  %v329 = vpack.c.bf16 %v178, %v177
  %v330 = vpack.c.bf16 %v180, %v179
  %v331 = vpack.c.bf16 %v182, %v181
  %v332 = vpack.c.bf16 %v184, %v183
  %v333 = vpack.c.bf16 %v186, %v185
  %v334 = vpack.c.bf16 %v188, %v187
  %v335 = vpack.c.bf16 %v190, %v189
  %v336 = vpack.c.bf16 %v192, %v191
  %v337 = vpack.c.bf16 %v194, %v193
  %v338 = vpack.c.bf16 %v196, %v195
  %v339 = vpack.c.bf16 %v198, %v197
  %v340 = vpack.c.bf16 %v200, %v199
  %v341 = vpack.c.bf16 %v202, %v201
  %v342 = vpack.c.bf16 %v204, %v203
  %v343 = vpack.c.bf16 %v206, %v205
  %v344 = vpack.c.bf16 %v208, %v207
  %v345 = vpack.c.bf16 %v210, %v209
  %v346 = vpack.c.bf16 %v212, %v211
  %v347 = vpack.c.bf16 %v214, %v213
  %v348 = vpack.c.bf16 %v216, %v215
  %v349 = vpack.c.bf16 %v218, %v217
  %v350 = vpack.c.bf16 %v220, %v219
  %v351 = vpack.c.bf16 %v222, %v221
  %v352 = vpack.c.bf16 %v224, %v223
  %v353 = vpack.c.bf16 %v226, %v225
  %v354 = vpack.c.bf16 %v228, %v227
  %v355 = vpack.c.bf16 %v230, %v229
  %v356 = vpack.c.bf16 %v232, %v231
  %v357 = vpack.c.bf16 %v234, %v233
  %v358 = vpack.c.bf16 %v236, %v235
  %v359 = vpack.c.bf16 %v238, %v237
  %v360 = vpack.c.bf16 %v240, %v239
  %v361 = vpack.c.bf16 %v242, %v241
  %v362 = vpack.c.bf16 %v244, %v243
  %v363 = vpack.c.bf16 %v246, %v245
  %v364 = vpack.c.bf16 %v248, %v247
  %v365 = vpack.c.bf16 %v250, %v249
  %v366 = vpack.c.bf16 %v252, %v251
  %v367 = vpack.c.bf16 %v254, %v253
  %v368 = vpack.c.bf16 %v256, %v255
  %v369 = vld [vmem:[%s1] sm:$0xff]
  %v370 = vld [vmem:[%s1 + $0x8] sm:$0xff]
  %v371 = vld [vmem:[%s1 + $0x10] sm:$0xff]
  %v372 = vld [vmem:[%s1 + $0x18] sm:$0xff]
  %s373 = scalar_lea.vmem %s1, 32
  %v374 = vld [vmem:[%s373] sm:$0xff]
  %v375 = vld [vmem:[%s373 + $0x8] sm:$0xff]
  %v376 = vld [vmem:[%s373 + $0x10] sm:$0xff]
  %v377 = vld [vmem:[%s373 + $0x18] sm:$0xff]
  %v382 = vunpack.c.l.b16 %v374
  %v383 = vunpack.c.h.b16 %v374
  %v384 = vunpack.c.l.b16 %v375
  %v385 = vunpack.c.h.b16 %v375
  %v386 = vunpack.c.l.b16 %v376
  %v387 = vunpack.c.h.b16 %v376
  %v388 = vunpack.c.l.b16 %v377
  %v389 = vunpack.c.h.b16 %v377
  %v390 = vpack.c.b16 %v384, %v382
  %v391 = vpack.c.b16 %v385, %v383
  %v392 = vpack.c.b16 %v388, %v386
  %v393 = vpack.c.b16 %v389, %v387
  %vm398 = vcmask 261120
  %v400 = vsel %vm398, %v261, 0
  %v403 = vsel %vm398, %v262, 0
  %v406 = vsel %vm398, %v263, 0
  %v409 = vsel %vm398, %v264, 0
  %v412 = vsel %vm398, %v265, 0
  %v415 = vsel %vm398, %v266, 0
  %v418 = vsel %vm398, %v267, 0
  %v421 = vsel %vm398, %v268, 0
  %v424 = vsel %vm398, %v269, 0
  %v427 = vsel %vm398, %v270, 0
  %v430 = vsel %vm398, %v271, 0
  %v433 = vsel %vm398, %v272, 0
  %v436 = vsel %vm398, %v273, 0
  %v439 = vsel %vm398, %v274, 0
  %v442 = vsel %vm398, %v275, 0
  %v445 = vsel %vm398, %v276, 0
  %v448 = vsel %vm398, %v277, 0
  %v451 = vsel %vm398, %v278, 0
  %v454 = vsel %vm398, %v279, 0
  %v457 = vsel %vm398, %v280, 0
  %v460 = vsel %vm398, %v281, 0
  %v463 = vsel %vm398, %v282, 0
  %v466 = vsel %vm398, %v283, 0
  %v469 = vsel %vm398, %v284, 0
  %v472 = vsel %vm398, %v285, 0
  %v475 = vsel %vm398, %v286, 0
  %v478 = vsel %vm398, %v287, 0
  %v481 = vsel %vm398, %v288, 0
  %v484 = vsel %vm398, %v289, 0
  %v487 = vsel %vm398, %v290, 0
  %v490 = vsel %vm398, %v291, 0
  %v493 = vsel %vm398, %v292, 0
  %v496 = vsel %vm398, %v293, 0
  %v499 = vsel %vm398, %v294, 0
  %v502 = vsel %vm398, %v295, 0
  %v505 = vsel %vm398, %v296, 0
  %v508 = vsel %vm398, %v297, 0
  %v511 = vsel %vm398, %v298, 0
  %v514 = vsel %vm398, %v299, 0
  %v517 = vsel %vm398, %v300, 0
  %v520 = vsel %vm398, %v301, 0
  %v523 = vsel %vm398, %v302, 0
  %v526 = vsel %vm398, %v303, 0
  %v529 = vsel %vm398, %v304, 0
  %v532 = vsel %vm398, %v305, 0
  %v535 = vsel %vm398, %v306, 0
  %v538 = vsel %vm398, %v307, 0
  %v541 = vsel %vm398, %v308, 0
  %v544 = vsel %vm398, %v309, 0
  %v547 = vsel %vm398, %v310, 0
  %v550 = vsel %vm398, %v311, 0
  %v553 = vsel %vm398, %v312, 0
  %v556 = vsel %vm398, %v313, 0
  %v559 = vsel %vm398, %v314, 0
  %v562 = vsel %vm398, %v315, 0
  %v565 = vsel %vm398, %v316, 0
  %v568 = vsel %vm398, %v317, 0
  %v571 = vsel %vm398, %v318, 0
  %v574 = vsel %vm398, %v319, 0
  %v577 = vsel %vm398, %v320, 0
  %v580 = vsel %vm398, %v321, 0
  %v583 = vsel %vm398, %v322, 0
  %v586 = vsel %vm398, %v323, 0
  %v589 = vsel %vm398, %v324, 0
  %v592 = vsel %vm398, %v325, 0
  %v595 = vsel %vm398, %v326, 0
  %v598 = vsel %vm398, %v327, 0
  %v601 = vsel %vm398, %v328, 0
  %v604 = vsel %vm398, %v329, 0
  %v607 = vsel %vm398, %v330, 0
  %v610 = vsel %vm398, %v331, 0
  %v613 = vsel %vm398, %v332, 0
  %v616 = vsel %vm398, %v333, 0
  %v619 = vsel %vm398, %v334, 0
  %v622 = vsel %vm398, %v335, 0
  %v625 = vsel %vm398, %v336, 0
  %v628 = vsel %vm398, %v337, 0
  %v631 = vsel %vm398, %v338, 0
  %v634 = vsel %vm398, %v339, 0
  %v637 = vsel %vm398, %v340, 0
  %v640 = vsel %vm398, %v341, 0
  %v643 = vsel %vm398, %v342, 0
  %v646 = vsel %vm398, %v343, 0
  %v649 = vsel %vm398, %v344, 0
  %v652 = vsel %vm398, %v345, 0
  %v655 = vsel %vm398, %v346, 0
  %v658 = vsel %vm398, %v347, 0
  %v661 = vsel %vm398, %v348, 0
  %v664 = vsel %vm398, %v349, 0
  %v667 = vsel %vm398, %v350, 0
  %v670 = vsel %vm398, %v351, 0
  %v673 = vsel %vm398, %v352, 0
  %v676 = vsel %vm398, %v353, 0
  %v679 = vsel %vm398, %v354, 0
  %v682 = vsel %vm398, %v355, 0
  %v685 = vsel %vm398, %v356, 0
  %687 = vmatprep.subr.bf16.mxu0 %v391
  %688 = vmatpush1.bf16.msra.mxu0 %v390
  %689 = vmatprep.subr.bf16.mxu0 %v393
  %690 = vmatpush1.bf16.msra.mxu0 %v392
  %691 = vmatprep.subr.bf16.mxu0 0
  %692 = vmatpush1.bf16.msra.mxu0 0
  %693 = vmatprep.subr.bf16.mxu0 0
  %694 = vmatpush1.bf16.msra.mxu0 0
  %695 = vmatprep.subr.bf16.mxu0 0
  %696 = vmatpush1.bf16.msra.mxu0 0
  %697 = vmatprep.subr.bf16.mxu0 0
  %698 = vmatpush1.bf16.msra.mxu0 0
  %699 = vmatprep.subr.bf16.mxu0 0
  %700 = vmatpush1.bf16.msra.mxu0 0
  %701 = vmatprep.subr.bf16.mxu0 0
  %702 = vmatpush1.bf16.msra.mxu0 0
  %703 = vmatprep.subr.bf16.mxu0 0
  %704 = vmatpush1.bf16.msra.mxu0 0
  %705 = vmatprep.subr.bf16.mxu0 0
  %706 = vmatpush1.bf16.msra.mxu0 0
  %707 = vmatprep.subr.bf16.mxu0 0
  %708 = vmatpush1.bf16.msra.mxu0 0
  %709 = vmatprep.subr.bf16.mxu0 0
  %710 = vmatpush1.bf16.msra.mxu0 0
  %711 = vmatprep.subr.bf16.mxu0 0
  %712 = vmatpush1.bf16.msra.mxu0 0
  %713 = vmatprep.subr.bf16.mxu0 0
  %714 = vmatpush1.bf16.msra.mxu0 0
  %715 = vmatprep.subr.bf16.mxu0 0
  %716 = vmatpush1.bf16.msra.mxu0 0
  %717 = vmatprep.subr.bf16.mxu0 0
  %718 = vmatpush1.bf16.msra.mxu0 0
  %719 = vmatprep.mubr.bf16.mxu0 0
  %720 = vmatmul.mubr.bf16.gmra.mrb[0].mxu0 %v400
  %v721 = vpop.f32.mrb[0].mxu0
  %v722 = vadd.f32 0.0, %v721
  %v723 = vpop.f32.mrb[0].mxu0
  %v724 = vadd.f32 0.0, %v723
  %v725 = vpop.f32.mrb[0].mxu0
  %v726 = vadd.f32 0.0, %v725
  %v727 = vpop.f32.mrb[0].mxu0
  %v728 = vadd.f32 0.0, %v727
  %729 = vmatprep.mubr.bf16.mxu0 0
  %730 = vmatmul.mubr.bf16.gmra.mrb[0].mxu0 %v403
  %v731 = vpop.f32.mrb[0].mxu0
  %v732 = vadd.f32 0.0, %v731
  %v733 = vpop.f32.mrb[0].mxu0
  %v734 = vadd.f32 0.0, %v733
  %v735 = vpop.f32.mrb[0].mxu0
  %v736 = vadd.f32 0.0, %v735
  %v737 = vpop.f32.mrb[0].mxu0
  %v738 = vadd.f32 0.0, %v737
  %739 = vmatprep.mubr.bf16.mxu0 0
  %740 = vmatmul.mubr.bf16.gmra.mrb[0].mxu0 %v406
  %v741 = vpop.f32.mrb[0].mxu0
  %v742 = vadd.f32 0.0, %v741
  %v743 = vpop.f32.mrb[0].mxu0
  %v744 = vadd.f32 0.0, %v743
  %v745 = vpop.f32.mrb[0].mxu0
  %v746 = vadd.f32 0.0, %v745
  %v747 = vpop.f32.mrb[0].mxu0
  %v748 = vadd.f32 0.0, %v747
  %749 = vmatprep.mubr.bf16.mxu0 0
  %750 = vmatmul.mubr.bf16.gmra.mrb[0].mxu0 %v409
  %v751 = vpop.f32.mrb[0].mxu0
  %v752 = vadd.f32 0.0, %v751
  %v753 = vpop.f32.mrb[0].mxu0
  %v754 = vadd.f32 0.0, %v753
  %v755 = vpop.f32.mrb[0].mxu0
  %v756 = vadd.f32 0.0, %v755
  %v757 = vpop.f32.mrb[0].mxu0
  %v758 = vadd.f32 0.0, %v757
  %759 = vmatprep.mubr.bf16.mxu0 0
  %760 = vmatmul.mubr.bf16.gmra.mrb[0].mxu0 %v412
  %v761 = vpop.f32.mrb[0].mxu0
  %v762 = vadd.f32 0.0, %v761
  %v763 = vpop.f32.mrb[0].mxu0
  %v764 = vadd.f32 0.0, %v763
  %v765 = vpop.f32.mrb[0].mxu0
  %v766 = vadd.f32 0.0, %v765
  %v767 = vpop.f32.mrb[0].mxu0
  %v768 = vadd.f32 0.0, %v767
  %769 = vmatprep.mubr.bf16.mxu0 0
  %770 = vmatmul.mubr.bf16.gmra.mrb[0].mxu0 %v415
  %v771 = vpop.f32.mrb[0].mxu0
  %v772 = vadd.f32 0.0, %v771
  %v773 = vpop.f32.mrb[0].mxu0
  %v774 = vadd.f32 0.0, %v773
  %v775 = vpop.f32.mrb[0].mxu0
  %v776 = vadd.f32 0.0, %v775
  %v777 = vpop.f32.mrb[0].mxu0
  %v778 = vadd.f32 0.0, %v777
  %779 = vmatprep.mubr.bf16.mxu0 0
  %780 = vmatmul.mubr.bf16.gmra.mrb[0].mxu0 %v418
  %v781 = vpop.f32.mrb[0].mxu0
  %v782 = vadd.f32 0.0, %v781
  %v783 = vpop.f32.mrb[0].mxu0
  %v784 = vadd.f32 0.0, %v783
  %v785 = vpop.f32.mrb[0].mxu0
  %v786 = vadd.f32 0.0, %v785
  %v787 = vpop.f32.mrb[0].mxu0
  %v788 = vadd.f32 0.0, %v787
  %789 = vmatprep.mubr.bf16.mxu0 0
  %790 = vmatmul.mubr.bf16.gmra.mrb[0].mxu0 %v421
  %v791 = vpop.f32.mrb[0].mxu0
  %v792 = vadd.f32 0.0, %v791
  %v793 = vpop.f32.mrb[0].mxu0
  %v794 = vadd.f32 0.0, %v793
  %v795 = vpop.f32.mrb[0].mxu0
  %v796 = vadd.f32 0.0, %v795
  %v797 = vpop.f32.mrb[0].mxu0
  %v798 = vadd.f32 0.0, %v797
  %799 = vmatprep.mubr.bf16.mxu0 0
  %800 = vmatmul.mubr.bf16.gmra.mrb[0].mxu0 %v424
  %v801 = vpop.f32.mrb[0].mxu0
  %v802 = vadd.f32 0.0, %v801
  %v803 = vpop.f32.mrb[0].mxu0
  %v804 = vadd.f32 0.0, %v803
  %v805 = vpop.f32.mrb[0].mxu0
  %v806 = vadd.f32 0.0, %v805
  %v807 = vpop.f32.mrb[0].mxu0
  %v808 = vadd.f32 0.0, %v807
  %809 = vmatprep.mubr.bf16.mxu0 0
  %810 = vmatmul.mubr.bf16.gmra.mrb[0].mxu0 %v427
  %v811 = vpop.f32.mrb[0].mxu0
  %v812 = vadd.f32 0.0, %v811
  %v813 = vpop.f32.mrb[0].mxu0
  %v814 = vadd.f32 0.0, %v813
  %v815 = vpop.f32.mrb[0].mxu0
  %v816 = vadd.f32 0.0, %v815
  %v817 = vpop.f32.mrb[0].mxu0
  %v818 = vadd.f32 0.0, %v817
  %819 = vmatprep.mubr.bf16.mxu0 0
  %820 = vmatmul.mubr.bf16.gmra.mrb[0].mxu0 %v430
  %v821 = vpop.f32.mrb[0].mxu0
  %v822 = vadd.f32 0.0, %v821
  %v823 = vpop.f32.mrb[0].mxu0
  %v824 = vadd.f32 0.0, %v823
  %v825 = vpop.f32.mrb[0].mxu0
  %v826 = vadd.f32 0.0, %v825
  %v827 = vpop.f32.mrb[0].mxu0
  %v828 = vadd.f32 0.0, %v827
  %829 = vmatprep.mubr.bf16.mxu0 0
  %830 = vmatmul.mubr.bf16.gmra.mrb[0].mxu0 %v433
  %v831 = vpop.f32.mrb[0].mxu0
  %v832 = vadd.f32 0.0, %v831
  %v833 = vpop.f32.mrb[0].mxu0
  %v834 = vadd.f32 0.0, %v833
  %v835 = vpop.f32.mrb[0].mxu0
  %v836 = vadd.f32 0.0, %v835
  %v837 = vpop.f32.mrb[0].mxu0
  %v838 = vadd.f32 0.0, %v837
  %839 = vmatprep.mubr.bf16.mxu0 0
  %840 = vmatmul.mubr.bf16.gmra.mrb[0].mxu0 %v436
  %v841 = vpop.f32.mrb[0].mxu0
  %v842 = vadd.f32 0.0, %v841
  %v843 = vpop.f32.mrb[0].mxu0
  %v844 = vadd.f32 0.0, %v843
  %v845 = vpop.f32.mrb[0].mxu0
  %v846 = vadd.f32 0.0, %v845
  %v847 = vpop.f32.mrb[0].mxu0
  %v848 = vadd.f32 0.0, %v847
  %849 = vmatprep.mubr.bf16.mxu0 0
  %850 = vmatmul.mubr.bf16.gmra.mrb[0].mxu0 %v439
  %v851 = vpop.f32.mrb[0].mxu0
  %v852 = vadd.f32 0.0, %v851
  %v853 = vpop.f32.mrb[0].mxu0
  %v854 = vadd.f32 0.0, %v853
  %v855 = vpop.f32.mrb[0].mxu0
  %v856 = vadd.f32 0.0, %v855
  %v857 = vpop.f32.mrb[0].mxu0
  %v858 = vadd.f32 0.0, %v857
  %859 = vmatprep.mubr.bf16.mxu0 0
  %860 = vmatmul.mubr.bf16.gmra.mrb[0].mxu0 %v442
  %v861 = vpop.f32.mrb[0].mxu0
  %v862 = vadd.f32 0.0, %v861
  %v863 = vpop.f32.mrb[0].mxu0
  %v864 = vadd.f32 0.0, %v863
  %v865 = vpop.f32.mrb[0].mxu0
  %v866 = vadd.f32 0.0, %v865
  %v867 = vpop.f32.mrb[0].mxu0
  %v868 = vadd.f32 0.0, %v867
  %869 = vmatprep.mubr.bf16.mxu0 0
  %870 = vmatmul.mubr.bf16.gmra.mrb[0].mxu0 %v445
  %v871 = vpop.f32.mrb[0].mxu0
  %v872 = vadd.f32 0.0, %v871
  %v873 = vpop.f32.mrb[0].mxu0
  %v874 = vadd.f32 0.0, %v873
  %v875 = vpop.f32.mrb[0].mxu0
  %v876 = vadd.f32 0.0, %v875
  %v877 = vpop.f32.mrb[0].mxu0
  %v878 = vadd.f32 0.0, %v877
  %879 = vmatprep.mubr.bf16.mxu0 0
  %880 = vmatmul.mubr.bf16.gmra.mrb[0].mxu0 %v448
  %v881 = vpop.f32.mrb[0].mxu0
  %v882 = vadd.f32 0.0, %v881
  %v883 = vpop.f32.mrb[0].mxu0
  %v884 = vadd.f32 0.0, %v883
  %v885 = vpop.f32.mrb[0].mxu0
  %v886 = vadd.f32 0.0, %v885
  %v887 = vpop.f32.mrb[0].mxu0
  %v888 = vadd.f32 0.0, %v887
  %889 = vmatprep.mubr.bf16.mxu0 0
  %890 = vmatmul.mubr.bf16.gmra.mrb[0].mxu0 %v451
  %v891 = vpop.f32.mrb[0].mxu0
  %v892 = vadd.f32 0.0, %v891
  %v893 = vpop.f32.mrb[0].mxu0
  %v894 = vadd.f32 0.0, %v893
  %v895 = vpop.f32.mrb[0].mxu0
  %v896 = vadd.f32 0.0, %v895
  %v897 = vpop.f32.mrb[0].mxu0
  %v898 = vadd.f32 0.0, %v897
  %899 = vmatprep.mubr.bf16.mxu0 0
  %900 = vmatmul.mubr.bf16.gmra.mrb[0].mxu0 %v454
  %v901 = vpop.f32.mrb[0].mxu0
  %v902 = vadd.f32 0.0, %v901
  %v903 = vpop.f32.mrb[0].mxu0
  %v904 = vadd.f32 0.0, %v903
  %v905 = vpop.f32.mrb[0].mxu0
  %v906 = vadd.f32 0.0, %v905
  %v907 = vpop.f32.mrb[0].mxu0
  %v908 = vadd.f32 0.0, %v907
  %909 = vmatprep.mubr.bf16.mxu0 0
  %910 = vmatmul.mubr.bf16.gmra.mrb[0].mxu0 %v457
  %v911 = vpop.f32.mrb[0].mxu0
  %v912 = vadd.f32 0.0, %v911
  %v913 = vpop.f32.mrb[0].mxu0
  %v914 = vadd.f32 0.0, %v913
  %v915 = vpop.f32.mrb[0].mxu0
  %v916 = vadd.f32 0.0, %v915
  %v917 = vpop.f32.mrb[0].mxu0
  %v918 = vadd.f32 0.0, %v917
  %919 = vmatprep.mubr.bf16.mxu0 0
  %920 = vmatmul.mubr.bf16.gmra.mrb[0].mxu0 %v460
  %v921 = vpop.f32.mrb[0].mxu0
  %v922 = vadd.f32 0.0, %v921
  %v923 = vpop.f32.mrb[0].mxu0
  %v924 = vadd.f32 0.0, %v923
  %v925 = vpop.f32.mrb[0].mxu0
  %v926 = vadd.f32 0.0, %v925
  %v927 = vpop.f32.mrb[0].mxu0
  %v928 = vadd.f32 0.0, %v927
  %929 = vmatprep.mubr.bf16.mxu0 0
  %930 = vmatmul.mubr.bf16.gmra.mrb[0].mxu0 %v463
  %v931 = vpop.f32.mrb[0].mxu0
  %v932 = vadd.f32 0.0, %v931
  %v933 = vpop.f32.mrb[0].mxu0
  %v934 = vadd.f32 0.0, %v933
  %v935 = vpop.f32.mrb[0].mxu0
  %v936 = vadd.f32 0.0, %v935
  %v937 = vpop.f32.mrb[0].mxu0
  %v938 = vadd.f32 0.0, %v937
  %939 = vmatprep.mubr.bf16.mxu0 0
  %940 = vmatmul.mubr.bf16.gmra.mrb[0].mxu0 %v466
  %v941 = vpop.f32.mrb[0].mxu0
  %v942 = vadd.f32 0.0, %v941
  %v943 = vpop.f32.mrb[0].mxu0
  %v944 = vadd.f32 0.0, %v943
  %v945 = vpop.f32.mrb[0].mxu0
  %v946 = vadd.f32 0.0, %v945
  %v947 = vpop.f32.mrb[0].mxu0
  %v948 = vadd.f32 0.0, %v947
  %949 = vmatprep.mubr.bf16.mxu0 0
  %950 = vmatmul.mubr.bf16.gmra.mrb[0].mxu0 %v469
  %v951 = vpop.f32.mrb[0].mxu0
  %v952 = vadd.f32 0.0, %v951
  %v953 = vpop.f32.mrb[0].mxu0
  %v954 = vadd.f32 0.0, %v953
  %v955 = vpop.f32.mrb[0].mxu0
  %v956 = vadd.f32 0.0, %v955
  %v957 = vpop.f32.mrb[0].mxu0
  %v958 = vadd.f32 0.0, %v957
  %959 = vmatprep.mubr.bf16.mxu0 0
  %960 = vmatmul.mubr.bf16.gmra.mrb[0].mxu0 %v472
  %v961 = vpop.f32.mrb[0].mxu0
  %v962 = vadd.f32 0.0, %v961
  %v963 = vpop.f32.mrb[0].mxu0
  %v964 = vadd.f32 0.0, %v963
  %v965 = vpop.f32.mrb[0].mxu0
  %v966 = vadd.f32 0.0, %v965
  %v967 = vpop.f32.mrb[0].mxu0
  %v968 = vadd.f32 0.0, %v967
  %969 = vmatprep.mubr.bf16.mxu0 0
  %970 = vmatmul.mubr.bf16.gmra.mrb[0].mxu0 %v475
  %v971 = vpop.f32.mrb[0].mxu0
  %v972 = vadd.f32 0.0, %v971
  %v973 = vpop.f32.mrb[0].mxu0
  %v974 = vadd.f32 0.0, %v973
  %v975 = vpop.f32.mrb[0].mxu0
  %v976 = vadd.f32 0.0, %v975
  %v977 = vpop.f32.mrb[0].mxu0
  %v978 = vadd.f32 0.0, %v977
  %979 = vmatprep.mubr.bf16.mxu0 0
  %980 = vmatmul.mubr.bf16.gmra.mrb[0].mxu0 %v478
  %v981 = vpop.f32.mrb[0].mxu0
  %v982 = vadd.f32 0.0, %v981
  %v983 = vpop.f32.mrb[0].mxu0
  %v984 = vadd.f32 0.0, %v983
  %v985 = vpop.f32.mrb[0].mxu0
  %v986 = vadd.f32 0.0, %v985
  %v987 = vpop.f32.mrb[0].mxu0
  %v988 = vadd.f32 0.0, %v987
  %989 = vmatprep.mubr.bf16.mxu0 0
  %990 = vmatmul.mubr.bf16.gmra.mrb[0].mxu0 %v481
  %v991 = vpop.f32.mrb[0].mxu0
  %v992 = vadd.f32 0.0, %v991
  %v993 = vpop.f32.mrb[0].mxu0
  %v994 = vadd.f32 0.0, %v993
  %v995 = vpop.f32.mrb[0].mxu0
  %v996 = vadd.f32 0.0, %v995
  %v997 = vpop.f32.mrb[0].mxu0
  %v998 = vadd.f32 0.0, %v997
  %999 = vmatprep.mubr.bf16.mxu0 0
  %1000 = vmatmul.mubr.bf16.gmra.mrb[0].mxu0 %v484
  %v1001 = vpop.f32.mrb[0].mxu0
  %v1002 = vadd.f32 0.0, %v1001
  %v1003 = vpop.f32.mrb[0].mxu0
  %v1004 = vadd.f32 0.0, %v1003
  %v1005 = vpop.f32.mrb[0].mxu0
  %v1006 = vadd.f32 0.0, %v1005
  %v1007 = vpop.f32.mrb[0].mxu0
  %v1008 = vadd.f32 0.0, %v1007
  %1009 = vmatprep.mubr.bf16.mxu0 0
  %1010 = vmatmul.mubr.bf16.gmra.mrb[0].mxu0 %v487
  %v1011 = vpop.f32.mrb[0].mxu0
  %v1012 = vadd.f32 0.0, %v1011
  %v1013 = vpop.f32.mrb[0].mxu0
  %v1014 = vadd.f32 0.0, %v1013
  %v1015 = vpop.f32.mrb[0].mxu0
  %v1016 = vadd.f32 0.0, %v1015
  %v1017 = vpop.f32.mrb[0].mxu0
  %v1018 = vadd.f32 0.0, %v1017
  %1019 = vmatprep.mubr.bf16.mxu0 0
  %1020 = vmatmul.mubr.bf16.gmra.mrb[0].mxu0 %v490
  %v1021 = vpop.f32.mrb[0].mxu0
  %v1022 = vadd.f32 0.0, %v1021
  %v1023 = vpop.f32.mrb[0].mxu0
  %v1024 = vadd.f32 0.0, %v1023
  %v1025 = vpop.f32.mrb[0].mxu0
  %v1026 = vadd.f32 0.0, %v1025
  %v1027 = vpop.f32.mrb[0].mxu0
  %v1028 = vadd.f32 0.0, %v1027
  %1029 = vmatprep.mubr.bf16.mxu0 0
  %1030 = vmatmul.mubr.bf16.gmra.mrb[0].mxu0 %v493
  %v1031 = vpop.f32.mrb[0].mxu0
  %v1032 = vadd.f32 0.0, %v1031
  %v1033 = vpop.f32.mrb[0].mxu0
  %v1034 = vadd.f32 0.0, %v1033
  %v1035 = vpop.f32.mrb[0].mxu0
  %v1036 = vadd.f32 0.0, %v1035
  %v1037 = vpop.f32.mrb[0].mxu0
  %v1038 = vadd.f32 0.0, %v1037
  %1039 = vmatprep.mubr.bf16.mxu0 0
  %1040 = vmatmul.mubr.bf16.gmra.mrb[0].mxu0 %v496
  %v1041 = vpop.f32.mrb[0].mxu0
  %v1042 = vadd.f32 0.0, %v1041
  %v1043 = vpop.f32.mrb[0].mxu0
  %v1044 = vadd.f32 0.0, %v1043
  %v1045 = vpop.f32.mrb[0].mxu0
  %v1046 = vadd.f32 0.0, %v1045
  %v1047 = vpop.f32.mrb[0].mxu0
  %v1048 = vadd.f32 0.0, %v1047
  %1049 = vmatprep.mubr.bf16.mxu0 0
  %1050 = vmatmul.mubr.bf16.gmra.mrb[0].mxu0 %v499
  %v1051 = vpop.f32.mrb[0].mxu0
  %v1052 = vadd.f32 0.0, %v1051
  %v1053 = vpop.f32.mrb[0].mxu0
  %v1054 = vadd.f32 0.0, %v1053
  %v1055 = vpop.f32.mrb[0].mxu0
  %v1056 = vadd.f32 0.0, %v1055
  %v1057 = vpop.f32.mrb[0].mxu0
  %v1058 = vadd.f32 0.0, %v1057
  %1059 = vmatprep.mubr.bf16.mxu0 0
  %1060 = vmatmul.mubr.bf16.gmra.mrb[0].mxu0 %v502
  %v1061 = vpop.f32.mrb[0].mxu0
  %v1062 = vadd.f32 0.0, %v1061
  %v1063 = vpop.f32.mrb[0].mxu0
  %v1064 = vadd.f32 0.0, %v1063
  %v1065 = vpop.f32.mrb[0].mxu0
  %v1066 = vadd.f32 0.0, %v1065
  %v1067 = vpop.f32.mrb[0].mxu0
  %v1068 = vadd.f32 0.0, %v1067
  %1069 = vmatprep.mubr.bf16.mxu0 0
  %1070 = vmatmul.mubr.bf16.gmra.mrb[0].mxu0 %v505
  %v1071 = vpop.f32.mrb[0].mxu0
  %v1072 = vadd.f32 0.0, %v1071
  %v1073 = vpop.f32.mrb[0].mxu0
  %v1074 = vadd.f32 0.0, %v1073
  %v1075 = vpop.f32.mrb[0].mxu0
  %v1076 = vadd.f32 0.0, %v1075
  %v1077 = vpop.f32.mrb[0].mxu0
  %v1078 = vadd.f32 0.0, %v1077
  %1079 = vmatprep.mubr.bf16.mxu0 0
  %1080 = vmatmul.mubr.bf16.gmra.mrb[0].mxu0 %v508
  %v1081 = vpop.f32.mrb[0].mxu0
  %v1082 = vadd.f32 0.0, %v1081
  %v1083 = vpop.f32.mrb[0].mxu0
  %v1084 = vadd.f32 0.0, %v1083
  %v1085 = vpop.f32.mrb[0].mxu0
  %v1086 = vadd.f32 0.0, %v1085
  %v1087 = vpop.f32.mrb[0].mxu0
  %v1088 = vadd.f32 0.0, %v1087
  %1089 = vmatprep.mubr.bf16.mxu0 0
  %1090 = vmatmul.mubr.bf16.gmra.mrb[0].mxu0 %v511
  %v1091 = vpop.f32.mrb[0].mxu0
  %v1092 = vadd.f32 0.0, %v1091
  %v1093 = vpop.f32.mrb[0].mxu0
  %v1094 = vadd.f32 0.0, %v1093
  %v1095 = vpop.f32.mrb[0].mxu0
  %v1096 = vadd.f32 0.0, %v1095
  %v1097 = vpop.f32.mrb[0].mxu0
  %v1098 = vadd.f32 0.0, %v1097
  %1099 = vmatprep.mubr.bf16.mxu0 0
  %1100 = vmatmul.mubr.bf16.gmra.mrb[0].mxu0 %v514
  %v1101 = vpop.f32.mrb[0].mxu0
  %v1102 = vadd.f32 0.0, %v1101
  %v1103 = vpop.f32.mrb[0].mxu0
  %v1104 = vadd.f32 0.0, %v1103
  %v1105 = vpop.f32.mrb[0].mxu0
  %v1106 = vadd.f32 0.0, %v1105
  %v1107 = vpop.f32.mrb[0].mxu0
  %v1108 = vadd.f32 0.0, %v1107
  %1109 = vmatprep.mubr.bf16.mxu0 0
  %1110 = vmatmul.mubr.bf16.gmra.mrb[0].mxu0 %v517
  %v1111 = vpop.f32.mrb[0].mxu0
  %v1112 = vadd.f32 0.0, %v1111
  %v1113 = vpop.f32.mrb[0].mxu0
  %v1114 = vadd.f32 0.0, %v1113
  %v1115 = vpop.f32.mrb[0].mxu0
  %v1116 = vadd.f32 0.0, %v1115
  %v1117 = vpop.f32.mrb[0].mxu0
  %v1118 = vadd.f32 0.0, %v1117
  %1119 = vmatprep.mubr.bf16.mxu0 0
  %1120 = vmatmul.mubr.bf16.gmra.mrb[0].mxu0 %v520
  %v1121 = vpop.f32.mrb[0].mxu0
  %v1122 = vadd.f32 0.0, %v1121
  %v1123 = vpop.f32.mrb[0].mxu0
  %v1124 = vadd.f32 0.0, %v1123
  %v1125 = vpop.f32.mrb[0].mxu0
  %v1126 = vadd.f32 0.0, %v1125
  %v1127 = vpop.f32.mrb[0].mxu0
  %v1128 = vadd.f32 0.0, %v1127
  %1129 = vmatprep.mubr.bf16.mxu0 0
  %1130 = vmatmul.mubr.bf16.gmra.mrb[0].mxu0 %v523
  %v1131 = vpop.f32.mrb[0].mxu0
  %v1132 = vadd.f32 0.0, %v1131
  %v1133 = vpop.f32.mrb[0].mxu0
  %v1134 = vadd.f32 0.0, %v1133
  %v1135 = vpop.f32.mrb[0].mxu0
  %v1136 = vadd.f32 0.0, %v1135
  %v1137 = vpop.f32.mrb[0].mxu0
  %v1138 = vadd.f32 0.0, %v1137
  %1139 = vmatprep.mubr.bf16.mxu0 0
  %1140 = vmatmul.mubr.bf16.gmra.mrb[0].mxu0 %v526
  %v1141 = vpop.f32.mrb[0].mxu0
  %v1142 = vadd.f32 0.0, %v1141
  %v1143 = vpop.f32.mrb[0].mxu0
  %v1144 = vadd.f32 0.0, %v1143
  %v1145 = vpop.f32.mrb[0].mxu0
  %v1146 = vadd.f32 0.0, %v1145
  %v1147 = vpop.f32.mrb[0].mxu0
  %v1148 = vadd.f32 0.0, %v1147
  %1149 = vmatprep.mubr.bf16.mxu0 0
  %1150 = vmatmul.mubr.bf16.gmra.mrb[0].mxu0 %v529
  %v1151 = vpop.f32.mrb[0].mxu0
  %v1152 = vadd.f32 0.0, %v1151
  %v1153 = vpop.f32.mrb[0].mxu0
  %v1154 = vadd.f32 0.0, %v1153
  %v1155 = vpop.f32.mrb[0].mxu0
  %v1156 = vadd.f32 0.0, %v1155
  %v1157 = vpop.f32.mrb[0].mxu0
  %v1158 = vadd.f32 0.0, %v1157
  %1159 = vmatprep.mubr.bf16.mxu0 0
  %1160 = vmatmul.mubr.bf16.gmra.mrb[0].mxu0 %v532
  %v1161 = vpop.f32.mrb[0].mxu0
  %v1162 = vadd.f32 0.0, %v1161
  %v1163 = vpop.f32.mrb[0].mxu0
  %v1164 = vadd.f32 0.0, %v1163
  %v1165 = vpop.f32.mrb[0].mxu0
  %v1166 = vadd.f32 0.0, %v1165
  %v1167 = vpop.f32.mrb[0].mxu0
  %v1168 = vadd.f32 0.0, %v1167
  %1169 = vmatprep.mubr.bf16.mxu0 0
  %1170 = vmatmul.mubr.bf16.gmra.mrb[0].mxu0 %v535
  %v1171 = vpop.f32.mrb[0].mxu0
  %v1172 = vadd.f32 0.0, %v1171
  %v1173 = vpop.f32.mrb[0].mxu0
  %v1174 = vadd.f32 0.0, %v1173
  %v1175 = vpop.f32.mrb[0].mxu0
  %v1176 = vadd.f32 0.0, %v1175
  %v1177 = vpop.f32.mrb[0].mxu0
  %v1178 = vadd.f32 0.0, %v1177
  %1179 = vmatprep.mubr.bf16.mxu0 0
  %1180 = vmatmul.mubr.bf16.gmra.mrb[0].mxu0 %v538
  %v1181 = vpop.f32.mrb[0].mxu0
  %v1182 = vadd.f32 0.0, %v1181
  %v1183 = vpop.f32.mrb[0].mxu0
  %v1184 = vadd.f32 0.0, %v1183
  %v1185 = vpop.f32.mrb[0].mxu0
  %v1186 = vadd.f32 0.0, %v1185
  %v1187 = vpop.f32.mrb[0].mxu0
  %v1188 = vadd.f32 0.0, %v1187
  %1189 = vmatprep.mubr.bf16.mxu0 0
  %1190 = vmatmul.mubr.bf16.gmra.mrb[0].mxu0 %v541
  %v1191 = vpop.f32.mrb[0].mxu0
  %v1192 = vadd.f32 0.0, %v1191
  %v1193 = vpop.f32.mrb[0].mxu0
  %v1194 = vadd.f32 0.0, %v1193
  %v1195 = vpop.f32.mrb[0].mxu0
  %v1196 = vadd.f32 0.0, %v1195
  %v1197 = vpop.f32.mrb[0].mxu0
  %v1198 = vadd.f32 0.0, %v1197
  %1199 = vmatprep.mubr.bf16.mxu0 0
  %1200 = vmatmul.mubr.bf16.gmra.mrb[0].mxu0 %v544
  %v1201 = vpop.f32.mrb[0].mxu0
  %v1202 = vadd.f32 0.0, %v1201
  %v1203 = vpop.f32.mrb[0].mxu0
  %v1204 = vadd.f32 0.0, %v1203
  %v1205 = vpop.f32.mrb[0].mxu0
  %v1206 = vadd.f32 0.0, %v1205
  %v1207 = vpop.f32.mrb[0].mxu0
  %v1208 = vadd.f32 0.0, %v1207
  %1209 = vmatprep.mubr.bf16.mxu0 0
  %1210 = vmatmul.mubr.bf16.gmra.mrb[0].mxu0 %v547
  %v1211 = vpop.f32.mrb[0].mxu0
  %v1212 = vadd.f32 0.0, %v1211
  %v1213 = vpop.f32.mrb[0].mxu0
  %v1214 = vadd.f32 0.0, %v1213
  %v1215 = vpop.f32.mrb[0].mxu0
  %v1216 = vadd.f32 0.0, %v1215
  %v1217 = vpop.f32.mrb[0].mxu0
  %v1218 = vadd.f32 0.0, %v1217
  %1219 = vmatprep.mubr.bf16.mxu0 0
  %1220 = vmatmul.mubr.bf16.gmra.mrb[0].mxu0 %v550
  %v1221 = vpop.f32.mrb[0].mxu0
  %v1222 = vadd.f32 0.0, %v1221
  %v1223 = vpop.f32.mrb[0].mxu0
  %v1224 = vadd.f32 0.0, %v1223
  %v1225 = vpop.f32.mrb[0].mxu0
  %v1226 = vadd.f32 0.0, %v1225
  %v1227 = vpop.f32.mrb[0].mxu0
  %v1228 = vadd.f32 0.0, %v1227
  %1229 = vmatprep.mubr.bf16.mxu0 0
  %1230 = vmatmul.mubr.bf16.gmra.mrb[0].mxu0 %v553
  %v1231 = vpop.f32.mrb[0].mxu0
  %v1232 = vadd.f32 0.0, %v1231
  %v1233 = vpop.f32.mrb[0].mxu0
  %v1234 = vadd.f32 0.0, %v1233
  %v1235 = vpop.f32.mrb[0].mxu0
  %v1236 = vadd.f32 0.0, %v1235
  %v1237 = vpop.f32.mrb[0].mxu0
  %v1238 = vadd.f32 0.0, %v1237
  %1239 = vmatprep.mubr.bf16.mxu0 0
  %1240 = vmatmul.mubr.bf16.gmra.mrb[0].mxu0 %v556
  %v1241 = vpop.f32.mrb[0].mxu0
  %v1242 = vadd.f32 0.0, %v1241
  %v1243 = vpop.f32.mrb[0].mxu0
  %v1244 = vadd.f32 0.0, %v1243
  %v1245 = vpop.f32.mrb[0].mxu0
  %v1246 = vadd.f32 0.0, %v1245
  %v1247 = vpop.f32.mrb[0].mxu0
  %v1248 = vadd.f32 0.0, %v1247
  %1249 = vmatprep.mubr.bf16.mxu0 0
  %1250 = vmatmul.mubr.bf16.gmra.mrb[0].mxu0 %v559
  %v1251 = vpop.f32.mrb[0].mxu0
  %v1252 = vadd.f32 0.0, %v1251
  %v1253 = vpop.f32.mrb[0].mxu0
  %v1254 = vadd.f32 0.0, %v1253
  %v1255 = vpop.f32.mrb[0].mxu0
  %v1256 = vadd.f32 0.0, %v1255
  %v1257 = vpop.f32.mrb[0].mxu0
  %v1258 = vadd.f32 0.0, %v1257
  %1259 = vmatprep.mubr.bf16.mxu0 0
  %1260 = vmatmul.mubr.bf16.gmra.mrb[0].mxu0 %v562
  %v1261 = vpop.f32.mrb[0].mxu0
  %v1262 = vadd.f32 0.0, %v1261
  %v1263 = vpop.f32.mrb[0].mxu0
  %v1264 = vadd.f32 0.0, %v1263
  %v1265 = vpop.f32.mrb[0].mxu0
  %v1266 = vadd.f32 0.0, %v1265
  %v1267 = vpop.f32.mrb[0].mxu0
  %v1268 = vadd.f32 0.0, %v1267
  %1269 = vmatprep.mubr.bf16.mxu0 0
  %1270 = vmatmul.mubr.bf16.gmra.mrb[0].mxu0 %v565
  %v1271 = vpop.f32.mrb[0].mxu0
  %v1272 = vadd.f32 0.0, %v1271
  %v1273 = vpop.f32.mrb[0].mxu0
  %v1274 = vadd.f32 0.0, %v1273
  %v1275 = vpop.f32.mrb[0].mxu0
  %v1276 = vadd.f32 0.0, %v1275
  %v1277 = vpop.f32.mrb[0].mxu0
  %v1278 = vadd.f32 0.0, %v1277
  %1279 = vmatprep.mubr.bf16.mxu0 0
  %1280 = vmatmul.mubr.bf16.gmra.mrb[0].mxu0 %v568
  %v1281 = vpop.f32.mrb[0].mxu0
  %v1282 = vadd.f32 0.0, %v1281
  %v1283 = vpop.f32.mrb[0].mxu0
  %v1284 = vadd.f32 0.0, %v1283
  %v1285 = vpop.f32.mrb[0].mxu0
  %v1286 = vadd.f32 0.0, %v1285
  %v1287 = vpop.f32.mrb[0].mxu0
  %v1288 = vadd.f32 0.0, %v1287
  %1289 = vmatprep.mubr.bf16.mxu0 0
  %1290 = vmatmul.mubr.bf16.gmra.mrb[0].mxu0 %v571
  %v1291 = vpop.f32.mrb[0].mxu0
  %v1292 = vadd.f32 0.0, %v1291
  %v1293 = vpop.f32.mrb[0].mxu0
  %v1294 = vadd.f32 0.0, %v1293
  %v1295 = vpop.f32.mrb[0].mxu0
  %v1296 = vadd.f32 0.0, %v1295
  %v1297 = vpop.f32.mrb[0].mxu0
  %v1298 = vadd.f32 0.0, %v1297
  %1299 = vmatprep.mubr.bf16.mxu0 0
  %1300 = vmatmul.mubr.bf16.gmra.mrb[0].mxu0 %v574
  %v1301 = vpop.f32.mrb[0].mxu0
  %v1302 = vadd.f32 0.0, %v1301
  %v1303 = vpop.f32.mrb[0].mxu0
  %v1304 = vadd.f32 0.0, %v1303
  %v1305 = vpop.f32.mrb[0].mxu0
  %v1306 = vadd.f32 0.0, %v1305
  %v1307 = vpop.f32.mrb[0].mxu0
  %v1308 = vadd.f32 0.0, %v1307
  %1309 = vmatprep.mubr.bf16.mxu0 0
  %1310 = vmatmul.mubr.bf16.gmra.mrb[0].mxu0 %v577
  %v1311 = vpop.f32.mrb[0].mxu0
  %v1312 = vadd.f32 0.0, %v1311
  %v1313 = vpop.f32.mrb[0].mxu0
  %v1314 = vadd.f32 0.0, %v1313
  %v1315 = vpop.f32.mrb[0].mxu0
  %v1316 = vadd.f32 0.0, %v1315
  %v1317 = vpop.f32.mrb[0].mxu0
  %v1318 = vadd.f32 0.0, %v1317
  %1319 = vmatprep.mubr.bf16.mxu0 0
  %1320 = vmatmul.mubr.bf16.gmra.mrb[0].mxu0 %v580
  %v1321 = vpop.f32.mrb[0].mxu0
  %v1322 = vadd.f32 0.0, %v1321
  %v1323 = vpop.f32.mrb[0].mxu0
  %v1324 = vadd.f32 0.0, %v1323
  %v1325 = vpop.f32.mrb[0].mxu0
  %v1326 = vadd.f32 0.0, %v1325
  %v1327 = vpop.f32.mrb[0].mxu0
  %v1328 = vadd.f32 0.0, %v1327
  %1329 = vmatprep.mubr.bf16.mxu0 0
  %1330 = vmatmul.mubr.bf16.gmra.mrb[0].mxu0 %v583
  %v1331 = vpop.f32.mrb[0].mxu0
  %v1332 = vadd.f32 0.0, %v1331
  %v1333 = vpop.f32.mrb[0].mxu0
  %v1334 = vadd.f32 0.0, %v1333
  %v1335 = vpop.f32.mrb[0].mxu0
  %v1336 = vadd.f32 0.0, %v1335
  %v1337 = vpop.f32.mrb[0].mxu0
  %v1338 = vadd.f32 0.0, %v1337
  %1339 = vmatprep.mubr.bf16.mxu0 0
  %1340 = vmatmul.mubr.bf16.gmra.mrb[0].mxu0 %v586
  %v1341 = vpop.f32.mrb[0].mxu0
  %v1342 = vadd.f32 0.0, %v1341
  %v1343 = vpop.f32.mrb[0].mxu0
  %v1344 = vadd.f32 0.0, %v1343
  %v1345 = vpop.f32.mrb[0].mxu0
  %v1346 = vadd.f32 0.0, %v1345
  %v1347 = vpop.f32.mrb[0].mxu0
  %v1348 = vadd.f32 0.0, %v1347
  %1349 = vmatprep.mubr.bf16.mxu0 0
  %1350 = vmatmul.mubr.bf16.gmra.mrb[0].mxu0 %v589
  %v1351 = vpop.f32.mrb[0].mxu0
  %v1352 = vadd.f32 0.0, %v1351
  %v1353 = vpop.f32.mrb[0].mxu0
  %v1354 = vadd.f32 0.0, %v1353
  %v1355 = vpop.f32.mrb[0].mxu0
  %v1356 = vadd.f32 0.0, %v1355
  %v1357 = vpop.f32.mrb[0].mxu0
  %v1358 = vadd.f32 0.0, %v1357
  %1359 = vmatprep.mubr.bf16.mxu0 0
  %1360 = vmatmul.mubr.bf16.gmra.mrb[0].mxu0 %v592
  %v1361 = vpop.f32.mrb[0].mxu0
  %v1362 = vadd.f32 0.0, %v1361
  %v1363 = vpop.f32.mrb[0].mxu0
  %v1364 = vadd.f32 0.0, %v1363
  %v1365 = vpop.f32.mrb[0].mxu0
  %v1366 = vadd.f32 0.0, %v1365
  %v1367 = vpop.f32.mrb[0].mxu0
  %v1368 = vadd.f32 0.0, %v1367
  %1369 = vmatprep.mubr.bf16.mxu0 0
  %1370 = vmatmul.mubr.bf16.gmra.mrb[0].mxu0 %v595
  %v1371 = vpop.f32.mrb[0].mxu0
  %v1372 = vadd.f32 0.0, %v1371
  %v1373 = vpop.f32.mrb[0].mxu0
  %v1374 = vadd.f32 0.0, %v1373
  %v1375 = vpop.f32.mrb[0].mxu0
  %v1376 = vadd.f32 0.0, %v1375
  %v1377 = vpop.f32.mrb[0].mxu0
  %v1378 = vadd.f32 0.0, %v1377
  %1379 = vmatprep.mubr.bf16.mxu0 0
  %1380 = vmatmul.mubr.bf16.gmra.mrb[0].mxu0 %v598
  %v1381 = vpop.f32.mrb[0].mxu0
  %v1382 = vadd.f32 0.0, %v1381
  %v1383 = vpop.f32.mrb[0].mxu0
  %v1384 = vadd.f32 0.0, %v1383
  %v1385 = vpop.f32.mrb[0].mxu0
  %v1386 = vadd.f32 0.0, %v1385
  %v1387 = vpop.f32.mrb[0].mxu0
  %v1388 = vadd.f32 0.0, %v1387
  %1389 = vmatprep.mubr.bf16.mxu0 0
  %1390 = vmatmul.mubr.bf16.gmra.mrb[0].mxu0 %v601
  %v1391 = vpop.f32.mrb[0].mxu0
  %v1392 = vadd.f32 0.0, %v1391
  %v1393 = vpop.f32.mrb[0].mxu0
  %v1394 = vadd.f32 0.0, %v1393
  %v1395 = vpop.f32.mrb[0].mxu0
  %v1396 = vadd.f32 0.0, %v1395
  %v1397 = vpop.f32.mrb[0].mxu0
  %v1398 = vadd.f32 0.0, %v1397
  %1399 = vmatprep.mubr.bf16.mxu0 0
  %1400 = vmatmul.mubr.bf16.gmra.mrb[0].mxu0 %v604
  %v1401 = vpop.f32.mrb[0].mxu0
  %v1402 = vadd.f32 0.0, %v1401
  %v1403 = vpop.f32.mrb[0].mxu0
  %v1404 = vadd.f32 0.0, %v1403
  %v1405 = vpop.f32.mrb[0].mxu0
  %v1406 = vadd.f32 0.0, %v1405
  %v1407 = vpop.f32.mrb[0].mxu0
  %v1408 = vadd.f32 0.0, %v1407
  %1409 = vmatprep.mubr.bf16.mxu0 0
  %1410 = vmatmul.mubr.bf16.gmra.mrb[0].mxu0 %v607
  %v1411 = vpop.f32.mrb[0].mxu0
  %v1412 = vadd.f32 0.0, %v1411
  %v1413 = vpop.f32.mrb[0].mxu0
  %v1414 = vadd.f32 0.0, %v1413
  %v1415 = vpop.f32.mrb[0].mxu0
  %v1416 = vadd.f32 0.0, %v1415
  %v1417 = vpop.f32.mrb[0].mxu0
  %v1418 = vadd.f32 0.0, %v1417
  %1419 = vmatprep.mubr.bf16.mxu0 0
  %1420 = vmatmul.mubr.bf16.gmra.mrb[0].mxu0 %v610
  %v1421 = vpop.f32.mrb[0].mxu0
  %v1422 = vadd.f32 0.0, %v1421
  %v1423 = vpop.f32.mrb[0].mxu0
  %v1424 = vadd.f32 0.0, %v1423
  %v1425 = vpop.f32.mrb[0].mxu0
  %v1426 = vadd.f32 0.0, %v1425
  %v1427 = vpop.f32.mrb[0].mxu0
  %v1428 = vadd.f32 0.0, %v1427
  %1429 = vmatprep.mubr.bf16.mxu0 0
  %1430 = vmatmul.mubr.bf16.gmra.mrb[0].mxu0 %v613
  %v1431 = vpop.f32.mrb[0].mxu0
  %v1432 = vadd.f32 0.0, %v1431
  %v1433 = vpop.f32.mrb[0].mxu0
  %v1434 = vadd.f32 0.0, %v1433
  %v1435 = vpop.f32.mrb[0].mxu0
  %v1436 = vadd.f32 0.0, %v1435
  %v1437 = vpop.f32.mrb[0].mxu0
  %v1438 = vadd.f32 0.0, %v1437
  %1439 = vmatprep.mubr.bf16.mxu0 0
  %1440 = vmatmul.mubr.bf16.gmra.mrb[0].mxu0 %v616
  %v1441 = vpop.f32.mrb[0].mxu0
  %v1442 = vadd.f32 0.0, %v1441
  %v1443 = vpop.f32.mrb[0].mxu0
  %v1444 = vadd.f32 0.0, %v1443
  %v1445 = vpop.f32.mrb[0].mxu0
  %v1446 = vadd.f32 0.0, %v1445
  %v1447 = vpop.f32.mrb[0].mxu0
  %v1448 = vadd.f32 0.0, %v1447
  %1449 = vmatprep.mubr.bf16.mxu0 0
  %1450 = vmatmul.mubr.bf16.gmra.mrb[0].mxu0 %v619
  %v1451 = vpop.f32.mrb[0].mxu0
  %v1452 = vadd.f32 0.0, %v1451
  %v1453 = vpop.f32.mrb[0].mxu0
  %v1454 = vadd.f32 0.0, %v1453
  %v1455 = vpop.f32.mrb[0].mxu0
  %v1456 = vadd.f32 0.0, %v1455
  %v1457 = vpop.f32.mrb[0].mxu0
  %v1458 = vadd.f32 0.0, %v1457
  %1459 = vmatprep.mubr.bf16.mxu0 0
  %1460 = vmatmul.mubr.bf16.gmra.mrb[0].mxu0 %v622
  %v1461 = vpop.f32.mrb[0].mxu0
  %v1462 = vadd.f32 0.0, %v1461
  %v1463 = vpop.f32.mrb[0].mxu0
  %v1464 = vadd.f32 0.0, %v1463
  %v1465 = vpop.f32.mrb[0].mxu0
  %v1466 = vadd.f32 0.0, %v1465
  %v1467 = vpop.f32.mrb[0].mxu0
  %v1468 = vadd.f32 0.0, %v1467
  %1469 = vmatprep.mubr.bf16.mxu0 0
  %1470 = vmatmul.mubr.bf16.gmra.mrb[0].mxu0 %v625
  %v1471 = vpop.f32.mrb[0].mxu0
  %v1472 = vadd.f32 0.0, %v1471
  %v1473 = vpop.f32.mrb[0].mxu0
  %v1474 = vadd.f32 0.0, %v1473
  %v1475 = vpop.f32.mrb[0].mxu0
  %v1476 = vadd.f32 0.0, %v1475
  %v1477 = vpop.f32.mrb[0].mxu0
  %v1478 = vadd.f32 0.0, %v1477
  %1479 = vmatprep.mubr.bf16.mxu0 0
  %1480 = vmatmul.mubr.bf16.gmra.mrb[0].mxu0 %v628
  %v1481 = vpop.f32.mrb[0].mxu0
  %v1482 = vadd.f32 0.0, %v1481
  %v1483 = vpop.f32.mrb[0].mxu0
  %v1484 = vadd.f32 0.0, %v1483
  %v1485 = vpop.f32.mrb[0].mxu0
  %v1486 = vadd.f32 0.0, %v1485
  %v1487 = vpop.f32.mrb[0].mxu0
  %v1488 = vadd.f32 0.0, %v1487
  %1489 = vmatprep.mubr.bf16.mxu0 0
  %1490 = vmatmul.mubr.bf16.gmra.mrb[0].mxu0 %v631
  %v1491 = vpop.f32.mrb[0].mxu0
  %v1492 = vadd.f32 0.0, %v1491
  %v1493 = vpop.f32.mrb[0].mxu0
  %v1494 = vadd.f32 0.0, %v1493
  %v1495 = vpop.f32.mrb[0].mxu0
  %v1496 = vadd.f32 0.0, %v1495
  %v1497 = vpop.f32.mrb[0].mxu0
  %v1498 = vadd.f32 0.0, %v1497
  %1499 = vmatprep.mubr.bf16.mxu0 0
  %1500 = vmatmul.mubr.bf16.gmra.mrb[0].mxu0 %v634
  %v1501 = vpop.f32.mrb[0].mxu0
  %v1502 = vadd.f32 0.0, %v1501
  %v1503 = vpop.f32.mrb[0].mxu0
  %v1504 = vadd.f32 0.0, %v1503
  %v1505 = vpop.f32.mrb[0].mxu0
  %v1506 = vadd.f32 0.0, %v1505
  %v1507 = vpop.f32.mrb[0].mxu0
  %v1508 = vadd.f32 0.0, %v1507
  %1509 = vmatprep.mubr.bf16.mxu0 0
  %1510 = vmatmul.mubr.bf16.gmra.mrb[0].mxu0 %v637
  %v1511 = vpop.f32.mrb[0].mxu0
  %v1512 = vadd.f32 0.0, %v1511
  %v1513 = vpop.f32.mrb[0].mxu0
  %v1514 = vadd.f32 0.0, %v1513
  %v1515 = vpop.f32.mrb[0].mxu0
  %v1516 = vadd.f32 0.0, %v1515
  %v1517 = vpop.f32.mrb[0].mxu0
  %v1518 = vadd.f32 0.0, %v1517
  %1519 = vmatprep.mubr.bf16.mxu0 0
  %1520 = vmatmul.mubr.bf16.gmra.mrb[0].mxu0 %v640
  %v1521 = vpop.f32.mrb[0].mxu0
  %v1522 = vadd.f32 0.0, %v1521
  %v1523 = vpop.f32.mrb[0].mxu0
  %v1524 = vadd.f32 0.0, %v1523
  %v1525 = vpop.f32.mrb[0].mxu0
  %v1526 = vadd.f32 0.0, %v1525
  %v1527 = vpop.f32.mrb[0].mxu0
  %v1528 = vadd.f32 0.0, %v1527
  %1529 = vmatprep.mubr.bf16.mxu0 0
  %1530 = vmatmul.mubr.bf16.gmra.mrb[0].mxu0 %v643
  %v1531 = vpop.f32.mrb[0].mxu0
  %v1532 = vadd.f32 0.0, %v1531
  %v1533 = vpop.f32.mrb[0].mxu0
  %v1534 = vadd.f32 0.0, %v1533
  %v1535 = vpop.f32.mrb[0].mxu0
  %v1536 = vadd.f32 0.0, %v1535
  %v1537 = vpop.f32.mrb[0].mxu0
  %v1538 = vadd.f32 0.0, %v1537
  %1539 = vmatprep.mubr.bf16.mxu0 0
  %1540 = vmatmul.mubr.bf16.gmra.mrb[0].mxu0 %v646
  %v1541 = vpop.f32.mrb[0].mxu0
  %v1542 = vadd.f32 0.0, %v1541
  %v1543 = vpop.f32.mrb[0].mxu0
  %v1544 = vadd.f32 0.0, %v1543
  %v1545 = vpop.f32.mrb[0].mxu0
  %v1546 = vadd.f32 0.0, %v1545
  %v1547 = vpop.f32.mrb[0].mxu0
  %v1548 = vadd.f32 0.0, %v1547
  %1549 = vmatprep.mubr.bf16.mxu0 0
  %1550 = vmatmul.mubr.bf16.gmra.mrb[0].mxu0 %v649
  %v1551 = vpop.f32.mrb[0].mxu0
  %v1552 = vadd.f32 0.0, %v1551
  %v1553 = vpop.f32.mrb[0].mxu0
  %v1554 = vadd.f32 0.0, %v1553
  %v1555 = vpop.f32.mrb[0].mxu0
  %v1556 = vadd.f32 0.0, %v1555
  %v1557 = vpop.f32.mrb[0].mxu0
  %v1558 = vadd.f32 0.0, %v1557
  %1559 = vmatprep.mubr.bf16.mxu0 0
  %1560 = vmatmul.mubr.bf16.gmra.mrb[0].mxu0 %v652
  %v1561 = vpop.f32.mrb[0].mxu0
  %v1562 = vadd.f32 0.0, %v1561
  %v1563 = vpop.f32.mrb[0].mxu0
  %v1564 = vadd.f32 0.0, %v1563
  %v1565 = vpop.f32.mrb[0].mxu0
  %v1566 = vadd.f32 0.0, %v1565
  %v1567 = vpop.f32.mrb[0].mxu0
  %v1568 = vadd.f32 0.0, %v1567
  %1569 = vmatprep.mubr.bf16.mxu0 0
  %1570 = vmatmul.mubr.bf16.gmra.mrb[0].mxu0 %v655
  %v1571 = vpop.f32.mrb[0].mxu0
  %v1572 = vadd.f32 0.0, %v1571
  %v1573 = vpop.f32.mrb[0].mxu0
  %v1574 = vadd.f32 0.0, %v1573
  %v1575 = vpop.f32.mrb[0].mxu0
  %v1576 = vadd.f32 0.0, %v1575
  %v1577 = vpop.f32.mrb[0].mxu0
  %v1578 = vadd.f32 0.0, %v1577
  %1579 = vmatprep.mubr.bf16.mxu0 0
  %1580 = vmatmul.mubr.bf16.gmra.mrb[0].mxu0 %v658
  %v1581 = vpop.f32.mrb[0].mxu0
  %v1582 = vadd.f32 0.0, %v1581
  %v1583 = vpop.f32.mrb[0].mxu0
  %v1584 = vadd.f32 0.0, %v1583
  %v1585 = vpop.f32.mrb[0].mxu0
  %v1586 = vadd.f32 0.0, %v1585
  %v1587 = vpop.f32.mrb[0].mxu0
  %v1588 = vadd.f32 0.0, %v1587
  %1589 = vmatprep.mubr.bf16.mxu0 0
  %1590 = vmatmul.mubr.bf16.gmra.mrb[0].mxu0 %v661
  %v1591 = vpop.f32.mrb[0].mxu0
  %v1592 = vadd.f32 0.0, %v1591
  %v1593 = vpop.f32.mrb[0].mxu0
  %v1594 = vadd.f32 0.0, %v1593
  %v1595 = vpop.f32.mrb[0].mxu0
  %v1596 = vadd.f32 0.0, %v1595
  %v1597 = vpop.f32.mrb[0].mxu0
  %v1598 = vadd.f32 0.0, %v1597
  %1599 = vmatprep.mubr.bf16.mxu0 0
  %1600 = vmatmul.mubr.bf16.gmra.mrb[0].mxu0 %v664
  %v1601 = vpop.f32.mrb[0].mxu0
  %v1602 = vadd.f32 0.0, %v1601
  %v1603 = vpop.f32.mrb[0].mxu0
  %v1604 = vadd.f32 0.0, %v1603
  %v1605 = vpop.f32.mrb[0].mxu0
  %v1606 = vadd.f32 0.0, %v1605
  %v1607 = vpop.f32.mrb[0].mxu0
  %v1608 = vadd.f32 0.0, %v1607
  %1609 = vmatprep.mubr.bf16.mxu0 0
  %1610 = vmatmul.mubr.bf16.gmra.mrb[0].mxu0 %v667
  %v1611 = vpop.f32.mrb[0].mxu0
  %v1612 = vadd.f32 0.0, %v1611
  %v1613 = vpop.f32.mrb[0].mxu0
  %v1614 = vadd.f32 0.0, %v1613
  %v1615 = vpop.f32.mrb[0].mxu0
  %v1616 = vadd.f32 0.0, %v1615
  %v1617 = vpop.f32.mrb[0].mxu0
  %v1618 = vadd.f32 0.0, %v1617
  %1619 = vmatprep.mubr.bf16.mxu0 0
  %1620 = vmatmul.mubr.bf16.gmra.mrb[0].mxu0 %v670
  %v1621 = vpop.f32.mrb[0].mxu0
  %v1622 = vadd.f32 0.0, %v1621
  %v1623 = vpop.f32.mrb[0].mxu0
  %v1624 = vadd.f32 0.0, %v1623
  %v1625 = vpop.f32.mrb[0].mxu0
  %v1626 = vadd.f32 0.0, %v1625
  %v1627 = vpop.f32.mrb[0].mxu0
  %v1628 = vadd.f32 0.0, %v1627
  %1629 = vmatprep.mubr.bf16.mxu0 0
  %1630 = vmatmul.mubr.bf16.gmra.mrb[0].mxu0 %v673
  %v1631 = vpop.f32.mrb[0].mxu0
  %v1632 = vadd.f32 0.0, %v1631
  %v1633 = vpop.f32.mrb[0].mxu0
  %v1634 = vadd.f32 0.0, %v1633
  %v1635 = vpop.f32.mrb[0].mxu0
  %v1636 = vadd.f32 0.0, %v1635
  %v1637 = vpop.f32.mrb[0].mxu0
  %v1638 = vadd.f32 0.0, %v1637
  %1639 = vmatprep.mubr.bf16.mxu0 0
  %1640 = vmatmul.mubr.bf16.gmra.mrb[0].mxu0 %v676
  %v1641 = vpop.f32.mrb[0].mxu0
  %v1642 = vadd.f32 0.0, %v1641
  %v1643 = vpop.f32.mrb[0].mxu0
  %v1644 = vadd.f32 0.0, %v1643
  %v1645 = vpop.f32.mrb[0].mxu0
  %v1646 = vadd.f32 0.0, %v1645
  %v1647 = vpop.f32.mrb[0].mxu0
  %v1648 = vadd.f32 0.0, %v1647
  %1649 = vmatprep.mubr.bf16.mxu0 0
  %1650 = vmatmul.mubr.bf16.gmra.mrb[0].mxu0 %v679
  %v1651 = vpop.f32.mrb[0].mxu0
  %v1652 = vadd.f32 0.0, %v1651
  %v1653 = vpop.f32.mrb[0].mxu0
  %v1654 = vadd.f32 0.0, %v1653
  %v1655 = vpop.f32.mrb[0].mxu0
  %v1656 = vadd.f32 0.0, %v1655
  %v1657 = vpop.f32.mrb[0].mxu0
  %v1658 = vadd.f32 0.0, %v1657
  %1659 = vmatprep.mubr.bf16.mxu0 0
  %1660 = vmatmul.mubr.bf16.gmra.mrb[0].mxu0 %v682
  %v1661 = vpop.f32.mrb[0].mxu0
  %v1662 = vadd.f32 0.0, %v1661
  %v1663 = vpop.f32.mrb[0].mxu0
  %v1664 = vadd.f32 0.0, %v1663
  %v1665 = vpop.f32.mrb[0].mxu0
  %v1666 = vadd.f32 0.0, %v1665
  %v1667 = vpop.f32.mrb[0].mxu0
  %v1668 = vadd.f32 0.0, %v1667
  %1669 = vmatprep.mubr.bf16.mxu0 0
  %1670 = vmatmul.mubr.bf16.gmra.mrb[0].mxu0 %v685
  %v1671 = vpop.f32.mrb[0].mxu0
  %v1672 = vadd.f32 0.0, %v1671
  %v1673 = vpop.f32.mrb[0].mxu0
  %v1674 = vadd.f32 0.0, %v1673
  %v1675 = vpop.f32.mrb[0].mxu0
  %v1676 = vadd.f32 0.0, %v1675
  %v1677 = vpop.f32.mrb[0].mxu0
  %v1678 = vadd.f32 0.0, %v1677
  %1679 = vdwg.mxu0
  %v1684 = vunpack.c.l.b16 %v369
  %v1685 = vunpack.c.h.b16 %v369
  %v1686 = vunpack.c.l.b16 %v370
  %v1687 = vunpack.c.h.b16 %v370
  %v1688 = vunpack.c.l.b16 %v371
  %v1689 = vunpack.c.h.b16 %v371
  %v1690 = vunpack.c.l.b16 %v372
  %v1691 = vunpack.c.h.b16 %v372
  %v1692 = vpack.c.b16 %v1686, %v1684
  %v1693 = vpack.c.b16 %v1687, %v1685
  %v1694 = vpack.c.b16 %v1690, %v1688
  %v1695 = vpack.c.b16 %v1691, %v1689
  %v1701 = vsel %vm398, %v257, 0
  %v1704 = vsel %vm398, %v258, 0
  %v1707 = vsel %vm398, %v259, 0
  %v1710 = vsel %vm398, %v260, 0
  %1712 = vmatprep.subr.bf16.mxu0 %v1693
  %1713 = vmatpush1.bf16.msra.mxu0 %v1692
  %1714 = vmatprep.subr.bf16.mxu0 %v1695
  %1715 = vmatpush1.bf16.msra.mxu0 %v1694
  %1716 = vmatprep.subr.bf16.mxu0 0
  %1717 = vmatpush1.bf16.msra.mxu0 0
  %1718 = vmatprep.subr.bf16.mxu0 0
  %1719 = vmatpush1.bf16.msra.mxu0 0
  %1720 = vmatprep.subr.bf16.mxu0 0
  %1721 = vmatpush1.bf16.msra.mxu0 0
  %1722 = vmatprep.subr.bf16.mxu0 0
  %1723 = vmatpush1.bf16.msra.mxu0 0
  %1724 = vmatprep.subr.bf16.mxu0 0
  %1725 = vmatpush1.bf16.msra.mxu0 0
  %1726 = vmatprep.subr.bf16.mxu0 0
  %1727 = vmatpush1.bf16.msra.mxu0 0
  %1728 = vmatprep.subr.bf16.mxu0 0
  %1729 = vmatpush1.bf16.msra.mxu0 0
  %1730 = vmatprep.subr.bf16.mxu0 0
  %1731 = vmatpush1.bf16.msra.mxu0 0
  %1732 = vmatprep.subr.bf16.mxu0 0
  %1733 = vmatpush1.bf16.msra.mxu0 0
  %1734 = vmatprep.subr.bf16.mxu0 0
  %1735 = vmatpush1.bf16.msra.mxu0 0
  %1736 = vmatprep.subr.bf16.mxu0 0
  %1737 = vmatpush1.bf16.msra.mxu0 0
  %1738 = vmatprep.subr.bf16.mxu0 0
  %1739 = vmatpush1.bf16.msra.mxu0 0
  %1740 = vmatprep.subr.bf16.mxu0 0
  %1741 = vmatpush1.bf16.msra.mxu0 0
  %1742 = vmatprep.subr.bf16.mxu0 0
  %1743 = vmatpush1.bf16.msra.mxu0 0
  %1744 = vmatprep.mubr.bf16.mxu0 0
  %1745 = vmatmul.mubr.bf16.gmra.mrb[0].mxu0 %v1701
  %v1746 = vpop.f32.mrb[0].mxu0
  %v1747 = vadd.f32 %v722, %v1746
  %v1748 = vpop.f32.mrb[0].mxu0
  %v1749 = vadd.f32 %v724, %v1748
  %v1750 = vpop.f32.mrb[0].mxu0
  %v1751 = vadd.f32 %v726, %v1750
  %v1752 = vpop.f32.mrb[0].mxu0
  %v1753 = vadd.f32 %v728, %v1752
  %1754 = vmatprep.mubr.bf16.mxu0 0
  %1755 = vmatmul.mubr.bf16.gmra.mrb[0].mxu0 %v1704
  %v1756 = vpop.f32.mrb[0].mxu0
  %v1757 = vadd.f32 %v732, %v1756
  %v1758 = vpop.f32.mrb[0].mxu0
  %v1759 = vadd.f32 %v734, %v1758
  %v1760 = vpop.f32.mrb[0].mxu0
  %v1761 = vadd.f32 %v736, %v1760
  %v1762 = vpop.f32.mrb[0].mxu0
  %v1763 = vadd.f32 %v738, %v1762
  %1764 = vmatprep.mubr.bf16.mxu0 0
  %1765 = vmatmul.mubr.bf16.gmra.mrb[0].mxu0 %v1707
  %v1766 = vpop.f32.mrb[0].mxu0
  %v1767 = vadd.f32 %v742, %v1766
  %v1768 = vpop.f32.mrb[0].mxu0
  %v1769 = vadd.f32 %v744, %v1768
  %v1770 = vpop.f32.mrb[0].mxu0
  %v1771 = vadd.f32 %v746, %v1770
  %v1772 = vpop.f32.mrb[0].mxu0
  %v1773 = vadd.f32 %v748, %v1772
  %1774 = vmatprep.mubr.bf16.mxu0 0
  %1775 = vmatmul.mubr.bf16.gmra.mrb[0].mxu0 %v1710
  %v1776 = vpop.f32.mrb[0].mxu0
  %v1777 = vadd.f32 %v752, %v1776
  %v1778 = vpop.f32.mrb[0].mxu0
  %v1779 = vadd.f32 %v754, %v1778
  %v1780 = vpop.f32.mrb[0].mxu0
  %v1781 = vadd.f32 %v756, %v1780
  %v1782 = vpop.f32.mrb[0].mxu0
  %v1783 = vadd.f32 %v758, %v1782
  %1784 = vmatprep.mubr.bf16.mxu0 0
  %1785 = vmatmul.mubr.bf16.gmra.mrb[0].mxu0 %v400
  %v1786 = vpop.f32.mrb[0].mxu0
  %v1787 = vadd.f32 %v762, %v1786
  %v1788 = vpop.f32.mrb[0].mxu0
  %v1789 = vadd.f32 %v764, %v1788
  %v1790 = vpop.f32.mrb[0].mxu0
  %v1791 = vadd.f32 %v766, %v1790
  %v1792 = vpop.f32.mrb[0].mxu0
  %v1793 = vadd.f32 %v768, %v1792
  %1794 = vmatprep.mubr.bf16.mxu0 0
  %1795 = vmatmul.mubr.bf16.gmra.mrb[0].mxu0 %v403
  %v1796 = vpop.f32.mrb[0].mxu0
  %v1797 = vadd.f32 %v772, %v1796
  %v1798 = vpop.f32.mrb[0].mxu0
  %v1799 = vadd.f32 %v774, %v1798
  %v1800 = vpop.f32.mrb[0].mxu0
  %v1801 = vadd.f32 %v776, %v1800
  %v1802 = vpop.f32.mrb[0].mxu0
  %v1803 = vadd.f32 %v778, %v1802
  %1804 = vmatprep.mubr.bf16.mxu0 0
  %1805 = vmatmul.mubr.bf16.gmra.mrb[0].mxu0 %v406
  %v1806 = vpop.f32.mrb[0].mxu0
  %v1807 = vadd.f32 %v782, %v1806
  %v1808 = vpop.f32.mrb[0].mxu0
  %v1809 = vadd.f32 %v784, %v1808
  %v1810 = vpop.f32.mrb[0].mxu0
  %v1811 = vadd.f32 %v786, %v1810
  %v1812 = vpop.f32.mrb[0].mxu0
  %v1813 = vadd.f32 %v788, %v1812
  %1814 = vmatprep.mubr.bf16.mxu0 0
  %1815 = vmatmul.mubr.bf16.gmra.mrb[0].mxu0 %v409
  %v1816 = vpop.f32.mrb[0].mxu0
  %v1817 = vadd.f32 %v792, %v1816
  %v1818 = vpop.f32.mrb[0].mxu0
  %v1819 = vadd.f32 %v794, %v1818
  %v1820 = vpop.f32.mrb[0].mxu0
  %v1821 = vadd.f32 %v796, %v1820
  %v1822 = vpop.f32.mrb[0].mxu0
  %v1823 = vadd.f32 %v798, %v1822
  %1824 = vmatprep.mubr.bf16.mxu0 0
  %1825 = vmatmul.mubr.bf16.gmra.mrb[0].mxu0 %v412
  %v1826 = vpop.f32.mrb[0].mxu0
  %v1827 = vadd.f32 %v802, %v1826
  %v1828 = vpop.f32.mrb[0].mxu0
  %v1829 = vadd.f32 %v804, %v1828
  %v1830 = vpop.f32.mrb[0].mxu0
  %v1831 = vadd.f32 %v806, %v1830
  %v1832 = vpop.f32.mrb[0].mxu0
  %v1833 = vadd.f32 %v808, %v1832
  %1834 = vmatprep.mubr.bf16.mxu0 0
  %1835 = vmatmul.mubr.bf16.gmra.mrb[0].mxu0 %v415
  %v1836 = vpop.f32.mrb[0].mxu0
  %v1837 = vadd.f32 %v812, %v1836
  %v1838 = vpop.f32.mrb[0].mxu0
  %v1839 = vadd.f32 %v814, %v1838
  %v1840 = vpop.f32.mrb[0].mxu0
  %v1841 = vadd.f32 %v816, %v1840
  %v1842 = vpop.f32.mrb[0].mxu0
  %v1843 = vadd.f32 %v818, %v1842
  %1844 = vmatprep.mubr.bf16.mxu0 0
  %1845 = vmatmul.mubr.bf16.gmra.mrb[0].mxu0 %v418
  %v1846 = vpop.f32.mrb[0].mxu0
  %v1847 = vadd.f32 %v822, %v1846
  %v1848 = vpop.f32.mrb[0].mxu0
  %v1849 = vadd.f32 %v824, %v1848
  %v1850 = vpop.f32.mrb[0].mxu0
  %v1851 = vadd.f32 %v826, %v1850
  %v1852 = vpop.f32.mrb[0].mxu0
  %v1853 = vadd.f32 %v828, %v1852
  %1854 = vmatprep.mubr.bf16.mxu0 0
  %1855 = vmatmul.mubr.bf16.gmra.mrb[0].mxu0 %v421
  %v1856 = vpop.f32.mrb[0].mxu0
  %v1857 = vadd.f32 %v832, %v1856
  %v1858 = vpop.f32.mrb[0].mxu0
  %v1859 = vadd.f32 %v834, %v1858
  %v1860 = vpop.f32.mrb[0].mxu0
  %v1861 = vadd.f32 %v836, %v1860
  %v1862 = vpop.f32.mrb[0].mxu0
  %v1863 = vadd.f32 %v838, %v1862
  %1864 = vmatprep.mubr.bf16.mxu0 0
  %1865 = vmatmul.mubr.bf16.gmra.mrb[0].mxu0 %v424
  %v1866 = vpop.f32.mrb[0].mxu0
  %v1867 = vadd.f32 %v842, %v1866
  %v1868 = vpop.f32.mrb[0].mxu0
  %v1869 = vadd.f32 %v844, %v1868
  %v1870 = vpop.f32.mrb[0].mxu0
  %v1871 = vadd.f32 %v846, %v1870
  %v1872 = vpop.f32.mrb[0].mxu0
  %v1873 = vadd.f32 %v848, %v1872
  %1874 = vmatprep.mubr.bf16.mxu0 0
  %1875 = vmatmul.mubr.bf16.gmra.mrb[0].mxu0 %v427
  %v1876 = vpop.f32.mrb[0].mxu0
  %v1877 = vadd.f32 %v852, %v1876
  %v1878 = vpop.f32.mrb[0].mxu0
  %v1879 = vadd.f32 %v854, %v1878
  %v1880 = vpop.f32.mrb[0].mxu0
  %v1881 = vadd.f32 %v856, %v1880
  %v1882 = vpop.f32.mrb[0].mxu0
  %v1883 = vadd.f32 %v858, %v1882
  %1884 = vmatprep.mubr.bf16.mxu0 0
  %1885 = vmatmul.mubr.bf16.gmra.mrb[0].mxu0 %v430
  %v1886 = vpop.f32.mrb[0].mxu0
  %v1887 = vadd.f32 %v862, %v1886
  %v1888 = vpop.f32.mrb[0].mxu0
  %v1889 = vadd.f32 %v864, %v1888
  %v1890 = vpop.f32.mrb[0].mxu0
  %v1891 = vadd.f32 %v866, %v1890
  %v1892 = vpop.f32.mrb[0].mxu0
  %v1893 = vadd.f32 %v868, %v1892
  %1894 = vmatprep.mubr.bf16.mxu0 0
  %1895 = vmatmul.mubr.bf16.gmra.mrb[0].mxu0 %v433
  %v1896 = vpop.f32.mrb[0].mxu0
  %v1897 = vadd.f32 %v872, %v1896
  %v1898 = vpop.f32.mrb[0].mxu0
  %v1899 = vadd.f32 %v874, %v1898
  %v1900 = vpop.f32.mrb[0].mxu0
  %v1901 = vadd.f32 %v876, %v1900
  %v1902 = vpop.f32.mrb[0].mxu0
  %v1903 = vadd.f32 %v878, %v1902
  %1904 = vmatprep.mubr.bf16.mxu0 0
  %1905 = vmatmul.mubr.bf16.gmra.mrb[0].mxu0 %v436
  %v1906 = vpop.f32.mrb[0].mxu0
  %v1907 = vadd.f32 %v882, %v1906
  %v1908 = vpop.f32.mrb[0].mxu0
  %v1909 = vadd.f32 %v884, %v1908
  %v1910 = vpop.f32.mrb[0].mxu0
  %v1911 = vadd.f32 %v886, %v1910
  %v1912 = vpop.f32.mrb[0].mxu0
  %v1913 = vadd.f32 %v888, %v1912
  %1914 = vmatprep.mubr.bf16.mxu0 0
  %1915 = vmatmul.mubr.bf16.gmra.mrb[0].mxu0 %v439
  %v1916 = vpop.f32.mrb[0].mxu0
  %v1917 = vadd.f32 %v892, %v1916
  %v1918 = vpop.f32.mrb[0].mxu0
  %v1919 = vadd.f32 %v894, %v1918
  %v1920 = vpop.f32.mrb[0].mxu0
  %v1921 = vadd.f32 %v896, %v1920
  %v1922 = vpop.f32.mrb[0].mxu0
  %v1923 = vadd.f32 %v898, %v1922
  %1924 = vmatprep.mubr.bf16.mxu0 0
  %1925 = vmatmul.mubr.bf16.gmra.mrb[0].mxu0 %v442
  %v1926 = vpop.f32.mrb[0].mxu0
  %v1927 = vadd.f32 %v902, %v1926
  %v1928 = vpop.f32.mrb[0].mxu0
  %v1929 = vadd.f32 %v904, %v1928
  %v1930 = vpop.f32.mrb[0].mxu0
  %v1931 = vadd.f32 %v906, %v1930
  %v1932 = vpop.f32.mrb[0].mxu0
  %v1933 = vadd.f32 %v908, %v1932
  %1934 = vmatprep.mubr.bf16.mxu0 0
  %1935 = vmatmul.mubr.bf16.gmra.mrb[0].mxu0 %v445
  %v1936 = vpop.f32.mrb[0].mxu0
  %v1937 = vadd.f32 %v912, %v1936
  %v1938 = vpop.f32.mrb[0].mxu0
  %v1939 = vadd.f32 %v914, %v1938
  %v1940 = vpop.f32.mrb[0].mxu0
  %v1941 = vadd.f32 %v916, %v1940
  %v1942 = vpop.f32.mrb[0].mxu0
  %v1943 = vadd.f32 %v918, %v1942
  %1944 = vmatprep.mubr.bf16.mxu0 0
  %1945 = vmatmul.mubr.bf16.gmra.mrb[0].mxu0 %v448
  %v1946 = vpop.f32.mrb[0].mxu0
  %v1947 = vadd.f32 %v922, %v1946
  %v1948 = vpop.f32.mrb[0].mxu0
  %v1949 = vadd.f32 %v924, %v1948
  %v1950 = vpop.f32.mrb[0].mxu0
  %v1951 = vadd.f32 %v926, %v1950
  %v1952 = vpop.f32.mrb[0].mxu0
  %v1953 = vadd.f32 %v928, %v1952
  %1954 = vmatprep.mubr.bf16.mxu0 0
  %1955 = vmatmul.mubr.bf16.gmra.mrb[0].mxu0 %v451
  %v1956 = vpop.f32.mrb[0].mxu0
  %v1957 = vadd.f32 %v932, %v1956
  %v1958 = vpop.f32.mrb[0].mxu0
  %v1959 = vadd.f32 %v934, %v1958
  %v1960 = vpop.f32.mrb[0].mxu0
  %v1961 = vadd.f32 %v936, %v1960
  %v1962 = vpop.f32.mrb[0].mxu0
  %v1963 = vadd.f32 %v938, %v1962
  %1964 = vmatprep.mubr.bf16.mxu0 0
  %1965 = vmatmul.mubr.bf16.gmra.mrb[0].mxu0 %v454
  %v1966 = vpop.f32.mrb[0].mxu0
  %v1967 = vadd.f32 %v942, %v1966
  %v1968 = vpop.f32.mrb[0].mxu0
  %v1969 = vadd.f32 %v944, %v1968
  %v1970 = vpop.f32.mrb[0].mxu0
  %v1971 = vadd.f32 %v946, %v1970
  %v1972 = vpop.f32.mrb[0].mxu0
  %v1973 = vadd.f32 %v948, %v1972
  %1974 = vmatprep.mubr.bf16.mxu0 0
  %1975 = vmatmul.mubr.bf16.gmra.mrb[0].mxu0 %v457
  %v1976 = vpop.f32.mrb[0].mxu0
  %v1977 = vadd.f32 %v952, %v1976
  %v1978 = vpop.f32.mrb[0].mxu0
  %v1979 = vadd.f32 %v954, %v1978
  %v1980 = vpop.f32.mrb[0].mxu0
  %v1981 = vadd.f32 %v956, %v1980
  %v1982 = vpop.f32.mrb[0].mxu0
  %v1983 = vadd.f32 %v958, %v1982
  %1984 = vmatprep.mubr.bf16.mxu0 0
  %1985 = vmatmul.mubr.bf16.gmra.mrb[0].mxu0 %v460
  %v1986 = vpop.f32.mrb[0].mxu0
  %v1987 = vadd.f32 %v962, %v1986
  %v1988 = vpop.f32.mrb[0].mxu0
  %v1989 = vadd.f32 %v964, %v1988
  %v1990 = vpop.f32.mrb[0].mxu0
  %v1991 = vadd.f32 %v966, %v1990
  %v1992 = vpop.f32.mrb[0].mxu0
  %v1993 = vadd.f32 %v968, %v1992
  %1994 = vmatprep.mubr.bf16.mxu0 0
  %1995 = vmatmul.mubr.bf16.gmra.mrb[0].mxu0 %v463
  %v1996 = vpop.f32.mrb[0].mxu0
  %v1997 = vadd.f32 %v972, %v1996
  %v1998 = vpop.f32.mrb[0].mxu0
  %v1999 = vadd.f32 %v974, %v1998
  %v2000 = vpop.f32.mrb[0].mxu0
  %v2001 = vadd.f32 %v976, %v2000
  %v2002 = vpop.f32.mrb[0].mxu0
  %v2003 = vadd.f32 %v978, %v2002
  %2004 = vmatprep.mubr.bf16.mxu0 0
  %2005 = vmatmul.mubr.bf16.gmra.mrb[0].mxu0 %v466
  %v2006 = vpop.f32.mrb[0].mxu0
  %v2007 = vadd.f32 %v982, %v2006
  %v2008 = vpop.f32.mrb[0].mxu0
  %v2009 = vadd.f32 %v984, %v2008
  %v2010 = vpop.f32.mrb[0].mxu0
  %v2011 = vadd.f32 %v986, %v2010
  %v2012 = vpop.f32.mrb[0].mxu0
  %v2013 = vadd.f32 %v988, %v2012
  %2014 = vmatprep.mubr.bf16.mxu0 0
  %2015 = vmatmul.mubr.bf16.gmra.mrb[0].mxu0 %v469
  %v2016 = vpop.f32.mrb[0].mxu0
  %v2017 = vadd.f32 %v992, %v2016
  %v2018 = vpop.f32.mrb[0].mxu0
  %v2019 = vadd.f32 %v994, %v2018
  %v2020 = vpop.f32.mrb[0].mxu0
  %v2021 = vadd.f32 %v996, %v2020
  %v2022 = vpop.f32.mrb[0].mxu0
  %v2023 = vadd.f32 %v998, %v2022
  %2024 = vmatprep.mubr.bf16.mxu0 0
  %2025 = vmatmul.mubr.bf16.gmra.mrb[0].mxu0 %v472
  %v2026 = vpop.f32.mrb[0].mxu0
  %v2027 = vadd.f32 %v1002, %v2026
  %v2028 = vpop.f32.mrb[0].mxu0
  %v2029 = vadd.f32 %v1004, %v2028
  %v2030 = vpop.f32.mrb[0].mxu0
  %v2031 = vadd.f32 %v1006, %v2030
  %v2032 = vpop.f32.mrb[0].mxu0
  %v2033 = vadd.f32 %v1008, %v2032
  %2034 = vmatprep.mubr.bf16.mxu0 0
  %2035 = vmatmul.mubr.bf16.gmra.mrb[0].mxu0 %v475
  %v2036 = vpop.f32.mrb[0].mxu0
  %v2037 = vadd.f32 %v1012, %v2036
  %v2038 = vpop.f32.mrb[0].mxu0
  %v2039 = vadd.f32 %v1014, %v2038
  %v2040 = vpop.f32.mrb[0].mxu0
  %v2041 = vadd.f32 %v1016, %v2040
  %v2042 = vpop.f32.mrb[0].mxu0
  %v2043 = vadd.f32 %v1018, %v2042
  %2044 = vmatprep.mubr.bf16.mxu0 0
  %2045 = vmatmul.mubr.bf16.gmra.mrb[0].mxu0 %v478
  %v2046 = vpop.f32.mrb[0].mxu0
  %v2047 = vadd.f32 %v1022, %v2046
  %v2048 = vpop.f32.mrb[0].mxu0
  %v2049 = vadd.f32 %v1024, %v2048
  %v2050 = vpop.f32.mrb[0].mxu0
  %v2051 = vadd.f32 %v1026, %v2050
  %v2052 = vpop.f32.mrb[0].mxu0
  %v2053 = vadd.f32 %v1028, %v2052
  %2054 = vmatprep.mubr.bf16.mxu0 0
  %2055 = vmatmul.mubr.bf16.gmra.mrb[0].mxu0 %v481
  %v2056 = vpop.f32.mrb[0].mxu0
  %v2057 = vadd.f32 %v1032, %v2056
  %v2058 = vpop.f32.mrb[0].mxu0
  %v2059 = vadd.f32 %v1034, %v2058
  %v2060 = vpop.f32.mrb[0].mxu0
  %v2061 = vadd.f32 %v1036, %v2060
  %v2062 = vpop.f32.mrb[0].mxu0
  %v2063 = vadd.f32 %v1038, %v2062
  %2064 = vmatprep.mubr.bf16.mxu0 0
  %2065 = vmatmul.mubr.bf16.gmra.mrb[0].mxu0 %v484
  %v2066 = vpop.f32.mrb[0].mxu0
  %v2067 = vadd.f32 %v1042, %v2066
  %v2068 = vpop.f32.mrb[0].mxu0
  %v2069 = vadd.f32 %v1044, %v2068
  %v2070 = vpop.f32.mrb[0].mxu0
  %v2071 = vadd.f32 %v1046, %v2070
  %v2072 = vpop.f32.mrb[0].mxu0
  %v2073 = vadd.f32 %v1048, %v2072
  %2074 = vmatprep.mubr.bf16.mxu0 0
  %2075 = vmatmul.mubr.bf16.gmra.mrb[0].mxu0 %v487
  %v2076 = vpop.f32.mrb[0].mxu0
  %v2077 = vadd.f32 %v1052, %v2076
  %v2078 = vpop.f32.mrb[0].mxu0
  %v2079 = vadd.f32 %v1054, %v2078
  %v2080 = vpop.f32.mrb[0].mxu0
  %v2081 = vadd.f32 %v1056, %v2080
  %v2082 = vpop.f32.mrb[0].mxu0
  %v2083 = vadd.f32 %v1058, %v2082
  %2084 = vmatprep.mubr.bf16.mxu0 0
  %2085 = vmatmul.mubr.bf16.gmra.mrb[0].mxu0 %v490
  %v2086 = vpop.f32.mrb[0].mxu0
  %v2087 = vadd.f32 %v1062, %v2086
  %v2088 = vpop.f32.mrb[0].mxu0
  %v2089 = vadd.f32 %v1064, %v2088
  %v2090 = vpop.f32.mrb[0].mxu0
  %v2091 = vadd.f32 %v1066, %v2090
  %v2092 = vpop.f32.mrb[0].mxu0
  %v2093 = vadd.f32 %v1068, %v2092
  %2094 = vmatprep.mubr.bf16.mxu0 0
  %2095 = vmatmul.mubr.bf16.gmra.mrb[0].mxu0 %v493
  %v2096 = vpop.f32.mrb[0].mxu0
  %v2097 = vadd.f32 %v1072, %v2096
  %v2098 = vpop.f32.mrb[0].mxu0
  %v2099 = vadd.f32 %v1074, %v2098
  %v2100 = vpop.f32.mrb[0].mxu0
  %v2101 = vadd.f32 %v1076, %v2100
  %v2102 = vpop.f32.mrb[0].mxu0
  %v2103 = vadd.f32 %v1078, %v2102
  %2104 = vmatprep.mubr.bf16.mxu0 0
  %2105 = vmatmul.mubr.bf16.gmra.mrb[0].mxu0 %v496
  %v2106 = vpop.f32.mrb[0].mxu0
  %v2107 = vadd.f32 %v1082, %v2106
  %v2108 = vpop.f32.mrb[0].mxu0
  %v2109 = vadd.f32 %v1084, %v2108
  %v2110 = vpop.f32.mrb[0].mxu0
  %v2111 = vadd.f32 %v1086, %v2110
  %v2112 = vpop.f32.mrb[0].mxu0
  %v2113 = vadd.f32 %v1088, %v2112
  %2114 = vmatprep.mubr.bf16.mxu0 0
  %2115 = vmatmul.mubr.bf16.gmra.mrb[0].mxu0 %v499
  %v2116 = vpop.f32.mrb[0].mxu0
  %v2117 = vadd.f32 %v1092, %v2116
  %v2118 = vpop.f32.mrb[0].mxu0
  %v2119 = vadd.f32 %v1094, %v2118
  %v2120 = vpop.f32.mrb[0].mxu0
  %v2121 = vadd.f32 %v1096, %v2120
  %v2122 = vpop.f32.mrb[0].mxu0
  %v2123 = vadd.f32 %v1098, %v2122
  %2124 = vmatprep.mubr.bf16.mxu0 0
  %2125 = vmatmul.mubr.bf16.gmra.mrb[0].mxu0 %v502
  %v2126 = vpop.f32.mrb[0].mxu0
  %v2127 = vadd.f32 %v1102, %v2126
  %v2128 = vpop.f32.mrb[0].mxu0
  %v2129 = vadd.f32 %v1104, %v2128
  %v2130 = vpop.f32.mrb[0].mxu0
  %v2131 = vadd.f32 %v1106, %v2130
  %v2132 = vpop.f32.mrb[0].mxu0
  %v2133 = vadd.f32 %v1108, %v2132
  %2134 = vmatprep.mubr.bf16.mxu0 0
  %2135 = vmatmul.mubr.bf16.gmra.mrb[0].mxu0 %v505
  %v2136 = vpop.f32.mrb[0].mxu0
  %v2137 = vadd.f32 %v1112, %v2136
  %v2138 = vpop.f32.mrb[0].mxu0
  %v2139 = vadd.f32 %v1114, %v2138
  %v2140 = vpop.f32.mrb[0].mxu0
  %v2141 = vadd.f32 %v1116, %v2140
  %v2142 = vpop.f32.mrb[0].mxu0
  %v2143 = vadd.f32 %v1118, %v2142
  %2144 = vmatprep.mubr.bf16.mxu0 0
  %2145 = vmatmul.mubr.bf16.gmra.mrb[0].mxu0 %v508
  %v2146 = vpop.f32.mrb[0].mxu0
  %v2147 = vadd.f32 %v1122, %v2146
  %v2148 = vpop.f32.mrb[0].mxu0
  %v2149 = vadd.f32 %v1124, %v2148
  %v2150 = vpop.f32.mrb[0].mxu0
  %v2151 = vadd.f32 %v1126, %v2150
  %v2152 = vpop.f32.mrb[0].mxu0
  %v2153 = vadd.f32 %v1128, %v2152
  %2154 = vmatprep.mubr.bf16.mxu0 0
  %2155 = vmatmul.mubr.bf16.gmra.mrb[0].mxu0 %v511
  %v2156 = vpop.f32.mrb[0].mxu0
  %v2157 = vadd.f32 %v1132, %v2156
  %v2158 = vpop.f32.mrb[0].mxu0
  %v2159 = vadd.f32 %v1134, %v2158
  %v2160 = vpop.f32.mrb[0].mxu0
  %v2161 = vadd.f32 %v1136, %v2160
  %v2162 = vpop.f32.mrb[0].mxu0
  %v2163 = vadd.f32 %v1138, %v2162
  %2164 = vmatprep.mubr.bf16.mxu0 0
  %2165 = vmatmul.mubr.bf16.gmra.mrb[0].mxu0 %v514
  %v2166 = vpop.f32.mrb[0].mxu0
  %v2167 = vadd.f32 %v1142, %v2166
  %v2168 = vpop.f32.mrb[0].mxu0
  %v2169 = vadd.f32 %v1144, %v2168
  %v2170 = vpop.f32.mrb[0].mxu0
  %v2171 = vadd.f32 %v1146, %v2170
  %v2172 = vpop.f32.mrb[0].mxu0
  %v2173 = vadd.f32 %v1148, %v2172
  %2174 = vmatprep.mubr.bf16.mxu0 0
  %2175 = vmatmul.mubr.bf16.gmra.mrb[0].mxu0 %v517
  %v2176 = vpop.f32.mrb[0].mxu0
  %v2177 = vadd.f32 %v1152, %v2176
  %v2178 = vpop.f32.mrb[0].mxu0
  %v2179 = vadd.f32 %v1154, %v2178
  %v2180 = vpop.f32.mrb[0].mxu0
  %v2181 = vadd.f32 %v1156, %v2180
  %v2182 = vpop.f32.mrb[0].mxu0
  %v2183 = vadd.f32 %v1158, %v2182
  %2184 = vmatprep.mubr.bf16.mxu0 0
  %2185 = vmatmul.mubr.bf16.gmra.mrb[0].mxu0 %v520
  %v2186 = vpop.f32.mrb[0].mxu0
  %v2187 = vadd.f32 %v1162, %v2186
  %v2188 = vpop.f32.mrb[0].mxu0
  %v2189 = vadd.f32 %v1164, %v2188
  %v2190 = vpop.f32.mrb[0].mxu0
  %v2191 = vadd.f32 %v1166, %v2190
  %v2192 = vpop.f32.mrb[0].mxu0
  %v2193 = vadd.f32 %v1168, %v2192
  %2194 = vmatprep.mubr.bf16.mxu0 0
  %2195 = vmatmul.mubr.bf16.gmra.mrb[0].mxu0 %v523
  %v2196 = vpop.f32.mrb[0].mxu0
  %v2197 = vadd.f32 %v1172, %v2196
  %v2198 = vpop.f32.mrb[0].mxu0
  %v2199 = vadd.f32 %v1174, %v2198
  %v2200 = vpop.f32.mrb[0].mxu0
  %v2201 = vadd.f32 %v1176, %v2200
  %v2202 = vpop.f32.mrb[0].mxu0
  %v2203 = vadd.f32 %v1178, %v2202
  %2204 = vmatprep.mubr.bf16.mxu0 0
  %2205 = vmatmul.mubr.bf16.gmra.mrb[0].mxu0 %v526
  %v2206 = vpop.f32.mrb[0].mxu0
  %v2207 = vadd.f32 %v1182, %v2206
  %v2208 = vpop.f32.mrb[0].mxu0
  %v2209 = vadd.f32 %v1184, %v2208
  %v2210 = vpop.f32.mrb[0].mxu0
  %v2211 = vadd.f32 %v1186, %v2210
  %v2212 = vpop.f32.mrb[0].mxu0
  %v2213 = vadd.f32 %v1188, %v2212
  %2214 = vmatprep.mubr.bf16.mxu0 0
  %2215 = vmatmul.mubr.bf16.gmra.mrb[0].mxu0 %v529
  %v2216 = vpop.f32.mrb[0].mxu0
  %v2217 = vadd.f32 %v1192, %v2216
  %v2218 = vpop.f32.mrb[0].mxu0
  %v2219 = vadd.f32 %v1194, %v2218
  %v2220 = vpop.f32.mrb[0].mxu0
  %v2221 = vadd.f32 %v1196, %v2220
  %v2222 = vpop.f32.mrb[0].mxu0
  %v2223 = vadd.f32 %v1198, %v2222
  %2224 = vmatprep.mubr.bf16.mxu0 0
  %2225 = vmatmul.mubr.bf16.gmra.mrb[0].mxu0 %v532
  %v2226 = vpop.f32.mrb[0].mxu0
  %v2227 = vadd.f32 %v1202, %v2226
  %v2228 = vpop.f32.mrb[0].mxu0
  %v2229 = vadd.f32 %v1204, %v2228
  %v2230 = vpop.f32.mrb[0].mxu0
  %v2231 = vadd.f32 %v1206, %v2230
  %v2232 = vpop.f32.mrb[0].mxu0
  %v2233 = vadd.f32 %v1208, %v2232
  %2234 = vmatprep.mubr.bf16.mxu0 0
  %2235 = vmatmul.mubr.bf16.gmra.mrb[0].mxu0 %v535
  %v2236 = vpop.f32.mrb[0].mxu0
  %v2237 = vadd.f32 %v1212, %v2236
  %v2238 = vpop.f32.mrb[0].mxu0
  %v2239 = vadd.f32 %v1214, %v2238
  %v2240 = vpop.f32.mrb[0].mxu0
  %v2241 = vadd.f32 %v1216, %v2240
  %v2242 = vpop.f32.mrb[0].mxu0
  %v2243 = vadd.f32 %v1218, %v2242
  %2244 = vmatprep.mubr.bf16.mxu0 0
  %2245 = vmatmul.mubr.bf16.gmra.mrb[0].mxu0 %v538
  %v2246 = vpop.f32.mrb[0].mxu0
  %v2247 = vadd.f32 %v1222, %v2246
  %v2248 = vpop.f32.mrb[0].mxu0
  %v2249 = vadd.f32 %v1224, %v2248
  %v2250 = vpop.f32.mrb[0].mxu0
  %v2251 = vadd.f32 %v1226, %v2250
  %v2252 = vpop.f32.mrb[0].mxu0
  %v2253 = vadd.f32 %v1228, %v2252
  %2254 = vmatprep.mubr.bf16.mxu0 0
  %2255 = vmatmul.mubr.bf16.gmra.mrb[0].mxu0 %v541
  %v2256 = vpop.f32.mrb[0].mxu0
  %v2257 = vadd.f32 %v1232, %v2256
  %v2258 = vpop.f32.mrb[0].mxu0
  %v2259 = vadd.f32 %v1234, %v2258
  %v2260 = vpop.f32.mrb[0].mxu0
  %v2261 = vadd.f32 %v1236, %v2260
  %v2262 = vpop.f32.mrb[0].mxu0
  %v2263 = vadd.f32 %v1238, %v2262
  %2264 = vmatprep.mubr.bf16.mxu0 0
  %2265 = vmatmul.mubr.bf16.gmra.mrb[0].mxu0 %v544
  %v2266 = vpop.f32.mrb[0].mxu0
  %v2267 = vadd.f32 %v1242, %v2266
  %v2268 = vpop.f32.mrb[0].mxu0
  %v2269 = vadd.f32 %v1244, %v2268
  %v2270 = vpop.f32.mrb[0].mxu0
  %v2271 = vadd.f32 %v1246, %v2270
  %v2272 = vpop.f32.mrb[0].mxu0
  %v2273 = vadd.f32 %v1248, %v2272
  %2274 = vmatprep.mubr.bf16.mxu0 0
  %2275 = vmatmul.mubr.bf16.gmra.mrb[0].mxu0 %v547
  %v2276 = vpop.f32.mrb[0].mxu0
  %v2277 = vadd.f32 %v1252, %v2276
  %v2278 = vpop.f32.mrb[0].mxu0
  %v2279 = vadd.f32 %v1254, %v2278
  %v2280 = vpop.f32.mrb[0].mxu0
  %v2281 = vadd.f32 %v1256, %v2280
  %v2282 = vpop.f32.mrb[0].mxu0
  %v2283 = vadd.f32 %v1258, %v2282
  %2284 = vmatprep.mubr.bf16.mxu0 0
  %2285 = vmatmul.mubr.bf16.gmra.mrb[0].mxu0 %v550
  %v2286 = vpop.f32.mrb[0].mxu0
  %v2287 = vadd.f32 %v1262, %v2286
  %v2288 = vpop.f32.mrb[0].mxu0
  %v2289 = vadd.f32 %v1264, %v2288
  %v2290 = vpop.f32.mrb[0].mxu0
  %v2291 = vadd.f32 %v1266, %v2290
  %v2292 = vpop.f32.mrb[0].mxu0
  %v2293 = vadd.f32 %v1268, %v2292
  %2294 = vmatprep.mubr.bf16.mxu0 0
  %2295 = vmatmul.mubr.bf16.gmra.mrb[0].mxu0 %v553
  %v2296 = vpop.f32.mrb[0].mxu0
  %v2297 = vadd.f32 %v1272, %v2296
  %v2298 = vpop.f32.mrb[0].mxu0
  %v2299 = vadd.f32 %v1274, %v2298
  %v2300 = vpop.f32.mrb[0].mxu0
  %v2301 = vadd.f32 %v1276, %v2300
  %v2302 = vpop.f32.mrb[0].mxu0
  %v2303 = vadd.f32 %v1278, %v2302
  %2304 = vmatprep.mubr.bf16.mxu0 0
  %2305 = vmatmul.mubr.bf16.gmra.mrb[0].mxu0 %v556
  %v2306 = vpop.f32.mrb[0].mxu0
  %v2307 = vadd.f32 %v1282, %v2306
  %v2308 = vpop.f32.mrb[0].mxu0
  %v2309 = vadd.f32 %v1284, %v2308
  %v2310 = vpop.f32.mrb[0].mxu0
  %v2311 = vadd.f32 %v1286, %v2310
  %v2312 = vpop.f32.mrb[0].mxu0
  %v2313 = vadd.f32 %v1288, %v2312
  %2314 = vmatprep.mubr.bf16.mxu0 0
  %2315 = vmatmul.mubr.bf16.gmra.mrb[0].mxu0 %v559
  %v2316 = vpop.f32.mrb[0].mxu0
  %v2317 = vadd.f32 %v1292, %v2316
  %v2318 = vpop.f32.mrb[0].mxu0
  %v2319 = vadd.f32 %v1294, %v2318
  %v2320 = vpop.f32.mrb[0].mxu0
  %v2321 = vadd.f32 %v1296, %v2320
  %v2322 = vpop.f32.mrb[0].mxu0
  %v2323 = vadd.f32 %v1298, %v2322
  %2324 = vmatprep.mubr.bf16.mxu0 0
  %2325 = vmatmul.mubr.bf16.gmra.mrb[0].mxu0 %v562
  %v2326 = vpop.f32.mrb[0].mxu0
  %v2327 = vadd.f32 %v1302, %v2326
  %v2328 = vpop.f32.mrb[0].mxu0
  %v2329 = vadd.f32 %v1304, %v2328
  %v2330 = vpop.f32.mrb[0].mxu0
  %v2331 = vadd.f32 %v1306, %v2330
  %v2332 = vpop.f32.mrb[0].mxu0
  %v2333 = vadd.f32 %v1308, %v2332
  %2334 = vmatprep.mubr.bf16.mxu0 0
  %2335 = vmatmul.mubr.bf16.gmra.mrb[0].mxu0 %v565
  %v2336 = vpop.f32.mrb[0].mxu0
  %v2337 = vadd.f32 %v1312, %v2336
  %v2338 = vpop.f32.mrb[0].mxu0
  %v2339 = vadd.f32 %v1314, %v2338
  %v2340 = vpop.f32.mrb[0].mxu0
  %v2341 = vadd.f32 %v1316, %v2340
  %v2342 = vpop.f32.mrb[0].mxu0
  %v2343 = vadd.f32 %v1318, %v2342
  %2344 = vmatprep.mubr.bf16.mxu0 0
  %2345 = vmatmul.mubr.bf16.gmra.mrb[0].mxu0 %v568
  %v2346 = vpop.f32.mrb[0].mxu0
  %v2347 = vadd.f32 %v1322, %v2346
  %v2348 = vpop.f32.mrb[0].mxu0
  %v2349 = vadd.f32 %v1324, %v2348
  %v2350 = vpop.f32.mrb[0].mxu0
  %v2351 = vadd.f32 %v1326, %v2350
  %v2352 = vpop.f32.mrb[0].mxu0
  %v2353 = vadd.f32 %v1328, %v2352
  %2354 = vmatprep.mubr.bf16.mxu0 0
  %2355 = vmatmul.mubr.bf16.gmra.mrb[0].mxu0 %v571
  %v2356 = vpop.f32.mrb[0].mxu0
  %v2357 = vadd.f32 %v1332, %v2356
  %v2358 = vpop.f32.mrb[0].mxu0
  %v2359 = vadd.f32 %v1334, %v2358
  %v2360 = vpop.f32.mrb[0].mxu0
  %v2361 = vadd.f32 %v1336, %v2360
  %v2362 = vpop.f32.mrb[0].mxu0
  %v2363 = vadd.f32 %v1338, %v2362
  %2364 = vmatprep.mubr.bf16.mxu0 0
  %2365 = vmatmul.mubr.bf16.gmra.mrb[0].mxu0 %v574
  %v2366 = vpop.f32.mrb[0].mxu0
  %v2367 = vadd.f32 %v1342, %v2366
  %v2368 = vpop.f32.mrb[0].mxu0
  %v2369 = vadd.f32 %v1344, %v2368
  %v2370 = vpop.f32.mrb[0].mxu0
  %v2371 = vadd.f32 %v1346, %v2370
  %v2372 = vpop.f32.mrb[0].mxu0
  %v2373 = vadd.f32 %v1348, %v2372
  %2374 = vmatprep.mubr.bf16.mxu0 0
  %2375 = vmatmul.mubr.bf16.gmra.mrb[0].mxu0 %v577
  %v2376 = vpop.f32.mrb[0].mxu0
  %v2377 = vadd.f32 %v1352, %v2376
  %v2378 = vpop.f32.mrb[0].mxu0
  %v2379 = vadd.f32 %v1354, %v2378
  %v2380 = vpop.f32.mrb[0].mxu0
  %v2381 = vadd.f32 %v1356, %v2380
  %v2382 = vpop.f32.mrb[0].mxu0
  %v2383 = vadd.f32 %v1358, %v2382
  %2384 = vmatprep.mubr.bf16.mxu0 0
  %2385 = vmatmul.mubr.bf16.gmra.mrb[0].mxu0 %v580
  %v2386 = vpop.f32.mrb[0].mxu0
  %v2387 = vadd.f32 %v1362, %v2386
  %v2388 = vpop.f32.mrb[0].mxu0
  %v2389 = vadd.f32 %v1364, %v2388
  %v2390 = vpop.f32.mrb[0].mxu0
  %v2391 = vadd.f32 %v1366, %v2390
  %v2392 = vpop.f32.mrb[0].mxu0
  %v2393 = vadd.f32 %v1368, %v2392
  %2394 = vmatprep.mubr.bf16.mxu0 0
  %2395 = vmatmul.mubr.bf16.gmra.mrb[0].mxu0 %v583
  %v2396 = vpop.f32.mrb[0].mxu0
  %v2397 = vadd.f32 %v1372, %v2396
  %v2398 = vpop.f32.mrb[0].mxu0
  %v2399 = vadd.f32 %v1374, %v2398
  %v2400 = vpop.f32.mrb[0].mxu0
  %v2401 = vadd.f32 %v1376, %v2400
  %v2402 = vpop.f32.mrb[0].mxu0
  %v2403 = vadd.f32 %v1378, %v2402
  %2404 = vmatprep.mubr.bf16.mxu0 0
  %2405 = vmatmul.mubr.bf16.gmra.mrb[0].mxu0 %v586
  %v2406 = vpop.f32.mrb[0].mxu0
  %v2407 = vadd.f32 %v1382, %v2406
  %v2408 = vpop.f32.mrb[0].mxu0
  %v2409 = vadd.f32 %v1384, %v2408
  %v2410 = vpop.f32.mrb[0].mxu0
  %v2411 = vadd.f32 %v1386, %v2410
  %v2412 = vpop.f32.mrb[0].mxu0
  %v2413 = vadd.f32 %v1388, %v2412
  %2414 = vmatprep.mubr.bf16.mxu0 0
  %2415 = vmatmul.mubr.bf16.gmra.mrb[0].mxu0 %v589
  %v2416 = vpop.f32.mrb[0].mxu0
  %v2417 = vadd.f32 %v1392, %v2416
  %v2418 = vpop.f32.mrb[0].mxu0
  %v2419 = vadd.f32 %v1394, %v2418
  %v2420 = vpop.f32.mrb[0].mxu0
  %v2421 = vadd.f32 %v1396, %v2420
  %v2422 = vpop.f32.mrb[0].mxu0
  %v2423 = vadd.f32 %v1398, %v2422
  %2424 = vmatprep.mubr.bf16.mxu0 0
  %2425 = vmatmul.mubr.bf16.gmra.mrb[0].mxu0 %v592
  %v2426 = vpop.f32.mrb[0].mxu0
  %v2427 = vadd.f32 %v1402, %v2426
  %v2428 = vpop.f32.mrb[0].mxu0
  %v2429 = vadd.f32 %v1404, %v2428
  %v2430 = vpop.f32.mrb[0].mxu0
  %v2431 = vadd.f32 %v1406, %v2430
  %v2432 = vpop.f32.mrb[0].mxu0
  %v2433 = vadd.f32 %v1408, %v2432
  %2434 = vmatprep.mubr.bf16.mxu0 0
  %2435 = vmatmul.mubr.bf16.gmra.mrb[0].mxu0 %v595
  %v2436 = vpop.f32.mrb[0].mxu0
  %v2437 = vadd.f32 %v1412, %v2436
  %v2438 = vpop.f32.mrb[0].mxu0
  %v2439 = vadd.f32 %v1414, %v2438
  %v2440 = vpop.f32.mrb[0].mxu0
  %v2441 = vadd.f32 %v1416, %v2440
  %v2442 = vpop.f32.mrb[0].mxu0
  %v2443 = vadd.f32 %v1418, %v2442
  %2444 = vmatprep.mubr.bf16.mxu0 0
  %2445 = vmatmul.mubr.bf16.gmra.mrb[0].mxu0 %v598
  %v2446 = vpop.f32.mrb[0].mxu0
  %v2447 = vadd.f32 %v1422, %v2446
  %v2448 = vpop.f32.mrb[0].mxu0
  %v2449 = vadd.f32 %v1424, %v2448
  %v2450 = vpop.f32.mrb[0].mxu0
  %v2451 = vadd.f32 %v1426, %v2450
  %v2452 = vpop.f32.mrb[0].mxu0
  %v2453 = vadd.f32 %v1428, %v2452
  %2454 = vmatprep.mubr.bf16.mxu0 0
  %2455 = vmatmul.mubr.bf16.gmra.mrb[0].mxu0 %v601
  %v2456 = vpop.f32.mrb[0].mxu0
  %v2457 = vadd.f32 %v1432, %v2456
  %v2458 = vpop.f32.mrb[0].mxu0
  %v2459 = vadd.f32 %v1434, %v2458
  %v2460 = vpop.f32.mrb[0].mxu0
  %v2461 = vadd.f32 %v1436, %v2460
  %v2462 = vpop.f32.mrb[0].mxu0
  %v2463 = vadd.f32 %v1438, %v2462
  %2464 = vmatprep.mubr.bf16.mxu0 0
  %2465 = vmatmul.mubr.bf16.gmra.mrb[0].mxu0 %v604
  %v2466 = vpop.f32.mrb[0].mxu0
  %v2467 = vadd.f32 %v1442, %v2466
  %v2468 = vpop.f32.mrb[0].mxu0
  %v2469 = vadd.f32 %v1444, %v2468
  %v2470 = vpop.f32.mrb[0].mxu0
  %v2471 = vadd.f32 %v1446, %v2470
  %v2472 = vpop.f32.mrb[0].mxu0
  %v2473 = vadd.f32 %v1448, %v2472
  %2474 = vmatprep.mubr.bf16.mxu0 0
  %2475 = vmatmul.mubr.bf16.gmra.mrb[0].mxu0 %v607
  %v2476 = vpop.f32.mrb[0].mxu0
  %v2477 = vadd.f32 %v1452, %v2476
  %v2478 = vpop.f32.mrb[0].mxu0
  %v2479 = vadd.f32 %v1454, %v2478
  %v2480 = vpop.f32.mrb[0].mxu0
  %v2481 = vadd.f32 %v1456, %v2480
  %v2482 = vpop.f32.mrb[0].mxu0
  %v2483 = vadd.f32 %v1458, %v2482
  %2484 = vmatprep.mubr.bf16.mxu0 0
  %2485 = vmatmul.mubr.bf16.gmra.mrb[0].mxu0 %v610
  %v2486 = vpop.f32.mrb[0].mxu0
  %v2487 = vadd.f32 %v1462, %v2486
  %v2488 = vpop.f32.mrb[0].mxu0
  %v2489 = vadd.f32 %v1464, %v2488
  %v2490 = vpop.f32.mrb[0].mxu0
  %v2491 = vadd.f32 %v1466, %v2490
  %v2492 = vpop.f32.mrb[0].mxu0
  %v2493 = vadd.f32 %v1468, %v2492
  %2494 = vmatprep.mubr.bf16.mxu0 0
  %2495 = vmatmul.mubr.bf16.gmra.mrb[0].mxu0 %v613
  %v2496 = vpop.f32.mrb[0].mxu0
  %v2497 = vadd.f32 %v1472, %v2496
  %v2498 = vpop.f32.mrb[0].mxu0
  %v2499 = vadd.f32 %v1474, %v2498
  %v2500 = vpop.f32.mrb[0].mxu0
  %v2501 = vadd.f32 %v1476, %v2500
  %v2502 = vpop.f32.mrb[0].mxu0
  %v2503 = vadd.f32 %v1478, %v2502
  %2504 = vmatprep.mubr.bf16.mxu0 0
  %2505 = vmatmul.mubr.bf16.gmra.mrb[0].mxu0 %v616
  %v2506 = vpop.f32.mrb[0].mxu0
  %v2507 = vadd.f32 %v1482, %v2506
  %v2508 = vpop.f32.mrb[0].mxu0
  %v2509 = vadd.f32 %v1484, %v2508
  %v2510 = vpop.f32.mrb[0].mxu0
  %v2511 = vadd.f32 %v1486, %v2510
  %v2512 = vpop.f32.mrb[0].mxu0
  %v2513 = vadd.f32 %v1488, %v2512
  %2514 = vmatprep.mubr.bf16.mxu0 0
  %2515 = vmatmul.mubr.bf16.gmra.mrb[0].mxu0 %v619
  %v2516 = vpop.f32.mrb[0].mxu0
  %v2517 = vadd.f32 %v1492, %v2516
  %v2518 = vpop.f32.mrb[0].mxu0
  %v2519 = vadd.f32 %v1494, %v2518
  %v2520 = vpop.f32.mrb[0].mxu0
  %v2521 = vadd.f32 %v1496, %v2520
  %v2522 = vpop.f32.mrb[0].mxu0
  %v2523 = vadd.f32 %v1498, %v2522
  %2524 = vmatprep.mubr.bf16.mxu0 0
  %2525 = vmatmul.mubr.bf16.gmra.mrb[0].mxu0 %v622
  %v2526 = vpop.f32.mrb[0].mxu0
  %v2527 = vadd.f32 %v1502, %v2526
  %v2528 = vpop.f32.mrb[0].mxu0
  %v2529 = vadd.f32 %v1504, %v2528
  %v2530 = vpop.f32.mrb[0].mxu0
  %v2531 = vadd.f32 %v1506, %v2530
  %v2532 = vpop.f32.mrb[0].mxu0
  %v2533 = vadd.f32 %v1508, %v2532
  %2534 = vmatprep.mubr.bf16.mxu0 0
  %2535 = vmatmul.mubr.bf16.gmra.mrb[0].mxu0 %v625
  %v2536 = vpop.f32.mrb[0].mxu0
  %v2537 = vadd.f32 %v1512, %v2536
  %v2538 = vpop.f32.mrb[0].mxu0
  %v2539 = vadd.f32 %v1514, %v2538
  %v2540 = vpop.f32.mrb[0].mxu0
  %v2541 = vadd.f32 %v1516, %v2540
  %v2542 = vpop.f32.mrb[0].mxu0
  %v2543 = vadd.f32 %v1518, %v2542
  %2544 = vmatprep.mubr.bf16.mxu0 0
  %2545 = vmatmul.mubr.bf16.gmra.mrb[0].mxu0 %v628
  %v2546 = vpop.f32.mrb[0].mxu0
  %v2547 = vadd.f32 %v1522, %v2546
  %v2548 = vpop.f32.mrb[0].mxu0
  %v2549 = vadd.f32 %v1524, %v2548
  %v2550 = vpop.f32.mrb[0].mxu0
  %v2551 = vadd.f32 %v1526, %v2550
  %v2552 = vpop.f32.mrb[0].mxu0
  %v2553 = vadd.f32 %v1528, %v2552
  %2554 = vmatprep.mubr.bf16.mxu0 0
  %2555 = vmatmul.mubr.bf16.gmra.mrb[0].mxu0 %v631
  %v2556 = vpop.f32.mrb[0].mxu0
  %v2557 = vadd.f32 %v1532, %v2556
  %v2558 = vpop.f32.mrb[0].mxu0
  %v2559 = vadd.f32 %v1534, %v2558
  %v2560 = vpop.f32.mrb[0].mxu0
  %v2561 = vadd.f32 %v1536, %v2560
  %v2562 = vpop.f32.mrb[0].mxu0
  %v2563 = vadd.f32 %v1538, %v2562
  %2564 = vmatprep.mubr.bf16.mxu0 0
  %2565 = vmatmul.mubr.bf16.gmra.mrb[0].mxu0 %v634
  %v2566 = vpop.f32.mrb[0].mxu0
  %v2567 = vadd.f32 %v1542, %v2566
  %v2568 = vpop.f32.mrb[0].mxu0
  %v2569 = vadd.f32 %v1544, %v2568
  %v2570 = vpop.f32.mrb[0].mxu0
  %v2571 = vadd.f32 %v1546, %v2570
  %v2572 = vpop.f32.mrb[0].mxu0
  %v2573 = vadd.f32 %v1548, %v2572
  %2574 = vmatprep.mubr.bf16.mxu0 0
  %2575 = vmatmul.mubr.bf16.gmra.mrb[0].mxu0 %v637
  %v2576 = vpop.f32.mrb[0].mxu0
  %v2577 = vadd.f32 %v1552, %v2576
  %v2578 = vpop.f32.mrb[0].mxu0
  %v2579 = vadd.f32 %v1554, %v2578
  %v2580 = vpop.f32.mrb[0].mxu0
  %v2581 = vadd.f32 %v1556, %v2580
  %v2582 = vpop.f32.mrb[0].mxu0
  %v2583 = vadd.f32 %v1558, %v2582
  %2584 = vmatprep.mubr.bf16.mxu0 0
  %2585 = vmatmul.mubr.bf16.gmra.mrb[0].mxu0 %v640
  %v2586 = vpop.f32.mrb[0].mxu0
  %v2587 = vadd.f32 %v1562, %v2586
  %v2588 = vpop.f32.mrb[0].mxu0
  %v2589 = vadd.f32 %v1564, %v2588
  %v2590 = vpop.f32.mrb[0].mxu0
  %v2591 = vadd.f32 %v1566, %v2590
  %v2592 = vpop.f32.mrb[0].mxu0
  %v2593 = vadd.f32 %v1568, %v2592
  %2594 = vmatprep.mubr.bf16.mxu0 0
  %2595 = vmatmul.mubr.bf16.gmra.mrb[0].mxu0 %v643
  %v2596 = vpop.f32.mrb[0].mxu0
  %v2597 = vadd.f32 %v1572, %v2596
  %v2598 = vpop.f32.mrb[0].mxu0
  %v2599 = vadd.f32 %v1574, %v2598
  %v2600 = vpop.f32.mrb[0].mxu0
  %v2601 = vadd.f32 %v1576, %v2600
  %v2602 = vpop.f32.mrb[0].mxu0
  %v2603 = vadd.f32 %v1578, %v2602
  %2604 = vmatprep.mubr.bf16.mxu0 0
  %2605 = vmatmul.mubr.bf16.gmra.mrb[0].mxu0 %v646
  %v2606 = vpop.f32.mrb[0].mxu0
  %v2607 = vadd.f32 %v1582, %v2606
  %v2608 = vpop.f32.mrb[0].mxu0
  %v2609 = vadd.f32 %v1584, %v2608
  %v2610 = vpop.f32.mrb[0].mxu0
  %v2611 = vadd.f32 %v1586, %v2610
  %v2612 = vpop.f32.mrb[0].mxu0
  %v2613 = vadd.f32 %v1588, %v2612
  %2614 = vmatprep.mubr.bf16.mxu0 0
  %2615 = vmatmul.mubr.bf16.gmra.mrb[0].mxu0 %v649
  %v2616 = vpop.f32.mrb[0].mxu0
  %v2617 = vadd.f32 %v1592, %v2616
  %v2618 = vpop.f32.mrb[0].mxu0
  %v2619 = vadd.f32 %v1594, %v2618
  %v2620 = vpop.f32.mrb[0].mxu0
  %v2621 = vadd.f32 %v1596, %v2620
  %v2622 = vpop.f32.mrb[0].mxu0
  %v2623 = vadd.f32 %v1598, %v2622
  %2624 = vmatprep.mubr.bf16.mxu0 0
  %2625 = vmatmul.mubr.bf16.gmra.mrb[0].mxu0 %v652
  %v2626 = vpop.f32.mrb[0].mxu0
  %v2627 = vadd.f32 %v1602, %v2626
  %v2628 = vpop.f32.mrb[0].mxu0
  %v2629 = vadd.f32 %v1604, %v2628
  %v2630 = vpop.f32.mrb[0].mxu0
  %v2631 = vadd.f32 %v1606, %v2630
  %v2632 = vpop.f32.mrb[0].mxu0
  %v2633 = vadd.f32 %v1608, %v2632
  %2634 = vmatprep.mubr.bf16.mxu0 0
  %2635 = vmatmul.mubr.bf16.gmra.mrb[0].mxu0 %v655
  %v2636 = vpop.f32.mrb[0].mxu0
  %v2637 = vadd.f32 %v1612, %v2636
  %v2638 = vpop.f32.mrb[0].mxu0
  %v2639 = vadd.f32 %v1614, %v2638
  %v2640 = vpop.f32.mrb[0].mxu0
  %v2641 = vadd.f32 %v1616, %v2640
  %v2642 = vpop.f32.mrb[0].mxu0
  %v2643 = vadd.f32 %v1618, %v2642
  %2644 = vmatprep.mubr.bf16.mxu0 0
  %2645 = vmatmul.mubr.bf16.gmra.mrb[0].mxu0 %v658
  %v2646 = vpop.f32.mrb[0].mxu0
  %v2647 = vadd.f32 %v1622, %v2646
  %v2648 = vpop.f32.mrb[0].mxu0
  %v2649 = vadd.f32 %v1624, %v2648
  %v2650 = vpop.f32.mrb[0].mxu0
  %v2651 = vadd.f32 %v1626, %v2650
  %v2652 = vpop.f32.mrb[0].mxu0
  %v2653 = vadd.f32 %v1628, %v2652
  %2654 = vmatprep.mubr.bf16.mxu0 0
  %2655 = vmatmul.mubr.bf16.gmra.mrb[0].mxu0 %v661
  %v2656 = vpop.f32.mrb[0].mxu0
  %v2657 = vadd.f32 %v1632, %v2656
  %v2658 = vpop.f32.mrb[0].mxu0
  %v2659 = vadd.f32 %v1634, %v2658
  %v2660 = vpop.f32.mrb[0].mxu0
  %v2661 = vadd.f32 %v1636, %v2660
  %v2662 = vpop.f32.mrb[0].mxu0
  %v2663 = vadd.f32 %v1638, %v2662
  %2664 = vmatprep.mubr.bf16.mxu0 0
  %2665 = vmatmul.mubr.bf16.gmra.mrb[0].mxu0 %v664
  %v2666 = vpop.f32.mrb[0].mxu0
  %v2667 = vadd.f32 %v1642, %v2666
  %v2668 = vpop.f32.mrb[0].mxu0
  %v2669 = vadd.f32 %v1644, %v2668
  %v2670 = vpop.f32.mrb[0].mxu0
  %v2671 = vadd.f32 %v1646, %v2670
  %v2672 = vpop.f32.mrb[0].mxu0
  %v2673 = vadd.f32 %v1648, %v2672
  %2674 = vmatprep.mubr.bf16.mxu0 0
  %2675 = vmatmul.mubr.bf16.gmra.mrb[0].mxu0 %v667
  %v2676 = vpop.f32.mrb[0].mxu0
  %v2677 = vadd.f32 %v1652, %v2676
  %v2678 = vpop.f32.mrb[0].mxu0
  %v2679 = vadd.f32 %v1654, %v2678
  %v2680 = vpop.f32.mrb[0].mxu0
  %v2681 = vadd.f32 %v1656, %v2680
  %v2682 = vpop.f32.mrb[0].mxu0
  %v2683 = vadd.f32 %v1658, %v2682
  %2684 = vmatprep.mubr.bf16.mxu0 0
  %2685 = vmatmul.mubr.bf16.gmra.mrb[0].mxu0 %v670
  %v2686 = vpop.f32.mrb[0].mxu0
  %v2687 = vadd.f32 %v1662, %v2686
  %v2688 = vpop.f32.mrb[0].mxu0
  %v2689 = vadd.f32 %v1664, %v2688
  %v2690 = vpop.f32.mrb[0].mxu0
  %v2691 = vadd.f32 %v1666, %v2690
  %v2692 = vpop.f32.mrb[0].mxu0
  %v2693 = vadd.f32 %v1668, %v2692
  %2694 = vmatprep.mubr.bf16.mxu0 0
  %2695 = vmatmul.mubr.bf16.gmra.mrb[0].mxu0 %v673
  %v2696 = vpop.f32.mrb[0].mxu0
  %v2697 = vadd.f32 %v1672, %v2696
  %v2698 = vpop.f32.mrb[0].mxu0
  %v2699 = vadd.f32 %v1674, %v2698
  %v2700 = vpop.f32.mrb[0].mxu0
  %v2701 = vadd.f32 %v1676, %v2700
  %v2702 = vpop.f32.mrb[0].mxu0
  %v2703 = vadd.f32 %v1678, %v2702
  %2704 = vdwg.mxu0
  %s2705 = scalar_lea.vmem %s1, 64
  %v2706 = vld [vmem:[%s2705] sm:$0xff]
  %v2707 = vld [vmem:[%s2705 + $0x8] sm:$0xff]
  %v2708 = vld [vmem:[%s2705 + $0x10] sm:$0xff]
  %v2709 = vld [vmem:[%s2705 + $0x18] sm:$0xff]
  %v2714 = vunpack.c.l.b16 %v2706
  %v2715 = vunpack.c.h.b16 %v2706
  %v2716 = vunpack.c.l.b16 %v2707
  %v2717 = vunpack.c.h.b16 %v2707
  %v2718 = vunpack.c.l.b16 %v2708
  %v2719 = vunpack.c.h.b16 %v2708
  %v2720 = vunpack.c.l.b16 %v2709
  %v2721 = vunpack.c.h.b16 %v2709
  %v2722 = vpack.c.b16 %v2716, %v2714
  %v2723 = vpack.c.b16 %v2717, %v2715
  %v2724 = vpack.c.b16 %v2720, %v2718
  %v2725 = vpack.c.b16 %v2721, %v2719
  %v2731 = vsel %vm398, %v357, 0
  %v2734 = vsel %vm398, %v358, 0
  %v2737 = vsel %vm398, %v359, 0
  %v2740 = vsel %vm398, %v360, 0
  %2742 = vmatprep.subr.bf16.mxu0 %v2723
  %2743 = vmatpush1.bf16.msra.mxu0 %v2722
  %2744 = vmatprep.subr.bf16.mxu0 %v2725
  %2745 = vmatpush1.bf16.msra.mxu0 %v2724
  %2746 = vmatprep.subr.bf16.mxu0 0
  %2747 = vmatpush1.bf16.msra.mxu0 0
  %2748 = vmatprep.subr.bf16.mxu0 0
  %2749 = vmatpush1.bf16.msra.mxu0 0
  %2750 = vmatprep.subr.bf16.mxu0 0
  %2751 = vmatpush1.bf16.msra.mxu0 0
  %2752 = vmatprep.subr.bf16.mxu0 0
  %2753 = vmatpush1.bf16.msra.mxu0 0
  %2754 = vmatprep.subr.bf16.mxu0 0
  %2755 = vmatpush1.bf16.msra.mxu0 0
  %2756 = vmatprep.subr.bf16.mxu0 0
  %2757 = vmatpush1.bf16.msra.mxu0 0
  %2758 = vmatprep.subr.bf16.mxu0 0
  %2759 = vmatpush1.bf16.msra.mxu0 0
  %2760 = vmatprep.subr.bf16.mxu0 0
  %2761 = vmatpush1.bf16.msra.mxu0 0
  %2762 = vmatprep.subr.bf16.mxu0 0
  %2763 = vmatpush1.bf16.msra.mxu0 0
  %2764 = vmatprep.subr.bf16.mxu0 0
  %2765 = vmatpush1.bf16.msra.mxu0 0
  %2766 = vmatprep.subr.bf16.mxu0 0
  %2767 = vmatpush1.bf16.msra.mxu0 0
  %2768 = vmatprep.subr.bf16.mxu0 0
  %2769 = vmatpush1.bf16.msra.mxu0 0
  %2770 = vmatprep.subr.bf16.mxu0 0
  %2771 = vmatpush1.bf16.msra.mxu0 0
  %2772 = vmatprep.subr.bf16.mxu0 0
  %2773 = vmatpush1.bf16.msra.mxu0 0
  %2774 = vmatprep.mubr.bf16.mxu0 0
  %2775 = vmatmul.mubr.bf16.gmra.mrb[0].mxu0 %v412
  %v2776 = vpop.f32.mrb[0].mxu0
  %v2777 = vadd.f32 0.0, %v2776
  %v2778 = vpop.f32.mrb[0].mxu0
  %v2779 = vadd.f32 0.0, %v2778
  %v2780 = vpop.f32.mrb[0].mxu0
  %v2781 = vadd.f32 0.0, %v2780
  %v2782 = vpop.f32.mrb[0].mxu0
  %v2783 = vadd.f32 0.0, %v2782
  %2784 = vmatprep.mubr.bf16.mxu0 0
  %2785 = vmatmul.mubr.bf16.gmra.mrb[0].mxu0 %v415
  %v2786 = vpop.f32.mrb[0].mxu0
  %v2787 = vadd.f32 0.0, %v2786
  %v2788 = vpop.f32.mrb[0].mxu0
  %v2789 = vadd.f32 0.0, %v2788
  %v2790 = vpop.f32.mrb[0].mxu0
  %v2791 = vadd.f32 0.0, %v2790
  %v2792 = vpop.f32.mrb[0].mxu0
  %v2793 = vadd.f32 0.0, %v2792
  %2794 = vmatprep.mubr.bf16.mxu0 0
  %2795 = vmatmul.mubr.bf16.gmra.mrb[0].mxu0 %v418
  %v2796 = vpop.f32.mrb[0].mxu0
  %v2797 = vadd.f32 0.0, %v2796
  %v2798 = vpop.f32.mrb[0].mxu0
  %v2799 = vadd.f32 0.0, %v2798
  %v2800 = vpop.f32.mrb[0].mxu0
  %v2801 = vadd.f32 0.0, %v2800
  %v2802 = vpop.f32.mrb[0].mxu0
  %v2803 = vadd.f32 0.0, %v2802
  %2804 = vmatprep.mubr.bf16.mxu0 0
  %2805 = vmatmul.mubr.bf16.gmra.mrb[0].mxu0 %v421
  %v2806 = vpop.f32.mrb[0].mxu0
  %v2807 = vadd.f32 0.0, %v2806
  %v2808 = vpop.f32.mrb[0].mxu0
  %v2809 = vadd.f32 0.0, %v2808
  %v2810 = vpop.f32.mrb[0].mxu0
  %v2811 = vadd.f32 0.0, %v2810
  %v2812 = vpop.f32.mrb[0].mxu0
  %v2813 = vadd.f32 0.0, %v2812
  %2814 = vmatprep.mubr.bf16.mxu0 0
  %2815 = vmatmul.mubr.bf16.gmra.mrb[0].mxu0 %v424
  %v2816 = vpop.f32.mrb[0].mxu0
  %v2817 = vadd.f32 0.0, %v2816
  %v2818 = vpop.f32.mrb[0].mxu0
  %v2819 = vadd.f32 0.0, %v2818
  %v2820 = vpop.f32.mrb[0].mxu0
  %v2821 = vadd.f32 0.0, %v2820
  %v2822 = vpop.f32.mrb[0].mxu0
  %v2823 = vadd.f32 0.0, %v2822
  %2824 = vmatprep.mubr.bf16.mxu0 0
  %2825 = vmatmul.mubr.bf16.gmra.mrb[0].mxu0 %v427
  %v2826 = vpop.f32.mrb[0].mxu0
  %v2827 = vadd.f32 0.0, %v2826
  %v2828 = vpop.f32.mrb[0].mxu0
  %v2829 = vadd.f32 0.0, %v2828
  %v2830 = vpop.f32.mrb[0].mxu0
  %v2831 = vadd.f32 0.0, %v2830
  %v2832 = vpop.f32.mrb[0].mxu0
  %v2833 = vadd.f32 0.0, %v2832
  %2834 = vmatprep.mubr.bf16.mxu0 0
  %2835 = vmatmul.mubr.bf16.gmra.mrb[0].mxu0 %v430
  %v2836 = vpop.f32.mrb[0].mxu0
  %v2837 = vadd.f32 0.0, %v2836
  %v2838 = vpop.f32.mrb[0].mxu0
  %v2839 = vadd.f32 0.0, %v2838
  %v2840 = vpop.f32.mrb[0].mxu0
  %v2841 = vadd.f32 0.0, %v2840
  %v2842 = vpop.f32.mrb[0].mxu0
  %v2843 = vadd.f32 0.0, %v2842
  %2844 = vmatprep.mubr.bf16.mxu0 0
  %2845 = vmatmul.mubr.bf16.gmra.mrb[0].mxu0 %v433
  %v2846 = vpop.f32.mrb[0].mxu0
  %v2847 = vadd.f32 0.0, %v2846
  %v2848 = vpop.f32.mrb[0].mxu0
  %v2849 = vadd.f32 0.0, %v2848
  %v2850 = vpop.f32.mrb[0].mxu0
  %v2851 = vadd.f32 0.0, %v2850
  %v2852 = vpop.f32.mrb[0].mxu0
  %v2853 = vadd.f32 0.0, %v2852
  %2854 = vmatprep.mubr.bf16.mxu0 0
  %2855 = vmatmul.mubr.bf16.gmra.mrb[0].mxu0 %v436
  %v2856 = vpop.f32.mrb[0].mxu0
  %v2857 = vadd.f32 0.0, %v2856
  %v2858 = vpop.f32.mrb[0].mxu0
  %v2859 = vadd.f32 0.0, %v2858
  %v2860 = vpop.f32.mrb[0].mxu0
  %v2861 = vadd.f32 0.0, %v2860
  %v2862 = vpop.f32.mrb[0].mxu0
  %v2863 = vadd.f32 0.0, %v2862
  %2864 = vmatprep.mubr.bf16.mxu0 0
  %2865 = vmatmul.mubr.bf16.gmra.mrb[0].mxu0 %v439
  %v2866 = vpop.f32.mrb[0].mxu0
  %v2867 = vadd.f32 0.0, %v2866
  %v2868 = vpop.f32.mrb[0].mxu0
  %v2869 = vadd.f32 0.0, %v2868
  %v2870 = vpop.f32.mrb[0].mxu0
  %v2871 = vadd.f32 0.0, %v2870
  %v2872 = vpop.f32.mrb[0].mxu0
  %v2873 = vadd.f32 0.0, %v2872
  %2874 = vmatprep.mubr.bf16.mxu0 0
  %2875 = vmatmul.mubr.bf16.gmra.mrb[0].mxu0 %v442
  %v2876 = vpop.f32.mrb[0].mxu0
  %v2877 = vadd.f32 0.0, %v2876
  %v2878 = vpop.f32.mrb[0].mxu0
  %v2879 = vadd.f32 0.0, %v2878
  %v2880 = vpop.f32.mrb[0].mxu0
  %v2881 = vadd.f32 0.0, %v2880
  %v2882 = vpop.f32.mrb[0].mxu0
  %v2883 = vadd.f32 0.0, %v2882
  %2884 = vmatprep.mubr.bf16.mxu0 0
  %2885 = vmatmul.mubr.bf16.gmra.mrb[0].mxu0 %v445
  %v2886 = vpop.f32.mrb[0].mxu0
  %v2887 = vadd.f32 0.0, %v2886
  %v2888 = vpop.f32.mrb[0].mxu0
  %v2889 = vadd.f32 0.0, %v2888
  %v2890 = vpop.f32.mrb[0].mxu0
  %v2891 = vadd.f32 0.0, %v2890
  %v2892 = vpop.f32.mrb[0].mxu0
  %v2893 = vadd.f32 0.0, %v2892
  %2894 = vmatprep.mubr.bf16.mxu0 0
  %2895 = vmatmul.mubr.bf16.gmra.mrb[0].mxu0 %v448
  %v2896 = vpop.f32.mrb[0].mxu0
  %v2897 = vadd.f32 0.0, %v2896
  %v2898 = vpop.f32.mrb[0].mxu0
  %v2899 = vadd.f32 0.0, %v2898
  %v2900 = vpop.f32.mrb[0].mxu0
  %v2901 = vadd.f32 0.0, %v2900
  %v2902 = vpop.f32.mrb[0].mxu0
  %v2903 = vadd.f32 0.0, %v2902
  %2904 = vmatprep.mubr.bf16.mxu0 0
  %2905 = vmatmul.mubr.bf16.gmra.mrb[0].mxu0 %v451
  %v2906 = vpop.f32.mrb[0].mxu0
  %v2907 = vadd.f32 0.0, %v2906
  %v2908 = vpop.f32.mrb[0].mxu0
  %v2909 = vadd.f32 0.0, %v2908
  %v2910 = vpop.f32.mrb[0].mxu0
  %v2911 = vadd.f32 0.0, %v2910
  %v2912 = vpop.f32.mrb[0].mxu0
  %v2913 = vadd.f32 0.0, %v2912
  %2914 = vmatprep.mubr.bf16.mxu0 0
  %2915 = vmatmul.mubr.bf16.gmra.mrb[0].mxu0 %v454
  %v2916 = vpop.f32.mrb[0].mxu0
  %v2917 = vadd.f32 0.0, %v2916
  %v2918 = vpop.f32.mrb[0].mxu0
  %v2919 = vadd.f32 0.0, %v2918
  %v2920 = vpop.f32.mrb[0].mxu0
  %v2921 = vadd.f32 0.0, %v2920
  %v2922 = vpop.f32.mrb[0].mxu0
  %v2923 = vadd.f32 0.0, %v2922
  %2924 = vmatprep.mubr.bf16.mxu0 0
  %2925 = vmatmul.mubr.bf16.gmra.mrb[0].mxu0 %v457
  %v2926 = vpop.f32.mrb[0].mxu0
  %v2927 = vadd.f32 0.0, %v2926
  %v2928 = vpop.f32.mrb[0].mxu0
  %v2929 = vadd.f32 0.0, %v2928
  %v2930 = vpop.f32.mrb[0].mxu0
  %v2931 = vadd.f32 0.0, %v2930
  %v2932 = vpop.f32.mrb[0].mxu0
  %v2933 = vadd.f32 0.0, %v2932
  %2934 = vmatprep.mubr.bf16.mxu0 0
  %2935 = vmatmul.mubr.bf16.gmra.mrb[0].mxu0 %v460
  %v2936 = vpop.f32.mrb[0].mxu0
  %v2937 = vadd.f32 0.0, %v2936
  %v2938 = vpop.f32.mrb[0].mxu0
  %v2939 = vadd.f32 0.0, %v2938
  %v2940 = vpop.f32.mrb[0].mxu0
  %v2941 = vadd.f32 0.0, %v2940
  %v2942 = vpop.f32.mrb[0].mxu0
  %v2943 = vadd.f32 0.0, %v2942
  %2944 = vmatprep.mubr.bf16.mxu0 0
  %2945 = vmatmul.mubr.bf16.gmra.mrb[0].mxu0 %v463
  %v2946 = vpop.f32.mrb[0].mxu0
  %v2947 = vadd.f32 0.0, %v2946
  %v2948 = vpop.f32.mrb[0].mxu0
  %v2949 = vadd.f32 0.0, %v2948
  %v2950 = vpop.f32.mrb[0].mxu0
  %v2951 = vadd.f32 0.0, %v2950
  %v2952 = vpop.f32.mrb[0].mxu0
  %v2953 = vadd.f32 0.0, %v2952
  %2954 = vmatprep.mubr.bf16.mxu0 0
  %2955 = vmatmul.mubr.bf16.gmra.mrb[0].mxu0 %v466
  %v2956 = vpop.f32.mrb[0].mxu0
  %v2957 = vadd.f32 0.0, %v2956
  %v2958 = vpop.f32.mrb[0].mxu0
  %v2959 = vadd.f32 0.0, %v2958
  %v2960 = vpop.f32.mrb[0].mxu0
  %v2961 = vadd.f32 0.0, %v2960
  %v2962 = vpop.f32.mrb[0].mxu0
  %v2963 = vadd.f32 0.0, %v2962
  %2964 = vmatprep.mubr.bf16.mxu0 0
  %2965 = vmatmul.mubr.bf16.gmra.mrb[0].mxu0 %v469
  %v2966 = vpop.f32.mrb[0].mxu0
  %v2967 = vadd.f32 0.0, %v2966
  %v2968 = vpop.f32.mrb[0].mxu0
  %v2969 = vadd.f32 0.0, %v2968
  %v2970 = vpop.f32.mrb[0].mxu0
  %v2971 = vadd.f32 0.0, %v2970
  %v2972 = vpop.f32.mrb[0].mxu0
  %v2973 = vadd.f32 0.0, %v2972
  %2974 = vmatprep.mubr.bf16.mxu0 0
  %2975 = vmatmul.mubr.bf16.gmra.mrb[0].mxu0 %v472
  %v2976 = vpop.f32.mrb[0].mxu0
  %v2977 = vadd.f32 0.0, %v2976
  %v2978 = vpop.f32.mrb[0].mxu0
  %v2979 = vadd.f32 0.0, %v2978
  %v2980 = vpop.f32.mrb[0].mxu0
  %v2981 = vadd.f32 0.0, %v2980
  %v2982 = vpop.f32.mrb[0].mxu0
  %v2983 = vadd.f32 0.0, %v2982
  %2984 = vmatprep.mubr.bf16.mxu0 0
  %2985 = vmatmul.mubr.bf16.gmra.mrb[0].mxu0 %v475
  %v2986 = vpop.f32.mrb[0].mxu0
  %v2987 = vadd.f32 0.0, %v2986
  %v2988 = vpop.f32.mrb[0].mxu0
  %v2989 = vadd.f32 0.0, %v2988
  %v2990 = vpop.f32.mrb[0].mxu0
  %v2991 = vadd.f32 0.0, %v2990
  %v2992 = vpop.f32.mrb[0].mxu0
  %v2993 = vadd.f32 0.0, %v2992
  %2994 = vmatprep.mubr.bf16.mxu0 0
  %2995 = vmatmul.mubr.bf16.gmra.mrb[0].mxu0 %v478
  %v2996 = vpop.f32.mrb[0].mxu0
  %v2997 = vadd.f32 0.0, %v2996
  %v2998 = vpop.f32.mrb[0].mxu0
  %v2999 = vadd.f32 0.0, %v2998
  %v3000 = vpop.f32.mrb[0].mxu0
  %v3001 = vadd.f32 0.0, %v3000
  %v3002 = vpop.f32.mrb[0].mxu0
  %v3003 = vadd.f32 0.0, %v3002
  %3004 = vmatprep.mubr.bf16.mxu0 0
  %3005 = vmatmul.mubr.bf16.gmra.mrb[0].mxu0 %v481
  %v3006 = vpop.f32.mrb[0].mxu0
  %v3007 = vadd.f32 0.0, %v3006
  %v3008 = vpop.f32.mrb[0].mxu0
  %v3009 = vadd.f32 0.0, %v3008
  %v3010 = vpop.f32.mrb[0].mxu0
  %v3011 = vadd.f32 0.0, %v3010
  %v3012 = vpop.f32.mrb[0].mxu0
  %v3013 = vadd.f32 0.0, %v3012
  %3014 = vmatprep.mubr.bf16.mxu0 0
  %3015 = vmatmul.mubr.bf16.gmra.mrb[0].mxu0 %v484
  %v3016 = vpop.f32.mrb[0].mxu0
  %v3017 = vadd.f32 0.0, %v3016
  %v3018 = vpop.f32.mrb[0].mxu0
  %v3019 = vadd.f32 0.0, %v3018
  %v3020 = vpop.f32.mrb[0].mxu0
  %v3021 = vadd.f32 0.0, %v3020
  %v3022 = vpop.f32.mrb[0].mxu0
  %v3023 = vadd.f32 0.0, %v3022
  %3024 = vmatprep.mubr.bf16.mxu0 0
  %3025 = vmatmul.mubr.bf16.gmra.mrb[0].mxu0 %v487
  %v3026 = vpop.f32.mrb[0].mxu0
  %v3027 = vadd.f32 0.0, %v3026
  %v3028 = vpop.f32.mrb[0].mxu0
  %v3029 = vadd.f32 0.0, %v3028
  %v3030 = vpop.f32.mrb[0].mxu0
  %v3031 = vadd.f32 0.0, %v3030
  %v3032 = vpop.f32.mrb[0].mxu0
  %v3033 = vadd.f32 0.0, %v3032
  %3034 = vmatprep.mubr.bf16.mxu0 0
  %3035 = vmatmul.mubr.bf16.gmra.mrb[0].mxu0 %v490
  %v3036 = vpop.f32.mrb[0].mxu0
  %v3037 = vadd.f32 0.0, %v3036
  %v3038 = vpop.f32.mrb[0].mxu0
  %v3039 = vadd.f32 0.0, %v3038
  %v3040 = vpop.f32.mrb[0].mxu0
  %v3041 = vadd.f32 0.0, %v3040
  %v3042 = vpop.f32.mrb[0].mxu0
  %v3043 = vadd.f32 0.0, %v3042
  %3044 = vmatprep.mubr.bf16.mxu0 0
  %3045 = vmatmul.mubr.bf16.gmra.mrb[0].mxu0 %v493
  %v3046 = vpop.f32.mrb[0].mxu0
  %v3047 = vadd.f32 0.0, %v3046
  %v3048 = vpop.f32.mrb[0].mxu0
  %v3049 = vadd.f32 0.0, %v3048
  %v3050 = vpop.f32.mrb[0].mxu0
  %v3051 = vadd.f32 0.0, %v3050
  %v3052 = vpop.f32.mrb[0].mxu0
  %v3053 = vadd.f32 0.0, %v3052
  %3054 = vmatprep.mubr.bf16.mxu0 0
  %3055 = vmatmul.mubr.bf16.gmra.mrb[0].mxu0 %v496
  %v3056 = vpop.f32.mrb[0].mxu0
  %v3057 = vadd.f32 0.0, %v3056
  %v3058 = vpop.f32.mrb[0].mxu0
  %v3059 = vadd.f32 0.0, %v3058
  %v3060 = vpop.f32.mrb[0].mxu0
  %v3061 = vadd.f32 0.0, %v3060
  %v3062 = vpop.f32.mrb[0].mxu0
  %v3063 = vadd.f32 0.0, %v3062
  %3064 = vmatprep.mubr.bf16.mxu0 0
  %3065 = vmatmul.mubr.bf16.gmra.mrb[0].mxu0 %v499
  %v3066 = vpop.f32.mrb[0].mxu0
  %v3067 = vadd.f32 0.0, %v3066
  %v3068 = vpop.f32.mrb[0].mxu0
  %v3069 = vadd.f32 0.0, %v3068
  %v3070 = vpop.f32.mrb[0].mxu0
  %v3071 = vadd.f32 0.0, %v3070
  %v3072 = vpop.f32.mrb[0].mxu0
  %v3073 = vadd.f32 0.0, %v3072
  %3074 = vmatprep.mubr.bf16.mxu0 0
  %3075 = vmatmul.mubr.bf16.gmra.mrb[0].mxu0 %v502
  %v3076 = vpop.f32.mrb[0].mxu0
  %v3077 = vadd.f32 0.0, %v3076
  %v3078 = vpop.f32.mrb[0].mxu0
  %v3079 = vadd.f32 0.0, %v3078
  %v3080 = vpop.f32.mrb[0].mxu0
  %v3081 = vadd.f32 0.0, %v3080
  %v3082 = vpop.f32.mrb[0].mxu0
  %v3083 = vadd.f32 0.0, %v3082
  %3084 = vmatprep.mubr.bf16.mxu0 0
  %3085 = vmatmul.mubr.bf16.gmra.mrb[0].mxu0 %v505
  %v3086 = vpop.f32.mrb[0].mxu0
  %v3087 = vadd.f32 0.0, %v3086
  %v3088 = vpop.f32.mrb[0].mxu0
  %v3089 = vadd.f32 0.0, %v3088
  %v3090 = vpop.f32.mrb[0].mxu0
  %v3091 = vadd.f32 0.0, %v3090
  %v3092 = vpop.f32.mrb[0].mxu0
  %v3093 = vadd.f32 0.0, %v3092
  %3094 = vmatprep.mubr.bf16.mxu0 0
  %3095 = vmatmul.mubr.bf16.gmra.mrb[0].mxu0 %v508
  %v3096 = vpop.f32.mrb[0].mxu0
  %v3097 = vadd.f32 0.0, %v3096
  %v3098 = vpop.f32.mrb[0].mxu0
  %v3099 = vadd.f32 0.0, %v3098
  %v3100 = vpop.f32.mrb[0].mxu0
  %v3101 = vadd.f32 0.0, %v3100
  %v3102 = vpop.f32.mrb[0].mxu0
  %v3103 = vadd.f32 0.0, %v3102
  %3104 = vmatprep.mubr.bf16.mxu0 0
  %3105 = vmatmul.mubr.bf16.gmra.mrb[0].mxu0 %v511
  %v3106 = vpop.f32.mrb[0].mxu0
  %v3107 = vadd.f32 0.0, %v3106
  %v3108 = vpop.f32.mrb[0].mxu0
  %v3109 = vadd.f32 0.0, %v3108
  %v3110 = vpop.f32.mrb[0].mxu0
  %v3111 = vadd.f32 0.0, %v3110
  %v3112 = vpop.f32.mrb[0].mxu0
  %v3113 = vadd.f32 0.0, %v3112
  %3114 = vmatprep.mubr.bf16.mxu0 0
  %3115 = vmatmul.mubr.bf16.gmra.mrb[0].mxu0 %v514
  %v3116 = vpop.f32.mrb[0].mxu0
  %v3117 = vadd.f32 0.0, %v3116
  %v3118 = vpop.f32.mrb[0].mxu0
  %v3119 = vadd.f32 0.0, %v3118
  %v3120 = vpop.f32.mrb[0].mxu0
  %v3121 = vadd.f32 0.0, %v3120
  %v3122 = vpop.f32.mrb[0].mxu0
  %v3123 = vadd.f32 0.0, %v3122
  %3124 = vmatprep.mubr.bf16.mxu0 0
  %3125 = vmatmul.mubr.bf16.gmra.mrb[0].mxu0 %v517
  %v3126 = vpop.f32.mrb[0].mxu0
  %v3127 = vadd.f32 0.0, %v3126
  %v3128 = vpop.f32.mrb[0].mxu0
  %v3129 = vadd.f32 0.0, %v3128
  %v3130 = vpop.f32.mrb[0].mxu0
  %v3131 = vadd.f32 0.0, %v3130
  %v3132 = vpop.f32.mrb[0].mxu0
  %v3133 = vadd.f32 0.0, %v3132
  %3134 = vmatprep.mubr.bf16.mxu0 0
  %3135 = vmatmul.mubr.bf16.gmra.mrb[0].mxu0 %v520
  %v3136 = vpop.f32.mrb[0].mxu0
  %v3137 = vadd.f32 0.0, %v3136
  %v3138 = vpop.f32.mrb[0].mxu0
  %v3139 = vadd.f32 0.0, %v3138
  %v3140 = vpop.f32.mrb[0].mxu0
  %v3141 = vadd.f32 0.0, %v3140
  %v3142 = vpop.f32.mrb[0].mxu0
  %v3143 = vadd.f32 0.0, %v3142
  %3144 = vmatprep.mubr.bf16.mxu0 0
  %3145 = vmatmul.mubr.bf16.gmra.mrb[0].mxu0 %v523
  %v3146 = vpop.f32.mrb[0].mxu0
  %v3147 = vadd.f32 0.0, %v3146
  %v3148 = vpop.f32.mrb[0].mxu0
  %v3149 = vadd.f32 0.0, %v3148
  %v3150 = vpop.f32.mrb[0].mxu0
  %v3151 = vadd.f32 0.0, %v3150
  %v3152 = vpop.f32.mrb[0].mxu0
  %v3153 = vadd.f32 0.0, %v3152
  %3154 = vmatprep.mubr.bf16.mxu0 0
  %3155 = vmatmul.mubr.bf16.gmra.mrb[0].mxu0 %v526
  %v3156 = vpop.f32.mrb[0].mxu0
  %v3157 = vadd.f32 0.0, %v3156
  %v3158 = vpop.f32.mrb[0].mxu0
  %v3159 = vadd.f32 0.0, %v3158
  %v3160 = vpop.f32.mrb[0].mxu0
  %v3161 = vadd.f32 0.0, %v3160
  %v3162 = vpop.f32.mrb[0].mxu0
  %v3163 = vadd.f32 0.0, %v3162
  %3164 = vmatprep.mubr.bf16.mxu0 0
  %3165 = vmatmul.mubr.bf16.gmra.mrb[0].mxu0 %v529
  %v3166 = vpop.f32.mrb[0].mxu0
  %v3167 = vadd.f32 0.0, %v3166
  %v3168 = vpop.f32.mrb[0].mxu0
  %v3169 = vadd.f32 0.0, %v3168
  %v3170 = vpop.f32.mrb[0].mxu0
  %v3171 = vadd.f32 0.0, %v3170
  %v3172 = vpop.f32.mrb[0].mxu0
  %v3173 = vadd.f32 0.0, %v3172
  %3174 = vmatprep.mubr.bf16.mxu0 0
  %3175 = vmatmul.mubr.bf16.gmra.mrb[0].mxu0 %v532
  %v3176 = vpop.f32.mrb[0].mxu0
  %v3177 = vadd.f32 0.0, %v3176
  %v3178 = vpop.f32.mrb[0].mxu0
  %v3179 = vadd.f32 0.0, %v3178
  %v3180 = vpop.f32.mrb[0].mxu0
  %v3181 = vadd.f32 0.0, %v3180
  %v3182 = vpop.f32.mrb[0].mxu0
  %v3183 = vadd.f32 0.0, %v3182
  %3184 = vmatprep.mubr.bf16.mxu0 0
  %3185 = vmatmul.mubr.bf16.gmra.mrb[0].mxu0 %v535
  %v3186 = vpop.f32.mrb[0].mxu0
  %v3187 = vadd.f32 0.0, %v3186
  %v3188 = vpop.f32.mrb[0].mxu0
  %v3189 = vadd.f32 0.0, %v3188
  %v3190 = vpop.f32.mrb[0].mxu0
  %v3191 = vadd.f32 0.0, %v3190
  %v3192 = vpop.f32.mrb[0].mxu0
  %v3193 = vadd.f32 0.0, %v3192
  %3194 = vmatprep.mubr.bf16.mxu0 0
  %3195 = vmatmul.mubr.bf16.gmra.mrb[0].mxu0 %v538
  %v3196 = vpop.f32.mrb[0].mxu0
  %v3197 = vadd.f32 0.0, %v3196
  %v3198 = vpop.f32.mrb[0].mxu0
  %v3199 = vadd.f32 0.0, %v3198
  %v3200 = vpop.f32.mrb[0].mxu0
  %v3201 = vadd.f32 0.0, %v3200
  %v3202 = vpop.f32.mrb[0].mxu0
  %v3203 = vadd.f32 0.0, %v3202
  %3204 = vmatprep.mubr.bf16.mxu0 0
  %3205 = vmatmul.mubr.bf16.gmra.mrb[0].mxu0 %v541
  %v3206 = vpop.f32.mrb[0].mxu0
  %v3207 = vadd.f32 0.0, %v3206
  %v3208 = vpop.f32.mrb[0].mxu0
  %v3209 = vadd.f32 0.0, %v3208
  %v3210 = vpop.f32.mrb[0].mxu0
  %v3211 = vadd.f32 0.0, %v3210
  %v3212 = vpop.f32.mrb[0].mxu0
  %v3213 = vadd.f32 0.0, %v3212
  %3214 = vmatprep.mubr.bf16.mxu0 0
  %3215 = vmatmul.mubr.bf16.gmra.mrb[0].mxu0 %v544
  %v3216 = vpop.f32.mrb[0].mxu0
  %v3217 = vadd.f32 0.0, %v3216
  %v3218 = vpop.f32.mrb[0].mxu0
  %v3219 = vadd.f32 0.0, %v3218
  %v3220 = vpop.f32.mrb[0].mxu0
  %v3221 = vadd.f32 0.0, %v3220
  %v3222 = vpop.f32.mrb[0].mxu0
  %v3223 = vadd.f32 0.0, %v3222
  %3224 = vmatprep.mubr.bf16.mxu0 0
  %3225 = vmatmul.mubr.bf16.gmra.mrb[0].mxu0 %v547
  %v3226 = vpop.f32.mrb[0].mxu0
  %v3227 = vadd.f32 0.0, %v3226
  %v3228 = vpop.f32.mrb[0].mxu0
  %v3229 = vadd.f32 0.0, %v3228
  %v3230 = vpop.f32.mrb[0].mxu0
  %v3231 = vadd.f32 0.0, %v3230
  %v3232 = vpop.f32.mrb[0].mxu0
  %v3233 = vadd.f32 0.0, %v3232
  %3234 = vmatprep.mubr.bf16.mxu0 0
  %3235 = vmatmul.mubr.bf16.gmra.mrb[0].mxu0 %v550
  %v3236 = vpop.f32.mrb[0].mxu0
  %v3237 = vadd.f32 0.0, %v3236
  %v3238 = vpop.f32.mrb[0].mxu0
  %v3239 = vadd.f32 0.0, %v3238
  %v3240 = vpop.f32.mrb[0].mxu0
  %v3241 = vadd.f32 0.0, %v3240
  %v3242 = vpop.f32.mrb[0].mxu0
  %v3243 = vadd.f32 0.0, %v3242
  %3244 = vmatprep.mubr.bf16.mxu0 0
  %3245 = vmatmul.mubr.bf16.gmra.mrb[0].mxu0 %v553
  %v3246 = vpop.f32.mrb[0].mxu0
  %v3247 = vadd.f32 0.0, %v3246
  %v3248 = vpop.f32.mrb[0].mxu0
  %v3249 = vadd.f32 0.0, %v3248
  %v3250 = vpop.f32.mrb[0].mxu0
  %v3251 = vadd.f32 0.0, %v3250
  %v3252 = vpop.f32.mrb[0].mxu0
  %v3253 = vadd.f32 0.0, %v3252
  %3254 = vmatprep.mubr.bf16.mxu0 0
  %3255 = vmatmul.mubr.bf16.gmra.mrb[0].mxu0 %v556
  %v3256 = vpop.f32.mrb[0].mxu0
  %v3257 = vadd.f32 0.0, %v3256
  %v3258 = vpop.f32.mrb[0].mxu0
  %v3259 = vadd.f32 0.0, %v3258
  %v3260 = vpop.f32.mrb[0].mxu0
  %v3261 = vadd.f32 0.0, %v3260
  %v3262 = vpop.f32.mrb[0].mxu0
  %v3263 = vadd.f32 0.0, %v3262
  %3264 = vmatprep.mubr.bf16.mxu0 0
  %3265 = vmatmul.mubr.bf16.gmra.mrb[0].mxu0 %v559
  %v3266 = vpop.f32.mrb[0].mxu0
  %v3267 = vadd.f32 0.0, %v3266
  %v3268 = vpop.f32.mrb[0].mxu0
  %v3269 = vadd.f32 0.0, %v3268
  %v3270 = vpop.f32.mrb[0].mxu0
  %v3271 = vadd.f32 0.0, %v3270
  %v3272 = vpop.f32.mrb[0].mxu0
  %v3273 = vadd.f32 0.0, %v3272
  %3274 = vmatprep.mubr.bf16.mxu0 0
  %3275 = vmatmul.mubr.bf16.gmra.mrb[0].mxu0 %v562
  %v3276 = vpop.f32.mrb[0].mxu0
  %v3277 = vadd.f32 0.0, %v3276
  %v3278 = vpop.f32.mrb[0].mxu0
  %v3279 = vadd.f32 0.0, %v3278
  %v3280 = vpop.f32.mrb[0].mxu0
  %v3281 = vadd.f32 0.0, %v3280
  %v3282 = vpop.f32.mrb[0].mxu0
  %v3283 = vadd.f32 0.0, %v3282
  %3284 = vmatprep.mubr.bf16.mxu0 0
  %3285 = vmatmul.mubr.bf16.gmra.mrb[0].mxu0 %v565
  %v3286 = vpop.f32.mrb[0].mxu0
  %v3287 = vadd.f32 0.0, %v3286
  %v3288 = vpop.f32.mrb[0].mxu0
  %v3289 = vadd.f32 0.0, %v3288
  %v3290 = vpop.f32.mrb[0].mxu0
  %v3291 = vadd.f32 0.0, %v3290
  %v3292 = vpop.f32.mrb[0].mxu0
  %v3293 = vadd.f32 0.0, %v3292
  %3294 = vmatprep.mubr.bf16.mxu0 0
  %3295 = vmatmul.mubr.bf16.gmra.mrb[0].mxu0 %v568
  %v3296 = vpop.f32.mrb[0].mxu0
  %v3297 = vadd.f32 0.0, %v3296
  %v3298 = vpop.f32.mrb[0].mxu0
  %v3299 = vadd.f32 0.0, %v3298
  %v3300 = vpop.f32.mrb[0].mxu0
  %v3301 = vadd.f32 0.0, %v3300
  %v3302 = vpop.f32.mrb[0].mxu0
  %v3303 = vadd.f32 0.0, %v3302
  %3304 = vmatprep.mubr.bf16.mxu0 0
  %3305 = vmatmul.mubr.bf16.gmra.mrb[0].mxu0 %v571
  %v3306 = vpop.f32.mrb[0].mxu0
  %v3307 = vadd.f32 0.0, %v3306
  %v3308 = vpop.f32.mrb[0].mxu0
  %v3309 = vadd.f32 0.0, %v3308
  %v3310 = vpop.f32.mrb[0].mxu0
  %v3311 = vadd.f32 0.0, %v3310
  %v3312 = vpop.f32.mrb[0].mxu0
  %v3313 = vadd.f32 0.0, %v3312
  %3314 = vmatprep.mubr.bf16.mxu0 0
  %3315 = vmatmul.mubr.bf16.gmra.mrb[0].mxu0 %v574
  %v3316 = vpop.f32.mrb[0].mxu0
  %v3317 = vadd.f32 0.0, %v3316
  %v3318 = vpop.f32.mrb[0].mxu0
  %v3319 = vadd.f32 0.0, %v3318
  %v3320 = vpop.f32.mrb[0].mxu0
  %v3321 = vadd.f32 0.0, %v3320
  %v3322 = vpop.f32.mrb[0].mxu0
  %v3323 = vadd.f32 0.0, %v3322
  %3324 = vmatprep.mubr.bf16.mxu0 0
  %3325 = vmatmul.mubr.bf16.gmra.mrb[0].mxu0 %v577
  %v3326 = vpop.f32.mrb[0].mxu0
  %v3327 = vadd.f32 0.0, %v3326
  %v3328 = vpop.f32.mrb[0].mxu0
  %v3329 = vadd.f32 0.0, %v3328
  %v3330 = vpop.f32.mrb[0].mxu0
  %v3331 = vadd.f32 0.0, %v3330
  %v3332 = vpop.f32.mrb[0].mxu0
  %v3333 = vadd.f32 0.0, %v3332
  %3334 = vmatprep.mubr.bf16.mxu0 0
  %3335 = vmatmul.mubr.bf16.gmra.mrb[0].mxu0 %v580
  %v3336 = vpop.f32.mrb[0].mxu0
  %v3337 = vadd.f32 0.0, %v3336
  %v3338 = vpop.f32.mrb[0].mxu0
  %v3339 = vadd.f32 0.0, %v3338
  %v3340 = vpop.f32.mrb[0].mxu0
  %v3341 = vadd.f32 0.0, %v3340
  %v3342 = vpop.f32.mrb[0].mxu0
  %v3343 = vadd.f32 0.0, %v3342
  %3344 = vmatprep.mubr.bf16.mxu0 0
  %3345 = vmatmul.mubr.bf16.gmra.mrb[0].mxu0 %v583
  %v3346 = vpop.f32.mrb[0].mxu0
  %v3347 = vadd.f32 0.0, %v3346
  %v3348 = vpop.f32.mrb[0].mxu0
  %v3349 = vadd.f32 0.0, %v3348
  %v3350 = vpop.f32.mrb[0].mxu0
  %v3351 = vadd.f32 0.0, %v3350
  %v3352 = vpop.f32.mrb[0].mxu0
  %v3353 = vadd.f32 0.0, %v3352
  %3354 = vmatprep.mubr.bf16.mxu0 0
  %3355 = vmatmul.mubr.bf16.gmra.mrb[0].mxu0 %v586
  %v3356 = vpop.f32.mrb[0].mxu0
  %v3357 = vadd.f32 0.0, %v3356
  %v3358 = vpop.f32.mrb[0].mxu0
  %v3359 = vadd.f32 0.0, %v3358
  %v3360 = vpop.f32.mrb[0].mxu0
  %v3361 = vadd.f32 0.0, %v3360
  %v3362 = vpop.f32.mrb[0].mxu0
  %v3363 = vadd.f32 0.0, %v3362
  %3364 = vmatprep.mubr.bf16.mxu0 0
  %3365 = vmatmul.mubr.bf16.gmra.mrb[0].mxu0 %v589
  %v3366 = vpop.f32.mrb[0].mxu0
  %v3367 = vadd.f32 0.0, %v3366
  %v3368 = vpop.f32.mrb[0].mxu0
  %v3369 = vadd.f32 0.0, %v3368
  %v3370 = vpop.f32.mrb[0].mxu0
  %v3371 = vadd.f32 0.0, %v3370
  %v3372 = vpop.f32.mrb[0].mxu0
  %v3373 = vadd.f32 0.0, %v3372
  %3374 = vmatprep.mubr.bf16.mxu0 0
  %3375 = vmatmul.mubr.bf16.gmra.mrb[0].mxu0 %v592
  %v3376 = vpop.f32.mrb[0].mxu0
  %v3377 = vadd.f32 0.0, %v3376
  %v3378 = vpop.f32.mrb[0].mxu0
  %v3379 = vadd.f32 0.0, %v3378
  %v3380 = vpop.f32.mrb[0].mxu0
  %v3381 = vadd.f32 0.0, %v3380
  %v3382 = vpop.f32.mrb[0].mxu0
  %v3383 = vadd.f32 0.0, %v3382
  %3384 = vmatprep.mubr.bf16.mxu0 0
  %3385 = vmatmul.mubr.bf16.gmra.mrb[0].mxu0 %v595
  %v3386 = vpop.f32.mrb[0].mxu0
  %v3387 = vadd.f32 0.0, %v3386
  %v3388 = vpop.f32.mrb[0].mxu0
  %v3389 = vadd.f32 0.0, %v3388
  %v3390 = vpop.f32.mrb[0].mxu0
  %v3391 = vadd.f32 0.0, %v3390
  %v3392 = vpop.f32.mrb[0].mxu0
  %v3393 = vadd.f32 0.0, %v3392
  %3394 = vmatprep.mubr.bf16.mxu0 0
  %3395 = vmatmul.mubr.bf16.gmra.mrb[0].mxu0 %v598
  %v3396 = vpop.f32.mrb[0].mxu0
  %v3397 = vadd.f32 0.0, %v3396
  %v3398 = vpop.f32.mrb[0].mxu0
  %v3399 = vadd.f32 0.0, %v3398
  %v3400 = vpop.f32.mrb[0].mxu0
  %v3401 = vadd.f32 0.0, %v3400
  %v3402 = vpop.f32.mrb[0].mxu0
  %v3403 = vadd.f32 0.0, %v3402
  %3404 = vmatprep.mubr.bf16.mxu0 0
  %3405 = vmatmul.mubr.bf16.gmra.mrb[0].mxu0 %v601
  %v3406 = vpop.f32.mrb[0].mxu0
  %v3407 = vadd.f32 0.0, %v3406
  %v3408 = vpop.f32.mrb[0].mxu0
  %v3409 = vadd.f32 0.0, %v3408
  %v3410 = vpop.f32.mrb[0].mxu0
  %v3411 = vadd.f32 0.0, %v3410
  %v3412 = vpop.f32.mrb[0].mxu0
  %v3413 = vadd.f32 0.0, %v3412
  %3414 = vmatprep.mubr.bf16.mxu0 0
  %3415 = vmatmul.mubr.bf16.gmra.mrb[0].mxu0 %v604
  %v3416 = vpop.f32.mrb[0].mxu0
  %v3417 = vadd.f32 0.0, %v3416
  %v3418 = vpop.f32.mrb[0].mxu0
  %v3419 = vadd.f32 0.0, %v3418
  %v3420 = vpop.f32.mrb[0].mxu0
  %v3421 = vadd.f32 0.0, %v3420
  %v3422 = vpop.f32.mrb[0].mxu0
  %v3423 = vadd.f32 0.0, %v3422
  %3424 = vmatprep.mubr.bf16.mxu0 0
  %3425 = vmatmul.mubr.bf16.gmra.mrb[0].mxu0 %v607
  %v3426 = vpop.f32.mrb[0].mxu0
  %v3427 = vadd.f32 0.0, %v3426
  %v3428 = vpop.f32.mrb[0].mxu0
  %v3429 = vadd.f32 0.0, %v3428
  %v3430 = vpop.f32.mrb[0].mxu0
  %v3431 = vadd.f32 0.0, %v3430
  %v3432 = vpop.f32.mrb[0].mxu0
  %v3433 = vadd.f32 0.0, %v3432
  %3434 = vmatprep.mubr.bf16.mxu0 0
  %3435 = vmatmul.mubr.bf16.gmra.mrb[0].mxu0 %v610
  %v3436 = vpop.f32.mrb[0].mxu0
  %v3437 = vadd.f32 0.0, %v3436
  %v3438 = vpop.f32.mrb[0].mxu0
  %v3439 = vadd.f32 0.0, %v3438
  %v3440 = vpop.f32.mrb[0].mxu0
  %v3441 = vadd.f32 0.0, %v3440
  %v3442 = vpop.f32.mrb[0].mxu0
  %v3443 = vadd.f32 0.0, %v3442
  %3444 = vmatprep.mubr.bf16.mxu0 0
  %3445 = vmatmul.mubr.bf16.gmra.mrb[0].mxu0 %v613
  %v3446 = vpop.f32.mrb[0].mxu0
  %v3447 = vadd.f32 0.0, %v3446
  %v3448 = vpop.f32.mrb[0].mxu0
  %v3449 = vadd.f32 0.0, %v3448
  %v3450 = vpop.f32.mrb[0].mxu0
  %v3451 = vadd.f32 0.0, %v3450
  %v3452 = vpop.f32.mrb[0].mxu0
  %v3453 = vadd.f32 0.0, %v3452
  %3454 = vmatprep.mubr.bf16.mxu0 0
  %3455 = vmatmul.mubr.bf16.gmra.mrb[0].mxu0 %v616
  %v3456 = vpop.f32.mrb[0].mxu0
  %v3457 = vadd.f32 0.0, %v3456
  %v3458 = vpop.f32.mrb[0].mxu0
  %v3459 = vadd.f32 0.0, %v3458
  %v3460 = vpop.f32.mrb[0].mxu0
  %v3461 = vadd.f32 0.0, %v3460
  %v3462 = vpop.f32.mrb[0].mxu0
  %v3463 = vadd.f32 0.0, %v3462
  %3464 = vmatprep.mubr.bf16.mxu0 0
  %3465 = vmatmul.mubr.bf16.gmra.mrb[0].mxu0 %v619
  %v3466 = vpop.f32.mrb[0].mxu0
  %v3467 = vadd.f32 0.0, %v3466
  %v3468 = vpop.f32.mrb[0].mxu0
  %v3469 = vadd.f32 0.0, %v3468
  %v3470 = vpop.f32.mrb[0].mxu0
  %v3471 = vadd.f32 0.0, %v3470
  %v3472 = vpop.f32.mrb[0].mxu0
  %v3473 = vadd.f32 0.0, %v3472
  %3474 = vmatprep.mubr.bf16.mxu0 0
  %3475 = vmatmul.mubr.bf16.gmra.mrb[0].mxu0 %v622
  %v3476 = vpop.f32.mrb[0].mxu0
  %v3477 = vadd.f32 0.0, %v3476
  %v3478 = vpop.f32.mrb[0].mxu0
  %v3479 = vadd.f32 0.0, %v3478
  %v3480 = vpop.f32.mrb[0].mxu0
  %v3481 = vadd.f32 0.0, %v3480
  %v3482 = vpop.f32.mrb[0].mxu0
  %v3483 = vadd.f32 0.0, %v3482
  %3484 = vmatprep.mubr.bf16.mxu0 0
  %3485 = vmatmul.mubr.bf16.gmra.mrb[0].mxu0 %v625
  %v3486 = vpop.f32.mrb[0].mxu0
  %v3487 = vadd.f32 0.0, %v3486
  %v3488 = vpop.f32.mrb[0].mxu0
  %v3489 = vadd.f32 0.0, %v3488
  %v3490 = vpop.f32.mrb[0].mxu0
  %v3491 = vadd.f32 0.0, %v3490
  %v3492 = vpop.f32.mrb[0].mxu0
  %v3493 = vadd.f32 0.0, %v3492
  %3494 = vmatprep.mubr.bf16.mxu0 0
  %3495 = vmatmul.mubr.bf16.gmra.mrb[0].mxu0 %v628
  %v3496 = vpop.f32.mrb[0].mxu0
  %v3497 = vadd.f32 0.0, %v3496
  %v3498 = vpop.f32.mrb[0].mxu0
  %v3499 = vadd.f32 0.0, %v3498
  %v3500 = vpop.f32.mrb[0].mxu0
  %v3501 = vadd.f32 0.0, %v3500
  %v3502 = vpop.f32.mrb[0].mxu0
  %v3503 = vadd.f32 0.0, %v3502
  %3504 = vmatprep.mubr.bf16.mxu0 0
  %3505 = vmatmul.mubr.bf16.gmra.mrb[0].mxu0 %v631
  %v3506 = vpop.f32.mrb[0].mxu0
  %v3507 = vadd.f32 0.0, %v3506
  %v3508 = vpop.f32.mrb[0].mxu0
  %v3509 = vadd.f32 0.0, %v3508
  %v3510 = vpop.f32.mrb[0].mxu0
  %v3511 = vadd.f32 0.0, %v3510
  %v3512 = vpop.f32.mrb[0].mxu0
  %v3513 = vadd.f32 0.0, %v3512
  %3514 = vmatprep.mubr.bf16.mxu0 0
  %3515 = vmatmul.mubr.bf16.gmra.mrb[0].mxu0 %v634
  %v3516 = vpop.f32.mrb[0].mxu0
  %v3517 = vadd.f32 0.0, %v3516
  %v3518 = vpop.f32.mrb[0].mxu0
  %v3519 = vadd.f32 0.0, %v3518
  %v3520 = vpop.f32.mrb[0].mxu0
  %v3521 = vadd.f32 0.0, %v3520
  %v3522 = vpop.f32.mrb[0].mxu0
  %v3523 = vadd.f32 0.0, %v3522
  %3524 = vmatprep.mubr.bf16.mxu0 0
  %3525 = vmatmul.mubr.bf16.gmra.mrb[0].mxu0 %v637
  %v3526 = vpop.f32.mrb[0].mxu0
  %v3527 = vadd.f32 0.0, %v3526
  %v3528 = vpop.f32.mrb[0].mxu0
  %v3529 = vadd.f32 0.0, %v3528
  %v3530 = vpop.f32.mrb[0].mxu0
  %v3531 = vadd.f32 0.0, %v3530
  %v3532 = vpop.f32.mrb[0].mxu0
  %v3533 = vadd.f32 0.0, %v3532
  %3534 = vmatprep.mubr.bf16.mxu0 0
  %3535 = vmatmul.mubr.bf16.gmra.mrb[0].mxu0 %v640
  %v3536 = vpop.f32.mrb[0].mxu0
  %v3537 = vadd.f32 0.0, %v3536
  %v3538 = vpop.f32.mrb[0].mxu0
  %v3539 = vadd.f32 0.0, %v3538
  %v3540 = vpop.f32.mrb[0].mxu0
  %v3541 = vadd.f32 0.0, %v3540
  %v3542 = vpop.f32.mrb[0].mxu0
  %v3543 = vadd.f32 0.0, %v3542
  %3544 = vmatprep.mubr.bf16.mxu0 0
  %3545 = vmatmul.mubr.bf16.gmra.mrb[0].mxu0 %v643
  %v3546 = vpop.f32.mrb[0].mxu0
  %v3547 = vadd.f32 0.0, %v3546
  %v3548 = vpop.f32.mrb[0].mxu0
  %v3549 = vadd.f32 0.0, %v3548
  %v3550 = vpop.f32.mrb[0].mxu0
  %v3551 = vadd.f32 0.0, %v3550
  %v3552 = vpop.f32.mrb[0].mxu0
  %v3553 = vadd.f32 0.0, %v3552
  %3554 = vmatprep.mubr.bf16.mxu0 0
  %3555 = vmatmul.mubr.bf16.gmra.mrb[0].mxu0 %v646
  %v3556 = vpop.f32.mrb[0].mxu0
  %v3557 = vadd.f32 0.0, %v3556
  %v3558 = vpop.f32.mrb[0].mxu0
  %v3559 = vadd.f32 0.0, %v3558
  %v3560 = vpop.f32.mrb[0].mxu0
  %v3561 = vadd.f32 0.0, %v3560
  %v3562 = vpop.f32.mrb[0].mxu0
  %v3563 = vadd.f32 0.0, %v3562
  %3564 = vmatprep.mubr.bf16.mxu0 0
  %3565 = vmatmul.mubr.bf16.gmra.mrb[0].mxu0 %v649
  %v3566 = vpop.f32.mrb[0].mxu0
  %v3567 = vadd.f32 0.0, %v3566
  %v3568 = vpop.f32.mrb[0].mxu0
  %v3569 = vadd.f32 0.0, %v3568
  %v3570 = vpop.f32.mrb[0].mxu0
  %v3571 = vadd.f32 0.0, %v3570
  %v3572 = vpop.f32.mrb[0].mxu0
  %v3573 = vadd.f32 0.0, %v3572
  %3574 = vmatprep.mubr.bf16.mxu0 0
  %3575 = vmatmul.mubr.bf16.gmra.mrb[0].mxu0 %v652
  %v3576 = vpop.f32.mrb[0].mxu0
  %v3577 = vadd.f32 0.0, %v3576
  %v3578 = vpop.f32.mrb[0].mxu0
  %v3579 = vadd.f32 0.0, %v3578
  %v3580 = vpop.f32.mrb[0].mxu0
  %v3581 = vadd.f32 0.0, %v3580
  %v3582 = vpop.f32.mrb[0].mxu0
  %v3583 = vadd.f32 0.0, %v3582
  %3584 = vmatprep.mubr.bf16.mxu0 0
  %3585 = vmatmul.mubr.bf16.gmra.mrb[0].mxu0 %v655
  %v3586 = vpop.f32.mrb[0].mxu0
  %v3587 = vadd.f32 0.0, %v3586
  %v3588 = vpop.f32.mrb[0].mxu0
  %v3589 = vadd.f32 0.0, %v3588
  %v3590 = vpop.f32.mrb[0].mxu0
  %v3591 = vadd.f32 0.0, %v3590
  %v3592 = vpop.f32.mrb[0].mxu0
  %v3593 = vadd.f32 0.0, %v3592
  %3594 = vmatprep.mubr.bf16.mxu0 0
  %3595 = vmatmul.mubr.bf16.gmra.mrb[0].mxu0 %v658
  %v3596 = vpop.f32.mrb[0].mxu0
  %v3597 = vadd.f32 0.0, %v3596
  %v3598 = vpop.f32.mrb[0].mxu0
  %v3599 = vadd.f32 0.0, %v3598
  %v3600 = vpop.f32.mrb[0].mxu0
  %v3601 = vadd.f32 0.0, %v3600
  %v3602 = vpop.f32.mrb[0].mxu0
  %v3603 = vadd.f32 0.0, %v3602
  %3604 = vmatprep.mubr.bf16.mxu0 0
  %3605 = vmatmul.mubr.bf16.gmra.mrb[0].mxu0 %v661
  %v3606 = vpop.f32.mrb[0].mxu0
  %v3607 = vadd.f32 0.0, %v3606
  %v3608 = vpop.f32.mrb[0].mxu0
  %v3609 = vadd.f32 0.0, %v3608
  %v3610 = vpop.f32.mrb[0].mxu0
  %v3611 = vadd.f32 0.0, %v3610
  %v3612 = vpop.f32.mrb[0].mxu0
  %v3613 = vadd.f32 0.0, %v3612
  %3614 = vmatprep.mubr.bf16.mxu0 0
  %3615 = vmatmul.mubr.bf16.gmra.mrb[0].mxu0 %v664
  %v3616 = vpop.f32.mrb[0].mxu0
  %v3617 = vadd.f32 0.0, %v3616
  %v3618 = vpop.f32.mrb[0].mxu0
  %v3619 = vadd.f32 0.0, %v3618
  %v3620 = vpop.f32.mrb[0].mxu0
  %v3621 = vadd.f32 0.0, %v3620
  %v3622 = vpop.f32.mrb[0].mxu0
  %v3623 = vadd.f32 0.0, %v3622
  %3624 = vmatprep.mubr.bf16.mxu0 0
  %3625 = vmatmul.mubr.bf16.gmra.mrb[0].mxu0 %v667
  %v3626 = vpop.f32.mrb[0].mxu0
  %v3627 = vadd.f32 0.0, %v3626
  %v3628 = vpop.f32.mrb[0].mxu0
  %v3629 = vadd.f32 0.0, %v3628
  %v3630 = vpop.f32.mrb[0].mxu0
  %v3631 = vadd.f32 0.0, %v3630
  %v3632 = vpop.f32.mrb[0].mxu0
  %v3633 = vadd.f32 0.0, %v3632
  %3634 = vmatprep.mubr.bf16.mxu0 0
  %3635 = vmatmul.mubr.bf16.gmra.mrb[0].mxu0 %v670
  %v3636 = vpop.f32.mrb[0].mxu0
  %v3637 = vadd.f32 0.0, %v3636
  %v3638 = vpop.f32.mrb[0].mxu0
  %v3639 = vadd.f32 0.0, %v3638
  %v3640 = vpop.f32.mrb[0].mxu0
  %v3641 = vadd.f32 0.0, %v3640
  %v3642 = vpop.f32.mrb[0].mxu0
  %v3643 = vadd.f32 0.0, %v3642
  %3644 = vmatprep.mubr.bf16.mxu0 0
  %3645 = vmatmul.mubr.bf16.gmra.mrb[0].mxu0 %v673
  %v3646 = vpop.f32.mrb[0].mxu0
  %v3647 = vadd.f32 0.0, %v3646
  %v3648 = vpop.f32.mrb[0].mxu0
  %v3649 = vadd.f32 0.0, %v3648
  %v3650 = vpop.f32.mrb[0].mxu0
  %v3651 = vadd.f32 0.0, %v3650
  %v3652 = vpop.f32.mrb[0].mxu0
  %v3653 = vadd.f32 0.0, %v3652
  %3654 = vmatprep.mubr.bf16.mxu0 0
  %3655 = vmatmul.mubr.bf16.gmra.mrb[0].mxu0 %v676
  %v3656 = vpop.f32.mrb[0].mxu0
  %v3657 = vadd.f32 0.0, %v3656
  %v3658 = vpop.f32.mrb[0].mxu0
  %v3659 = vadd.f32 0.0, %v3658
  %v3660 = vpop.f32.mrb[0].mxu0
  %v3661 = vadd.f32 0.0, %v3660
  %v3662 = vpop.f32.mrb[0].mxu0
  %v3663 = vadd.f32 0.0, %v3662
  %3664 = vmatprep.mubr.bf16.mxu0 0
  %3665 = vmatmul.mubr.bf16.gmra.mrb[0].mxu0 %v679
  %v3666 = vpop.f32.mrb[0].mxu0
  %v3667 = vadd.f32 0.0, %v3666
  %v3668 = vpop.f32.mrb[0].mxu0
  %v3669 = vadd.f32 0.0, %v3668
  %v3670 = vpop.f32.mrb[0].mxu0
  %v3671 = vadd.f32 0.0, %v3670
  %v3672 = vpop.f32.mrb[0].mxu0
  %v3673 = vadd.f32 0.0, %v3672
  %3674 = vmatprep.mubr.bf16.mxu0 0
  %3675 = vmatmul.mubr.bf16.gmra.mrb[0].mxu0 %v682
  %v3676 = vpop.f32.mrb[0].mxu0
  %v3677 = vadd.f32 0.0, %v3676
  %v3678 = vpop.f32.mrb[0].mxu0
  %v3679 = vadd.f32 0.0, %v3678
  %v3680 = vpop.f32.mrb[0].mxu0
  %v3681 = vadd.f32 0.0, %v3680
  %v3682 = vpop.f32.mrb[0].mxu0
  %v3683 = vadd.f32 0.0, %v3682
  %3684 = vmatprep.mubr.bf16.mxu0 0
  %3685 = vmatmul.mubr.bf16.gmra.mrb[0].mxu0 %v685
  %v3686 = vpop.f32.mrb[0].mxu0
  %v3687 = vadd.f32 0.0, %v3686
  %v3688 = vpop.f32.mrb[0].mxu0
  %v3689 = vadd.f32 0.0, %v3688
  %v3690 = vpop.f32.mrb[0].mxu0
  %v3691 = vadd.f32 0.0, %v3690
  %v3692 = vpop.f32.mrb[0].mxu0
  %v3693 = vadd.f32 0.0, %v3692
  %3694 = vmatprep.mubr.bf16.mxu0 0
  %3695 = vmatmul.mubr.bf16.gmra.mrb[0].mxu0 %v2731
  %v3696 = vpop.f32.mrb[0].mxu0
  %v3697 = vadd.f32 0.0, %v3696
  %v3698 = vpop.f32.mrb[0].mxu0
  %v3699 = vadd.f32 0.0, %v3698
  %v3700 = vpop.f32.mrb[0].mxu0
  %v3701 = vadd.f32 0.0, %v3700
  %v3702 = vpop.f32.mrb[0].mxu0
  %v3703 = vadd.f32 0.0, %v3702
  %3704 = vmatprep.mubr.bf16.mxu0 0
  %3705 = vmatmul.mubr.bf16.gmra.mrb[0].mxu0 %v2734
  %v3706 = vpop.f32.mrb[0].mxu0
  %v3707 = vadd.f32 0.0, %v3706
  %v3708 = vpop.f32.mrb[0].mxu0
  %v3709 = vadd.f32 0.0, %v3708
  %v3710 = vpop.f32.mrb[0].mxu0
  %v3711 = vadd.f32 0.0, %v3710
  %v3712 = vpop.f32.mrb[0].mxu0
  %v3713 = vadd.f32 0.0, %v3712
  %3714 = vmatprep.mubr.bf16.mxu0 0
  %3715 = vmatmul.mubr.bf16.gmra.mrb[0].mxu0 %v2737
  %v3716 = vpop.f32.mrb[0].mxu0
  %v3717 = vadd.f32 0.0, %v3716
  %v3718 = vpop.f32.mrb[0].mxu0
  %v3719 = vadd.f32 0.0, %v3718
  %v3720 = vpop.f32.mrb[0].mxu0
  %v3721 = vadd.f32 0.0, %v3720
  %v3722 = vpop.f32.mrb[0].mxu0
  %v3723 = vadd.f32 0.0, %v3722
  %3724 = vmatprep.mubr.bf16.mxu0 0
  %3725 = vmatmul.mubr.bf16.gmra.mrb[0].mxu0 %v2740
  %v3726 = vpop.f32.mrb[0].mxu0
  %v3727 = vadd.f32 0.0, %v3726
  %v3728 = vpop.f32.mrb[0].mxu0
  %v3729 = vadd.f32 0.0, %v3728
  %v3730 = vpop.f32.mrb[0].mxu0
  %v3731 = vadd.f32 0.0, %v3730
  %v3732 = vpop.f32.mrb[0].mxu0
  %v3733 = vadd.f32 0.0, %v3732
  %3734 = vdwg.mxu0
  %v3735 = vadd.f32 %v1747, %v2777
  %v3736 = vadd.f32 %v1749, %v2779
  %v3737 = vadd.f32 %v1751, %v2781
  %v3738 = vadd.f32 %v1753, %v2783
  %v3739 = vadd.f32 %v1757, %v2787
  %v3740 = vadd.f32 %v1759, %v2789
  %v3741 = vadd.f32 %v1761, %v2791
  %v3742 = vadd.f32 %v1763, %v2793
  %v3743 = vadd.f32 %v1767, %v2797
  %v3744 = vadd.f32 %v1769, %v2799
  %v3745 = vadd.f32 %v1771, %v2801
  %v3746 = vadd.f32 %v1773, %v2803
  %v3747 = vadd.f32 %v1777, %v2807
  %v3748 = vadd.f32 %v1779, %v2809
  %v3749 = vadd.f32 %v1781, %v2811
  %v3750 = vadd.f32 %v1783, %v2813
  %v3751 = vadd.f32 %v1787, %v2817
  %v3752 = vadd.f32 %v1789, %v2819
  %v3753 = vadd.f32 %v1791, %v2821
  %v3754 = vadd.f32 %v1793, %v2823
  %v3755 = vadd.f32 %v1797, %v2827
  %v3756 = vadd.f32 %v1799, %v2829
  %v3757 = vadd.f32 %v1801, %v2831
  %v3758 = vadd.f32 %v1803, %v2833
  %v3759 = vadd.f32 %v1807, %v2837
  %v3760 = vadd.f32 %v1809, %v2839
  %v3761 = vadd.f32 %v1811, %v2841
  %v3762 = vadd.f32 %v1813, %v2843
  %v3763 = vadd.f32 %v1817, %v2847
  %v3764 = vadd.f32 %v1819, %v2849
  %v3765 = vadd.f32 %v1821, %v2851
  %v3766 = vadd.f32 %v1823, %v2853
  %v3767 = vadd.f32 %v1827, %v2857
  %v3768 = vadd.f32 %v1829, %v2859
  %v3769 = vadd.f32 %v1831, %v2861
  %v3770 = vadd.f32 %v1833, %v2863
  %v3771 = vadd.f32 %v1837, %v2867
  %v3772 = vadd.f32 %v1839, %v2869
  %v3773 = vadd.f32 %v1841, %v2871
  %v3774 = vadd.f32 %v1843, %v2873
  %v3775 = vadd.f32 %v1847, %v2877
  %v3776 = vadd.f32 %v1849, %v2879
  %v3777 = vadd.f32 %v1851, %v2881
  %v3778 = vadd.f32 %v1853, %v2883
  %v3779 = vadd.f32 %v1857, %v2887
  %v3780 = vadd.f32 %v1859, %v2889
  %v3781 = vadd.f32 %v1861, %v2891
  %v3782 = vadd.f32 %v1863, %v2893
  %v3783 = vadd.f32 %v1867, %v2897
  %v3784 = vadd.f32 %v1869, %v2899
  %v3785 = vadd.f32 %v1871, %v2901
  %v3786 = vadd.f32 %v1873, %v2903
  %v3787 = vadd.f32 %v1877, %v2907
  %v3788 = vadd.f32 %v1879, %v2909
  %v3789 = vadd.f32 %v1881, %v2911
  %v3790 = vadd.f32 %v1883, %v2913
  %v3791 = vadd.f32 %v1887, %v2917
  %v3792 = vadd.f32 %v1889, %v2919
  %v3793 = vadd.f32 %v1891, %v2921
  %v3794 = vadd.f32 %v1893, %v2923
  %v3795 = vadd.f32 %v1897, %v2927
  %v3796 = vadd.f32 %v1899, %v2929
  %v3797 = vadd.f32 %v1901, %v2931
  %v3798 = vadd.f32 %v1903, %v2933
  %v3799 = vadd.f32 %v1907, %v2937
  %v3800 = vadd.f32 %v1909, %v2939
  %v3801 = vadd.f32 %v1911, %v2941
  %v3802 = vadd.f32 %v1913, %v2943
  %v3803 = vadd.f32 %v1917, %v2947
  %v3804 = vadd.f32 %v1919, %v2949
  %v3805 = vadd.f32 %v1921, %v2951
  %v3806 = vadd.f32 %v1923, %v2953
  %v3807 = vadd.f32 %v1927, %v2957
  %v3808 = vadd.f32 %v1929, %v2959
  %v3809 = vadd.f32 %v1931, %v2961
  %v3810 = vadd.f32 %v1933, %v2963
  %v3811 = vadd.f32 %v1937, %v2967
  %v3812 = vadd.f32 %v1939, %v2969
  %v3813 = vadd.f32 %v1941, %v2971
  %v3814 = vadd.f32 %v1943, %v2973
  %v3815 = vadd.f32 %v1947, %v2977
  %v3816 = vadd.f32 %v1949, %v2979
  %v3817 = vadd.f32 %v1951, %v2981
  %v3818 = vadd.f32 %v1953, %v2983
  %v3819 = vadd.f32 %v1957, %v2987
  %v3820 = vadd.f32 %v1959, %v2989
  %v3821 = vadd.f32 %v1961, %v2991
  %v3822 = vadd.f32 %v1963, %v2993
  %v3823 = vadd.f32 %v1967, %v2997
  %v3824 = vadd.f32 %v1969, %v2999
  %v3825 = vadd.f32 %v1971, %v3001
  %v3826 = vadd.f32 %v1973, %v3003
  %v3827 = vadd.f32 %v1977, %v3007
  %v3828 = vadd.f32 %v1979, %v3009
  %v3829 = vadd.f32 %v1981, %v3011
  %v3830 = vadd.f32 %v1983, %v3013
  %v3831 = vadd.f32 %v1987, %v3017
  %v3832 = vadd.f32 %v1989, %v3019
  %v3833 = vadd.f32 %v1991, %v3021
  %v3834 = vadd.f32 %v1993, %v3023
  %v3835 = vadd.f32 %v1997, %v3027
  %v3836 = vadd.f32 %v1999, %v3029
  %v3837 = vadd.f32 %v2001, %v3031
  %v3838 = vadd.f32 %v2003, %v3033
  %v3839 = vadd.f32 %v2007, %v3037
  %v3840 = vadd.f32 %v2009, %v3039
  %v3841 = vadd.f32 %v2011, %v3041
  %v3842 = vadd.f32 %v2013, %v3043
  %v3843 = vadd.f32 %v2017, %v3047
  %v3844 = vadd.f32 %v2019, %v3049
  %v3845 = vadd.f32 %v2021, %v3051
  %v3846 = vadd.f32 %v2023, %v3053
  %v3847 = vadd.f32 %v2027, %v3057
  %v3848 = vadd.f32 %v2029, %v3059
  %v3849 = vadd.f32 %v2031, %v3061
  %v3850 = vadd.f32 %v2033, %v3063
  %v3851 = vadd.f32 %v2037, %v3067
  %v3852 = vadd.f32 %v2039, %v3069
  %v3853 = vadd.f32 %v2041, %v3071
  %v3854 = vadd.f32 %v2043, %v3073
  %v3855 = vadd.f32 %v2047, %v3077
  %v3856 = vadd.f32 %v2049, %v3079
  %v3857 = vadd.f32 %v2051, %v3081
  %v3858 = vadd.f32 %v2053, %v3083
  %v3859 = vadd.f32 %v2057, %v3087
  %v3860 = vadd.f32 %v2059, %v3089
  %v3861 = vadd.f32 %v2061, %v3091
  %v3862 = vadd.f32 %v2063, %v3093
  %v3863 = vadd.f32 %v2067, %v3097
  %v3864 = vadd.f32 %v2069, %v3099
  %v3865 = vadd.f32 %v2071, %v3101
  %v3866 = vadd.f32 %v2073, %v3103
  %v3867 = vadd.f32 %v2077, %v3107
  %v3868 = vadd.f32 %v2079, %v3109
  %v3869 = vadd.f32 %v2081, %v3111
  %v3870 = vadd.f32 %v2083, %v3113
  %v3871 = vadd.f32 %v2087, %v3117
  %v3872 = vadd.f32 %v2089, %v3119
  %v3873 = vadd.f32 %v2091, %v3121
  %v3874 = vadd.f32 %v2093, %v3123
  %v3875 = vadd.f32 %v2097, %v3127
  %v3876 = vadd.f32 %v2099, %v3129
  %v3877 = vadd.f32 %v2101, %v3131
  %v3878 = vadd.f32 %v2103, %v3133
  %v3879 = vadd.f32 %v2107, %v3137
  %v3880 = vadd.f32 %v2109, %v3139
  %v3881 = vadd.f32 %v2111, %v3141
  %v3882 = vadd.f32 %v2113, %v3143
  %v3883 = vadd.f32 %v2117, %v3147
  %v3884 = vadd.f32 %v2119, %v3149
  %v3885 = vadd.f32 %v2121, %v3151
  %v3886 = vadd.f32 %v2123, %v3153
  %v3887 = vadd.f32 %v2127, %v3157
  %v3888 = vadd.f32 %v2129, %v3159
  %v3889 = vadd.f32 %v2131, %v3161
  %v3890 = vadd.f32 %v2133, %v3163
  %v3891 = vadd.f32 %v2137, %v3167
  %v3892 = vadd.f32 %v2139, %v3169
  %v3893 = vadd.f32 %v2141, %v3171
  %v3894 = vadd.f32 %v2143, %v3173
  %v3895 = vadd.f32 %v2147, %v3177
  %v3896 = vadd.f32 %v2149, %v3179
  %v3897 = vadd.f32 %v2151, %v3181
  %v3898 = vadd.f32 %v2153, %v3183
  %v3899 = vadd.f32 %v2157, %v3187
  %v3900 = vadd.f32 %v2159, %v3189
  %v3901 = vadd.f32 %v2161, %v3191
  %v3902 = vadd.f32 %v2163, %v3193
  %v3903 = vadd.f32 %v2167, %v3197
  %v3904 = vadd.f32 %v2169, %v3199
  %v3905 = vadd.f32 %v2171, %v3201
  %v3906 = vadd.f32 %v2173, %v3203
  %v3907 = vadd.f32 %v2177, %v3207
  %v3908 = vadd.f32 %v2179, %v3209
  %v3909 = vadd.f32 %v2181, %v3211
  %v3910 = vadd.f32 %v2183, %v3213
  %v3911 = vadd.f32 %v2187, %v3217
  %v3912 = vadd.f32 %v2189, %v3219
  %v3913 = vadd.f32 %v2191, %v3221
  %v3914 = vadd.f32 %v2193, %v3223
  %v3915 = vadd.f32 %v2197, %v3227
  %v3916 = vadd.f32 %v2199, %v3229
  %v3917 = vadd.f32 %v2201, %v3231
  %v3918 = vadd.f32 %v2203, %v3233
  %v3919 = vadd.f32 %v2207, %v3237
  %v3920 = vadd.f32 %v2209, %v3239
  %v3921 = vadd.f32 %v2211, %v3241
  %v3922 = vadd.f32 %v2213, %v3243
  %v3923 = vadd.f32 %v2217, %v3247
  %v3924 = vadd.f32 %v2219, %v3249
  %v3925 = vadd.f32 %v2221, %v3251
  %v3926 = vadd.f32 %v2223, %v3253
  %v3927 = vadd.f32 %v2227, %v3257
  %v3928 = vadd.f32 %v2229, %v3259
  %v3929 = vadd.f32 %v2231, %v3261
  %v3930 = vadd.f32 %v2233, %v3263
  %v3931 = vadd.f32 %v2237, %v3267
  %v3932 = vadd.f32 %v2239, %v3269
  %v3933 = vadd.f32 %v2241, %v3271
  %v3934 = vadd.f32 %v2243, %v3273
  %v3935 = vadd.f32 %v2247, %v3277
  %v3936 = vadd.f32 %v2249, %v3279
  %v3937 = vadd.f32 %v2251, %v3281
  %v3938 = vadd.f32 %v2253, %v3283
  %v3939 = vadd.f32 %v2257, %v3287
  %v3940 = vadd.f32 %v2259, %v3289
  %v3941 = vadd.f32 %v2261, %v3291
  %v3942 = vadd.f32 %v2263, %v3293
  %v3943 = vadd.f32 %v2267, %v3297
  %v3944 = vadd.f32 %v2269, %v3299
  %v3945 = vadd.f32 %v2271, %v3301
  %v3946 = vadd.f32 %v2273, %v3303
  %v3947 = vadd.f32 %v2277, %v3307
  %v3948 = vadd.f32 %v2279, %v3309
  %v3949 = vadd.f32 %v2281, %v3311
  %v3950 = vadd.f32 %v2283, %v3313
  %v3951 = vadd.f32 %v2287, %v3317
  %v3952 = vadd.f32 %v2289, %v3319
  %v3953 = vadd.f32 %v2291, %v3321
  %v3954 = vadd.f32 %v2293, %v3323
  %v3955 = vadd.f32 %v2297, %v3327
  %v3956 = vadd.f32 %v2299, %v3329
  %v3957 = vadd.f32 %v2301, %v3331
  %v3958 = vadd.f32 %v2303, %v3333
  %v3959 = vadd.f32 %v2307, %v3337
  %v3960 = vadd.f32 %v2309, %v3339
  %v3961 = vadd.f32 %v2311, %v3341
  %v3962 = vadd.f32 %v2313, %v3343
  %v3963 = vadd.f32 %v2317, %v3347
  %v3964 = vadd.f32 %v2319, %v3349
  %v3965 = vadd.f32 %v2321, %v3351
  %v3966 = vadd.f32 %v2323, %v3353
  %v3967 = vadd.f32 %v2327, %v3357
  %v3968 = vadd.f32 %v2329, %v3359
  %v3969 = vadd.f32 %v2331, %v3361
  %v3970 = vadd.f32 %v2333, %v3363
  %v3971 = vadd.f32 %v2337, %v3367
  %v3972 = vadd.f32 %v2339, %v3369
  %v3973 = vadd.f32 %v2341, %v3371
  %v3974 = vadd.f32 %v2343, %v3373
  %v3975 = vadd.f32 %v2347, %v3377
  %v3976 = vadd.f32 %v2349, %v3379
  %v3977 = vadd.f32 %v2351, %v3381
  %v3978 = vadd.f32 %v2353, %v3383
  %v3979 = vadd.f32 %v2357, %v3387
  %v3980 = vadd.f32 %v2359, %v3389
  %v3981 = vadd.f32 %v2361, %v3391
  %v3982 = vadd.f32 %v2363, %v3393
  %v3983 = vadd.f32 %v2367, %v3397
  %v3984 = vadd.f32 %v2369, %v3399
  %v3985 = vadd.f32 %v2371, %v3401
  %v3986 = vadd.f32 %v2373, %v3403
  %v3987 = vadd.f32 %v2377, %v3407
  %v3988 = vadd.f32 %v2379, %v3409
  %v3989 = vadd.f32 %v2381, %v3411
  %v3990 = vadd.f32 %v2383, %v3413
  %v3991 = vadd.f32 %v2387, %v3417
  %v3992 = vadd.f32 %v2389, %v3419
  %v3993 = vadd.f32 %v2391, %v3421
  %v3994 = vadd.f32 %v2393, %v3423
  %v3995 = vadd.f32 %v2397, %v3427
  %v3996 = vadd.f32 %v2399, %v3429
  %v3997 = vadd.f32 %v2401, %v3431
  %v3998 = vadd.f32 %v2403, %v3433
  %v3999 = vadd.f32 %v2407, %v3437
  %v4000 = vadd.f32 %v2409, %v3439
  %v4001 = vadd.f32 %v2411, %v3441
  %v4002 = vadd.f32 %v2413, %v3443
  %v4003 = vadd.f32 %v2417, %v3447
  %v4004 = vadd.f32 %v2419, %v3449
  %v4005 = vadd.f32 %v2421, %v3451
  %v4006 = vadd.f32 %v2423, %v3453
  %v4007 = vadd.f32 %v2427, %v3457
  %v4008 = vadd.f32 %v2429, %v3459
  %v4009 = vadd.f32 %v2431, %v3461
  %v4010 = vadd.f32 %v2433, %v3463
  %v4011 = vadd.f32 %v2437, %v3467
  %v4012 = vadd.f32 %v2439, %v3469
  %v4013 = vadd.f32 %v2441, %v3471
  %v4014 = vadd.f32 %v2443, %v3473
  %v4015 = vadd.f32 %v2447, %v3477
  %v4016 = vadd.f32 %v2449, %v3479
  %v4017 = vadd.f32 %v2451, %v3481
  %v4018 = vadd.f32 %v2453, %v3483
  %v4019 = vadd.f32 %v2457, %v3487
  %v4020 = vadd.f32 %v2459, %v3489
  %v4021 = vadd.f32 %v2461, %v3491
  %v4022 = vadd.f32 %v2463, %v3493
  %v4023 = vadd.f32 %v2467, %v3497
  %v4024 = vadd.f32 %v2469, %v3499
  %v4025 = vadd.f32 %v2471, %v3501
  %v4026 = vadd.f32 %v2473, %v3503
  %v4027 = vadd.f32 %v2477, %v3507
  %v4028 = vadd.f32 %v2479, %v3509
  %v4029 = vadd.f32 %v2481, %v3511
  %v4030 = vadd.f32 %v2483, %v3513
  %v4031 = vadd.f32 %v2487, %v3517
  %v4032 = vadd.f32 %v2489, %v3519
  %v4033 = vadd.f32 %v2491, %v3521
  %v4034 = vadd.f32 %v2493, %v3523
  %v4035 = vadd.f32 %v2497, %v3527
  %v4036 = vadd.f32 %v2499, %v3529
  %v4037 = vadd.f32 %v2501, %v3531
  %v4038 = vadd.f32 %v2503, %v3533
  %v4039 = vadd.f32 %v2507, %v3537
  %v4040 = vadd.f32 %v2509, %v3539
  %v4041 = vadd.f32 %v2511, %v3541
  %v4042 = vadd.f32 %v2513, %v3543
  %v4043 = vadd.f32 %v2517, %v3547
  %v4044 = vadd.f32 %v2519, %v3549
  %v4045 = vadd.f32 %v2521, %v3551
  %v4046 = vadd.f32 %v2523, %v3553
  %v4047 = vadd.f32 %v2527, %v3557
  %v4048 = vadd.f32 %v2529, %v3559
  %v4049 = vadd.f32 %v2531, %v3561
  %v4050 = vadd.f32 %v2533, %v3563
  %v4051 = vadd.f32 %v2537, %v3567
  %v4052 = vadd.f32 %v2539, %v3569
  %v4053 = vadd.f32 %v2541, %v3571
  %v4054 = vadd.f32 %v2543, %v3573
  %v4055 = vadd.f32 %v2547, %v3577
  %v4056 = vadd.f32 %v2549, %v3579
  %v4057 = vadd.f32 %v2551, %v3581
  %v4058 = vadd.f32 %v2553, %v3583
  %v4059 = vadd.f32 %v2557, %v3587
  %v4060 = vadd.f32 %v2559, %v3589
  %v4061 = vadd.f32 %v2561, %v3591
  %v4062 = vadd.f32 %v2563, %v3593
  %v4063 = vadd.f32 %v2567, %v3597
  %v4064 = vadd.f32 %v2569, %v3599
  %v4065 = vadd.f32 %v2571, %v3601
  %v4066 = vadd.f32 %v2573, %v3603
  %v4067 = vadd.f32 %v2577, %v3607
  %v4068 = vadd.f32 %v2579, %v3609
  %v4069 = vadd.f32 %v2581, %v3611
  %v4070 = vadd.f32 %v2583, %v3613
  %v4071 = vadd.f32 %v2587, %v3617
  %v4072 = vadd.f32 %v2589, %v3619
  %v4073 = vadd.f32 %v2591, %v3621
  %v4074 = vadd.f32 %v2593, %v3623
  %v4075 = vadd.f32 %v2597, %v3627
  %v4076 = vadd.f32 %v2599, %v3629
  %v4077 = vadd.f32 %v2601, %v3631
  %v4078 = vadd.f32 %v2603, %v3633
  %v4079 = vadd.f32 %v2607, %v3637
  %v4080 = vadd.f32 %v2609, %v3639
  %v4081 = vadd.f32 %v2611, %v3641
  %v4082 = vadd.f32 %v2613, %v3643
  %v4083 = vadd.f32 %v2617, %v3647
  %v4084 = vadd.f32 %v2619, %v3649
  %v4085 = vadd.f32 %v2621, %v3651
  %v4086 = vadd.f32 %v2623, %v3653
  %v4087 = vadd.f32 %v2627, %v3657
  %v4088 = vadd.f32 %v2629, %v3659
  %v4089 = vadd.f32 %v2631, %v3661
  %v4090 = vadd.f32 %v2633, %v3663
  %v4091 = vadd.f32 %v2637, %v3667
  %v4092 = vadd.f32 %v2639, %v3669
  %v4093 = vadd.f32 %v2641, %v3671
  %v4094 = vadd.f32 %v2643, %v3673
  %v4095 = vadd.f32 %v2647, %v3677
  %v4096 = vadd.f32 %v2649, %v3679
  %v4097 = vadd.f32 %v2651, %v3681
  %v4098 = vadd.f32 %v2653, %v3683
  %v4099 = vadd.f32 %v2657, %v3687
  %v4100 = vadd.f32 %v2659, %v3689
  %v4101 = vadd.f32 %v2661, %v3691
  %v4102 = vadd.f32 %v2663, %v3693
  %v4103 = vadd.f32 %v2667, %v3697
  %v4104 = vadd.f32 %v2669, %v3699
  %v4105 = vadd.f32 %v2671, %v3701
  %v4106 = vadd.f32 %v2673, %v3703
  %v4107 = vadd.f32 %v2677, %v3707
  %v4108 = vadd.f32 %v2679, %v3709
  %v4109 = vadd.f32 %v2681, %v3711
  %v4110 = vadd.f32 %v2683, %v3713
  %v4111 = vadd.f32 %v2687, %v3717
  %v4112 = vadd.f32 %v2689, %v3719
  %v4113 = vadd.f32 %v2691, %v3721
  %v4114 = vadd.f32 %v2693, %v3723
  %v4115 = vadd.f32 %v2697, %v3727
  %v4116 = vadd.f32 %v2699, %v3729
  %v4117 = vadd.f32 %v2701, %v3731
  %v4118 = vadd.f32 %v2703, %v3733
  %s4119 = scalar_lea.vmem %s1, 96
  %v4120 = vld [vmem:[%s4119] sm:$0xff]
  %v4121 = vld [vmem:[%s4119 + $0x8] sm:$0xff]
  %v4122 = vld [vmem:[%s4119 + $0x10] sm:$0xff]
  %v4123 = vld [vmem:[%s4119 + $0x18] sm:$0xff]
  %v4128 = vunpack.c.l.b16 %v4120
  %v4129 = vunpack.c.h.b16 %v4120
  %v4130 = vunpack.c.l.b16 %v4121
  %v4131 = vunpack.c.h.b16 %v4121
  %v4132 = vunpack.c.l.b16 %v4122
  %v4133 = vunpack.c.h.b16 %v4122
  %v4134 = vunpack.c.l.b16 %v4123
  %v4135 = vunpack.c.h.b16 %v4123
  %v4136 = vpack.c.b16 %v4130, %v4128
  %v4137 = vpack.c.b16 %v4131, %v4129
  %v4138 = vpack.c.b16 %v4134, %v4132
  %v4139 = vpack.c.b16 %v4135, %v4133
  %v4145 = vsel %vm398, %v361, 0
  %v4148 = vsel %vm398, %v362, 0
  %v4151 = vsel %vm398, %v363, 0
  %v4154 = vsel %vm398, %v364, 0
  %4156 = vmatprep.subr.bf16.mxu0 %v4137
  %4157 = vmatpush1.bf16.msra.mxu0 %v4136
  %4158 = vmatprep.subr.bf16.mxu0 %v4139
  %4159 = vmatpush1.bf16.msra.mxu0 %v4138
  %4160 = vmatprep.subr.bf16.mxu0 0
  %4161 = vmatpush1.bf16.msra.mxu0 0
  %4162 = vmatprep.subr.bf16.mxu0 0
  %4163 = vmatpush1.bf16.msra.mxu0 0
  %4164 = vmatprep.subr.bf16.mxu0 0
  %4165 = vmatpush1.bf16.msra.mxu0 0
  %4166 = vmatprep.subr.bf16.mxu0 0
  %4167 = vmatpush1.bf16.msra.mxu0 0
  %4168 = vmatprep.subr.bf16.mxu0 0
  %4169 = vmatpush1.bf16.msra.mxu0 0
  %4170 = vmatprep.subr.bf16.mxu0 0
  %4171 = vmatpush1.bf16.msra.mxu0 0
  %4172 = vmatprep.subr.bf16.mxu0 0
  %4173 = vmatpush1.bf16.msra.mxu0 0
  %4174 = vmatprep.subr.bf16.mxu0 0
  %4175 = vmatpush1.bf16.msra.mxu0 0
  %4176 = vmatprep.subr.bf16.mxu0 0
  %4177 = vmatpush1.bf16.msra.mxu0 0
  %4178 = vmatprep.subr.bf16.mxu0 0
  %4179 = vmatpush1.bf16.msra.mxu0 0
  %4180 = vmatprep.subr.bf16.mxu0 0
  %4181 = vmatpush1.bf16.msra.mxu0 0
  %4182 = vmatprep.subr.bf16.mxu0 0
  %4183 = vmatpush1.bf16.msra.mxu0 0
  %4184 = vmatprep.subr.bf16.mxu0 0
  %4185 = vmatpush1.bf16.msra.mxu0 0
  %4186 = vmatprep.subr.bf16.mxu0 0
  %4187 = vmatpush1.bf16.msra.mxu0 0
  %4188 = vmatprep.mubr.bf16.mxu0 0
  %4189 = vmatmul.mubr.bf16.gmra.mrb[0].mxu0 %v424
  %v4190 = vpop.f32.mrb[0].mxu0
  %v4191 = vadd.f32 0.0, %v4190
  %v4192 = vpop.f32.mrb[0].mxu0
  %v4193 = vadd.f32 0.0, %v4192
  %v4194 = vpop.f32.mrb[0].mxu0
  %v4195 = vadd.f32 0.0, %v4194
  %v4196 = vpop.f32.mrb[0].mxu0
  %v4197 = vadd.f32 0.0, %v4196
  %4198 = vmatprep.mubr.bf16.mxu0 0
  %4199 = vmatmul.mubr.bf16.gmra.mrb[0].mxu0 %v427
  %v4200 = vpop.f32.mrb[0].mxu0
  %v4201 = vadd.f32 0.0, %v4200
  %v4202 = vpop.f32.mrb[0].mxu0
  %v4203 = vadd.f32 0.0, %v4202
  %v4204 = vpop.f32.mrb[0].mxu0
  %v4205 = vadd.f32 0.0, %v4204
  %v4206 = vpop.f32.mrb[0].mxu0
  %v4207 = vadd.f32 0.0, %v4206
  %4208 = vmatprep.mubr.bf16.mxu0 0
  %4209 = vmatmul.mubr.bf16.gmra.mrb[0].mxu0 %v430
  %v4210 = vpop.f32.mrb[0].mxu0
  %v4211 = vadd.f32 0.0, %v4210
  %v4212 = vpop.f32.mrb[0].mxu0
  %v4213 = vadd.f32 0.0, %v4212
  %v4214 = vpop.f32.mrb[0].mxu0
  %v4215 = vadd.f32 0.0, %v4214
  %v4216 = vpop.f32.mrb[0].mxu0
  %v4217 = vadd.f32 0.0, %v4216
  %4218 = vmatprep.mubr.bf16.mxu0 0
  %4219 = vmatmul.mubr.bf16.gmra.mrb[0].mxu0 %v433
  %v4220 = vpop.f32.mrb[0].mxu0
  %v4221 = vadd.f32 0.0, %v4220
  %v4222 = vpop.f32.mrb[0].mxu0
  %v4223 = vadd.f32 0.0, %v4222
  %v4224 = vpop.f32.mrb[0].mxu0
  %v4225 = vadd.f32 0.0, %v4224
  %v4226 = vpop.f32.mrb[0].mxu0
  %v4227 = vadd.f32 0.0, %v4226
  %4228 = vmatprep.mubr.bf16.mxu0 0
  %4229 = vmatmul.mubr.bf16.gmra.mrb[0].mxu0 %v436
  %v4230 = vpop.f32.mrb[0].mxu0
  %v4231 = vadd.f32 0.0, %v4230
  %v4232 = vpop.f32.mrb[0].mxu0
  %v4233 = vadd.f32 0.0, %v4232
  %v4234 = vpop.f32.mrb[0].mxu0
  %v4235 = vadd.f32 0.0, %v4234
  %v4236 = vpop.f32.mrb[0].mxu0
  %v4237 = vadd.f32 0.0, %v4236
  %4238 = vmatprep.mubr.bf16.mxu0 0
  %4239 = vmatmul.mubr.bf16.gmra.mrb[0].mxu0 %v439
  %v4240 = vpop.f32.mrb[0].mxu0
  %v4241 = vadd.f32 0.0, %v4240
  %v4242 = vpop.f32.mrb[0].mxu0
  %v4243 = vadd.f32 0.0, %v4242
  %v4244 = vpop.f32.mrb[0].mxu0
  %v4245 = vadd.f32 0.0, %v4244
  %v4246 = vpop.f32.mrb[0].mxu0
  %v4247 = vadd.f32 0.0, %v4246
  %4248 = vmatprep.mubr.bf16.mxu0 0
  %4249 = vmatmul.mubr.bf16.gmra.mrb[0].mxu0 %v442
  %v4250 = vpop.f32.mrb[0].mxu0
  %v4251 = vadd.f32 0.0, %v4250
  %v4252 = vpop.f32.mrb[0].mxu0
  %v4253 = vadd.f32 0.0, %v4252
  %v4254 = vpop.f32.mrb[0].mxu0
  %v4255 = vadd.f32 0.0, %v4254
  %v4256 = vpop.f32.mrb[0].mxu0
  %v4257 = vadd.f32 0.0, %v4256
  %4258 = vmatprep.mubr.bf16.mxu0 0
  %4259 = vmatmul.mubr.bf16.gmra.mrb[0].mxu0 %v445
  %v4260 = vpop.f32.mrb[0].mxu0
  %v4261 = vadd.f32 0.0, %v4260
  %v4262 = vpop.f32.mrb[0].mxu0
  %v4263 = vadd.f32 0.0, %v4262
  %v4264 = vpop.f32.mrb[0].mxu0
  %v4265 = vadd.f32 0.0, %v4264
  %v4266 = vpop.f32.mrb[0].mxu0
  %v4267 = vadd.f32 0.0, %v4266
  %4268 = vmatprep.mubr.bf16.mxu0 0
  %4269 = vmatmul.mubr.bf16.gmra.mrb[0].mxu0 %v448
  %v4270 = vpop.f32.mrb[0].mxu0
  %v4271 = vadd.f32 0.0, %v4270
  %v4272 = vpop.f32.mrb[0].mxu0
  %v4273 = vadd.f32 0.0, %v4272
  %v4274 = vpop.f32.mrb[0].mxu0
  %v4275 = vadd.f32 0.0, %v4274
  %v4276 = vpop.f32.mrb[0].mxu0
  %v4277 = vadd.f32 0.0, %v4276
  %4278 = vmatprep.mubr.bf16.mxu0 0
  %4279 = vmatmul.mubr.bf16.gmra.mrb[0].mxu0 %v451
  %v4280 = vpop.f32.mrb[0].mxu0
  %v4281 = vadd.f32 0.0, %v4280
  %v4282 = vpop.f32.mrb[0].mxu0
  %v4283 = vadd.f32 0.0, %v4282
  %v4284 = vpop.f32.mrb[0].mxu0
  %v4285 = vadd.f32 0.0, %v4284
  %v4286 = vpop.f32.mrb[0].mxu0
  %v4287 = vadd.f32 0.0, %v4286
  %4288 = vmatprep.mubr.bf16.mxu0 0
  %4289 = vmatmul.mubr.bf16.gmra.mrb[0].mxu0 %v454
  %v4290 = vpop.f32.mrb[0].mxu0
  %v4291 = vadd.f32 0.0, %v4290
  %v4292 = vpop.f32.mrb[0].mxu0
  %v4293 = vadd.f32 0.0, %v4292
  %v4294 = vpop.f32.mrb[0].mxu0
  %v4295 = vadd.f32 0.0, %v4294
  %v4296 = vpop.f32.mrb[0].mxu0
  %v4297 = vadd.f32 0.0, %v4296
  %4298 = vmatprep.mubr.bf16.mxu0 0
  %4299 = vmatmul.mubr.bf16.gmra.mrb[0].mxu0 %v457
  %v4300 = vpop.f32.mrb[0].mxu0
  %v4301 = vadd.f32 0.0, %v4300
  %v4302 = vpop.f32.mrb[0].mxu0
  %v4303 = vadd.f32 0.0, %v4302
  %v4304 = vpop.f32.mrb[0].mxu0
  %v4305 = vadd.f32 0.0, %v4304
  %v4306 = vpop.f32.mrb[0].mxu0
  %v4307 = vadd.f32 0.0, %v4306
  %4308 = vmatprep.mubr.bf16.mxu0 0
  %4309 = vmatmul.mubr.bf16.gmra.mrb[0].mxu0 %v460
  %v4310 = vpop.f32.mrb[0].mxu0
  %v4311 = vadd.f32 0.0, %v4310
  %v4312 = vpop.f32.mrb[0].mxu0
  %v4313 = vadd.f32 0.0, %v4312
  %v4314 = vpop.f32.mrb[0].mxu0
  %v4315 = vadd.f32 0.0, %v4314
  %v4316 = vpop.f32.mrb[0].mxu0
  %v4317 = vadd.f32 0.0, %v4316
  %4318 = vmatprep.mubr.bf16.mxu0 0
  %4319 = vmatmul.mubr.bf16.gmra.mrb[0].mxu0 %v463
  %v4320 = vpop.f32.mrb[0].mxu0
  %v4321 = vadd.f32 0.0, %v4320
  %v4322 = vpop.f32.mrb[0].mxu0
  %v4323 = vadd.f32 0.0, %v4322
  %v4324 = vpop.f32.mrb[0].mxu0
  %v4325 = vadd.f32 0.0, %v4324
  %v4326 = vpop.f32.mrb[0].mxu0
  %v4327 = vadd.f32 0.0, %v4326
  %4328 = vmatprep.mubr.bf16.mxu0 0
  %4329 = vmatmul.mubr.bf16.gmra.mrb[0].mxu0 %v466
  %v4330 = vpop.f32.mrb[0].mxu0
  %v4331 = vadd.f32 0.0, %v4330
  %v4332 = vpop.f32.mrb[0].mxu0
  %v4333 = vadd.f32 0.0, %v4332
  %v4334 = vpop.f32.mrb[0].mxu0
  %v4335 = vadd.f32 0.0, %v4334
  %v4336 = vpop.f32.mrb[0].mxu0
  %v4337 = vadd.f32 0.0, %v4336
  %4338 = vmatprep.mubr.bf16.mxu0 0
  %4339 = vmatmul.mubr.bf16.gmra.mrb[0].mxu0 %v469
  %v4340 = vpop.f32.mrb[0].mxu0
  %v4341 = vadd.f32 0.0, %v4340
  %v4342 = vpop.f32.mrb[0].mxu0
  %v4343 = vadd.f32 0.0, %v4342
  %v4344 = vpop.f32.mrb[0].mxu0
  %v4345 = vadd.f32 0.0, %v4344
  %v4346 = vpop.f32.mrb[0].mxu0
  %v4347 = vadd.f32 0.0, %v4346
  %4348 = vmatprep.mubr.bf16.mxu0 0
  %4349 = vmatmul.mubr.bf16.gmra.mrb[0].mxu0 %v472
  %v4350 = vpop.f32.mrb[0].mxu0
  %v4351 = vadd.f32 0.0, %v4350
  %v4352 = vpop.f32.mrb[0].mxu0
  %v4353 = vadd.f32 0.0, %v4352
  %v4354 = vpop.f32.mrb[0].mxu0
  %v4355 = vadd.f32 0.0, %v4354
  %v4356 = vpop.f32.mrb[0].mxu0
  %v4357 = vadd.f32 0.0, %v4356
  %4358 = vmatprep.mubr.bf16.mxu0 0
  %4359 = vmatmul.mubr.bf16.gmra.mrb[0].mxu0 %v475
  %v4360 = vpop.f32.mrb[0].mxu0
  %v4361 = vadd.f32 0.0, %v4360
  %v4362 = vpop.f32.mrb[0].mxu0
  %v4363 = vadd.f32 0.0, %v4362
  %v4364 = vpop.f32.mrb[0].mxu0
  %v4365 = vadd.f32 0.0, %v4364
  %v4366 = vpop.f32.mrb[0].mxu0
  %v4367 = vadd.f32 0.0, %v4366
  %4368 = vmatprep.mubr.bf16.mxu0 0
  %4369 = vmatmul.mubr.bf16.gmra.mrb[0].mxu0 %v478
  %v4370 = vpop.f32.mrb[0].mxu0
  %v4371 = vadd.f32 0.0, %v4370
  %v4372 = vpop.f32.mrb[0].mxu0
  %v4373 = vadd.f32 0.0, %v4372
  %v4374 = vpop.f32.mrb[0].mxu0
  %v4375 = vadd.f32 0.0, %v4374
  %v4376 = vpop.f32.mrb[0].mxu0
  %v4377 = vadd.f32 0.0, %v4376
  %4378 = vmatprep.mubr.bf16.mxu0 0
  %4379 = vmatmul.mubr.bf16.gmra.mrb[0].mxu0 %v481
  %v4380 = vpop.f32.mrb[0].mxu0
  %v4381 = vadd.f32 0.0, %v4380
  %v4382 = vpop.f32.mrb[0].mxu0
  %v4383 = vadd.f32 0.0, %v4382
  %v4384 = vpop.f32.mrb[0].mxu0
  %v4385 = vadd.f32 0.0, %v4384
  %v4386 = vpop.f32.mrb[0].mxu0
  %v4387 = vadd.f32 0.0, %v4386
  %4388 = vmatprep.mubr.bf16.mxu0 0
  %4389 = vmatmul.mubr.bf16.gmra.mrb[0].mxu0 %v484
  %v4390 = vpop.f32.mrb[0].mxu0
  %v4391 = vadd.f32 0.0, %v4390
  %v4392 = vpop.f32.mrb[0].mxu0
  %v4393 = vadd.f32 0.0, %v4392
  %v4394 = vpop.f32.mrb[0].mxu0
  %v4395 = vadd.f32 0.0, %v4394
  %v4396 = vpop.f32.mrb[0].mxu0
  %v4397 = vadd.f32 0.0, %v4396
  %4398 = vmatprep.mubr.bf16.mxu0 0
  %4399 = vmatmul.mubr.bf16.gmra.mrb[0].mxu0 %v487
  %v4400 = vpop.f32.mrb[0].mxu0
  %v4401 = vadd.f32 0.0, %v4400
  %v4402 = vpop.f32.mrb[0].mxu0
  %v4403 = vadd.f32 0.0, %v4402
  %v4404 = vpop.f32.mrb[0].mxu0
  %v4405 = vadd.f32 0.0, %v4404
  %v4406 = vpop.f32.mrb[0].mxu0
  %v4407 = vadd.f32 0.0, %v4406
  %4408 = vmatprep.mubr.bf16.mxu0 0
  %4409 = vmatmul.mubr.bf16.gmra.mrb[0].mxu0 %v490
  %v4410 = vpop.f32.mrb[0].mxu0
  %v4411 = vadd.f32 0.0, %v4410
  %v4412 = vpop.f32.mrb[0].mxu0
  %v4413 = vadd.f32 0.0, %v4412
  %v4414 = vpop.f32.mrb[0].mxu0
  %v4415 = vadd.f32 0.0, %v4414
  %v4416 = vpop.f32.mrb[0].mxu0
  %v4417 = vadd.f32 0.0, %v4416
  %4418 = vmatprep.mubr.bf16.mxu0 0
  %4419 = vmatmul.mubr.bf16.gmra.mrb[0].mxu0 %v493
  %v4420 = vpop.f32.mrb[0].mxu0
  %v4421 = vadd.f32 0.0, %v4420
  %v4422 = vpop.f32.mrb[0].mxu0
  %v4423 = vadd.f32 0.0, %v4422
  %v4424 = vpop.f32.mrb[0].mxu0
  %v4425 = vadd.f32 0.0, %v4424
  %v4426 = vpop.f32.mrb[0].mxu0
  %v4427 = vadd.f32 0.0, %v4426
  %4428 = vmatprep.mubr.bf16.mxu0 0
  %4429 = vmatmul.mubr.bf16.gmra.mrb[0].mxu0 %v496
  %v4430 = vpop.f32.mrb[0].mxu0
  %v4431 = vadd.f32 0.0, %v4430
  %v4432 = vpop.f32.mrb[0].mxu0
  %v4433 = vadd.f32 0.0, %v4432
  %v4434 = vpop.f32.mrb[0].mxu0
  %v4435 = vadd.f32 0.0, %v4434
  %v4436 = vpop.f32.mrb[0].mxu0
  %v4437 = vadd.f32 0.0, %v4436
  %4438 = vmatprep.mubr.bf16.mxu0 0
  %4439 = vmatmul.mubr.bf16.gmra.mrb[0].mxu0 %v499
  %v4440 = vpop.f32.mrb[0].mxu0
  %v4441 = vadd.f32 0.0, %v4440
  %v4442 = vpop.f32.mrb[0].mxu0
  %v4443 = vadd.f32 0.0, %v4442
  %v4444 = vpop.f32.mrb[0].mxu0
  %v4445 = vadd.f32 0.0, %v4444
  %v4446 = vpop.f32.mrb[0].mxu0
  %v4447 = vadd.f32 0.0, %v4446
  %4448 = vmatprep.mubr.bf16.mxu0 0
  %4449 = vmatmul.mubr.bf16.gmra.mrb[0].mxu0 %v502
  %v4450 = vpop.f32.mrb[0].mxu0
  %v4451 = vadd.f32 0.0, %v4450
  %v4452 = vpop.f32.mrb[0].mxu0
  %v4453 = vadd.f32 0.0, %v4452
  %v4454 = vpop.f32.mrb[0].mxu0
  %v4455 = vadd.f32 0.0, %v4454
  %v4456 = vpop.f32.mrb[0].mxu0
  %v4457 = vadd.f32 0.0, %v4456
  %4458 = vmatprep.mubr.bf16.mxu0 0
  %4459 = vmatmul.mubr.bf16.gmra.mrb[0].mxu0 %v505
  %v4460 = vpop.f32.mrb[0].mxu0
  %v4461 = vadd.f32 0.0, %v4460
  %v4462 = vpop.f32.mrb[0].mxu0
  %v4463 = vadd.f32 0.0, %v4462
  %v4464 = vpop.f32.mrb[0].mxu0
  %v4465 = vadd.f32 0.0, %v4464
  %v4466 = vpop.f32.mrb[0].mxu0
  %v4467 = vadd.f32 0.0, %v4466
  %4468 = vmatprep.mubr.bf16.mxu0 0
  %4469 = vmatmul.mubr.bf16.gmra.mrb[0].mxu0 %v508
  %v4470 = vpop.f32.mrb[0].mxu0
  %v4471 = vadd.f32 0.0, %v4470
  %v4472 = vpop.f32.mrb[0].mxu0
  %v4473 = vadd.f32 0.0, %v4472
  %v4474 = vpop.f32.mrb[0].mxu0
  %v4475 = vadd.f32 0.0, %v4474
  %v4476 = vpop.f32.mrb[0].mxu0
  %v4477 = vadd.f32 0.0, %v4476
  %4478 = vmatprep.mubr.bf16.mxu0 0
  %4479 = vmatmul.mubr.bf16.gmra.mrb[0].mxu0 %v511
  %v4480 = vpop.f32.mrb[0].mxu0
  %v4481 = vadd.f32 0.0, %v4480
  %v4482 = vpop.f32.mrb[0].mxu0
  %v4483 = vadd.f32 0.0, %v4482
  %v4484 = vpop.f32.mrb[0].mxu0
  %v4485 = vadd.f32 0.0, %v4484
  %v4486 = vpop.f32.mrb[0].mxu0
  %v4487 = vadd.f32 0.0, %v4486
  %4488 = vmatprep.mubr.bf16.mxu0 0
  %4489 = vmatmul.mubr.bf16.gmra.mrb[0].mxu0 %v514
  %v4490 = vpop.f32.mrb[0].mxu0
  %v4491 = vadd.f32 0.0, %v4490
  %v4492 = vpop.f32.mrb[0].mxu0
  %v4493 = vadd.f32 0.0, %v4492
  %v4494 = vpop.f32.mrb[0].mxu0
  %v4495 = vadd.f32 0.0, %v4494
  %v4496 = vpop.f32.mrb[0].mxu0
  %v4497 = vadd.f32 0.0, %v4496
  %4498 = vmatprep.mubr.bf16.mxu0 0
  %4499 = vmatmul.mubr.bf16.gmra.mrb[0].mxu0 %v517
  %v4500 = vpop.f32.mrb[0].mxu0
  %v4501 = vadd.f32 0.0, %v4500
  %v4502 = vpop.f32.mrb[0].mxu0
  %v4503 = vadd.f32 0.0, %v4502
  %v4504 = vpop.f32.mrb[0].mxu0
  %v4505 = vadd.f32 0.0, %v4504
  %v4506 = vpop.f32.mrb[0].mxu0
  %v4507 = vadd.f32 0.0, %v4506
  %4508 = vmatprep.mubr.bf16.mxu0 0
  %4509 = vmatmul.mubr.bf16.gmra.mrb[0].mxu0 %v520
  %v4510 = vpop.f32.mrb[0].mxu0
  %v4511 = vadd.f32 0.0, %v4510
  %v4512 = vpop.f32.mrb[0].mxu0
  %v4513 = vadd.f32 0.0, %v4512
  %v4514 = vpop.f32.mrb[0].mxu0
  %v4515 = vadd.f32 0.0, %v4514
  %v4516 = vpop.f32.mrb[0].mxu0
  %v4517 = vadd.f32 0.0, %v4516
  %4518 = vmatprep.mubr.bf16.mxu0 0
  %4519 = vmatmul.mubr.bf16.gmra.mrb[0].mxu0 %v523
  %v4520 = vpop.f32.mrb[0].mxu0
  %v4521 = vadd.f32 0.0, %v4520
  %v4522 = vpop.f32.mrb[0].mxu0
  %v4523 = vadd.f32 0.0, %v4522
  %v4524 = vpop.f32.mrb[0].mxu0
  %v4525 = vadd.f32 0.0, %v4524
  %v4526 = vpop.f32.mrb[0].mxu0
  %v4527 = vadd.f32 0.0, %v4526
  %4528 = vmatprep.mubr.bf16.mxu0 0
  %4529 = vmatmul.mubr.bf16.gmra.mrb[0].mxu0 %v526
  %v4530 = vpop.f32.mrb[0].mxu0
  %v4531 = vadd.f32 0.0, %v4530
  %v4532 = vpop.f32.mrb[0].mxu0
  %v4533 = vadd.f32 0.0, %v4532
  %v4534 = vpop.f32.mrb[0].mxu0
  %v4535 = vadd.f32 0.0, %v4534
  %v4536 = vpop.f32.mrb[0].mxu0
  %v4537 = vadd.f32 0.0, %v4536
  %4538 = vmatprep.mubr.bf16.mxu0 0
  %4539 = vmatmul.mubr.bf16.gmra.mrb[0].mxu0 %v529
  %v4540 = vpop.f32.mrb[0].mxu0
  %v4541 = vadd.f32 0.0, %v4540
  %v4542 = vpop.f32.mrb[0].mxu0
  %v4543 = vadd.f32 0.0, %v4542
  %v4544 = vpop.f32.mrb[0].mxu0
  %v4545 = vadd.f32 0.0, %v4544
  %v4546 = vpop.f32.mrb[0].mxu0
  %v4547 = vadd.f32 0.0, %v4546
  %4548 = vmatprep.mubr.bf16.mxu0 0
  %4549 = vmatmul.mubr.bf16.gmra.mrb[0].mxu0 %v532
  %v4550 = vpop.f32.mrb[0].mxu0
  %v4551 = vadd.f32 0.0, %v4550
  %v4552 = vpop.f32.mrb[0].mxu0
  %v4553 = vadd.f32 0.0, %v4552
  %v4554 = vpop.f32.mrb[0].mxu0
  %v4555 = vadd.f32 0.0, %v4554
  %v4556 = vpop.f32.mrb[0].mxu0
  %v4557 = vadd.f32 0.0, %v4556
  %4558 = vmatprep.mubr.bf16.mxu0 0
  %4559 = vmatmul.mubr.bf16.gmra.mrb[0].mxu0 %v535
  %v4560 = vpop.f32.mrb[0].mxu0
  %v4561 = vadd.f32 0.0, %v4560
  %v4562 = vpop.f32.mrb[0].mxu0
  %v4563 = vadd.f32 0.0, %v4562
  %v4564 = vpop.f32.mrb[0].mxu0
  %v4565 = vadd.f32 0.0, %v4564
  %v4566 = vpop.f32.mrb[0].mxu0
  %v4567 = vadd.f32 0.0, %v4566
  %4568 = vmatprep.mubr.bf16.mxu0 0
  %4569 = vmatmul.mubr.bf16.gmra.mrb[0].mxu0 %v538
  %v4570 = vpop.f32.mrb[0].mxu0
  %v4571 = vadd.f32 0.0, %v4570
  %v4572 = vpop.f32.mrb[0].mxu0
  %v4573 = vadd.f32 0.0, %v4572
  %v4574 = vpop.f32.mrb[0].mxu0
  %v4575 = vadd.f32 0.0, %v4574
  %v4576 = vpop.f32.mrb[0].mxu0
  %v4577 = vadd.f32 0.0, %v4576
  %4578 = vmatprep.mubr.bf16.mxu0 0
  %4579 = vmatmul.mubr.bf16.gmra.mrb[0].mxu0 %v541
  %v4580 = vpop.f32.mrb[0].mxu0
  %v4581 = vadd.f32 0.0, %v4580
  %v4582 = vpop.f32.mrb[0].mxu0
  %v4583 = vadd.f32 0.0, %v4582
  %v4584 = vpop.f32.mrb[0].mxu0
  %v4585 = vadd.f32 0.0, %v4584
  %v4586 = vpop.f32.mrb[0].mxu0
  %v4587 = vadd.f32 0.0, %v4586
  %4588 = vmatprep.mubr.bf16.mxu0 0
  %4589 = vmatmul.mubr.bf16.gmra.mrb[0].mxu0 %v544
  %v4590 = vpop.f32.mrb[0].mxu0
  %v4591 = vadd.f32 0.0, %v4590
  %v4592 = vpop.f32.mrb[0].mxu0
  %v4593 = vadd.f32 0.0, %v4592
  %v4594 = vpop.f32.mrb[0].mxu0
  %v4595 = vadd.f32 0.0, %v4594
  %v4596 = vpop.f32.mrb[0].mxu0
  %v4597 = vadd.f32 0.0, %v4596
  %4598 = vmatprep.mubr.bf16.mxu0 0
  %4599 = vmatmul.mubr.bf16.gmra.mrb[0].mxu0 %v547
  %v4600 = vpop.f32.mrb[0].mxu0
  %v4601 = vadd.f32 0.0, %v4600
  %v4602 = vpop.f32.mrb[0].mxu0
  %v4603 = vadd.f32 0.0, %v4602
  %v4604 = vpop.f32.mrb[0].mxu0
  %v4605 = vadd.f32 0.0, %v4604
  %v4606 = vpop.f32.mrb[0].mxu0
  %v4607 = vadd.f32 0.0, %v4606
  %4608 = vmatprep.mubr.bf16.mxu0 0
  %4609 = vmatmul.mubr.bf16.gmra.mrb[0].mxu0 %v550
  %v4610 = vpop.f32.mrb[0].mxu0
  %v4611 = vadd.f32 0.0, %v4610
  %v4612 = vpop.f32.mrb[0].mxu0
  %v4613 = vadd.f32 0.0, %v4612
  %v4614 = vpop.f32.mrb[0].mxu0
  %v4615 = vadd.f32 0.0, %v4614
  %v4616 = vpop.f32.mrb[0].mxu0
  %v4617 = vadd.f32 0.0, %v4616
  %4618 = vmatprep.mubr.bf16.mxu0 0
  %4619 = vmatmul.mubr.bf16.gmra.mrb[0].mxu0 %v553
  %v4620 = vpop.f32.mrb[0].mxu0
  %v4621 = vadd.f32 0.0, %v4620
  %v4622 = vpop.f32.mrb[0].mxu0
  %v4623 = vadd.f32 0.0, %v4622
  %v4624 = vpop.f32.mrb[0].mxu0
  %v4625 = vadd.f32 0.0, %v4624
  %v4626 = vpop.f32.mrb[0].mxu0
  %v4627 = vadd.f32 0.0, %v4626
  %4628 = vmatprep.mubr.bf16.mxu0 0
  %4629 = vmatmul.mubr.bf16.gmra.mrb[0].mxu0 %v556
  %v4630 = vpop.f32.mrb[0].mxu0
  %v4631 = vadd.f32 0.0, %v4630
  %v4632 = vpop.f32.mrb[0].mxu0
  %v4633 = vadd.f32 0.0, %v4632
  %v4634 = vpop.f32.mrb[0].mxu0
  %v4635 = vadd.f32 0.0, %v4634
  %v4636 = vpop.f32.mrb[0].mxu0
  %v4637 = vadd.f32 0.0, %v4636
  %4638 = vmatprep.mubr.bf16.mxu0 0
  %4639 = vmatmul.mubr.bf16.gmra.mrb[0].mxu0 %v559
  %v4640 = vpop.f32.mrb[0].mxu0
  %v4641 = vadd.f32 0.0, %v4640
  %v4642 = vpop.f32.mrb[0].mxu0
  %v4643 = vadd.f32 0.0, %v4642
  %v4644 = vpop.f32.mrb[0].mxu0
  %v4645 = vadd.f32 0.0, %v4644
  %v4646 = vpop.f32.mrb[0].mxu0
  %v4647 = vadd.f32 0.0, %v4646
  %4648 = vmatprep.mubr.bf16.mxu0 0
  %4649 = vmatmul.mubr.bf16.gmra.mrb[0].mxu0 %v562
  %v4650 = vpop.f32.mrb[0].mxu0
  %v4651 = vadd.f32 0.0, %v4650
  %v4652 = vpop.f32.mrb[0].mxu0
  %v4653 = vadd.f32 0.0, %v4652
  %v4654 = vpop.f32.mrb[0].mxu0
  %v4655 = vadd.f32 0.0, %v4654
  %v4656 = vpop.f32.mrb[0].mxu0
  %v4657 = vadd.f32 0.0, %v4656
  %4658 = vmatprep.mubr.bf16.mxu0 0
  %4659 = vmatmul.mubr.bf16.gmra.mrb[0].mxu0 %v565
  %v4660 = vpop.f32.mrb[0].mxu0
  %v4661 = vadd.f32 0.0, %v4660
  %v4662 = vpop.f32.mrb[0].mxu0
  %v4663 = vadd.f32 0.0, %v4662
  %v4664 = vpop.f32.mrb[0].mxu0
  %v4665 = vadd.f32 0.0, %v4664
  %v4666 = vpop.f32.mrb[0].mxu0
  %v4667 = vadd.f32 0.0, %v4666
  %4668 = vmatprep.mubr.bf16.mxu0 0
  %4669 = vmatmul.mubr.bf16.gmra.mrb[0].mxu0 %v568
  %v4670 = vpop.f32.mrb[0].mxu0
  %v4671 = vadd.f32 0.0, %v4670
  %v4672 = vpop.f32.mrb[0].mxu0
  %v4673 = vadd.f32 0.0, %v4672
  %v4674 = vpop.f32.mrb[0].mxu0
  %v4675 = vadd.f32 0.0, %v4674
  %v4676 = vpop.f32.mrb[0].mxu0
  %v4677 = vadd.f32 0.0, %v4676
  %4678 = vmatprep.mubr.bf16.mxu0 0
  %4679 = vmatmul.mubr.bf16.gmra.mrb[0].mxu0 %v571
  %v4680 = vpop.f32.mrb[0].mxu0
  %v4681 = vadd.f32 0.0, %v4680
  %v4682 = vpop.f32.mrb[0].mxu0
  %v4683 = vadd.f32 0.0, %v4682
  %v4684 = vpop.f32.mrb[0].mxu0
  %v4685 = vadd.f32 0.0, %v4684
  %v4686 = vpop.f32.mrb[0].mxu0
  %v4687 = vadd.f32 0.0, %v4686
  %4688 = vmatprep.mubr.bf16.mxu0 0
  %4689 = vmatmul.mubr.bf16.gmra.mrb[0].mxu0 %v574
  %v4690 = vpop.f32.mrb[0].mxu0
  %v4691 = vadd.f32 0.0, %v4690
  %v4692 = vpop.f32.mrb[0].mxu0
  %v4693 = vadd.f32 0.0, %v4692
  %v4694 = vpop.f32.mrb[0].mxu0
  %v4695 = vadd.f32 0.0, %v4694
  %v4696 = vpop.f32.mrb[0].mxu0
  %v4697 = vadd.f32 0.0, %v4696
  %4698 = vmatprep.mubr.bf16.mxu0 0
  %4699 = vmatmul.mubr.bf16.gmra.mrb[0].mxu0 %v577
  %v4700 = vpop.f32.mrb[0].mxu0
  %v4701 = vadd.f32 0.0, %v4700
  %v4702 = vpop.f32.mrb[0].mxu0
  %v4703 = vadd.f32 0.0, %v4702
  %v4704 = vpop.f32.mrb[0].mxu0
  %v4705 = vadd.f32 0.0, %v4704
  %v4706 = vpop.f32.mrb[0].mxu0
  %v4707 = vadd.f32 0.0, %v4706
  %4708 = vmatprep.mubr.bf16.mxu0 0
  %4709 = vmatmul.mubr.bf16.gmra.mrb[0].mxu0 %v580
  %v4710 = vpop.f32.mrb[0].mxu0
  %v4711 = vadd.f32 0.0, %v4710
  %v4712 = vpop.f32.mrb[0].mxu0
  %v4713 = vadd.f32 0.0, %v4712
  %v4714 = vpop.f32.mrb[0].mxu0
  %v4715 = vadd.f32 0.0, %v4714
  %v4716 = vpop.f32.mrb[0].mxu0
  %v4717 = vadd.f32 0.0, %v4716
  %4718 = vmatprep.mubr.bf16.mxu0 0
  %4719 = vmatmul.mubr.bf16.gmra.mrb[0].mxu0 %v583
  %v4720 = vpop.f32.mrb[0].mxu0
  %v4721 = vadd.f32 0.0, %v4720
  %v4722 = vpop.f32.mrb[0].mxu0
  %v4723 = vadd.f32 0.0, %v4722
  %v4724 = vpop.f32.mrb[0].mxu0
  %v4725 = vadd.f32 0.0, %v4724
  %v4726 = vpop.f32.mrb[0].mxu0
  %v4727 = vadd.f32 0.0, %v4726
  %4728 = vmatprep.mubr.bf16.mxu0 0
  %4729 = vmatmul.mubr.bf16.gmra.mrb[0].mxu0 %v586
  %v4730 = vpop.f32.mrb[0].mxu0
  %v4731 = vadd.f32 0.0, %v4730
  %v4732 = vpop.f32.mrb[0].mxu0
  %v4733 = vadd.f32 0.0, %v4732
  %v4734 = vpop.f32.mrb[0].mxu0
  %v4735 = vadd.f32 0.0, %v4734
  %v4736 = vpop.f32.mrb[0].mxu0
  %v4737 = vadd.f32 0.0, %v4736
  %4738 = vmatprep.mubr.bf16.mxu0 0
  %4739 = vmatmul.mubr.bf16.gmra.mrb[0].mxu0 %v589
  %v4740 = vpop.f32.mrb[0].mxu0
  %v4741 = vadd.f32 0.0, %v4740
  %v4742 = vpop.f32.mrb[0].mxu0
  %v4743 = vadd.f32 0.0, %v4742
  %v4744 = vpop.f32.mrb[0].mxu0
  %v4745 = vadd.f32 0.0, %v4744
  %v4746 = vpop.f32.mrb[0].mxu0
  %v4747 = vadd.f32 0.0, %v4746
  %4748 = vmatprep.mubr.bf16.mxu0 0
  %4749 = vmatmul.mubr.bf16.gmra.mrb[0].mxu0 %v592
  %v4750 = vpop.f32.mrb[0].mxu0
  %v4751 = vadd.f32 0.0, %v4750
  %v4752 = vpop.f32.mrb[0].mxu0
  %v4753 = vadd.f32 0.0, %v4752
  %v4754 = vpop.f32.mrb[0].mxu0
  %v4755 = vadd.f32 0.0, %v4754
  %v4756 = vpop.f32.mrb[0].mxu0
  %v4757 = vadd.f32 0.0, %v4756
  %4758 = vmatprep.mubr.bf16.mxu0 0
  %4759 = vmatmul.mubr.bf16.gmra.mrb[0].mxu0 %v595
  %v4760 = vpop.f32.mrb[0].mxu0
  %v4761 = vadd.f32 0.0, %v4760
  %v4762 = vpop.f32.mrb[0].mxu0
  %v4763 = vadd.f32 0.0, %v4762
  %v4764 = vpop.f32.mrb[0].mxu0
  %v4765 = vadd.f32 0.0, %v4764
  %v4766 = vpop.f32.mrb[0].mxu0
  %v4767 = vadd.f32 0.0, %v4766
  %4768 = vmatprep.mubr.bf16.mxu0 0
  %4769 = vmatmul.mubr.bf16.gmra.mrb[0].mxu0 %v598
  %v4770 = vpop.f32.mrb[0].mxu0
  %v4771 = vadd.f32 0.0, %v4770
  %v4772 = vpop.f32.mrb[0].mxu0
  %v4773 = vadd.f32 0.0, %v4772
  %v4774 = vpop.f32.mrb[0].mxu0
  %v4775 = vadd.f32 0.0, %v4774
  %v4776 = vpop.f32.mrb[0].mxu0
  %v4777 = vadd.f32 0.0, %v4776
  %4778 = vmatprep.mubr.bf16.mxu0 0
  %4779 = vmatmul.mubr.bf16.gmra.mrb[0].mxu0 %v601
  %v4780 = vpop.f32.mrb[0].mxu0
  %v4781 = vadd.f32 0.0, %v4780
  %v4782 = vpop.f32.mrb[0].mxu0
  %v4783 = vadd.f32 0.0, %v4782
  %v4784 = vpop.f32.mrb[0].mxu0
  %v4785 = vadd.f32 0.0, %v4784
  %v4786 = vpop.f32.mrb[0].mxu0
  %v4787 = vadd.f32 0.0, %v4786
  %4788 = vmatprep.mubr.bf16.mxu0 0
  %4789 = vmatmul.mubr.bf16.gmra.mrb[0].mxu0 %v604
  %v4790 = vpop.f32.mrb[0].mxu0
  %v4791 = vadd.f32 0.0, %v4790
  %v4792 = vpop.f32.mrb[0].mxu0
  %v4793 = vadd.f32 0.0, %v4792
  %v4794 = vpop.f32.mrb[0].mxu0
  %v4795 = vadd.f32 0.0, %v4794
  %v4796 = vpop.f32.mrb[0].mxu0
  %v4797 = vadd.f32 0.0, %v4796
  %4798 = vmatprep.mubr.bf16.mxu0 0
  %4799 = vmatmul.mubr.bf16.gmra.mrb[0].mxu0 %v607
  %v4800 = vpop.f32.mrb[0].mxu0
  %v4801 = vadd.f32 0.0, %v4800
  %v4802 = vpop.f32.mrb[0].mxu0
  %v4803 = vadd.f32 0.0, %v4802
  %v4804 = vpop.f32.mrb[0].mxu0
  %v4805 = vadd.f32 0.0, %v4804
  %v4806 = vpop.f32.mrb[0].mxu0
  %v4807 = vadd.f32 0.0, %v4806
  %4808 = vmatprep.mubr.bf16.mxu0 0
  %4809 = vmatmul.mubr.bf16.gmra.mrb[0].mxu0 %v610
  %v4810 = vpop.f32.mrb[0].mxu0
  %v4811 = vadd.f32 0.0, %v4810
  %v4812 = vpop.f32.mrb[0].mxu0
  %v4813 = vadd.f32 0.0, %v4812
  %v4814 = vpop.f32.mrb[0].mxu0
  %v4815 = vadd.f32 0.0, %v4814
  %v4816 = vpop.f32.mrb[0].mxu0
  %v4817 = vadd.f32 0.0, %v4816
  %4818 = vmatprep.mubr.bf16.mxu0 0
  %4819 = vmatmul.mubr.bf16.gmra.mrb[0].mxu0 %v613
  %v4820 = vpop.f32.mrb[0].mxu0
  %v4821 = vadd.f32 0.0, %v4820
  %v4822 = vpop.f32.mrb[0].mxu0
  %v4823 = vadd.f32 0.0, %v4822
  %v4824 = vpop.f32.mrb[0].mxu0
  %v4825 = vadd.f32 0.0, %v4824
  %v4826 = vpop.f32.mrb[0].mxu0
  %v4827 = vadd.f32 0.0, %v4826
  %4828 = vmatprep.mubr.bf16.mxu0 0
  %4829 = vmatmul.mubr.bf16.gmra.mrb[0].mxu0 %v616
  %v4830 = vpop.f32.mrb[0].mxu0
  %v4831 = vadd.f32 0.0, %v4830
  %v4832 = vpop.f32.mrb[0].mxu0
  %v4833 = vadd.f32 0.0, %v4832
  %v4834 = vpop.f32.mrb[0].mxu0
  %v4835 = vadd.f32 0.0, %v4834
  %v4836 = vpop.f32.mrb[0].mxu0
  %v4837 = vadd.f32 0.0, %v4836
  %4838 = vmatprep.mubr.bf16.mxu0 0
  %4839 = vmatmul.mubr.bf16.gmra.mrb[0].mxu0 %v619
  %v4840 = vpop.f32.mrb[0].mxu0
  %v4841 = vadd.f32 0.0, %v4840
  %v4842 = vpop.f32.mrb[0].mxu0
  %v4843 = vadd.f32 0.0, %v4842
  %v4844 = vpop.f32.mrb[0].mxu0
  %v4845 = vadd.f32 0.0, %v4844
  %v4846 = vpop.f32.mrb[0].mxu0
  %v4847 = vadd.f32 0.0, %v4846
  %4848 = vmatprep.mubr.bf16.mxu0 0
  %4849 = vmatmul.mubr.bf16.gmra.mrb[0].mxu0 %v622
  %v4850 = vpop.f32.mrb[0].mxu0
  %v4851 = vadd.f32 0.0, %v4850
  %v4852 = vpop.f32.mrb[0].mxu0
  %v4853 = vadd.f32 0.0, %v4852
  %v4854 = vpop.f32.mrb[0].mxu0
  %v4855 = vadd.f32 0.0, %v4854
  %v4856 = vpop.f32.mrb[0].mxu0
  %v4857 = vadd.f32 0.0, %v4856
  %4858 = vmatprep.mubr.bf16.mxu0 0
  %4859 = vmatmul.mubr.bf16.gmra.mrb[0].mxu0 %v625
  %v4860 = vpop.f32.mrb[0].mxu0
  %v4861 = vadd.f32 0.0, %v4860
  %v4862 = vpop.f32.mrb[0].mxu0
  %v4863 = vadd.f32 0.0, %v4862
  %v4864 = vpop.f32.mrb[0].mxu0
  %v4865 = vadd.f32 0.0, %v4864
  %v4866 = vpop.f32.mrb[0].mxu0
  %v4867 = vadd.f32 0.0, %v4866
  %4868 = vmatprep.mubr.bf16.mxu0 0
  %4869 = vmatmul.mubr.bf16.gmra.mrb[0].mxu0 %v628
  %v4870 = vpop.f32.mrb[0].mxu0
  %v4871 = vadd.f32 0.0, %v4870
  %v4872 = vpop.f32.mrb[0].mxu0
  %v4873 = vadd.f32 0.0, %v4872
  %v4874 = vpop.f32.mrb[0].mxu0
  %v4875 = vadd.f32 0.0, %v4874
  %v4876 = vpop.f32.mrb[0].mxu0
  %v4877 = vadd.f32 0.0, %v4876
  %4878 = vmatprep.mubr.bf16.mxu0 0
  %4879 = vmatmul.mubr.bf16.gmra.mrb[0].mxu0 %v631
  %v4880 = vpop.f32.mrb[0].mxu0
  %v4881 = vadd.f32 0.0, %v4880
  %v4882 = vpop.f32.mrb[0].mxu0
  %v4883 = vadd.f32 0.0, %v4882
  %v4884 = vpop.f32.mrb[0].mxu0
  %v4885 = vadd.f32 0.0, %v4884
  %v4886 = vpop.f32.mrb[0].mxu0
  %v4887 = vadd.f32 0.0, %v4886
  %4888 = vmatprep.mubr.bf16.mxu0 0
  %4889 = vmatmul.mubr.bf16.gmra.mrb[0].mxu0 %v634
  %v4890 = vpop.f32.mrb[0].mxu0
  %v4891 = vadd.f32 0.0, %v4890
  %v4892 = vpop.f32.mrb[0].mxu0
  %v4893 = vadd.f32 0.0, %v4892
  %v4894 = vpop.f32.mrb[0].mxu0
  %v4895 = vadd.f32 0.0, %v4894
  %v4896 = vpop.f32.mrb[0].mxu0
  %v4897 = vadd.f32 0.0, %v4896
  %4898 = vmatprep.mubr.bf16.mxu0 0
  %4899 = vmatmul.mubr.bf16.gmra.mrb[0].mxu0 %v637
  %v4900 = vpop.f32.mrb[0].mxu0
  %v4901 = vadd.f32 0.0, %v4900
  %v4902 = vpop.f32.mrb[0].mxu0
  %v4903 = vadd.f32 0.0, %v4902
  %v4904 = vpop.f32.mrb[0].mxu0
  %v4905 = vadd.f32 0.0, %v4904
  %v4906 = vpop.f32.mrb[0].mxu0
  %v4907 = vadd.f32 0.0, %v4906
  %4908 = vmatprep.mubr.bf16.mxu0 0
  %4909 = vmatmul.mubr.bf16.gmra.mrb[0].mxu0 %v640
  %v4910 = vpop.f32.mrb[0].mxu0
  %v4911 = vadd.f32 0.0, %v4910
  %v4912 = vpop.f32.mrb[0].mxu0
  %v4913 = vadd.f32 0.0, %v4912
  %v4914 = vpop.f32.mrb[0].mxu0
  %v4915 = vadd.f32 0.0, %v4914
  %v4916 = vpop.f32.mrb[0].mxu0
  %v4917 = vadd.f32 0.0, %v4916
  %4918 = vmatprep.mubr.bf16.mxu0 0
  %4919 = vmatmul.mubr.bf16.gmra.mrb[0].mxu0 %v643
  %v4920 = vpop.f32.mrb[0].mxu0
  %v4921 = vadd.f32 0.0, %v4920
  %v4922 = vpop.f32.mrb[0].mxu0
  %v4923 = vadd.f32 0.0, %v4922
  %v4924 = vpop.f32.mrb[0].mxu0
  %v4925 = vadd.f32 0.0, %v4924
  %v4926 = vpop.f32.mrb[0].mxu0
  %v4927 = vadd.f32 0.0, %v4926
  %4928 = vmatprep.mubr.bf16.mxu0 0
  %4929 = vmatmul.mubr.bf16.gmra.mrb[0].mxu0 %v646
  %v4930 = vpop.f32.mrb[0].mxu0
  %v4931 = vadd.f32 0.0, %v4930
  %v4932 = vpop.f32.mrb[0].mxu0
  %v4933 = vadd.f32 0.0, %v4932
  %v4934 = vpop.f32.mrb[0].mxu0
  %v4935 = vadd.f32 0.0, %v4934
  %v4936 = vpop.f32.mrb[0].mxu0
  %v4937 = vadd.f32 0.0, %v4936
  %4938 = vmatprep.mubr.bf16.mxu0 0
  %4939 = vmatmul.mubr.bf16.gmra.mrb[0].mxu0 %v649
  %v4940 = vpop.f32.mrb[0].mxu0
  %v4941 = vadd.f32 0.0, %v4940
  %v4942 = vpop.f32.mrb[0].mxu0
  %v4943 = vadd.f32 0.0, %v4942
  %v4944 = vpop.f32.mrb[0].mxu0
  %v4945 = vadd.f32 0.0, %v4944
  %v4946 = vpop.f32.mrb[0].mxu0
  %v4947 = vadd.f32 0.0, %v4946
  %4948 = vmatprep.mubr.bf16.mxu0 0
  %4949 = vmatmul.mubr.bf16.gmra.mrb[0].mxu0 %v652
  %v4950 = vpop.f32.mrb[0].mxu0
  %v4951 = vadd.f32 0.0, %v4950
  %v4952 = vpop.f32.mrb[0].mxu0
  %v4953 = vadd.f32 0.0, %v4952
  %v4954 = vpop.f32.mrb[0].mxu0
  %v4955 = vadd.f32 0.0, %v4954
  %v4956 = vpop.f32.mrb[0].mxu0
  %v4957 = vadd.f32 0.0, %v4956
  %4958 = vmatprep.mubr.bf16.mxu0 0
  %4959 = vmatmul.mubr.bf16.gmra.mrb[0].mxu0 %v655
  %v4960 = vpop.f32.mrb[0].mxu0
  %v4961 = vadd.f32 0.0, %v4960
  %v4962 = vpop.f32.mrb[0].mxu0
  %v4963 = vadd.f32 0.0, %v4962
  %v4964 = vpop.f32.mrb[0].mxu0
  %v4965 = vadd.f32 0.0, %v4964
  %v4966 = vpop.f32.mrb[0].mxu0
  %v4967 = vadd.f32 0.0, %v4966
  %4968 = vmatprep.mubr.bf16.mxu0 0
  %4969 = vmatmul.mubr.bf16.gmra.mrb[0].mxu0 %v658
  %v4970 = vpop.f32.mrb[0].mxu0
  %v4971 = vadd.f32 0.0, %v4970
  %v4972 = vpop.f32.mrb[0].mxu0
  %v4973 = vadd.f32 0.0, %v4972
  %v4974 = vpop.f32.mrb[0].mxu0
  %v4975 = vadd.f32 0.0, %v4974
  %v4976 = vpop.f32.mrb[0].mxu0
  %v4977 = vadd.f32 0.0, %v4976
  %4978 = vmatprep.mubr.bf16.mxu0 0
  %4979 = vmatmul.mubr.bf16.gmra.mrb[0].mxu0 %v661
  %v4980 = vpop.f32.mrb[0].mxu0
  %v4981 = vadd.f32 0.0, %v4980
  %v4982 = vpop.f32.mrb[0].mxu0
  %v4983 = vadd.f32 0.0, %v4982
  %v4984 = vpop.f32.mrb[0].mxu0
  %v4985 = vadd.f32 0.0, %v4984
  %v4986 = vpop.f32.mrb[0].mxu0
  %v4987 = vadd.f32 0.0, %v4986
  %4988 = vmatprep.mubr.bf16.mxu0 0
  %4989 = vmatmul.mubr.bf16.gmra.mrb[0].mxu0 %v664
  %v4990 = vpop.f32.mrb[0].mxu0
  %v4991 = vadd.f32 0.0, %v4990
  %v4992 = vpop.f32.mrb[0].mxu0
  %v4993 = vadd.f32 0.0, %v4992
  %v4994 = vpop.f32.mrb[0].mxu0
  %v4995 = vadd.f32 0.0, %v4994
  %v4996 = vpop.f32.mrb[0].mxu0
  %v4997 = vadd.f32 0.0, %v4996
  %4998 = vmatprep.mubr.bf16.mxu0 0
  %4999 = vmatmul.mubr.bf16.gmra.mrb[0].mxu0 %v667
  %v5000 = vpop.f32.mrb[0].mxu0
  %v5001 = vadd.f32 0.0, %v5000
  %v5002 = vpop.f32.mrb[0].mxu0
  %v5003 = vadd.f32 0.0, %v5002
  %v5004 = vpop.f32.mrb[0].mxu0
  %v5005 = vadd.f32 0.0, %v5004
  %v5006 = vpop.f32.mrb[0].mxu0
  %v5007 = vadd.f32 0.0, %v5006
  %5008 = vmatprep.mubr.bf16.mxu0 0
  %5009 = vmatmul.mubr.bf16.gmra.mrb[0].mxu0 %v670
  %v5010 = vpop.f32.mrb[0].mxu0
  %v5011 = vadd.f32 0.0, %v5010
  %v5012 = vpop.f32.mrb[0].mxu0
  %v5013 = vadd.f32 0.0, %v5012
  %v5014 = vpop.f32.mrb[0].mxu0
  %v5015 = vadd.f32 0.0, %v5014
  %v5016 = vpop.f32.mrb[0].mxu0
  %v5017 = vadd.f32 0.0, %v5016
  %5018 = vmatprep.mubr.bf16.mxu0 0
  %5019 = vmatmul.mubr.bf16.gmra.mrb[0].mxu0 %v673
  %v5020 = vpop.f32.mrb[0].mxu0
  %v5021 = vadd.f32 0.0, %v5020
  %v5022 = vpop.f32.mrb[0].mxu0
  %v5023 = vadd.f32 0.0, %v5022
  %v5024 = vpop.f32.mrb[0].mxu0
  %v5025 = vadd.f32 0.0, %v5024
  %v5026 = vpop.f32.mrb[0].mxu0
  %v5027 = vadd.f32 0.0, %v5026
  %5028 = vmatprep.mubr.bf16.mxu0 0
  %5029 = vmatmul.mubr.bf16.gmra.mrb[0].mxu0 %v676
  %v5030 = vpop.f32.mrb[0].mxu0
  %v5031 = vadd.f32 0.0, %v5030
  %v5032 = vpop.f32.mrb[0].mxu0
  %v5033 = vadd.f32 0.0, %v5032
  %v5034 = vpop.f32.mrb[0].mxu0
  %v5035 = vadd.f32 0.0, %v5034
  %v5036 = vpop.f32.mrb[0].mxu0
  %v5037 = vadd.f32 0.0, %v5036
  %5038 = vmatprep.mubr.bf16.mxu0 0
  %5039 = vmatmul.mubr.bf16.gmra.mrb[0].mxu0 %v679
  %v5040 = vpop.f32.mrb[0].mxu0
  %v5041 = vadd.f32 0.0, %v5040
  %v5042 = vpop.f32.mrb[0].mxu0
  %v5043 = vadd.f32 0.0, %v5042
  %v5044 = vpop.f32.mrb[0].mxu0
  %v5045 = vadd.f32 0.0, %v5044
  %v5046 = vpop.f32.mrb[0].mxu0
  %v5047 = vadd.f32 0.0, %v5046
  %5048 = vmatprep.mubr.bf16.mxu0 0
  %5049 = vmatmul.mubr.bf16.gmra.mrb[0].mxu0 %v682
  %v5050 = vpop.f32.mrb[0].mxu0
  %v5051 = vadd.f32 0.0, %v5050
  %v5052 = vpop.f32.mrb[0].mxu0
  %v5053 = vadd.f32 0.0, %v5052
  %v5054 = vpop.f32.mrb[0].mxu0
  %v5055 = vadd.f32 0.0, %v5054
  %v5056 = vpop.f32.mrb[0].mxu0
  %v5057 = vadd.f32 0.0, %v5056
  %5058 = vmatprep.mubr.bf16.mxu0 0
  %5059 = vmatmul.mubr.bf16.gmra.mrb[0].mxu0 %v685
  %v5060 = vpop.f32.mrb[0].mxu0
  %v5061 = vadd.f32 0.0, %v5060
  %v5062 = vpop.f32.mrb[0].mxu0
  %v5063 = vadd.f32 0.0, %v5062
  %v5064 = vpop.f32.mrb[0].mxu0
  %v5065 = vadd.f32 0.0, %v5064
  %v5066 = vpop.f32.mrb[0].mxu0
  %v5067 = vadd.f32 0.0, %v5066
  %5068 = vmatprep.mubr.bf16.mxu0 0
  %5069 = vmatmul.mubr.bf16.gmra.mrb[0].mxu0 %v2731
  %v5070 = vpop.f32.mrb[0].mxu0
  %v5071 = vadd.f32 0.0, %v5070
  %v5072 = vpop.f32.mrb[0].mxu0
  %v5073 = vadd.f32 0.0, %v5072
  %v5074 = vpop.f32.mrb[0].mxu0
  %v5075 = vadd.f32 0.0, %v5074
  %v5076 = vpop.f32.mrb[0].mxu0
  %v5077 = vadd.f32 0.0, %v5076
  %5078 = vmatprep.mubr.bf16.mxu0 0
  %5079 = vmatmul.mubr.bf16.gmra.mrb[0].mxu0 %v2734
  %v5080 = vpop.f32.mrb[0].mxu0
  %v5081 = vadd.f32 0.0, %v5080
  %v5082 = vpop.f32.mrb[0].mxu0
  %v5083 = vadd.f32 0.0, %v5082
  %v5084 = vpop.f32.mrb[0].mxu0
  %v5085 = vadd.f32 0.0, %v5084
  %v5086 = vpop.f32.mrb[0].mxu0
  %v5087 = vadd.f32 0.0, %v5086
  %5088 = vmatprep.mubr.bf16.mxu0 0
  %5089 = vmatmul.mubr.bf16.gmra.mrb[0].mxu0 %v2737
  %v5090 = vpop.f32.mrb[0].mxu0
  %v5091 = vadd.f32 0.0, %v5090
  %v5092 = vpop.f32.mrb[0].mxu0
  %v5093 = vadd.f32 0.0, %v5092
  %v5094 = vpop.f32.mrb[0].mxu0
  %v5095 = vadd.f32 0.0, %v5094
  %v5096 = vpop.f32.mrb[0].mxu0
  %v5097 = vadd.f32 0.0, %v5096
  %5098 = vmatprep.mubr.bf16.mxu0 0
  %5099 = vmatmul.mubr.bf16.gmra.mrb[0].mxu0 %v2740
  %v5100 = vpop.f32.mrb[0].mxu0
  %v5101 = vadd.f32 0.0, %v5100
  %v5102 = vpop.f32.mrb[0].mxu0
  %v5103 = vadd.f32 0.0, %v5102
  %v5104 = vpop.f32.mrb[0].mxu0
  %v5105 = vadd.f32 0.0, %v5104
  %v5106 = vpop.f32.mrb[0].mxu0
  %v5107 = vadd.f32 0.0, %v5106
  %5108 = vmatprep.mubr.bf16.mxu0 0
  %5109 = vmatmul.mubr.bf16.gmra.mrb[0].mxu0 %v4145
  %v5110 = vpop.f32.mrb[0].mxu0
  %v5111 = vadd.f32 0.0, %v5110
  %v5112 = vpop.f32.mrb[0].mxu0
  %v5113 = vadd.f32 0.0, %v5112
  %v5114 = vpop.f32.mrb[0].mxu0
  %v5115 = vadd.f32 0.0, %v5114
  %v5116 = vpop.f32.mrb[0].mxu0
  %v5117 = vadd.f32 0.0, %v5116
  %5118 = vmatprep.mubr.bf16.mxu0 0
  %5119 = vmatmul.mubr.bf16.gmra.mrb[0].mxu0 %v4148
  %v5120 = vpop.f32.mrb[0].mxu0
  %v5121 = vadd.f32 0.0, %v5120
  %v5122 = vpop.f32.mrb[0].mxu0
  %v5123 = vadd.f32 0.0, %v5122
  %v5124 = vpop.f32.mrb[0].mxu0
  %v5125 = vadd.f32 0.0, %v5124
  %v5126 = vpop.f32.mrb[0].mxu0
  %v5127 = vadd.f32 0.0, %v5126
  %5128 = vmatprep.mubr.bf16.mxu0 0
  %5129 = vmatmul.mubr.bf16.gmra.mrb[0].mxu0 %v4151
  %v5130 = vpop.f32.mrb[0].mxu0
  %v5131 = vadd.f32 0.0, %v5130
  %v5132 = vpop.f32.mrb[0].mxu0
  %v5133 = vadd.f32 0.0, %v5132
  %v5134 = vpop.f32.mrb[0].mxu0
  %v5135 = vadd.f32 0.0, %v5134
  %v5136 = vpop.f32.mrb[0].mxu0
  %v5137 = vadd.f32 0.0, %v5136
  %5138 = vmatprep.mubr.bf16.mxu0 0
  %5139 = vmatmul.mubr.bf16.gmra.mrb[0].mxu0 %v4154
  %v5140 = vpop.f32.mrb[0].mxu0
  %v5141 = vadd.f32 0.0, %v5140
  %v5142 = vpop.f32.mrb[0].mxu0
  %v5143 = vadd.f32 0.0, %v5142
  %v5144 = vpop.f32.mrb[0].mxu0
  %v5145 = vadd.f32 0.0, %v5144
  %v5146 = vpop.f32.mrb[0].mxu0
  %v5147 = vadd.f32 0.0, %v5146
  %5148 = vdwg.mxu0
  %v5149 = vadd.f32 %v3735, %v4191
  %v5150 = vadd.f32 %v3736, %v4193
  %v5151 = vadd.f32 %v3737, %v4195
  %v5152 = vadd.f32 %v3738, %v4197
  %v5153 = vadd.f32 %v3739, %v4201
  %v5154 = vadd.f32 %v3740, %v4203
  %v5155 = vadd.f32 %v3741, %v4205
  %v5156 = vadd.f32 %v3742, %v4207
  %v5157 = vadd.f32 %v3743, %v4211
  %v5158 = vadd.f32 %v3744, %v4213
  %v5159 = vadd.f32 %v3745, %v4215
  %v5160 = vadd.f32 %v3746, %v4217
  %v5161 = vadd.f32 %v3747, %v4221
  %v5162 = vadd.f32 %v3748, %v4223
  %v5163 = vadd.f32 %v3749, %v4225
  %v5164 = vadd.f32 %v3750, %v4227
  %v5165 = vadd.f32 %v3751, %v4231
  %v5166 = vadd.f32 %v3752, %v4233
  %v5167 = vadd.f32 %v3753, %v4235
  %v5168 = vadd.f32 %v3754, %v4237
  %v5169 = vadd.f32 %v3755, %v4241
  %v5170 = vadd.f32 %v3756, %v4243
  %v5171 = vadd.f32 %v3757, %v4245
  %v5172 = vadd.f32 %v3758, %v4247
  %v5173 = vadd.f32 %v3759, %v4251
  %v5174 = vadd.f32 %v3760, %v4253
  %v5175 = vadd.f32 %v3761, %v4255
  %v5176 = vadd.f32 %v3762, %v4257
  %v5177 = vadd.f32 %v3763, %v4261
  %v5178 = vadd.f32 %v3764, %v4263
  %v5179 = vadd.f32 %v3765, %v4265
  %v5180 = vadd.f32 %v3766, %v4267
  %v5181 = vadd.f32 %v3767, %v4271
  %v5182 = vadd.f32 %v3768, %v4273
  %v5183 = vadd.f32 %v3769, %v4275
  %v5184 = vadd.f32 %v3770, %v4277
  %v5185 = vadd.f32 %v3771, %v4281
  %v5186 = vadd.f32 %v3772, %v4283
  %v5187 = vadd.f32 %v3773, %v4285
  %v5188 = vadd.f32 %v3774, %v4287
  %v5189 = vadd.f32 %v3775, %v4291
  %v5190 = vadd.f32 %v3776, %v4293
  %v5191 = vadd.f32 %v3777, %v4295
  %v5192 = vadd.f32 %v3778, %v4297
  %v5193 = vadd.f32 %v3779, %v4301
  %v5194 = vadd.f32 %v3780, %v4303
  %v5195 = vadd.f32 %v3781, %v4305
  %v5196 = vadd.f32 %v3782, %v4307
  %v5197 = vadd.f32 %v3783, %v4311
  %v5198 = vadd.f32 %v3784, %v4313
  %v5199 = vadd.f32 %v3785, %v4315
  %v5200 = vadd.f32 %v3786, %v4317
  %v5201 = vadd.f32 %v3787, %v4321
  %v5202 = vadd.f32 %v3788, %v4323
  %v5203 = vadd.f32 %v3789, %v4325
  %v5204 = vadd.f32 %v3790, %v4327
  %v5205 = vadd.f32 %v3791, %v4331
  %v5206 = vadd.f32 %v3792, %v4333
  %v5207 = vadd.f32 %v3793, %v4335
  %v5208 = vadd.f32 %v3794, %v4337
  %v5209 = vadd.f32 %v3795, %v4341
  %v5210 = vadd.f32 %v3796, %v4343
  %v5211 = vadd.f32 %v3797, %v4345
  %v5212 = vadd.f32 %v3798, %v4347
  %v5213 = vadd.f32 %v3799, %v4351
  %v5214 = vadd.f32 %v3800, %v4353
  %v5215 = vadd.f32 %v3801, %v4355
  %v5216 = vadd.f32 %v3802, %v4357
  %v5217 = vadd.f32 %v3803, %v4361
  %v5218 = vadd.f32 %v3804, %v4363
  %v5219 = vadd.f32 %v3805, %v4365
  %v5220 = vadd.f32 %v3806, %v4367
  %v5221 = vadd.f32 %v3807, %v4371
  %v5222 = vadd.f32 %v3808, %v4373
  %v5223 = vadd.f32 %v3809, %v4375
  %v5224 = vadd.f32 %v3810, %v4377
  %v5225 = vadd.f32 %v3811, %v4381
  %v5226 = vadd.f32 %v3812, %v4383
  %v5227 = vadd.f32 %v3813, %v4385
  %v5228 = vadd.f32 %v3814, %v4387
  %v5229 = vadd.f32 %v3815, %v4391
  %v5230 = vadd.f32 %v3816, %v4393
  %v5231 = vadd.f32 %v3817, %v4395
  %v5232 = vadd.f32 %v3818, %v4397
  %v5233 = vadd.f32 %v3819, %v4401
  %v5234 = vadd.f32 %v3820, %v4403
  %v5235 = vadd.f32 %v3821, %v4405
  %v5236 = vadd.f32 %v3822, %v4407
  %v5237 = vadd.f32 %v3823, %v4411
  %v5238 = vadd.f32 %v3824, %v4413
  %v5239 = vadd.f32 %v3825, %v4415
  %v5240 = vadd.f32 %v3826, %v4417
  %v5241 = vadd.f32 %v3827, %v4421
  %v5242 = vadd.f32 %v3828, %v4423
  %v5243 = vadd.f32 %v3829, %v4425
  %v5244 = vadd.f32 %v3830, %v4427
  %v5245 = vadd.f32 %v3831, %v4431
  %v5246 = vadd.f32 %v3832, %v4433
  %v5247 = vadd.f32 %v3833, %v4435
  %v5248 = vadd.f32 %v3834, %v4437
  %v5249 = vadd.f32 %v3835, %v4441
  %v5250 = vadd.f32 %v3836, %v4443
  %v5251 = vadd.f32 %v3837, %v4445
  %v5252 = vadd.f32 %v3838, %v4447
  %v5253 = vadd.f32 %v3839, %v4451
  %v5254 = vadd.f32 %v3840, %v4453
  %v5255 = vadd.f32 %v3841, %v4455
  %v5256 = vadd.f32 %v3842, %v4457
  %v5257 = vadd.f32 %v3843, %v4461
  %v5258 = vadd.f32 %v3844, %v4463
  %v5259 = vadd.f32 %v3845, %v4465
  %v5260 = vadd.f32 %v3846, %v4467
  %v5261 = vadd.f32 %v3847, %v4471
  %v5262 = vadd.f32 %v3848, %v4473
  %v5263 = vadd.f32 %v3849, %v4475
  %v5264 = vadd.f32 %v3850, %v4477
  %v5265 = vadd.f32 %v3851, %v4481
  %v5266 = vadd.f32 %v3852, %v4483
  %v5267 = vadd.f32 %v3853, %v4485
  %v5268 = vadd.f32 %v3854, %v4487
  %v5269 = vadd.f32 %v3855, %v4491
  %v5270 = vadd.f32 %v3856, %v4493
  %v5271 = vadd.f32 %v3857, %v4495
  %v5272 = vadd.f32 %v3858, %v4497
  %v5273 = vadd.f32 %v3859, %v4501
  %v5274 = vadd.f32 %v3860, %v4503
  %v5275 = vadd.f32 %v3861, %v4505
  %v5276 = vadd.f32 %v3862, %v4507
  %v5277 = vadd.f32 %v3863, %v4511
  %v5278 = vadd.f32 %v3864, %v4513
  %v5279 = vadd.f32 %v3865, %v4515
  %v5280 = vadd.f32 %v3866, %v4517
  %v5281 = vadd.f32 %v3867, %v4521
  %v5282 = vadd.f32 %v3868, %v4523
  %v5283 = vadd.f32 %v3869, %v4525
  %v5284 = vadd.f32 %v3870, %v4527
  %v5285 = vadd.f32 %v3871, %v4531
  %v5286 = vadd.f32 %v3872, %v4533
  %v5287 = vadd.f32 %v3873, %v4535
  %v5288 = vadd.f32 %v3874, %v4537
  %v5289 = vadd.f32 %v3875, %v4541
  %v5290 = vadd.f32 %v3876, %v4543
  %v5291 = vadd.f32 %v3877, %v4545
  %v5292 = vadd.f32 %v3878, %v4547
  %v5293 = vadd.f32 %v3879, %v4551
  %v5294 = vadd.f32 %v3880, %v4553
  %v5295 = vadd.f32 %v3881, %v4555
  %v5296 = vadd.f32 %v3882, %v4557
  %v5297 = vadd.f32 %v3883, %v4561
  %v5298 = vadd.f32 %v3884, %v4563
  %v5299 = vadd.f32 %v3885, %v4565
  %v5300 = vadd.f32 %v3886, %v4567
  %v5301 = vadd.f32 %v3887, %v4571
  %v5302 = vadd.f32 %v3888, %v4573
  %v5303 = vadd.f32 %v3889, %v4575
  %v5304 = vadd.f32 %v3890, %v4577
  %v5305 = vadd.f32 %v3891, %v4581
  %v5306 = vadd.f32 %v3892, %v4583
  %v5307 = vadd.f32 %v3893, %v4585
  %v5308 = vadd.f32 %v3894, %v4587
  %v5309 = vadd.f32 %v3895, %v4591
  %v5310 = vadd.f32 %v3896, %v4593
  %v5311 = vadd.f32 %v3897, %v4595
  %v5312 = vadd.f32 %v3898, %v4597
  %v5313 = vadd.f32 %v3899, %v4601
  %v5314 = vadd.f32 %v3900, %v4603
  %v5315 = vadd.f32 %v3901, %v4605
  %v5316 = vadd.f32 %v3902, %v4607
  %v5317 = vadd.f32 %v3903, %v4611
  %v5318 = vadd.f32 %v3904, %v4613
  %v5319 = vadd.f32 %v3905, %v4615
  %v5320 = vadd.f32 %v3906, %v4617
  %v5321 = vadd.f32 %v3907, %v4621
  %v5322 = vadd.f32 %v3908, %v4623
  %v5323 = vadd.f32 %v3909, %v4625
  %v5324 = vadd.f32 %v3910, %v4627
  %v5325 = vadd.f32 %v3911, %v4631
  %v5326 = vadd.f32 %v3912, %v4633
  %v5327 = vadd.f32 %v3913, %v4635
  %v5328 = vadd.f32 %v3914, %v4637
  %v5329 = vadd.f32 %v3915, %v4641
  %v5330 = vadd.f32 %v3916, %v4643
  %v5331 = vadd.f32 %v3917, %v4645
  %v5332 = vadd.f32 %v3918, %v4647
  %v5333 = vadd.f32 %v3919, %v4651
  %v5334 = vadd.f32 %v3920, %v4653
  %v5335 = vadd.f32 %v3921, %v4655
  %v5336 = vadd.f32 %v3922, %v4657
  %v5337 = vadd.f32 %v3923, %v4661
  %v5338 = vadd.f32 %v3924, %v4663
  %v5339 = vadd.f32 %v3925, %v4665
  %v5340 = vadd.f32 %v3926, %v4667
  %v5341 = vadd.f32 %v3927, %v4671
  %v5342 = vadd.f32 %v3928, %v4673
  %v5343 = vadd.f32 %v3929, %v4675
  %v5344 = vadd.f32 %v3930, %v4677
  %v5345 = vadd.f32 %v3931, %v4681
  %v5346 = vadd.f32 %v3932, %v4683
  %v5347 = vadd.f32 %v3933, %v4685
  %v5348 = vadd.f32 %v3934, %v4687
  %v5349 = vadd.f32 %v3935, %v4691
  %v5350 = vadd.f32 %v3936, %v4693
  %v5351 = vadd.f32 %v3937, %v4695
  %v5352 = vadd.f32 %v3938, %v4697
  %v5353 = vadd.f32 %v3939, %v4701
  %v5354 = vadd.f32 %v3940, %v4703
  %v5355 = vadd.f32 %v3941, %v4705
  %v5356 = vadd.f32 %v3942, %v4707
  %v5357 = vadd.f32 %v3943, %v4711
  %v5358 = vadd.f32 %v3944, %v4713
  %v5359 = vadd.f32 %v3945, %v4715
  %v5360 = vadd.f32 %v3946, %v4717
  %v5361 = vadd.f32 %v3947, %v4721
  %v5362 = vadd.f32 %v3948, %v4723
  %v5363 = vadd.f32 %v3949, %v4725
  %v5364 = vadd.f32 %v3950, %v4727
  %v5365 = vadd.f32 %v3951, %v4731
  %v5366 = vadd.f32 %v3952, %v4733
  %v5367 = vadd.f32 %v3953, %v4735
  %v5368 = vadd.f32 %v3954, %v4737
  %v5369 = vadd.f32 %v3955, %v4741
  %v5370 = vadd.f32 %v3956, %v4743
  %v5371 = vadd.f32 %v3957, %v4745
  %v5372 = vadd.f32 %v3958, %v4747
  %v5373 = vadd.f32 %v3959, %v4751
  %v5374 = vadd.f32 %v3960, %v4753
  %v5375 = vadd.f32 %v3961, %v4755
  %v5376 = vadd.f32 %v3962, %v4757
  %v5377 = vadd.f32 %v3963, %v4761
  %v5378 = vadd.f32 %v3964, %v4763
  %v5379 = vadd.f32 %v3965, %v4765
  %v5380 = vadd.f32 %v3966, %v4767
  %v5381 = vadd.f32 %v3967, %v4771
  %v5382 = vadd.f32 %v3968, %v4773
  %v5383 = vadd.f32 %v3969, %v4775
  %v5384 = vadd.f32 %v3970, %v4777
  %v5385 = vadd.f32 %v3971, %v4781
  %v5386 = vadd.f32 %v3972, %v4783
  %v5387 = vadd.f32 %v3973, %v4785
  %v5388 = vadd.f32 %v3974, %v4787
  %v5389 = vadd.f32 %v3975, %v4791
  %v5390 = vadd.f32 %v3976, %v4793
  %v5391 = vadd.f32 %v3977, %v4795
  %v5392 = vadd.f32 %v3978, %v4797
  %v5393 = vadd.f32 %v3979, %v4801
  %v5394 = vadd.f32 %v3980, %v4803
  %v5395 = vadd.f32 %v3981, %v4805
  %v5396 = vadd.f32 %v3982, %v4807
  %v5397 = vadd.f32 %v3983, %v4811
  %v5398 = vadd.f32 %v3984, %v4813
  %v5399 = vadd.f32 %v3985, %v4815
  %v5400 = vadd.f32 %v3986, %v4817
  %v5401 = vadd.f32 %v3987, %v4821
  %v5402 = vadd.f32 %v3988, %v4823
  %v5403 = vadd.f32 %v3989, %v4825
  %v5404 = vadd.f32 %v3990, %v4827
  %v5405 = vadd.f32 %v3991, %v4831
  %v5406 = vadd.f32 %v3992, %v4833
  %v5407 = vadd.f32 %v3993, %v4835
  %v5408 = vadd.f32 %v3994, %v4837
  %v5409 = vadd.f32 %v3995, %v4841
  %v5410 = vadd.f32 %v3996, %v4843
  %v5411 = vadd.f32 %v3997, %v4845
  %v5412 = vadd.f32 %v3998, %v4847
  %v5413 = vadd.f32 %v3999, %v4851
  %v5414 = vadd.f32 %v4000, %v4853
  %v5415 = vadd.f32 %v4001, %v4855
  %v5416 = vadd.f32 %v4002, %v4857
  %v5417 = vadd.f32 %v4003, %v4861
  %v5418 = vadd.f32 %v4004, %v4863
  %v5419 = vadd.f32 %v4005, %v4865
  %v5420 = vadd.f32 %v4006, %v4867
  %v5421 = vadd.f32 %v4007, %v4871
  %v5422 = vadd.f32 %v4008, %v4873
  %v5423 = vadd.f32 %v4009, %v4875
  %v5424 = vadd.f32 %v4010, %v4877
  %v5425 = vadd.f32 %v4011, %v4881
  %v5426 = vadd.f32 %v4012, %v4883
  %v5427 = vadd.f32 %v4013, %v4885
  %v5428 = vadd.f32 %v4014, %v4887
  %v5429 = vadd.f32 %v4015, %v4891
  %v5430 = vadd.f32 %v4016, %v4893
  %v5431 = vadd.f32 %v4017, %v4895
  %v5432 = vadd.f32 %v4018, %v4897
  %v5433 = vadd.f32 %v4019, %v4901
  %v5434 = vadd.f32 %v4020, %v4903
  %v5435 = vadd.f32 %v4021, %v4905
  %v5436 = vadd.f32 %v4022, %v4907
  %v5437 = vadd.f32 %v4023, %v4911
  %v5438 = vadd.f32 %v4024, %v4913
  %v5439 = vadd.f32 %v4025, %v4915
  %v5440 = vadd.f32 %v4026, %v4917
  %v5441 = vadd.f32 %v4027, %v4921
  %v5442 = vadd.f32 %v4028, %v4923
  %v5443 = vadd.f32 %v4029, %v4925
  %v5444 = vadd.f32 %v4030, %v4927
  %v5445 = vadd.f32 %v4031, %v4931
  %v5446 = vadd.f32 %v4032, %v4933
  %v5447 = vadd.f32 %v4033, %v4935
  %v5448 = vadd.f32 %v4034, %v4937
  %v5449 = vadd.f32 %v4035, %v4941
  %v5450 = vadd.f32 %v4036, %v4943
  %v5451 = vadd.f32 %v4037, %v4945
  %v5452 = vadd.f32 %v4038, %v4947
  %v5453 = vadd.f32 %v4039, %v4951
  %v5454 = vadd.f32 %v4040, %v4953
  %v5455 = vadd.f32 %v4041, %v4955
  %v5456 = vadd.f32 %v4042, %v4957
  %v5457 = vadd.f32 %v4043, %v4961
  %v5458 = vadd.f32 %v4044, %v4963
  %v5459 = vadd.f32 %v4045, %v4965
  %v5460 = vadd.f32 %v4046, %v4967
  %v5461 = vadd.f32 %v4047, %v4971
  %v5462 = vadd.f32 %v4048, %v4973
  %v5463 = vadd.f32 %v4049, %v4975
  %v5464 = vadd.f32 %v4050, %v4977
  %v5465 = vadd.f32 %v4051, %v4981
  %v5466 = vadd.f32 %v4052, %v4983
  %v5467 = vadd.f32 %v4053, %v4985
  %v5468 = vadd.f32 %v4054, %v4987
  %v5469 = vadd.f32 %v4055, %v4991
  %v5470 = vadd.f32 %v4056, %v4993
  %v5471 = vadd.f32 %v4057, %v4995
  %v5472 = vadd.f32 %v4058, %v4997
  %v5473 = vadd.f32 %v4059, %v5001
  %v5474 = vadd.f32 %v4060, %v5003
  %v5475 = vadd.f32 %v4061, %v5005
  %v5476 = vadd.f32 %v4062, %v5007
  %v5477 = vadd.f32 %v4063, %v5011
  %v5478 = vadd.f32 %v4064, %v5013
  %v5479 = vadd.f32 %v4065, %v5015
  %v5480 = vadd.f32 %v4066, %v5017
  %v5481 = vadd.f32 %v4067, %v5021
  %v5482 = vadd.f32 %v4068, %v5023
  %v5483 = vadd.f32 %v4069, %v5025
  %v5484 = vadd.f32 %v4070, %v5027
  %v5485 = vadd.f32 %v4071, %v5031
  %v5486 = vadd.f32 %v4072, %v5033
  %v5487 = vadd.f32 %v4073, %v5035
  %v5488 = vadd.f32 %v4074, %v5037
  %v5489 = vadd.f32 %v4075, %v5041
  %v5490 = vadd.f32 %v4076, %v5043
  %v5491 = vadd.f32 %v4077, %v5045
  %v5492 = vadd.f32 %v4078, %v5047
  %v5493 = vadd.f32 %v4079, %v5051
  %v5494 = vadd.f32 %v4080, %v5053
  %v5495 = vadd.f32 %v4081, %v5055
  %v5496 = vadd.f32 %v4082, %v5057
  %v5497 = vadd.f32 %v4083, %v5061
  %v5498 = vadd.f32 %v4084, %v5063
  %v5499 = vadd.f32 %v4085, %v5065
  %v5500 = vadd.f32 %v4086, %v5067
  %v5501 = vadd.f32 %v4087, %v5071
  %v5502 = vadd.f32 %v4088, %v5073
  %v5503 = vadd.f32 %v4089, %v5075
  %v5504 = vadd.f32 %v4090, %v5077
  %v5505 = vadd.f32 %v4091, %v5081
  %v5506 = vadd.f32 %v4092, %v5083
  %v5507 = vadd.f32 %v4093, %v5085
  %v5508 = vadd.f32 %v4094, %v5087
  %v5509 = vadd.f32 %v4095, %v5091
  %v5510 = vadd.f32 %v4096, %v5093
  %v5511 = vadd.f32 %v4097, %v5095
  %v5512 = vadd.f32 %v4098, %v5097
  %v5513 = vadd.f32 %v4099, %v5101
  %v5514 = vadd.f32 %v4100, %v5103
  %v5515 = vadd.f32 %v4101, %v5105
  %v5516 = vadd.f32 %v4102, %v5107
  %v5517 = vadd.f32 %v4103, %v5111
  %v5518 = vadd.f32 %v4104, %v5113
  %v5519 = vadd.f32 %v4105, %v5115
  %v5520 = vadd.f32 %v4106, %v5117
  %v5521 = vadd.f32 %v4107, %v5121
  %v5522 = vadd.f32 %v4108, %v5123
  %v5523 = vadd.f32 %v4109, %v5125
  %v5524 = vadd.f32 %v4110, %v5127
  %v5525 = vadd.f32 %v4111, %v5131
  %v5526 = vadd.f32 %v4112, %v5133
  %v5527 = vadd.f32 %v4113, %v5135
  %v5528 = vadd.f32 %v4114, %v5137
  %v5529 = vadd.f32 %v4115, %v5141
  %v5530 = vadd.f32 %v4116, %v5143
  %v5531 = vadd.f32 %v4117, %v5145
  %v5532 = vadd.f32 %v4118, %v5147
  %s5533 = scalar_lea.vmem %s1, 128
  %v5534 = vld [vmem:[%s5533] sm:$0xff]
  %v5535 = vld [vmem:[%s5533 + $0x8] sm:$0xff]
  %v5536 = vld [vmem:[%s5533 + $0x10] sm:$0xff]
  %v5537 = vld [vmem:[%s5533 + $0x18] sm:$0xff]
  %v5542 = vunpack.c.l.b16 %v5534
  %v5543 = vunpack.c.h.b16 %v5534
  %v5544 = vunpack.c.l.b16 %v5535
  %v5545 = vunpack.c.h.b16 %v5535
  %v5546 = vunpack.c.l.b16 %v5536
  %v5547 = vunpack.c.h.b16 %v5536
  %v5548 = vunpack.c.l.b16 %v5537
  %v5549 = vunpack.c.h.b16 %v5537
  %v5550 = vpack.c.b16 %v5544, %v5542
  %v5551 = vpack.c.b16 %v5545, %v5543
  %v5552 = vpack.c.b16 %v5548, %v5546
  %v5553 = vpack.c.b16 %v5549, %v5547
  %v5559 = vsel %vm398, %v365, 0
  %v5562 = vsel %vm398, %v366, 0
  %v5565 = vsel %vm398, %v367, 0
  %v5568 = vsel %vm398, %v368, 0
  %5570 = vmatprep.subr.bf16.mxu0 %v5551
  %5571 = vmatpush1.bf16.msra.mxu0 %v5550
  %5572 = vmatprep.subr.bf16.mxu0 %v5553
  %5573 = vmatpush1.bf16.msra.mxu0 %v5552
  %5574 = vmatprep.subr.bf16.mxu0 0
  %5575 = vmatpush1.bf16.msra.mxu0 0
  %5576 = vmatprep.subr.bf16.mxu0 0
  %5577 = vmatpush1.bf16.msra.mxu0 0
  %5578 = vmatprep.subr.bf16.mxu0 0
  %5579 = vmatpush1.bf16.msra.mxu0 0
  %5580 = vmatprep.subr.bf16.mxu0 0
  %5581 = vmatpush1.bf16.msra.mxu0 0
  %5582 = vmatprep.subr.bf16.mxu0 0
  %5583 = vmatpush1.bf16.msra.mxu0 0
  %5584 = vmatprep.subr.bf16.mxu0 0
  %5585 = vmatpush1.bf16.msra.mxu0 0
  %5586 = vmatprep.subr.bf16.mxu0 0
  %5587 = vmatpush1.bf16.msra.mxu0 0
  %5588 = vmatprep.subr.bf16.mxu0 0
  %5589 = vmatpush1.bf16.msra.mxu0 0
  %5590 = vmatprep.subr.bf16.mxu0 0
  %5591 = vmatpush1.bf16.msra.mxu0 0
  %5592 = vmatprep.subr.bf16.mxu0 0
  %5593 = vmatpush1.bf16.msra.mxu0 0
  %5594 = vmatprep.subr.bf16.mxu0 0
  %5595 = vmatpush1.bf16.msra.mxu0 0
  %5596 = vmatprep.subr.bf16.mxu0 0
  %5597 = vmatpush1.bf16.msra.mxu0 0
  %5598 = vmatprep.subr.bf16.mxu0 0
  %5599 = vmatpush1.bf16.msra.mxu0 0
  %5600 = vmatprep.subr.bf16.mxu0 0
  %5601 = vmatpush1.bf16.msra.mxu0 0
  %5602 = vmatprep.mubr.bf16.mxu0 0
  %5603 = vmatmul.mubr.bf16.gmra.mrb[0].mxu0 %v436
  %v5604 = vpop.f32.mrb[0].mxu0
  %v5605 = vadd.f32 0.0, %v5604
  %v5606 = vpop.f32.mrb[0].mxu0
  %v5607 = vadd.f32 0.0, %v5606
  %v5608 = vpop.f32.mrb[0].mxu0
  %v5609 = vadd.f32 0.0, %v5608
  %v5610 = vpop.f32.mrb[0].mxu0
  %v5611 = vadd.f32 0.0, %v5610
  %5612 = vmatprep.mubr.bf16.mxu0 0
  %5613 = vmatmul.mubr.bf16.gmra.mrb[0].mxu0 %v439
  %v5614 = vpop.f32.mrb[0].mxu0
  %v5615 = vadd.f32 0.0, %v5614
  %v5616 = vpop.f32.mrb[0].mxu0
  %v5617 = vadd.f32 0.0, %v5616
  %v5618 = vpop.f32.mrb[0].mxu0
  %v5619 = vadd.f32 0.0, %v5618
  %v5620 = vpop.f32.mrb[0].mxu0
  %v5621 = vadd.f32 0.0, %v5620
  %5622 = vmatprep.mubr.bf16.mxu0 0
  %5623 = vmatmul.mubr.bf16.gmra.mrb[0].mxu0 %v442
  %v5624 = vpop.f32.mrb[0].mxu0
  %v5625 = vadd.f32 0.0, %v5624
  %v5626 = vpop.f32.mrb[0].mxu0
  %v5627 = vadd.f32 0.0, %v5626
  %v5628 = vpop.f32.mrb[0].mxu0
  %v5629 = vadd.f32 0.0, %v5628
  %v5630 = vpop.f32.mrb[0].mxu0
  %v5631 = vadd.f32 0.0, %v5630
  %5632 = vmatprep.mubr.bf16.mxu0 0
  %5633 = vmatmul.mubr.bf16.gmra.mrb[0].mxu0 %v445
  %v5634 = vpop.f32.mrb[0].mxu0
  %v5635 = vadd.f32 0.0, %v5634
  %v5636 = vpop.f32.mrb[0].mxu0
  %v5637 = vadd.f32 0.0, %v5636
  %v5638 = vpop.f32.mrb[0].mxu0
  %v5639 = vadd.f32 0.0, %v5638
  %v5640 = vpop.f32.mrb[0].mxu0
  %v5641 = vadd.f32 0.0, %v5640
  %5642 = vmatprep.mubr.bf16.mxu0 0
  %5643 = vmatmul.mubr.bf16.gmra.mrb[0].mxu0 %v448
  %v5644 = vpop.f32.mrb[0].mxu0
  %v5645 = vadd.f32 0.0, %v5644
  %v5646 = vpop.f32.mrb[0].mxu0
  %v5647 = vadd.f32 0.0, %v5646
  %v5648 = vpop.f32.mrb[0].mxu0
  %v5649 = vadd.f32 0.0, %v5648
  %v5650 = vpop.f32.mrb[0].mxu0
  %v5651 = vadd.f32 0.0, %v5650
  %5652 = vmatprep.mubr.bf16.mxu0 0
  %5653 = vmatmul.mubr.bf16.gmra.mrb[0].mxu0 %v451
  %v5654 = vpop.f32.mrb[0].mxu0
  %v5655 = vadd.f32 0.0, %v5654
  %v5656 = vpop.f32.mrb[0].mxu0
  %v5657 = vadd.f32 0.0, %v5656
  %v5658 = vpop.f32.mrb[0].mxu0
  %v5659 = vadd.f32 0.0, %v5658
  %v5660 = vpop.f32.mrb[0].mxu0
  %v5661 = vadd.f32 0.0, %v5660
  %5662 = vmatprep.mubr.bf16.mxu0 0
  %5663 = vmatmul.mubr.bf16.gmra.mrb[0].mxu0 %v454
  %v5664 = vpop.f32.mrb[0].mxu0
  %v5665 = vadd.f32 0.0, %v5664
  %v5666 = vpop.f32.mrb[0].mxu0
  %v5667 = vadd.f32 0.0, %v5666
  %v5668 = vpop.f32.mrb[0].mxu0
  %v5669 = vadd.f32 0.0, %v5668
  %v5670 = vpop.f32.mrb[0].mxu0
  %v5671 = vadd.f32 0.0, %v5670
  %5672 = vmatprep.mubr.bf16.mxu0 0
  %5673 = vmatmul.mubr.bf16.gmra.mrb[0].mxu0 %v457
  %v5674 = vpop.f32.mrb[0].mxu0
  %v5675 = vadd.f32 0.0, %v5674
  %v5676 = vpop.f32.mrb[0].mxu0
  %v5677 = vadd.f32 0.0, %v5676
  %v5678 = vpop.f32.mrb[0].mxu0
  %v5679 = vadd.f32 0.0, %v5678
  %v5680 = vpop.f32.mrb[0].mxu0
  %v5681 = vadd.f32 0.0, %v5680
  %5682 = vmatprep.mubr.bf16.mxu0 0
  %5683 = vmatmul.mubr.bf16.gmra.mrb[0].mxu0 %v460
  %v5684 = vpop.f32.mrb[0].mxu0
  %v5685 = vadd.f32 0.0, %v5684
  %v5686 = vpop.f32.mrb[0].mxu0
  %v5687 = vadd.f32 0.0, %v5686
  %v5688 = vpop.f32.mrb[0].mxu0
  %v5689 = vadd.f32 0.0, %v5688
  %v5690 = vpop.f32.mrb[0].mxu0
  %v5691 = vadd.f32 0.0, %v5690
  %5692 = vmatprep.mubr.bf16.mxu0 0
  %5693 = vmatmul.mubr.bf16.gmra.mrb[0].mxu0 %v463
  %v5694 = vpop.f32.mrb[0].mxu0
  %v5695 = vadd.f32 0.0, %v5694
  %v5696 = vpop.f32.mrb[0].mxu0
  %v5697 = vadd.f32 0.0, %v5696
  %v5698 = vpop.f32.mrb[0].mxu0
  %v5699 = vadd.f32 0.0, %v5698
  %v5700 = vpop.f32.mrb[0].mxu0
  %v5701 = vadd.f32 0.0, %v5700
  %5702 = vmatprep.mubr.bf16.mxu0 0
  %5703 = vmatmul.mubr.bf16.gmra.mrb[0].mxu0 %v466
  %v5704 = vpop.f32.mrb[0].mxu0
  %v5705 = vadd.f32 0.0, %v5704
  %v5706 = vpop.f32.mrb[0].mxu0
  %v5707 = vadd.f32 0.0, %v5706
  %v5708 = vpop.f32.mrb[0].mxu0
  %v5709 = vadd.f32 0.0, %v5708
  %v5710 = vpop.f32.mrb[0].mxu0
  %v5711 = vadd.f32 0.0, %v5710
  %5712 = vmatprep.mubr.bf16.mxu0 0
  %5713 = vmatmul.mubr.bf16.gmra.mrb[0].mxu0 %v469
  %v5714 = vpop.f32.mrb[0].mxu0
  %v5715 = vadd.f32 0.0, %v5714
  %v5716 = vpop.f32.mrb[0].mxu0
  %v5717 = vadd.f32 0.0, %v5716
  %v5718 = vpop.f32.mrb[0].mxu0
  %v5719 = vadd.f32 0.0, %v5718
  %v5720 = vpop.f32.mrb[0].mxu0
  %v5721 = vadd.f32 0.0, %v5720
  %5722 = vmatprep.mubr.bf16.mxu0 0
  %5723 = vmatmul.mubr.bf16.gmra.mrb[0].mxu0 %v472
  %v5724 = vpop.f32.mrb[0].mxu0
  %v5725 = vadd.f32 0.0, %v5724
  %v5726 = vpop.f32.mrb[0].mxu0
  %v5727 = vadd.f32 0.0, %v5726
  %v5728 = vpop.f32.mrb[0].mxu0
  %v5729 = vadd.f32 0.0, %v5728
  %v5730 = vpop.f32.mrb[0].mxu0
  %v5731 = vadd.f32 0.0, %v5730
  %5732 = vmatprep.mubr.bf16.mxu0 0
  %5733 = vmatmul.mubr.bf16.gmra.mrb[0].mxu0 %v475
  %v5734 = vpop.f32.mrb[0].mxu0
  %v5735 = vadd.f32 0.0, %v5734
  %v5736 = vpop.f32.mrb[0].mxu0
  %v5737 = vadd.f32 0.0, %v5736
  %v5738 = vpop.f32.mrb[0].mxu0
  %v5739 = vadd.f32 0.0, %v5738
  %v5740 = vpop.f32.mrb[0].mxu0
  %v5741 = vadd.f32 0.0, %v5740
  %5742 = vmatprep.mubr.bf16.mxu0 0
  %5743 = vmatmul.mubr.bf16.gmra.mrb[0].mxu0 %v478
  %v5744 = vpop.f32.mrb[0].mxu0
  %v5745 = vadd.f32 0.0, %v5744
  %v5746 = vpop.f32.mrb[0].mxu0
  %v5747 = vadd.f32 0.0, %v5746
  %v5748 = vpop.f32.mrb[0].mxu0
  %v5749 = vadd.f32 0.0, %v5748
  %v5750 = vpop.f32.mrb[0].mxu0
  %v5751 = vadd.f32 0.0, %v5750
  %5752 = vmatprep.mubr.bf16.mxu0 0
  %5753 = vmatmul.mubr.bf16.gmra.mrb[0].mxu0 %v481
  %v5754 = vpop.f32.mrb[0].mxu0
  %v5755 = vadd.f32 0.0, %v5754
  %v5756 = vpop.f32.mrb[0].mxu0
  %v5757 = vadd.f32 0.0, %v5756
  %v5758 = vpop.f32.mrb[0].mxu0
  %v5759 = vadd.f32 0.0, %v5758
  %v5760 = vpop.f32.mrb[0].mxu0
  %v5761 = vadd.f32 0.0, %v5760
  %5762 = vmatprep.mubr.bf16.mxu0 0
  %5763 = vmatmul.mubr.bf16.gmra.mrb[0].mxu0 %v484
  %v5764 = vpop.f32.mrb[0].mxu0
  %v5765 = vadd.f32 0.0, %v5764
  %v5766 = vpop.f32.mrb[0].mxu0
  %v5767 = vadd.f32 0.0, %v5766
  %v5768 = vpop.f32.mrb[0].mxu0
  %v5769 = vadd.f32 0.0, %v5768
  %v5770 = vpop.f32.mrb[0].mxu0
  %v5771 = vadd.f32 0.0, %v5770
  %5772 = vmatprep.mubr.bf16.mxu0 0
  %5773 = vmatmul.mubr.bf16.gmra.mrb[0].mxu0 %v487
  %v5774 = vpop.f32.mrb[0].mxu0
  %v5775 = vadd.f32 0.0, %v5774
  %v5776 = vpop.f32.mrb[0].mxu0
  %v5777 = vadd.f32 0.0, %v5776
  %v5778 = vpop.f32.mrb[0].mxu0
  %v5779 = vadd.f32 0.0, %v5778
  %v5780 = vpop.f32.mrb[0].mxu0
  %v5781 = vadd.f32 0.0, %v5780
  %5782 = vmatprep.mubr.bf16.mxu0 0
  %5783 = vmatmul.mubr.bf16.gmra.mrb[0].mxu0 %v490
  %v5784 = vpop.f32.mrb[0].mxu0
  %v5785 = vadd.f32 0.0, %v5784
  %v5786 = vpop.f32.mrb[0].mxu0
  %v5787 = vadd.f32 0.0, %v5786
  %v5788 = vpop.f32.mrb[0].mxu0
  %v5789 = vadd.f32 0.0, %v5788
  %v5790 = vpop.f32.mrb[0].mxu0
  %v5791 = vadd.f32 0.0, %v5790
  %5792 = vmatprep.mubr.bf16.mxu0 0
  %5793 = vmatmul.mubr.bf16.gmra.mrb[0].mxu0 %v493
  %v5794 = vpop.f32.mrb[0].mxu0
  %v5795 = vadd.f32 0.0, %v5794
  %v5796 = vpop.f32.mrb[0].mxu0
  %v5797 = vadd.f32 0.0, %v5796
  %v5798 = vpop.f32.mrb[0].mxu0
  %v5799 = vadd.f32 0.0, %v5798
  %v5800 = vpop.f32.mrb[0].mxu0
  %v5801 = vadd.f32 0.0, %v5800
  %5802 = vmatprep.mubr.bf16.mxu0 0
  %5803 = vmatmul.mubr.bf16.gmra.mrb[0].mxu0 %v496
  %v5804 = vpop.f32.mrb[0].mxu0
  %v5805 = vadd.f32 0.0, %v5804
  %v5806 = vpop.f32.mrb[0].mxu0
  %v5807 = vadd.f32 0.0, %v5806
  %v5808 = vpop.f32.mrb[0].mxu0
  %v5809 = vadd.f32 0.0, %v5808
  %v5810 = vpop.f32.mrb[0].mxu0
  %v5811 = vadd.f32 0.0, %v5810
  %5812 = vmatprep.mubr.bf16.mxu0 0
  %5813 = vmatmul.mubr.bf16.gmra.mrb[0].mxu0 %v499
  %v5814 = vpop.f32.mrb[0].mxu0
  %v5815 = vadd.f32 0.0, %v5814
  %v5816 = vpop.f32.mrb[0].mxu0
  %v5817 = vadd.f32 0.0, %v5816
  %v5818 = vpop.f32.mrb[0].mxu0
  %v5819 = vadd.f32 0.0, %v5818
  %v5820 = vpop.f32.mrb[0].mxu0
  %v5821 = vadd.f32 0.0, %v5820
  %5822 = vmatprep.mubr.bf16.mxu0 0
  %5823 = vmatmul.mubr.bf16.gmra.mrb[0].mxu0 %v502
  %v5824 = vpop.f32.mrb[0].mxu0
  %v5825 = vadd.f32 0.0, %v5824
  %v5826 = vpop.f32.mrb[0].mxu0
  %v5827 = vadd.f32 0.0, %v5826
  %v5828 = vpop.f32.mrb[0].mxu0
  %v5829 = vadd.f32 0.0, %v5828
  %v5830 = vpop.f32.mrb[0].mxu0
  %v5831 = vadd.f32 0.0, %v5830
  %5832 = vmatprep.mubr.bf16.mxu0 0
  %5833 = vmatmul.mubr.bf16.gmra.mrb[0].mxu0 %v505
  %v5834 = vpop.f32.mrb[0].mxu0
  %v5835 = vadd.f32 0.0, %v5834
  %v5836 = vpop.f32.mrb[0].mxu0
  %v5837 = vadd.f32 0.0, %v5836
  %v5838 = vpop.f32.mrb[0].mxu0
  %v5839 = vadd.f32 0.0, %v5838
  %v5840 = vpop.f32.mrb[0].mxu0
  %v5841 = vadd.f32 0.0, %v5840
  %5842 = vmatprep.mubr.bf16.mxu0 0
  %5843 = vmatmul.mubr.bf16.gmra.mrb[0].mxu0 %v508
  %v5844 = vpop.f32.mrb[0].mxu0
  %v5845 = vadd.f32 0.0, %v5844
  %v5846 = vpop.f32.mrb[0].mxu0
  %v5847 = vadd.f32 0.0, %v5846
  %v5848 = vpop.f32.mrb[0].mxu0
  %v5849 = vadd.f32 0.0, %v5848
  %v5850 = vpop.f32.mrb[0].mxu0
  %v5851 = vadd.f32 0.0, %v5850
  %5852 = vmatprep.mubr.bf16.mxu0 0
  %5853 = vmatmul.mubr.bf16.gmra.mrb[0].mxu0 %v511
  %v5854 = vpop.f32.mrb[0].mxu0
  %v5855 = vadd.f32 0.0, %v5854
  %v5856 = vpop.f32.mrb[0].mxu0
  %v5857 = vadd.f32 0.0, %v5856
  %v5858 = vpop.f32.mrb[0].mxu0
  %v5859 = vadd.f32 0.0, %v5858
  %v5860 = vpop.f32.mrb[0].mxu0
  %v5861 = vadd.f32 0.0, %v5860
  %5862 = vmatprep.mubr.bf16.mxu0 0
  %5863 = vmatmul.mubr.bf16.gmra.mrb[0].mxu0 %v514
  %v5864 = vpop.f32.mrb[0].mxu0
  %v5865 = vadd.f32 0.0, %v5864
  %v5866 = vpop.f32.mrb[0].mxu0
  %v5867 = vadd.f32 0.0, %v5866
  %v5868 = vpop.f32.mrb[0].mxu0
  %v5869 = vadd.f32 0.0, %v5868
  %v5870 = vpop.f32.mrb[0].mxu0
  %v5871 = vadd.f32 0.0, %v5870
  %5872 = vmatprep.mubr.bf16.mxu0 0
  %5873 = vmatmul.mubr.bf16.gmra.mrb[0].mxu0 %v517
  %v5874 = vpop.f32.mrb[0].mxu0
  %v5875 = vadd.f32 0.0, %v5874
  %v5876 = vpop.f32.mrb[0].mxu0
  %v5877 = vadd.f32 0.0, %v5876
  %v5878 = vpop.f32.mrb[0].mxu0
  %v5879 = vadd.f32 0.0, %v5878
  %v5880 = vpop.f32.mrb[0].mxu0
  %v5881 = vadd.f32 0.0, %v5880
  %5882 = vmatprep.mubr.bf16.mxu0 0
  %5883 = vmatmul.mubr.bf16.gmra.mrb[0].mxu0 %v520
  %v5884 = vpop.f32.mrb[0].mxu0
  %v5885 = vadd.f32 0.0, %v5884
  %v5886 = vpop.f32.mrb[0].mxu0
  %v5887 = vadd.f32 0.0, %v5886
  %v5888 = vpop.f32.mrb[0].mxu0
  %v5889 = vadd.f32 0.0, %v5888
  %v5890 = vpop.f32.mrb[0].mxu0
  %v5891 = vadd.f32 0.0, %v5890
  %5892 = vmatprep.mubr.bf16.mxu0 0
  %5893 = vmatmul.mubr.bf16.gmra.mrb[0].mxu0 %v523
  %v5894 = vpop.f32.mrb[0].mxu0
  %v5895 = vadd.f32 0.0, %v5894
  %v5896 = vpop.f32.mrb[0].mxu0
  %v5897 = vadd.f32 0.0, %v5896
  %v5898 = vpop.f32.mrb[0].mxu0
  %v5899 = vadd.f32 0.0, %v5898
  %v5900 = vpop.f32.mrb[0].mxu0
  %v5901 = vadd.f32 0.0, %v5900
  %5902 = vmatprep.mubr.bf16.mxu0 0
  %5903 = vmatmul.mubr.bf16.gmra.mrb[0].mxu0 %v526
  %v5904 = vpop.f32.mrb[0].mxu0
  %v5905 = vadd.f32 0.0, %v5904
  %v5906 = vpop.f32.mrb[0].mxu0
  %v5907 = vadd.f32 0.0, %v5906
  %v5908 = vpop.f32.mrb[0].mxu0
  %v5909 = vadd.f32 0.0, %v5908
  %v5910 = vpop.f32.mrb[0].mxu0
  %v5911 = vadd.f32 0.0, %v5910
  %5912 = vmatprep.mubr.bf16.mxu0 0
  %5913 = vmatmul.mubr.bf16.gmra.mrb[0].mxu0 %v529
  %v5914 = vpop.f32.mrb[0].mxu0
  %v5915 = vadd.f32 0.0, %v5914
  %v5916 = vpop.f32.mrb[0].mxu0
  %v5917 = vadd.f32 0.0, %v5916
  %v5918 = vpop.f32.mrb[0].mxu0
  %v5919 = vadd.f32 0.0, %v5918
  %v5920 = vpop.f32.mrb[0].mxu0
  %v5921 = vadd.f32 0.0, %v5920
  %5922 = vmatprep.mubr.bf16.mxu0 0
  %5923 = vmatmul.mubr.bf16.gmra.mrb[0].mxu0 %v532
  %v5924 = vpop.f32.mrb[0].mxu0
  %v5925 = vadd.f32 0.0, %v5924
  %v5926 = vpop.f32.mrb[0].mxu0
  %v5927 = vadd.f32 0.0, %v5926
  %v5928 = vpop.f32.mrb[0].mxu0
  %v5929 = vadd.f32 0.0, %v5928
  %v5930 = vpop.f32.mrb[0].mxu0
  %v5931 = vadd.f32 0.0, %v5930
  %5932 = vmatprep.mubr.bf16.mxu0 0
  %5933 = vmatmul.mubr.bf16.gmra.mrb[0].mxu0 %v535
  %v5934 = vpop.f32.mrb[0].mxu0
  %v5935 = vadd.f32 0.0, %v5934
  %v5936 = vpop.f32.mrb[0].mxu0
  %v5937 = vadd.f32 0.0, %v5936
  %v5938 = vpop.f32.mrb[0].mxu0
  %v5939 = vadd.f32 0.0, %v5938
  %v5940 = vpop.f32.mrb[0].mxu0
  %v5941 = vadd.f32 0.0, %v5940
  %5942 = vmatprep.mubr.bf16.mxu0 0
  %5943 = vmatmul.mubr.bf16.gmra.mrb[0].mxu0 %v538
  %v5944 = vpop.f32.mrb[0].mxu0
  %v5945 = vadd.f32 0.0, %v5944
  %v5946 = vpop.f32.mrb[0].mxu0
  %v5947 = vadd.f32 0.0, %v5946
  %v5948 = vpop.f32.mrb[0].mxu0
  %v5949 = vadd.f32 0.0, %v5948
  %v5950 = vpop.f32.mrb[0].mxu0
  %v5951 = vadd.f32 0.0, %v5950
  %5952 = vmatprep.mubr.bf16.mxu0 0
  %5953 = vmatmul.mubr.bf16.gmra.mrb[0].mxu0 %v541
  %v5954 = vpop.f32.mrb[0].mxu0
  %v5955 = vadd.f32 0.0, %v5954
  %v5956 = vpop.f32.mrb[0].mxu0
  %v5957 = vadd.f32 0.0, %v5956
  %v5958 = vpop.f32.mrb[0].mxu0
  %v5959 = vadd.f32 0.0, %v5958
  %v5960 = vpop.f32.mrb[0].mxu0
  %v5961 = vadd.f32 0.0, %v5960
  %5962 = vmatprep.mubr.bf16.mxu0 0
  %5963 = vmatmul.mubr.bf16.gmra.mrb[0].mxu0 %v544
  %v5964 = vpop.f32.mrb[0].mxu0
  %v5965 = vadd.f32 0.0, %v5964
  %v5966 = vpop.f32.mrb[0].mxu0
  %v5967 = vadd.f32 0.0, %v5966
  %v5968 = vpop.f32.mrb[0].mxu0
  %v5969 = vadd.f32 0.0, %v5968
  %v5970 = vpop.f32.mrb[0].mxu0
  %v5971 = vadd.f32 0.0, %v5970
  %5972 = vmatprep.mubr.bf16.mxu0 0
  %5973 = vmatmul.mubr.bf16.gmra.mrb[0].mxu0 %v547
  %v5974 = vpop.f32.mrb[0].mxu0
  %v5975 = vadd.f32 0.0, %v5974
  %v5976 = vpop.f32.mrb[0].mxu0
  %v5977 = vadd.f32 0.0, %v5976
  %v5978 = vpop.f32.mrb[0].mxu0
  %v5979 = vadd.f32 0.0, %v5978
  %v5980 = vpop.f32.mrb[0].mxu0
  %v5981 = vadd.f32 0.0, %v5980
  %5982 = vmatprep.mubr.bf16.mxu0 0
  %5983 = vmatmul.mubr.bf16.gmra.mrb[0].mxu0 %v550
  %v5984 = vpop.f32.mrb[0].mxu0
  %v5985 = vadd.f32 0.0, %v5984
  %v5986 = vpop.f32.mrb[0].mxu0
  %v5987 = vadd.f32 0.0, %v5986
  %v5988 = vpop.f32.mrb[0].mxu0
  %v5989 = vadd.f32 0.0, %v5988
  %v5990 = vpop.f32.mrb[0].mxu0
  %v5991 = vadd.f32 0.0, %v5990
  %5992 = vmatprep.mubr.bf16.mxu0 0
  %5993 = vmatmul.mubr.bf16.gmra.mrb[0].mxu0 %v553
  %v5994 = vpop.f32.mrb[0].mxu0
  %v5995 = vadd.f32 0.0, %v5994
  %v5996 = vpop.f32.mrb[0].mxu0
  %v5997 = vadd.f32 0.0, %v5996
  %v5998 = vpop.f32.mrb[0].mxu0
  %v5999 = vadd.f32 0.0, %v5998
  %v6000 = vpop.f32.mrb[0].mxu0
  %v6001 = vadd.f32 0.0, %v6000
  %6002 = vmatprep.mubr.bf16.mxu0 0
  %6003 = vmatmul.mubr.bf16.gmra.mrb[0].mxu0 %v556
  %v6004 = vpop.f32.mrb[0].mxu0
  %v6005 = vadd.f32 0.0, %v6004
  %v6006 = vpop.f32.mrb[0].mxu0
  %v6007 = vadd.f32 0.0, %v6006
  %v6008 = vpop.f32.mrb[0].mxu0
  %v6009 = vadd.f32 0.0, %v6008
  %v6010 = vpop.f32.mrb[0].mxu0
  %v6011 = vadd.f32 0.0, %v6010
  %6012 = vmatprep.mubr.bf16.mxu0 0
  %6013 = vmatmul.mubr.bf16.gmra.mrb[0].mxu0 %v559
  %v6014 = vpop.f32.mrb[0].mxu0
  %v6015 = vadd.f32 0.0, %v6014
  %v6016 = vpop.f32.mrb[0].mxu0
  %v6017 = vadd.f32 0.0, %v6016
  %v6018 = vpop.f32.mrb[0].mxu0
  %v6019 = vadd.f32 0.0, %v6018
  %v6020 = vpop.f32.mrb[0].mxu0
  %v6021 = vadd.f32 0.0, %v6020
  %6022 = vmatprep.mubr.bf16.mxu0 0
  %6023 = vmatmul.mubr.bf16.gmra.mrb[0].mxu0 %v562
  %v6024 = vpop.f32.mrb[0].mxu0
  %v6025 = vadd.f32 0.0, %v6024
  %v6026 = vpop.f32.mrb[0].mxu0
  %v6027 = vadd.f32 0.0, %v6026
  %v6028 = vpop.f32.mrb[0].mxu0
  %v6029 = vadd.f32 0.0, %v6028
  %v6030 = vpop.f32.mrb[0].mxu0
  %v6031 = vadd.f32 0.0, %v6030
  %6032 = vmatprep.mubr.bf16.mxu0 0
  %6033 = vmatmul.mubr.bf16.gmra.mrb[0].mxu0 %v565
  %v6034 = vpop.f32.mrb[0].mxu0
  %v6035 = vadd.f32 0.0, %v6034
  %v6036 = vpop.f32.mrb[0].mxu0
  %v6037 = vadd.f32 0.0, %v6036
  %v6038 = vpop.f32.mrb[0].mxu0
  %v6039 = vadd.f32 0.0, %v6038
  %v6040 = vpop.f32.mrb[0].mxu0
  %v6041 = vadd.f32 0.0, %v6040
  %6042 = vmatprep.mubr.bf16.mxu0 0
  %6043 = vmatmul.mubr.bf16.gmra.mrb[0].mxu0 %v568
  %v6044 = vpop.f32.mrb[0].mxu0
  %v6045 = vadd.f32 0.0, %v6044
  %v6046 = vpop.f32.mrb[0].mxu0
  %v6047 = vadd.f32 0.0, %v6046
  %v6048 = vpop.f32.mrb[0].mxu0
  %v6049 = vadd.f32 0.0, %v6048
  %v6050 = vpop.f32.mrb[0].mxu0
  %v6051 = vadd.f32 0.0, %v6050
  %6052 = vmatprep.mubr.bf16.mxu0 0
  %6053 = vmatmul.mubr.bf16.gmra.mrb[0].mxu0 %v571
  %v6054 = vpop.f32.mrb[0].mxu0
  %v6055 = vadd.f32 0.0, %v6054
  %v6056 = vpop.f32.mrb[0].mxu0
  %v6057 = vadd.f32 0.0, %v6056
  %v6058 = vpop.f32.mrb[0].mxu0
  %v6059 = vadd.f32 0.0, %v6058
  %v6060 = vpop.f32.mrb[0].mxu0
  %v6061 = vadd.f32 0.0, %v6060
  %6062 = vmatprep.mubr.bf16.mxu0 0
  %6063 = vmatmul.mubr.bf16.gmra.mrb[0].mxu0 %v574
  %v6064 = vpop.f32.mrb[0].mxu0
  %v6065 = vadd.f32 0.0, %v6064
  %v6066 = vpop.f32.mrb[0].mxu0
  %v6067 = vadd.f32 0.0, %v6066
  %v6068 = vpop.f32.mrb[0].mxu0
  %v6069 = vadd.f32 0.0, %v6068
  %v6070 = vpop.f32.mrb[0].mxu0
  %v6071 = vadd.f32 0.0, %v6070
  %6072 = vmatprep.mubr.bf16.mxu0 0
  %6073 = vmatmul.mubr.bf16.gmra.mrb[0].mxu0 %v577
  %v6074 = vpop.f32.mrb[0].mxu0
  %v6075 = vadd.f32 0.0, %v6074
  %v6076 = vpop.f32.mrb[0].mxu0
  %v6077 = vadd.f32 0.0, %v6076
  %v6078 = vpop.f32.mrb[0].mxu0
  %v6079 = vadd.f32 0.0, %v6078
  %v6080 = vpop.f32.mrb[0].mxu0
  %v6081 = vadd.f32 0.0, %v6080
  %6082 = vmatprep.mubr.bf16.mxu0 0
  %6083 = vmatmul.mubr.bf16.gmra.mrb[0].mxu0 %v580
  %v6084 = vpop.f32.mrb[0].mxu0
  %v6085 = vadd.f32 0.0, %v6084
  %v6086 = vpop.f32.mrb[0].mxu0
  %v6087 = vadd.f32 0.0, %v6086
  %v6088 = vpop.f32.mrb[0].mxu0
  %v6089 = vadd.f32 0.0, %v6088
  %v6090 = vpop.f32.mrb[0].mxu0
  %v6091 = vadd.f32 0.0, %v6090
  %6092 = vmatprep.mubr.bf16.mxu0 0
  %6093 = vmatmul.mubr.bf16.gmra.mrb[0].mxu0 %v583
  %v6094 = vpop.f32.mrb[0].mxu0
  %v6095 = vadd.f32 0.0, %v6094
  %v6096 = vpop.f32.mrb[0].mxu0
  %v6097 = vadd.f32 0.0, %v6096
  %v6098 = vpop.f32.mrb[0].mxu0
  %v6099 = vadd.f32 0.0, %v6098
  %v6100 = vpop.f32.mrb[0].mxu0
  %v6101 = vadd.f32 0.0, %v6100
  %6102 = vmatprep.mubr.bf16.mxu0 0
  %6103 = vmatmul.mubr.bf16.gmra.mrb[0].mxu0 %v586
  %v6104 = vpop.f32.mrb[0].mxu0
  %v6105 = vadd.f32 0.0, %v6104
  %v6106 = vpop.f32.mrb[0].mxu0
  %v6107 = vadd.f32 0.0, %v6106
  %v6108 = vpop.f32.mrb[0].mxu0
  %v6109 = vadd.f32 0.0, %v6108
  %v6110 = vpop.f32.mrb[0].mxu0
  %v6111 = vadd.f32 0.0, %v6110
  %6112 = vmatprep.mubr.bf16.mxu0 0
  %6113 = vmatmul.mubr.bf16.gmra.mrb[0].mxu0 %v589
  %v6114 = vpop.f32.mrb[0].mxu0
  %v6115 = vadd.f32 0.0, %v6114
  %v6116 = vpop.f32.mrb[0].mxu0
  %v6117 = vadd.f32 0.0, %v6116
  %v6118 = vpop.f32.mrb[0].mxu0
  %v6119 = vadd.f32 0.0, %v6118
  %v6120 = vpop.f32.mrb[0].mxu0
  %v6121 = vadd.f32 0.0, %v6120
  %6122 = vmatprep.mubr.bf16.mxu0 0
  %6123 = vmatmul.mubr.bf16.gmra.mrb[0].mxu0 %v592
  %v6124 = vpop.f32.mrb[0].mxu0
  %v6125 = vadd.f32 0.0, %v6124
  %v6126 = vpop.f32.mrb[0].mxu0
  %v6127 = vadd.f32 0.0, %v6126
  %v6128 = vpop.f32.mrb[0].mxu0
  %v6129 = vadd.f32 0.0, %v6128
  %v6130 = vpop.f32.mrb[0].mxu0
  %v6131 = vadd.f32 0.0, %v6130
  %6132 = vmatprep.mubr.bf16.mxu0 0
  %6133 = vmatmul.mubr.bf16.gmra.mrb[0].mxu0 %v595
  %v6134 = vpop.f32.mrb[0].mxu0
  %v6135 = vadd.f32 0.0, %v6134
  %v6136 = vpop.f32.mrb[0].mxu0
  %v6137 = vadd.f32 0.0, %v6136
  %v6138 = vpop.f32.mrb[0].mxu0
  %v6139 = vadd.f32 0.0, %v6138
  %v6140 = vpop.f32.mrb[0].mxu0
  %v6141 = vadd.f32 0.0, %v6140
  %6142 = vmatprep.mubr.bf16.mxu0 0
  %6143 = vmatmul.mubr.bf16.gmra.mrb[0].mxu0 %v598
  %v6144 = vpop.f32.mrb[0].mxu0
  %v6145 = vadd.f32 0.0, %v6144
  %v6146 = vpop.f32.mrb[0].mxu0
  %v6147 = vadd.f32 0.0, %v6146
  %v6148 = vpop.f32.mrb[0].mxu0
  %v6149 = vadd.f32 0.0, %v6148
  %v6150 = vpop.f32.mrb[0].mxu0
  %v6151 = vadd.f32 0.0, %v6150
  %6152 = vmatprep.mubr.bf16.mxu0 0
  %6153 = vmatmul.mubr.bf16.gmra.mrb[0].mxu0 %v601
  %v6154 = vpop.f32.mrb[0].mxu0
  %v6155 = vadd.f32 0.0, %v6154
  %v6156 = vpop.f32.mrb[0].mxu0
  %v6157 = vadd.f32 0.0, %v6156
  %v6158 = vpop.f32.mrb[0].mxu0
  %v6159 = vadd.f32 0.0, %v6158
  %v6160 = vpop.f32.mrb[0].mxu0
  %v6161 = vadd.f32 0.0, %v6160
  %6162 = vmatprep.mubr.bf16.mxu0 0
  %6163 = vmatmul.mubr.bf16.gmra.mrb[0].mxu0 %v604
  %v6164 = vpop.f32.mrb[0].mxu0
  %v6165 = vadd.f32 0.0, %v6164
  %v6166 = vpop.f32.mrb[0].mxu0
  %v6167 = vadd.f32 0.0, %v6166
  %v6168 = vpop.f32.mrb[0].mxu0
  %v6169 = vadd.f32 0.0, %v6168
  %v6170 = vpop.f32.mrb[0].mxu0
  %v6171 = vadd.f32 0.0, %v6170
  %6172 = vmatprep.mubr.bf16.mxu0 0
  %6173 = vmatmul.mubr.bf16.gmra.mrb[0].mxu0 %v607
  %v6174 = vpop.f32.mrb[0].mxu0
  %v6175 = vadd.f32 0.0, %v6174
  %v6176 = vpop.f32.mrb[0].mxu0
  %v6177 = vadd.f32 0.0, %v6176
  %v6178 = vpop.f32.mrb[0].mxu0
  %v6179 = vadd.f32 0.0, %v6178
  %v6180 = vpop.f32.mrb[0].mxu0
  %v6181 = vadd.f32 0.0, %v6180
  %6182 = vmatprep.mubr.bf16.mxu0 0
  %6183 = vmatmul.mubr.bf16.gmra.mrb[0].mxu0 %v610
  %v6184 = vpop.f32.mrb[0].mxu0
  %v6185 = vadd.f32 0.0, %v6184
  %v6186 = vpop.f32.mrb[0].mxu0
  %v6187 = vadd.f32 0.0, %v6186
  %v6188 = vpop.f32.mrb[0].mxu0
  %v6189 = vadd.f32 0.0, %v6188
  %v6190 = vpop.f32.mrb[0].mxu0
  %v6191 = vadd.f32 0.0, %v6190
  %6192 = vmatprep.mubr.bf16.mxu0 0
  %6193 = vmatmul.mubr.bf16.gmra.mrb[0].mxu0 %v613
  %v6194 = vpop.f32.mrb[0].mxu0
  %v6195 = vadd.f32 0.0, %v6194
  %v6196 = vpop.f32.mrb[0].mxu0
  %v6197 = vadd.f32 0.0, %v6196
  %v6198 = vpop.f32.mrb[0].mxu0
  %v6199 = vadd.f32 0.0, %v6198
  %v6200 = vpop.f32.mrb[0].mxu0
  %v6201 = vadd.f32 0.0, %v6200
  %6202 = vmatprep.mubr.bf16.mxu0 0
  %6203 = vmatmul.mubr.bf16.gmra.mrb[0].mxu0 %v616
  %v6204 = vpop.f32.mrb[0].mxu0
  %v6205 = vadd.f32 0.0, %v6204
  %v6206 = vpop.f32.mrb[0].mxu0
  %v6207 = vadd.f32 0.0, %v6206
  %v6208 = vpop.f32.mrb[0].mxu0
  %v6209 = vadd.f32 0.0, %v6208
  %v6210 = vpop.f32.mrb[0].mxu0
  %v6211 = vadd.f32 0.0, %v6210
  %6212 = vmatprep.mubr.bf16.mxu0 0
  %6213 = vmatmul.mubr.bf16.gmra.mrb[0].mxu0 %v619
  %v6214 = vpop.f32.mrb[0].mxu0
  %v6215 = vadd.f32 0.0, %v6214
  %v6216 = vpop.f32.mrb[0].mxu0
  %v6217 = vadd.f32 0.0, %v6216
  %v6218 = vpop.f32.mrb[0].mxu0
  %v6219 = vadd.f32 0.0, %v6218
  %v6220 = vpop.f32.mrb[0].mxu0
  %v6221 = vadd.f32 0.0, %v6220
  %6222 = vmatprep.mubr.bf16.mxu0 0
  %6223 = vmatmul.mubr.bf16.gmra.mrb[0].mxu0 %v622
  %v6224 = vpop.f32.mrb[0].mxu0
  %v6225 = vadd.f32 0.0, %v6224
  %v6226 = vpop.f32.mrb[0].mxu0
  %v6227 = vadd.f32 0.0, %v6226
  %v6228 = vpop.f32.mrb[0].mxu0
  %v6229 = vadd.f32 0.0, %v6228
  %v6230 = vpop.f32.mrb[0].mxu0
  %v6231 = vadd.f32 0.0, %v6230
  %6232 = vmatprep.mubr.bf16.mxu0 0
  %6233 = vmatmul.mubr.bf16.gmra.mrb[0].mxu0 %v625
  %v6234 = vpop.f32.mrb[0].mxu0
  %v6235 = vadd.f32 0.0, %v6234
  %v6236 = vpop.f32.mrb[0].mxu0
  %v6237 = vadd.f32 0.0, %v6236
  %v6238 = vpop.f32.mrb[0].mxu0
  %v6239 = vadd.f32 0.0, %v6238
  %v6240 = vpop.f32.mrb[0].mxu0
  %v6241 = vadd.f32 0.0, %v6240
  %6242 = vmatprep.mubr.bf16.mxu0 0
  %6243 = vmatmul.mubr.bf16.gmra.mrb[0].mxu0 %v628
  %v6244 = vpop.f32.mrb[0].mxu0
  %v6245 = vadd.f32 0.0, %v6244
  %v6246 = vpop.f32.mrb[0].mxu0
  %v6247 = vadd.f32 0.0, %v6246
  %v6248 = vpop.f32.mrb[0].mxu0
  %v6249 = vadd.f32 0.0, %v6248
  %v6250 = vpop.f32.mrb[0].mxu0
  %v6251 = vadd.f32 0.0, %v6250
  %6252 = vmatprep.mubr.bf16.mxu0 0
  %6253 = vmatmul.mubr.bf16.gmra.mrb[0].mxu0 %v631
  %v6254 = vpop.f32.mrb[0].mxu0
  %v6255 = vadd.f32 0.0, %v6254
  %v6256 = vpop.f32.mrb[0].mxu0
  %v6257 = vadd.f32 0.0, %v6256
  %v6258 = vpop.f32.mrb[0].mxu0
  %v6259 = vadd.f32 0.0, %v6258
  %v6260 = vpop.f32.mrb[0].mxu0
  %v6261 = vadd.f32 0.0, %v6260
  %6262 = vmatprep.mubr.bf16.mxu0 0
  %6263 = vmatmul.mubr.bf16.gmra.mrb[0].mxu0 %v634
  %v6264 = vpop.f32.mrb[0].mxu0
  %v6265 = vadd.f32 0.0, %v6264
  %v6266 = vpop.f32.mrb[0].mxu0
  %v6267 = vadd.f32 0.0, %v6266
  %v6268 = vpop.f32.mrb[0].mxu0
  %v6269 = vadd.f32 0.0, %v6268
  %v6270 = vpop.f32.mrb[0].mxu0
  %v6271 = vadd.f32 0.0, %v6270
  %6272 = vmatprep.mubr.bf16.mxu0 0
  %6273 = vmatmul.mubr.bf16.gmra.mrb[0].mxu0 %v637
  %v6274 = vpop.f32.mrb[0].mxu0
  %v6275 = vadd.f32 0.0, %v6274
  %v6276 = vpop.f32.mrb[0].mxu0
  %v6277 = vadd.f32 0.0, %v6276
  %v6278 = vpop.f32.mrb[0].mxu0
  %v6279 = vadd.f32 0.0, %v6278
  %v6280 = vpop.f32.mrb[0].mxu0
  %v6281 = vadd.f32 0.0, %v6280
  %6282 = vmatprep.mubr.bf16.mxu0 0
  %6283 = vmatmul.mubr.bf16.gmra.mrb[0].mxu0 %v640
  %v6284 = vpop.f32.mrb[0].mxu0
  %v6285 = vadd.f32 0.0, %v6284
  %v6286 = vpop.f32.mrb[0].mxu0
  %v6287 = vadd.f32 0.0, %v6286
  %v6288 = vpop.f32.mrb[0].mxu0
  %v6289 = vadd.f32 0.0, %v6288
  %v6290 = vpop.f32.mrb[0].mxu0
  %v6291 = vadd.f32 0.0, %v6290
  %6292 = vmatprep.mubr.bf16.mxu0 0
  %6293 = vmatmul.mubr.bf16.gmra.mrb[0].mxu0 %v643
  %v6294 = vpop.f32.mrb[0].mxu0
  %v6295 = vadd.f32 0.0, %v6294
  %v6296 = vpop.f32.mrb[0].mxu0
  %v6297 = vadd.f32 0.0, %v6296
  %v6298 = vpop.f32.mrb[0].mxu0
  %v6299 = vadd.f32 0.0, %v6298
  %v6300 = vpop.f32.mrb[0].mxu0
  %v6301 = vadd.f32 0.0, %v6300
  %6302 = vmatprep.mubr.bf16.mxu0 0
  %6303 = vmatmul.mubr.bf16.gmra.mrb[0].mxu0 %v646
  %v6304 = vpop.f32.mrb[0].mxu0
  %v6305 = vadd.f32 0.0, %v6304
  %v6306 = vpop.f32.mrb[0].mxu0
  %v6307 = vadd.f32 0.0, %v6306
  %v6308 = vpop.f32.mrb[0].mxu0
  %v6309 = vadd.f32 0.0, %v6308
  %v6310 = vpop.f32.mrb[0].mxu0
  %v6311 = vadd.f32 0.0, %v6310
  %6312 = vmatprep.mubr.bf16.mxu0 0
  %6313 = vmatmul.mubr.bf16.gmra.mrb[0].mxu0 %v649
  %v6314 = vpop.f32.mrb[0].mxu0
  %v6315 = vadd.f32 0.0, %v6314
  %v6316 = vpop.f32.mrb[0].mxu0
  %v6317 = vadd.f32 0.0, %v6316
  %v6318 = vpop.f32.mrb[0].mxu0
  %v6319 = vadd.f32 0.0, %v6318
  %v6320 = vpop.f32.mrb[0].mxu0
  %v6321 = vadd.f32 0.0, %v6320
  %6322 = vmatprep.mubr.bf16.mxu0 0
  %6323 = vmatmul.mubr.bf16.gmra.mrb[0].mxu0 %v652
  %v6324 = vpop.f32.mrb[0].mxu0
  %v6325 = vadd.f32 0.0, %v6324
  %v6326 = vpop.f32.mrb[0].mxu0
  %v6327 = vadd.f32 0.0, %v6326
  %v6328 = vpop.f32.mrb[0].mxu0
  %v6329 = vadd.f32 0.0, %v6328
  %v6330 = vpop.f32.mrb[0].mxu0
  %v6331 = vadd.f32 0.0, %v6330
  %6332 = vmatprep.mubr.bf16.mxu0 0
  %6333 = vmatmul.mubr.bf16.gmra.mrb[0].mxu0 %v655
  %v6334 = vpop.f32.mrb[0].mxu0
  %v6335 = vadd.f32 0.0, %v6334
  %v6336 = vpop.f32.mrb[0].mxu0
  %v6337 = vadd.f32 0.0, %v6336
  %v6338 = vpop.f32.mrb[0].mxu0
  %v6339 = vadd.f32 0.0, %v6338
  %v6340 = vpop.f32.mrb[0].mxu0
  %v6341 = vadd.f32 0.0, %v6340
  %6342 = vmatprep.mubr.bf16.mxu0 0
  %6343 = vmatmul.mubr.bf16.gmra.mrb[0].mxu0 %v658
  %v6344 = vpop.f32.mrb[0].mxu0
  %v6345 = vadd.f32 0.0, %v6344
  %v6346 = vpop.f32.mrb[0].mxu0
  %v6347 = vadd.f32 0.0, %v6346
  %v6348 = vpop.f32.mrb[0].mxu0
  %v6349 = vadd.f32 0.0, %v6348
  %v6350 = vpop.f32.mrb[0].mxu0
  %v6351 = vadd.f32 0.0, %v6350
  %6352 = vmatprep.mubr.bf16.mxu0 0
  %6353 = vmatmul.mubr.bf16.gmra.mrb[0].mxu0 %v661
  %v6354 = vpop.f32.mrb[0].mxu0
  %v6355 = vadd.f32 0.0, %v6354
  %v6356 = vpop.f32.mrb[0].mxu0
  %v6357 = vadd.f32 0.0, %v6356
  %v6358 = vpop.f32.mrb[0].mxu0
  %v6359 = vadd.f32 0.0, %v6358
  %v6360 = vpop.f32.mrb[0].mxu0
  %v6361 = vadd.f32 0.0, %v6360
  %6362 = vmatprep.mubr.bf16.mxu0 0
  %6363 = vmatmul.mubr.bf16.gmra.mrb[0].mxu0 %v664
  %v6364 = vpop.f32.mrb[0].mxu0
  %v6365 = vadd.f32 0.0, %v6364
  %v6366 = vpop.f32.mrb[0].mxu0
  %v6367 = vadd.f32 0.0, %v6366
  %v6368 = vpop.f32.mrb[0].mxu0
  %v6369 = vadd.f32 0.0, %v6368
  %v6370 = vpop.f32.mrb[0].mxu0
  %v6371 = vadd.f32 0.0, %v6370
  %6372 = vmatprep.mubr.bf16.mxu0 0
  %6373 = vmatmul.mubr.bf16.gmra.mrb[0].mxu0 %v667
  %v6374 = vpop.f32.mrb[0].mxu0
  %v6375 = vadd.f32 0.0, %v6374
  %v6376 = vpop.f32.mrb[0].mxu0
  %v6377 = vadd.f32 0.0, %v6376
  %v6378 = vpop.f32.mrb[0].mxu0
  %v6379 = vadd.f32 0.0, %v6378
  %v6380 = vpop.f32.mrb[0].mxu0
  %v6381 = vadd.f32 0.0, %v6380
  %6382 = vmatprep.mubr.bf16.mxu0 0
  %6383 = vmatmul.mubr.bf16.gmra.mrb[0].mxu0 %v670
  %v6384 = vpop.f32.mrb[0].mxu0
  %v6385 = vadd.f32 0.0, %v6384
  %v6386 = vpop.f32.mrb[0].mxu0
  %v6387 = vadd.f32 0.0, %v6386
  %v6388 = vpop.f32.mrb[0].mxu0
  %v6389 = vadd.f32 0.0, %v6388
  %v6390 = vpop.f32.mrb[0].mxu0
  %v6391 = vadd.f32 0.0, %v6390
  %6392 = vmatprep.mubr.bf16.mxu0 0
  %6393 = vmatmul.mubr.bf16.gmra.mrb[0].mxu0 %v673
  %v6394 = vpop.f32.mrb[0].mxu0
  %v6395 = vadd.f32 0.0, %v6394
  %v6396 = vpop.f32.mrb[0].mxu0
  %v6397 = vadd.f32 0.0, %v6396
  %v6398 = vpop.f32.mrb[0].mxu0
  %v6399 = vadd.f32 0.0, %v6398
  %v6400 = vpop.f32.mrb[0].mxu0
  %v6401 = vadd.f32 0.0, %v6400
  %6402 = vmatprep.mubr.bf16.mxu0 0
  %6403 = vmatmul.mubr.bf16.gmra.mrb[0].mxu0 %v676
  %v6404 = vpop.f32.mrb[0].mxu0
  %v6405 = vadd.f32 0.0, %v6404
  %v6406 = vpop.f32.mrb[0].mxu0
  %v6407 = vadd.f32 0.0, %v6406
  %v6408 = vpop.f32.mrb[0].mxu0
  %v6409 = vadd.f32 0.0, %v6408
  %v6410 = vpop.f32.mrb[0].mxu0
  %v6411 = vadd.f32 0.0, %v6410
  %6412 = vmatprep.mubr.bf16.mxu0 0
  %6413 = vmatmul.mubr.bf16.gmra.mrb[0].mxu0 %v679
  %v6414 = vpop.f32.mrb[0].mxu0
  %v6415 = vadd.f32 0.0, %v6414
  %v6416 = vpop.f32.mrb[0].mxu0
  %v6417 = vadd.f32 0.0, %v6416
  %v6418 = vpop.f32.mrb[0].mxu0
  %v6419 = vadd.f32 0.0, %v6418
  %v6420 = vpop.f32.mrb[0].mxu0
  %v6421 = vadd.f32 0.0, %v6420
  %6422 = vmatprep.mubr.bf16.mxu0 0
  %6423 = vmatmul.mubr.bf16.gmra.mrb[0].mxu0 %v682
  %v6424 = vpop.f32.mrb[0].mxu0
  %v6425 = vadd.f32 0.0, %v6424
  %v6426 = vpop.f32.mrb[0].mxu0
  %v6427 = vadd.f32 0.0, %v6426
  %v6428 = vpop.f32.mrb[0].mxu0
  %v6429 = vadd.f32 0.0, %v6428
  %v6430 = vpop.f32.mrb[0].mxu0
  %v6431 = vadd.f32 0.0, %v6430
  %6432 = vmatprep.mubr.bf16.mxu0 0
  %6433 = vmatmul.mubr.bf16.gmra.mrb[0].mxu0 %v685
  %v6434 = vpop.f32.mrb[0].mxu0
  %v6435 = vadd.f32 0.0, %v6434
  %v6436 = vpop.f32.mrb[0].mxu0
  %v6437 = vadd.f32 0.0, %v6436
  %v6438 = vpop.f32.mrb[0].mxu0
  %v6439 = vadd.f32 0.0, %v6438
  %v6440 = vpop.f32.mrb[0].mxu0
  %v6441 = vadd.f32 0.0, %v6440
  %6442 = vmatprep.mubr.bf16.mxu0 0
  %6443 = vmatmul.mubr.bf16.gmra.mrb[0].mxu0 %v2731
  %v6444 = vpop.f32.mrb[0].mxu0
  %v6445 = vadd.f32 0.0, %v6444
  %v6446 = vpop.f32.mrb[0].mxu0
  %v6447 = vadd.f32 0.0, %v6446
  %v6448 = vpop.f32.mrb[0].mxu0
  %v6449 = vadd.f32 0.0, %v6448
  %v6450 = vpop.f32.mrb[0].mxu0
  %v6451 = vadd.f32 0.0, %v6450
  %6452 = vmatprep.mubr.bf16.mxu0 0
  %6453 = vmatmul.mubr.bf16.gmra.mrb[0].mxu0 %v2734
  %v6454 = vpop.f32.mrb[0].mxu0
  %v6455 = vadd.f32 0.0, %v6454
  %v6456 = vpop.f32.mrb[0].mxu0
  %v6457 = vadd.f32 0.0, %v6456
  %v6458 = vpop.f32.mrb[0].mxu0
  %v6459 = vadd.f32 0.0, %v6458
  %v6460 = vpop.f32.mrb[0].mxu0
  %v6461 = vadd.f32 0.0, %v6460
  %6462 = vmatprep.mubr.bf16.mxu0 0
  %6463 = vmatmul.mubr.bf16.gmra.mrb[0].mxu0 %v2737
  %v6464 = vpop.f32.mrb[0].mxu0
  %v6465 = vadd.f32 0.0, %v6464
  %v6466 = vpop.f32.mrb[0].mxu0
  %v6467 = vadd.f32 0.0, %v6466
  %v6468 = vpop.f32.mrb[0].mxu0
  %v6469 = vadd.f32 0.0, %v6468
  %v6470 = vpop.f32.mrb[0].mxu0
  %v6471 = vadd.f32 0.0, %v6470
  %6472 = vmatprep.mubr.bf16.mxu0 0
  %6473 = vmatmul.mubr.bf16.gmra.mrb[0].mxu0 %v2740
  %v6474 = vpop.f32.mrb[0].mxu0
  %v6475 = vadd.f32 0.0, %v6474
  %v6476 = vpop.f32.mrb[0].mxu0
  %v6477 = vadd.f32 0.0, %v6476
  %v6478 = vpop.f32.mrb[0].mxu0
  %v6479 = vadd.f32 0.0, %v6478
  %v6480 = vpop.f32.mrb[0].mxu0
  %v6481 = vadd.f32 0.0, %v6480
  %6482 = vmatprep.mubr.bf16.mxu0 0
  %6483 = vmatmul.mubr.bf16.gmra.mrb[0].mxu0 %v4145
  %v6484 = vpop.f32.mrb[0].mxu0
  %v6485 = vadd.f32 0.0, %v6484
  %v6486 = vpop.f32.mrb[0].mxu0
  %v6487 = vadd.f32 0.0, %v6486
  %v6488 = vpop.f32.mrb[0].mxu0
  %v6489 = vadd.f32 0.0, %v6488
  %v6490 = vpop.f32.mrb[0].mxu0
  %v6491 = vadd.f32 0.0, %v6490
  %6492 = vmatprep.mubr.bf16.mxu0 0
  %6493 = vmatmul.mubr.bf16.gmra.mrb[0].mxu0 %v4148
  %v6494 = vpop.f32.mrb[0].mxu0
  %v6495 = vadd.f32 0.0, %v6494
  %v6496 = vpop.f32.mrb[0].mxu0
  %v6497 = vadd.f32 0.0, %v6496
  %v6498 = vpop.f32.mrb[0].mxu0
  %v6499 = vadd.f32 0.0, %v6498
  %v6500 = vpop.f32.mrb[0].mxu0
  %v6501 = vadd.f32 0.0, %v6500
  %6502 = vmatprep.mubr.bf16.mxu0 0
  %6503 = vmatmul.mubr.bf16.gmra.mrb[0].mxu0 %v4151
  %v6504 = vpop.f32.mrb[0].mxu0
  %v6505 = vadd.f32 0.0, %v6504
  %v6506 = vpop.f32.mrb[0].mxu0
  %v6507 = vadd.f32 0.0, %v6506
  %v6508 = vpop.f32.mrb[0].mxu0
  %v6509 = vadd.f32 0.0, %v6508
  %v6510 = vpop.f32.mrb[0].mxu0
  %v6511 = vadd.f32 0.0, %v6510
  %6512 = vmatprep.mubr.bf16.mxu0 0
  %6513 = vmatmul.mubr.bf16.gmra.mrb[0].mxu0 %v4154
  %v6514 = vpop.f32.mrb[0].mxu0
  %v6515 = vadd.f32 0.0, %v6514
  %v6516 = vpop.f32.mrb[0].mxu0
  %v6517 = vadd.f32 0.0, %v6516
  %v6518 = vpop.f32.mrb[0].mxu0
  %v6519 = vadd.f32 0.0, %v6518
  %v6520 = vpop.f32.mrb[0].mxu0
  %v6521 = vadd.f32 0.0, %v6520
  %6522 = vmatprep.mubr.bf16.mxu0 0
  %6523 = vmatmul.mubr.bf16.gmra.mrb[0].mxu0 %v5559
  %v6524 = vpop.f32.mrb[0].mxu0
  %v6525 = vadd.f32 0.0, %v6524
  %v6526 = vpop.f32.mrb[0].mxu0
  %v6527 = vadd.f32 0.0, %v6526
  %v6528 = vpop.f32.mrb[0].mxu0
  %v6529 = vadd.f32 0.0, %v6528
  %v6530 = vpop.f32.mrb[0].mxu0
  %v6531 = vadd.f32 0.0, %v6530
  %6532 = vmatprep.mubr.bf16.mxu0 0
  %6533 = vmatmul.mubr.bf16.gmra.mrb[0].mxu0 %v5562
  %v6534 = vpop.f32.mrb[0].mxu0
  %v6535 = vadd.f32 0.0, %v6534
  %v6536 = vpop.f32.mrb[0].mxu0
  %v6537 = vadd.f32 0.0, %v6536
  %v6538 = vpop.f32.mrb[0].mxu0
  %v6539 = vadd.f32 0.0, %v6538
  %v6540 = vpop.f32.mrb[0].mxu0
  %v6541 = vadd.f32 0.0, %v6540
  %6542 = vmatprep.mubr.bf16.mxu0 0
  %6543 = vmatmul.mubr.bf16.gmra.mrb[0].mxu0 %v5565
  %v6544 = vpop.f32.mrb[0].mxu0
  %v6545 = vadd.f32 0.0, %v6544
  %v6546 = vpop.f32.mrb[0].mxu0
  %v6547 = vadd.f32 0.0, %v6546
  %v6548 = vpop.f32.mrb[0].mxu0
  %v6549 = vadd.f32 0.0, %v6548
  %v6550 = vpop.f32.mrb[0].mxu0
  %v6551 = vadd.f32 0.0, %v6550
  %6552 = vmatprep.mubr.bf16.mxu0 0
  %6553 = vmatmul.mubr.bf16.gmra.mrb[0].mxu0 %v5568
  %v6554 = vpop.f32.mrb[0].mxu0
  %v6555 = vadd.f32 0.0, %v6554
  %v6556 = vpop.f32.mrb[0].mxu0
  %v6557 = vadd.f32 0.0, %v6556
  %v6558 = vpop.f32.mrb[0].mxu0
  %v6559 = vadd.f32 0.0, %v6558
  %v6560 = vpop.f32.mrb[0].mxu0
  %v6561 = vadd.f32 0.0, %v6560
  %6562 = vdwg.mxu0
  %v6563 = vadd.f32 %v5149, %v5605
  %v6564 = vadd.f32 %v5150, %v5607
  %v6565 = vadd.f32 %v5151, %v5609
  %v6566 = vadd.f32 %v5152, %v5611
  %v6567 = vadd.f32 %v5153, %v5615
  %v6568 = vadd.f32 %v5154, %v5617
  %v6569 = vadd.f32 %v5155, %v5619
  %v6570 = vadd.f32 %v5156, %v5621
  %v6571 = vadd.f32 %v5157, %v5625
  %v6572 = vadd.f32 %v5158, %v5627
  %v6573 = vadd.f32 %v5159, %v5629
  %v6574 = vadd.f32 %v5160, %v5631
  %v6575 = vadd.f32 %v5161, %v5635
  %v6576 = vadd.f32 %v5162, %v5637
  %v6577 = vadd.f32 %v5163, %v5639
  %v6578 = vadd.f32 %v5164, %v5641
  %v6579 = vadd.f32 %v5165, %v5645
  %v6580 = vadd.f32 %v5166, %v5647
  %v6581 = vadd.f32 %v5167, %v5649
  %v6582 = vadd.f32 %v5168, %v5651
  %v6583 = vadd.f32 %v5169, %v5655
  %v6584 = vadd.f32 %v5170, %v5657
  %v6585 = vadd.f32 %v5171, %v5659
  %v6586 = vadd.f32 %v5172, %v5661
  %v6587 = vadd.f32 %v5173, %v5665
  %v6588 = vadd.f32 %v5174, %v5667
  %v6589 = vadd.f32 %v5175, %v5669
  %v6590 = vadd.f32 %v5176, %v5671
  %v6591 = vadd.f32 %v5177, %v5675
  %v6592 = vadd.f32 %v5178, %v5677
  %v6593 = vadd.f32 %v5179, %v5679
  %v6594 = vadd.f32 %v5180, %v5681
  %v6595 = vadd.f32 %v5181, %v5685
  %v6596 = vadd.f32 %v5182, %v5687
  %v6597 = vadd.f32 %v5183, %v5689
  %v6598 = vadd.f32 %v5184, %v5691
  %v6599 = vadd.f32 %v5185, %v5695
  %v6600 = vadd.f32 %v5186, %v5697
  %v6601 = vadd.f32 %v5187, %v5699
  %v6602 = vadd.f32 %v5188, %v5701
  %v6603 = vadd.f32 %v5189, %v5705
  %v6604 = vadd.f32 %v5190, %v5707
  %v6605 = vadd.f32 %v5191, %v5709
  %v6606 = vadd.f32 %v5192, %v5711
  %v6607 = vadd.f32 %v5193, %v5715
  %v6608 = vadd.f32 %v5194, %v5717
  %v6609 = vadd.f32 %v5195, %v5719
  %v6610 = vadd.f32 %v5196, %v5721
  %v6611 = vadd.f32 %v5197, %v5725
  %v6612 = vadd.f32 %v5198, %v5727
  %v6613 = vadd.f32 %v5199, %v5729
  %v6614 = vadd.f32 %v5200, %v5731
  %v6615 = vadd.f32 %v5201, %v5735
  %v6616 = vadd.f32 %v5202, %v5737
  %v6617 = vadd.f32 %v5203, %v5739
  %v6618 = vadd.f32 %v5204, %v5741
  %v6619 = vadd.f32 %v5205, %v5745
  %v6620 = vadd.f32 %v5206, %v5747
  %v6621 = vadd.f32 %v5207, %v5749
  %v6622 = vadd.f32 %v5208, %v5751
  %v6623 = vadd.f32 %v5209, %v5755
  %v6624 = vadd.f32 %v5210, %v5757
  %v6625 = vadd.f32 %v5211, %v5759
  %v6626 = vadd.f32 %v5212, %v5761
  %v6627 = vadd.f32 %v5213, %v5765
  %v6628 = vadd.f32 %v5214, %v5767
  %v6629 = vadd.f32 %v5215, %v5769
  %v6630 = vadd.f32 %v5216, %v5771
  %v6631 = vadd.f32 %v5217, %v5775
  %v6632 = vadd.f32 %v5218, %v5777
  %v6633 = vadd.f32 %v5219, %v5779
  %v6634 = vadd.f32 %v5220, %v5781
  %v6635 = vadd.f32 %v5221, %v5785
  %v6636 = vadd.f32 %v5222, %v5787
  %v6637 = vadd.f32 %v5223, %v5789
  %v6638 = vadd.f32 %v5224, %v5791
  %v6639 = vadd.f32 %v5225, %v5795
  %v6640 = vadd.f32 %v5226, %v5797
  %v6641 = vadd.f32 %v5227, %v5799
  %v6642 = vadd.f32 %v5228, %v5801
  %v6643 = vadd.f32 %v5229, %v5805
  %v6644 = vadd.f32 %v5230, %v5807
  %v6645 = vadd.f32 %v5231, %v5809
  %v6646 = vadd.f32 %v5232, %v5811
  %v6647 = vadd.f32 %v5233, %v5815
  %v6648 = vadd.f32 %v5234, %v5817
  %v6649 = vadd.f32 %v5235, %v5819
  %v6650 = vadd.f32 %v5236, %v5821
  %v6651 = vadd.f32 %v5237, %v5825
  %v6652 = vadd.f32 %v5238, %v5827
  %v6653 = vadd.f32 %v5239, %v5829
  %v6654 = vadd.f32 %v5240, %v5831
  %v6655 = vadd.f32 %v5241, %v5835
  %v6656 = vadd.f32 %v5242, %v5837
  %v6657 = vadd.f32 %v5243, %v5839
  %v6658 = vadd.f32 %v5244, %v5841
  %v6659 = vadd.f32 %v5245, %v5845
  %v6660 = vadd.f32 %v5246, %v5847
  %v6661 = vadd.f32 %v5247, %v5849
  %v6662 = vadd.f32 %v5248, %v5851
  %v6663 = vadd.f32 %v5249, %v5855
  %v6664 = vadd.f32 %v5250, %v5857
  %v6665 = vadd.f32 %v5251, %v5859
  %v6666 = vadd.f32 %v5252, %v5861
  %v6667 = vadd.f32 %v5253, %v5865
  %v6668 = vadd.f32 %v5254, %v5867
  %v6669 = vadd.f32 %v5255, %v5869
  %v6670 = vadd.f32 %v5256, %v5871
  %v6671 = vadd.f32 %v5257, %v5875
  %v6672 = vadd.f32 %v5258, %v5877
  %v6673 = vadd.f32 %v5259, %v5879
  %v6674 = vadd.f32 %v5260, %v5881
  %v6675 = vadd.f32 %v5261, %v5885
  %v6676 = vadd.f32 %v5262, %v5887
  %v6677 = vadd.f32 %v5263, %v5889
  %v6678 = vadd.f32 %v5264, %v5891
  %v6679 = vadd.f32 %v5265, %v5895
  %v6680 = vadd.f32 %v5266, %v5897
  %v6681 = vadd.f32 %v5267, %v5899
  %v6682 = vadd.f32 %v5268, %v5901
  %v6683 = vadd.f32 %v5269, %v5905
  %v6684 = vadd.f32 %v5270, %v5907
  %v6685 = vadd.f32 %v5271, %v5909
  %v6686 = vadd.f32 %v5272, %v5911
  %v6687 = vadd.f32 %v5273, %v5915
  %v6688 = vadd.f32 %v5274, %v5917
  %v6689 = vadd.f32 %v5275, %v5919
  %v6690 = vadd.f32 %v5276, %v5921
  %v6691 = vadd.f32 %v5277, %v5925
  %v6692 = vadd.f32 %v5278, %v5927
  %v6693 = vadd.f32 %v5279, %v5929
  %v6694 = vadd.f32 %v5280, %v5931
  %v6695 = vadd.f32 %v5281, %v5935
  %v6696 = vadd.f32 %v5282, %v5937
  %v6697 = vadd.f32 %v5283, %v5939
  %v6698 = vadd.f32 %v5284, %v5941
  %v6699 = vadd.f32 %v5285, %v5945
  %v6700 = vadd.f32 %v5286, %v5947
  %v6701 = vadd.f32 %v5287, %v5949
  %v6702 = vadd.f32 %v5288, %v5951
  %v6703 = vadd.f32 %v5289, %v5955
  %v6704 = vadd.f32 %v5290, %v5957
  %v6705 = vadd.f32 %v5291, %v5959
  %v6706 = vadd.f32 %v5292, %v5961
  %v6707 = vadd.f32 %v5293, %v5965
  %v6708 = vadd.f32 %v5294, %v5967
  %v6709 = vadd.f32 %v5295, %v5969
  %v6710 = vadd.f32 %v5296, %v5971
  %v6711 = vadd.f32 %v5297, %v5975
  %v6712 = vadd.f32 %v5298, %v5977
  %v6713 = vadd.f32 %v5299, %v5979
  %v6714 = vadd.f32 %v5300, %v5981
  %v6715 = vadd.f32 %v5301, %v5985
  %v6716 = vadd.f32 %v5302, %v5987
  %v6717 = vadd.f32 %v5303, %v5989
  %v6718 = vadd.f32 %v5304, %v5991
  %v6719 = vadd.f32 %v5305, %v5995
  %v6720 = vadd.f32 %v5306, %v5997
  %v6721 = vadd.f32 %v5307, %v5999
  %v6722 = vadd.f32 %v5308, %v6001
  %v6723 = vadd.f32 %v5309, %v6005
  %v6724 = vadd.f32 %v5310, %v6007
  %v6725 = vadd.f32 %v5311, %v6009
  %v6726 = vadd.f32 %v5312, %v6011
  %v6727 = vadd.f32 %v5313, %v6015
  %v6728 = vadd.f32 %v5314, %v6017
  %v6729 = vadd.f32 %v5315, %v6019
  %v6730 = vadd.f32 %v5316, %v6021
  %v6731 = vadd.f32 %v5317, %v6025
  %v6732 = vadd.f32 %v5318, %v6027
  %v6733 = vadd.f32 %v5319, %v6029
  %v6734 = vadd.f32 %v5320, %v6031
  %v6735 = vadd.f32 %v5321, %v6035
  %v6736 = vadd.f32 %v5322, %v6037
  %v6737 = vadd.f32 %v5323, %v6039
  %v6738 = vadd.f32 %v5324, %v6041
  %v6739 = vadd.f32 %v5325, %v6045
  %v6740 = vadd.f32 %v5326, %v6047
  %v6741 = vadd.f32 %v5327, %v6049
  %v6742 = vadd.f32 %v5328, %v6051
  %v6743 = vadd.f32 %v5329, %v6055
  %v6744 = vadd.f32 %v5330, %v6057
  %v6745 = vadd.f32 %v5331, %v6059
  %v6746 = vadd.f32 %v5332, %v6061
  %v6747 = vadd.f32 %v5333, %v6065
  %v6748 = vadd.f32 %v5334, %v6067
  %v6749 = vadd.f32 %v5335, %v6069
  %v6750 = vadd.f32 %v5336, %v6071
  %v6751 = vadd.f32 %v5337, %v6075
  %v6752 = vadd.f32 %v5338, %v6077
  %v6753 = vadd.f32 %v5339, %v6079
  %v6754 = vadd.f32 %v5340, %v6081
  %v6755 = vadd.f32 %v5341, %v6085
  %v6756 = vadd.f32 %v5342, %v6087
  %v6757 = vadd.f32 %v5343, %v6089
  %v6758 = vadd.f32 %v5344, %v6091
  %v6759 = vadd.f32 %v5345, %v6095
  %v6760 = vadd.f32 %v5346, %v6097
  %v6761 = vadd.f32 %v5347, %v6099
  %v6762 = vadd.f32 %v5348, %v6101
  %v6763 = vadd.f32 %v5349, %v6105
  %v6764 = vadd.f32 %v5350, %v6107
  %v6765 = vadd.f32 %v5351, %v6109
  %v6766 = vadd.f32 %v5352, %v6111
  %v6767 = vadd.f32 %v5353, %v6115
  %v6768 = vadd.f32 %v5354, %v6117
  %v6769 = vadd.f32 %v5355, %v6119
  %v6770 = vadd.f32 %v5356, %v6121
  %v6771 = vadd.f32 %v5357, %v6125
  %v6772 = vadd.f32 %v5358, %v6127
  %v6773 = vadd.f32 %v5359, %v6129
  %v6774 = vadd.f32 %v5360, %v6131
  %v6775 = vadd.f32 %v5361, %v6135
  %v6776 = vadd.f32 %v5362, %v6137
  %v6777 = vadd.f32 %v5363, %v6139
  %v6778 = vadd.f32 %v5364, %v6141
  %v6779 = vadd.f32 %v5365, %v6145
  %v6780 = vadd.f32 %v5366, %v6147
  %v6781 = vadd.f32 %v5367, %v6149
  %v6782 = vadd.f32 %v5368, %v6151
  %v6783 = vadd.f32 %v5369, %v6155
  %v6784 = vadd.f32 %v5370, %v6157
  %v6785 = vadd.f32 %v5371, %v6159
  %v6786 = vadd.f32 %v5372, %v6161
  %v6787 = vadd.f32 %v5373, %v6165
  %v6788 = vadd.f32 %v5374, %v6167
  %v6789 = vadd.f32 %v5375, %v6169
  %v6790 = vadd.f32 %v5376, %v6171
  %v6791 = vadd.f32 %v5377, %v6175
  %v6792 = vadd.f32 %v5378, %v6177
  %v6793 = vadd.f32 %v5379, %v6179
  %v6794 = vadd.f32 %v5380, %v6181
  %v6795 = vadd.f32 %v5381, %v6185
  %v6796 = vadd.f32 %v5382, %v6187
  %v6797 = vadd.f32 %v5383, %v6189
  %v6798 = vadd.f32 %v5384, %v6191
  %v6799 = vadd.f32 %v5385, %v6195
  %v6800 = vadd.f32 %v5386, %v6197
  %v6801 = vadd.f32 %v5387, %v6199
  %v6802 = vadd.f32 %v5388, %v6201
  %v6803 = vadd.f32 %v5389, %v6205
  %v6804 = vadd.f32 %v5390, %v6207
  %v6805 = vadd.f32 %v5391, %v6209
  %v6806 = vadd.f32 %v5392, %v6211
  %v6807 = vadd.f32 %v5393, %v6215
  %v6808 = vadd.f32 %v5394, %v6217
  %v6809 = vadd.f32 %v5395, %v6219
  %v6810 = vadd.f32 %v5396, %v6221
  %v6811 = vadd.f32 %v5397, %v6225
  %v6812 = vadd.f32 %v5398, %v6227
  %v6813 = vadd.f32 %v5399, %v6229
  %v6814 = vadd.f32 %v5400, %v6231
  %v6815 = vadd.f32 %v5401, %v6235
  %v6816 = vadd.f32 %v5402, %v6237
  %v6817 = vadd.f32 %v5403, %v6239
  %v6818 = vadd.f32 %v5404, %v6241
  %v6819 = vadd.f32 %v5405, %v6245
  %v6820 = vadd.f32 %v5406, %v6247
  %v6821 = vadd.f32 %v5407, %v6249
  %v6822 = vadd.f32 %v5408, %v6251
  %v6823 = vadd.f32 %v5409, %v6255
  %v6824 = vadd.f32 %v5410, %v6257
  %v6825 = vadd.f32 %v5411, %v6259
  %v6826 = vadd.f32 %v5412, %v6261
  %v6827 = vadd.f32 %v5413, %v6265
  %v6828 = vadd.f32 %v5414, %v6267
  %v6829 = vadd.f32 %v5415, %v6269
  %v6830 = vadd.f32 %v5416, %v6271
  %v6831 = vadd.f32 %v5417, %v6275
  %v6832 = vadd.f32 %v5418, %v6277
  %v6833 = vadd.f32 %v5419, %v6279
  %v6834 = vadd.f32 %v5420, %v6281
  %v6835 = vadd.f32 %v5421, %v6285
  %v6836 = vadd.f32 %v5422, %v6287
  %v6837 = vadd.f32 %v5423, %v6289
  %v6838 = vadd.f32 %v5424, %v6291
  %v6839 = vadd.f32 %v5425, %v6295
  %v6840 = vadd.f32 %v5426, %v6297
  %v6841 = vadd.f32 %v5427, %v6299
  %v6842 = vadd.f32 %v5428, %v6301
  %v6843 = vadd.f32 %v5429, %v6305
  %v6844 = vadd.f32 %v5430, %v6307
  %v6845 = vadd.f32 %v5431, %v6309
  %v6846 = vadd.f32 %v5432, %v6311
  %v6847 = vadd.f32 %v5433, %v6315
  %v6848 = vadd.f32 %v5434, %v6317
  %v6849 = vadd.f32 %v5435, %v6319
  %v6850 = vadd.f32 %v5436, %v6321
  %v6851 = vadd.f32 %v5437, %v6325
  %v6852 = vadd.f32 %v5438, %v6327
  %v6853 = vadd.f32 %v5439, %v6329
  %v6854 = vadd.f32 %v5440, %v6331
  %v6855 = vadd.f32 %v5441, %v6335
  %v6856 = vadd.f32 %v5442, %v6337
  %v6857 = vadd.f32 %v5443, %v6339
  %v6858 = vadd.f32 %v5444, %v6341
  %v6859 = vadd.f32 %v5445, %v6345
  %v6860 = vadd.f32 %v5446, %v6347
  %v6861 = vadd.f32 %v5447, %v6349
  %v6862 = vadd.f32 %v5448, %v6351
  %v6863 = vadd.f32 %v5449, %v6355
  %v6864 = vadd.f32 %v5450, %v6357
  %v6865 = vadd.f32 %v5451, %v6359
  %v6866 = vadd.f32 %v5452, %v6361
  %v6867 = vadd.f32 %v5453, %v6365
  %v6868 = vadd.f32 %v5454, %v6367
  %v6869 = vadd.f32 %v5455, %v6369
  %v6870 = vadd.f32 %v5456, %v6371
  %v6871 = vadd.f32 %v5457, %v6375
  %v6872 = vadd.f32 %v5458, %v6377
  %v6873 = vadd.f32 %v5459, %v6379
  %v6874 = vadd.f32 %v5460, %v6381
  %v6875 = vadd.f32 %v5461, %v6385
  %v6876 = vadd.f32 %v5462, %v6387
  %v6877 = vadd.f32 %v5463, %v6389
  %v6878 = vadd.f32 %v5464, %v6391
  %v6879 = vadd.f32 %v5465, %v6395
  %v6880 = vadd.f32 %v5466, %v6397
  %v6881 = vadd.f32 %v5467, %v6399
  %v6882 = vadd.f32 %v5468, %v6401
  %v6883 = vadd.f32 %v5469, %v6405
  %v6884 = vadd.f32 %v5470, %v6407
  %v6885 = vadd.f32 %v5471, %v6409
  %v6886 = vadd.f32 %v5472, %v6411
  %v6887 = vadd.f32 %v5473, %v6415
  %v6888 = vadd.f32 %v5474, %v6417
  %v6889 = vadd.f32 %v5475, %v6419
  %v6890 = vadd.f32 %v5476, %v6421
  %v6891 = vadd.f32 %v5477, %v6425
  %v6892 = vadd.f32 %v5478, %v6427
  %v6893 = vadd.f32 %v5479, %v6429
  %v6894 = vadd.f32 %v5480, %v6431
  %v6895 = vadd.f32 %v5481, %v6435
  %v6896 = vadd.f32 %v5482, %v6437
  %v6897 = vadd.f32 %v5483, %v6439
  %v6898 = vadd.f32 %v5484, %v6441
  %v6899 = vadd.f32 %v5485, %v6445
  %v6900 = vadd.f32 %v5486, %v6447
  %v6901 = vadd.f32 %v5487, %v6449
  %v6902 = vadd.f32 %v5488, %v6451
  %v6903 = vadd.f32 %v5489, %v6455
  %v6904 = vadd.f32 %v5490, %v6457
  %v6905 = vadd.f32 %v5491, %v6459
  %v6906 = vadd.f32 %v5492, %v6461
  %v6907 = vadd.f32 %v5493, %v6465
  %v6908 = vadd.f32 %v5494, %v6467
  %v6909 = vadd.f32 %v5495, %v6469
  %v6910 = vadd.f32 %v5496, %v6471
  %v6911 = vadd.f32 %v5497, %v6475
  %v6912 = vadd.f32 %v5498, %v6477
  %v6913 = vadd.f32 %v5499, %v6479
  %v6914 = vadd.f32 %v5500, %v6481
  %v6915 = vadd.f32 %v5501, %v6485
  %v6916 = vadd.f32 %v5502, %v6487
  %v6917 = vadd.f32 %v5503, %v6489
  %v6918 = vadd.f32 %v5504, %v6491
  %v6919 = vadd.f32 %v5505, %v6495
  %v6920 = vadd.f32 %v5506, %v6497
  %v6921 = vadd.f32 %v5507, %v6499
  %v6922 = vadd.f32 %v5508, %v6501
  %v6923 = vadd.f32 %v5509, %v6505
  %v6924 = vadd.f32 %v5510, %v6507
  %v6925 = vadd.f32 %v5511, %v6509
  %v6926 = vadd.f32 %v5512, %v6511
  %v6927 = vadd.f32 %v5513, %v6515
  %v6928 = vadd.f32 %v5514, %v6517
  %v6929 = vadd.f32 %v5515, %v6519
  %v6930 = vadd.f32 %v5516, %v6521
  %v6931 = vadd.f32 %v5517, %v6525
  %v6932 = vadd.f32 %v5518, %v6527
  %v6933 = vadd.f32 %v5519, %v6529
  %v6934 = vadd.f32 %v5520, %v6531
  %v6935 = vadd.f32 %v5521, %v6535
  %v6936 = vadd.f32 %v5522, %v6537
  %v6937 = vadd.f32 %v5523, %v6539
  %v6938 = vadd.f32 %v5524, %v6541
  %v6939 = vadd.f32 %v5525, %v6545
  %v6940 = vadd.f32 %v5526, %v6547
  %v6941 = vadd.f32 %v5527, %v6549
  %v6942 = vadd.f32 %v5528, %v6551
  %v6943 = vadd.f32 %v5529, %v6555
  %v6944 = vadd.f32 %v5530, %v6557
  %v6945 = vadd.f32 %v5531, %v6559
  %v6946 = vadd.f32 %v5532, %v6561
  %v6947 = vld [vmem:[%s2] sm:$0x3]
  %v6949 = vlaneseq
  %v6950 = vshrl.u32 %v6949, 7
  %v6951 = vsub.s32 0, %v6950
  %v6952 = vrot.slane %v6947, %v6951
  %v6953 = vlaneseq
  %v6954 = vshrl.u32 %v6953, 7
  %v6955 = vsub.s32 1, %v6954
  %v6956 = vrot.slane %v6947, %v6955
  %v6959 = vadd.f32 %v6563, %v6952
  %v6960 = vadd.f32 %v6564, %v6956
  %v6961 = vadd.f32 %v6565, %v6952
  %v6962 = vadd.f32 %v6566, %v6956
  %v6963 = vadd.f32 %v6567, %v6952
  %v6964 = vadd.f32 %v6568, %v6956
  %v6965 = vadd.f32 %v6569, %v6952
  %v6966 = vadd.f32 %v6570, %v6956
  %v6967 = vadd.f32 %v6571, %v6952
  %v6968 = vadd.f32 %v6572, %v6956
  %v6969 = vadd.f32 %v6573, %v6952
  %v6970 = vadd.f32 %v6574, %v6956
  %v6971 = vadd.f32 %v6575, %v6952
  %v6972 = vadd.f32 %v6576, %v6956
  %v6973 = vadd.f32 %v6577, %v6952
  %v6974 = vadd.f32 %v6578, %v6956
  %v6975 = vadd.f32 %v6579, %v6952
  %v6976 = vadd.f32 %v6580, %v6956
  %v6977 = vadd.f32 %v6581, %v6952
  %v6978 = vadd.f32 %v6582, %v6956
  %v6979 = vadd.f32 %v6583, %v6952
  %v6980 = vadd.f32 %v6584, %v6956
  %v6981 = vadd.f32 %v6585, %v6952
  %v6982 = vadd.f32 %v6586, %v6956
  %v6983 = vadd.f32 %v6587, %v6952
  %v6984 = vadd.f32 %v6588, %v6956
  %v6985 = vadd.f32 %v6589, %v6952
  %v6986 = vadd.f32 %v6590, %v6956
  %v6987 = vadd.f32 %v6591, %v6952
  %v6988 = vadd.f32 %v6592, %v6956
  %v6989 = vadd.f32 %v6593, %v6952
  %v6990 = vadd.f32 %v6594, %v6956
  %v6991 = vadd.f32 %v6595, %v6952
  %v6992 = vadd.f32 %v6596, %v6956
  %v6993 = vadd.f32 %v6597, %v6952
  %v6994 = vadd.f32 %v6598, %v6956
  %v6995 = vadd.f32 %v6599, %v6952
  %v6996 = vadd.f32 %v6600, %v6956
  %v6997 = vadd.f32 %v6601, %v6952
  %v6998 = vadd.f32 %v6602, %v6956
  %v6999 = vadd.f32 %v6603, %v6952
  %v7000 = vadd.f32 %v6604, %v6956
  %v7001 = vadd.f32 %v6605, %v6952
  %v7002 = vadd.f32 %v6606, %v6956
  %v7003 = vadd.f32 %v6607, %v6952
  %v7004 = vadd.f32 %v6608, %v6956
  %v7005 = vadd.f32 %v6609, %v6952
  %v7006 = vadd.f32 %v6610, %v6956
  %v7007 = vadd.f32 %v6611, %v6952
  %v7008 = vadd.f32 %v6612, %v6956
  %v7009 = vadd.f32 %v6613, %v6952
  %v7010 = vadd.f32 %v6614, %v6956
  %v7011 = vadd.f32 %v6615, %v6952
  %v7012 = vadd.f32 %v6616, %v6956
  %v7013 = vadd.f32 %v6617, %v6952
  %v7014 = vadd.f32 %v6618, %v6956
  %v7015 = vadd.f32 %v6619, %v6952
  %v7016 = vadd.f32 %v6620, %v6956
  %v7017 = vadd.f32 %v6621, %v6952
  %v7018 = vadd.f32 %v6622, %v6956
  %v7019 = vadd.f32 %v6623, %v6952
  %v7020 = vadd.f32 %v6624, %v6956
  %v7021 = vadd.f32 %v6625, %v6952
  %v7022 = vadd.f32 %v6626, %v6956
  %v7023 = vadd.f32 %v6627, %v6952
  %v7024 = vadd.f32 %v6628, %v6956
  %v7025 = vadd.f32 %v6629, %v6952
  %v7026 = vadd.f32 %v6630, %v6956
  %v7027 = vadd.f32 %v6631, %v6952
  %v7028 = vadd.f32 %v6632, %v6956
  %v7029 = vadd.f32 %v6633, %v6952
  %v7030 = vadd.f32 %v6634, %v6956
  %v7031 = vadd.f32 %v6635, %v6952
  %v7032 = vadd.f32 %v6636, %v6956
  %v7033 = vadd.f32 %v6637, %v6952
  %v7034 = vadd.f32 %v6638, %v6956
  %v7035 = vadd.f32 %v6639, %v6952
  %v7036 = vadd.f32 %v6640, %v6956
  %v7037 = vadd.f32 %v6641, %v6952
  %v7038 = vadd.f32 %v6642, %v6956
  %v7039 = vadd.f32 %v6643, %v6952
  %v7040 = vadd.f32 %v6644, %v6956
  %v7041 = vadd.f32 %v6645, %v6952
  %v7042 = vadd.f32 %v6646, %v6956
  %v7043 = vadd.f32 %v6647, %v6952
  %v7044 = vadd.f32 %v6648, %v6956
  %v7045 = vadd.f32 %v6649, %v6952
  %v7046 = vadd.f32 %v6650, %v6956
  %v7047 = vadd.f32 %v6651, %v6952
  %v7048 = vadd.f32 %v6652, %v6956
  %v7049 = vadd.f32 %v6653, %v6952
  %v7050 = vadd.f32 %v6654, %v6956
  %v7051 = vadd.f32 %v6655, %v6952
  %v7052 = vadd.f32 %v6656, %v6956
  %v7053 = vadd.f32 %v6657, %v6952
  %v7054 = vadd.f32 %v6658, %v6956
  %v7055 = vadd.f32 %v6659, %v6952
  %v7056 = vadd.f32 %v6660, %v6956
  %v7057 = vadd.f32 %v6661, %v6952
  %v7058 = vadd.f32 %v6662, %v6956
  %v7059 = vadd.f32 %v6663, %v6952
  %v7060 = vadd.f32 %v6664, %v6956
  %v7061 = vadd.f32 %v6665, %v6952
  %v7062 = vadd.f32 %v6666, %v6956
  %v7063 = vadd.f32 %v6667, %v6952
  %v7064 = vadd.f32 %v6668, %v6956
  %v7065 = vadd.f32 %v6669, %v6952
  %v7066 = vadd.f32 %v6670, %v6956
  %v7067 = vadd.f32 %v6671, %v6952
  %v7068 = vadd.f32 %v6672, %v6956
  %v7069 = vadd.f32 %v6673, %v6952
  %v7070 = vadd.f32 %v6674, %v6956
  %v7071 = vadd.f32 %v6675, %v6952
  %v7072 = vadd.f32 %v6676, %v6956
  %v7073 = vadd.f32 %v6677, %v6952
  %v7074 = vadd.f32 %v6678, %v6956
  %v7075 = vadd.f32 %v6679, %v6952
  %v7076 = vadd.f32 %v6680, %v6956
  %v7077 = vadd.f32 %v6681, %v6952
  %v7078 = vadd.f32 %v6682, %v6956
  %v7079 = vadd.f32 %v6683, %v6952
  %v7080 = vadd.f32 %v6684, %v6956
  %v7081 = vadd.f32 %v6685, %v6952
  %v7082 = vadd.f32 %v6686, %v6956
  %v7083 = vadd.f32 %v6687, %v6952
  %v7084 = vadd.f32 %v6688, %v6956
  %v7085 = vadd.f32 %v6689, %v6952
  %v7086 = vadd.f32 %v6690, %v6956
  %v7087 = vadd.f32 %v6691, %v6952
  %v7088 = vadd.f32 %v6692, %v6956
  %v7089 = vadd.f32 %v6693, %v6952
  %v7090 = vadd.f32 %v6694, %v6956
  %v7091 = vadd.f32 %v6695, %v6952
  %v7092 = vadd.f32 %v6696, %v6956
  %v7093 = vadd.f32 %v6697, %v6952
  %v7094 = vadd.f32 %v6698, %v6956
  %v7095 = vadd.f32 %v6699, %v6952
  %v7096 = vadd.f32 %v6700, %v6956
  %v7097 = vadd.f32 %v6701, %v6952
  %v7098 = vadd.f32 %v6702, %v6956
  %v7099 = vadd.f32 %v6703, %v6952
  %v7100 = vadd.f32 %v6704, %v6956
  %v7101 = vadd.f32 %v6705, %v6952
  %v7102 = vadd.f32 %v6706, %v6956
  %v7103 = vadd.f32 %v6707, %v6952
  %v7104 = vadd.f32 %v6708, %v6956
  %v7105 = vadd.f32 %v6709, %v6952
  %v7106 = vadd.f32 %v6710, %v6956
  %v7107 = vadd.f32 %v6711, %v6952
  %v7108 = vadd.f32 %v6712, %v6956
  %v7109 = vadd.f32 %v6713, %v6952
  %v7110 = vadd.f32 %v6714, %v6956
  %v7111 = vadd.f32 %v6715, %v6952
  %v7112 = vadd.f32 %v6716, %v6956
  %v7113 = vadd.f32 %v6717, %v6952
  %v7114 = vadd.f32 %v6718, %v6956
  %v7115 = vadd.f32 %v6719, %v6952
  %v7116 = vadd.f32 %v6720, %v6956
  %v7117 = vadd.f32 %v6721, %v6952
  %v7118 = vadd.f32 %v6722, %v6956
  %v7119 = vadd.f32 %v6723, %v6952
  %v7120 = vadd.f32 %v6724, %v6956
  %v7121 = vadd.f32 %v6725, %v6952
  %v7122 = vadd.f32 %v6726, %v6956
  %v7123 = vadd.f32 %v6727, %v6952
  %v7124 = vadd.f32 %v6728, %v6956
  %v7125 = vadd.f32 %v6729, %v6952
  %v7126 = vadd.f32 %v6730, %v6956
  %v7127 = vadd.f32 %v6731, %v6952
  %v7128 = vadd.f32 %v6732, %v6956
  %v7129 = vadd.f32 %v6733, %v6952
  %v7130 = vadd.f32 %v6734, %v6956
  %v7131 = vadd.f32 %v6735, %v6952
  %v7132 = vadd.f32 %v6736, %v6956
  %v7133 = vadd.f32 %v6737, %v6952
  %v7134 = vadd.f32 %v6738, %v6956
  %v7135 = vadd.f32 %v6739, %v6952
  %v7136 = vadd.f32 %v6740, %v6956
  %v7137 = vadd.f32 %v6741, %v6952
  %v7138 = vadd.f32 %v6742, %v6956
  %v7139 = vadd.f32 %v6743, %v6952
  %v7140 = vadd.f32 %v6744, %v6956
  %v7141 = vadd.f32 %v6745, %v6952
  %v7142 = vadd.f32 %v6746, %v6956
  %v7143 = vadd.f32 %v6747, %v6952
  %v7144 = vadd.f32 %v6748, %v6956
  %v7145 = vadd.f32 %v6749, %v6952
  %v7146 = vadd.f32 %v6750, %v6956
  %v7147 = vadd.f32 %v6751, %v6952
  %v7148 = vadd.f32 %v6752, %v6956
  %v7149 = vadd.f32 %v6753, %v6952
  %v7150 = vadd.f32 %v6754, %v6956
  %v7151 = vadd.f32 %v6755, %v6952
  %v7152 = vadd.f32 %v6756, %v6956
  %v7153 = vadd.f32 %v6757, %v6952
  %v7154 = vadd.f32 %v6758, %v6956
  %v7155 = vadd.f32 %v6759, %v6952
  %v7156 = vadd.f32 %v6760, %v6956
  %v7157 = vadd.f32 %v6761, %v6952
  %v7158 = vadd.f32 %v6762, %v6956
  %v7159 = vadd.f32 %v6763, %v6952
  %v7160 = vadd.f32 %v6764, %v6956
  %v7161 = vadd.f32 %v6765, %v6952
  %v7162 = vadd.f32 %v6766, %v6956
  %v7163 = vadd.f32 %v6767, %v6952
  %v7164 = vadd.f32 %v6768, %v6956
  %v7165 = vadd.f32 %v6769, %v6952
  %v7166 = vadd.f32 %v6770, %v6956
  %v7167 = vadd.f32 %v6771, %v6952
  %v7168 = vadd.f32 %v6772, %v6956
  %v7169 = vadd.f32 %v6773, %v6952
  %v7170 = vadd.f32 %v6774, %v6956
  %v7171 = vadd.f32 %v6775, %v6952
  %v7172 = vadd.f32 %v6776, %v6956
  %v7173 = vadd.f32 %v6777, %v6952
  %v7174 = vadd.f32 %v6778, %v6956
  %v7175 = vadd.f32 %v6779, %v6952
  %v7176 = vadd.f32 %v6780, %v6956
  %v7177 = vadd.f32 %v6781, %v6952
  %v7178 = vadd.f32 %v6782, %v6956
  %v7179 = vadd.f32 %v6783, %v6952
  %v7180 = vadd.f32 %v6784, %v6956
  %v7181 = vadd.f32 %v6785, %v6952
  %v7182 = vadd.f32 %v6786, %v6956
  %v7183 = vadd.f32 %v6787, %v6952
  %v7184 = vadd.f32 %v6788, %v6956
  %v7185 = vadd.f32 %v6789, %v6952
  %v7186 = vadd.f32 %v6790, %v6956
  %v7187 = vadd.f32 %v6791, %v6952
  %v7188 = vadd.f32 %v6792, %v6956
  %v7189 = vadd.f32 %v6793, %v6952
  %v7190 = vadd.f32 %v6794, %v6956
  %v7191 = vadd.f32 %v6795, %v6952
  %v7192 = vadd.f32 %v6796, %v6956
  %v7193 = vadd.f32 %v6797, %v6952
  %v7194 = vadd.f32 %v6798, %v6956
  %v7195 = vadd.f32 %v6799, %v6952
  %v7196 = vadd.f32 %v6800, %v6956
  %v7197 = vadd.f32 %v6801, %v6952
  %v7198 = vadd.f32 %v6802, %v6956
  %v7199 = vadd.f32 %v6803, %v6952
  %v7200 = vadd.f32 %v6804, %v6956
  %v7201 = vadd.f32 %v6805, %v6952
  %v7202 = vadd.f32 %v6806, %v6956
  %v7203 = vadd.f32 %v6807, %v6952
  %v7204 = vadd.f32 %v6808, %v6956
  %v7205 = vadd.f32 %v6809, %v6952
  %v7206 = vadd.f32 %v6810, %v6956
  %v7207 = vadd.f32 %v6811, %v6952
  %v7208 = vadd.f32 %v6812, %v6956
  %v7209 = vadd.f32 %v6813, %v6952
  %v7210 = vadd.f32 %v6814, %v6956
  %v7211 = vadd.f32 %v6815, %v6952
  %v7212 = vadd.f32 %v6816, %v6956
  %v7213 = vadd.f32 %v6817, %v6952
  %v7214 = vadd.f32 %v6818, %v6956
  %v7215 = vadd.f32 %v6819, %v6952
  %v7216 = vadd.f32 %v6820, %v6956
  %v7217 = vadd.f32 %v6821, %v6952
  %v7218 = vadd.f32 %v6822, %v6956
  %v7219 = vadd.f32 %v6823, %v6952
  %v7220 = vadd.f32 %v6824, %v6956
  %v7221 = vadd.f32 %v6825, %v6952
  %v7222 = vadd.f32 %v6826, %v6956
  %v7223 = vadd.f32 %v6827, %v6952
  %v7224 = vadd.f32 %v6828, %v6956
  %v7225 = vadd.f32 %v6829, %v6952
  %v7226 = vadd.f32 %v6830, %v6956
  %v7227 = vadd.f32 %v6831, %v6952
  %v7228 = vadd.f32 %v6832, %v6956
  %v7229 = vadd.f32 %v6833, %v6952
  %v7230 = vadd.f32 %v6834, %v6956
  %v7231 = vadd.f32 %v6835, %v6952
  %v7232 = vadd.f32 %v6836, %v6956
  %v7233 = vadd.f32 %v6837, %v6952
  %v7234 = vadd.f32 %v6838, %v6956
  %v7235 = vadd.f32 %v6839, %v6952
  %v7236 = vadd.f32 %v6840, %v6956
  %v7237 = vadd.f32 %v6841, %v6952
  %v7238 = vadd.f32 %v6842, %v6956
  %v7239 = vadd.f32 %v6843, %v6952
  %v7240 = vadd.f32 %v6844, %v6956
  %v7241 = vadd.f32 %v6845, %v6952
  %v7242 = vadd.f32 %v6846, %v6956
  %v7243 = vadd.f32 %v6847, %v6952
  %v7244 = vadd.f32 %v6848, %v6956
  %v7245 = vadd.f32 %v6849, %v6952
  %v7246 = vadd.f32 %v6850, %v6956
  %v7247 = vadd.f32 %v6851, %v6952
  %v7248 = vadd.f32 %v6852, %v6956
  %v7249 = vadd.f32 %v6853, %v6952
  %v7250 = vadd.f32 %v6854, %v6956
  %v7251 = vadd.f32 %v6855, %v6952
  %v7252 = vadd.f32 %v6856, %v6956
  %v7253 = vadd.f32 %v6857, %v6952
  %v7254 = vadd.f32 %v6858, %v6956
  %v7255 = vadd.f32 %v6859, %v6952
  %v7256 = vadd.f32 %v6860, %v6956
  %v7257 = vadd.f32 %v6861, %v6952
  %v7258 = vadd.f32 %v6862, %v6956
  %v7259 = vadd.f32 %v6863, %v6952
  %v7260 = vadd.f32 %v6864, %v6956
  %v7261 = vadd.f32 %v6865, %v6952
  %v7262 = vadd.f32 %v6866, %v6956
  %v7263 = vadd.f32 %v6867, %v6952
  %v7264 = vadd.f32 %v6868, %v6956
  %v7265 = vadd.f32 %v6869, %v6952
  %v7266 = vadd.f32 %v6870, %v6956
  %v7267 = vadd.f32 %v6871, %v6952
  %v7268 = vadd.f32 %v6872, %v6956
  %v7269 = vadd.f32 %v6873, %v6952
  %v7270 = vadd.f32 %v6874, %v6956
  %v7271 = vadd.f32 %v6875, %v6952
  %v7272 = vadd.f32 %v6876, %v6956
  %v7273 = vadd.f32 %v6877, %v6952
  %v7274 = vadd.f32 %v6878, %v6956
  %v7275 = vadd.f32 %v6879, %v6952
  %v7276 = vadd.f32 %v6880, %v6956
  %v7277 = vadd.f32 %v6881, %v6952
  %v7278 = vadd.f32 %v6882, %v6956
  %v7279 = vadd.f32 %v6883, %v6952
  %v7280 = vadd.f32 %v6884, %v6956
  %v7281 = vadd.f32 %v6885, %v6952
  %v7282 = vadd.f32 %v6886, %v6956
  %v7283 = vadd.f32 %v6887, %v6952
  %v7284 = vadd.f32 %v6888, %v6956
  %v7285 = vadd.f32 %v6889, %v6952
  %v7286 = vadd.f32 %v6890, %v6956
  %v7287 = vadd.f32 %v6891, %v6952
  %v7288 = vadd.f32 %v6892, %v6956
  %v7289 = vadd.f32 %v6893, %v6952
  %v7290 = vadd.f32 %v6894, %v6956
  %v7291 = vadd.f32 %v6895, %v6952
  %v7292 = vadd.f32 %v6896, %v6956
  %v7293 = vadd.f32 %v6897, %v6952
  %v7294 = vadd.f32 %v6898, %v6956
  %v7295 = vadd.f32 %v6899, %v6952
  %v7296 = vadd.f32 %v6900, %v6956
  %v7297 = vadd.f32 %v6901, %v6952
  %v7298 = vadd.f32 %v6902, %v6956
  %v7299 = vadd.f32 %v6903, %v6952
  %v7300 = vadd.f32 %v6904, %v6956
  %v7301 = vadd.f32 %v6905, %v6952
  %v7302 = vadd.f32 %v6906, %v6956
  %v7303 = vadd.f32 %v6907, %v6952
  %v7304 = vadd.f32 %v6908, %v6956
  %v7305 = vadd.f32 %v6909, %v6952
  %v7306 = vadd.f32 %v6910, %v6956
  %v7307 = vadd.f32 %v6911, %v6952
  %v7308 = vadd.f32 %v6912, %v6956
  %v7309 = vadd.f32 %v6913, %v6952
  %v7310 = vadd.f32 %v6914, %v6956
  %v7311 = vadd.f32 %v6915, %v6952
  %v7312 = vadd.f32 %v6916, %v6956
  %v7313 = vadd.f32 %v6917, %v6952
  %v7314 = vadd.f32 %v6918, %v6956
  %v7315 = vadd.f32 %v6919, %v6952
  %v7316 = vadd.f32 %v6920, %v6956
  %v7317 = vadd.f32 %v6921, %v6952
  %v7318 = vadd.f32 %v6922, %v6956
  %v7319 = vadd.f32 %v6923, %v6952
  %v7320 = vadd.f32 %v6924, %v6956
  %v7321 = vadd.f32 %v6925, %v6952
  %v7322 = vadd.f32 %v6926, %v6956
  %v7323 = vadd.f32 %v6927, %v6952
  %v7324 = vadd.f32 %v6928, %v6956
  %v7325 = vadd.f32 %v6929, %v6952
  %v7326 = vadd.f32 %v6930, %v6956
  %v7327 = vadd.f32 %v6931, %v6952
  %v7328 = vadd.f32 %v6932, %v6956
  %v7329 = vadd.f32 %v6933, %v6952
  %v7330 = vadd.f32 %v6934, %v6956
  %v7331 = vadd.f32 %v6935, %v6952
  %v7332 = vadd.f32 %v6936, %v6956
  %v7333 = vadd.f32 %v6937, %v6952
  %v7334 = vadd.f32 %v6938, %v6956
  %v7335 = vadd.f32 %v6939, %v6952
  %v7336 = vadd.f32 %v6940, %v6956
  %v7337 = vadd.f32 %v6941, %v6952
  %v7338 = vadd.f32 %v6942, %v6956
  %v7339 = vadd.f32 %v6943, %v6952
  %v7340 = vadd.f32 %v6944, %v6956
  %v7341 = vadd.f32 %v6945, %v6952
  %v7342 = vadd.f32 %v6946, %v6956
  %v7343 = vmax.f32 %v6959, 0.0
  %v7344 = vmax.f32 %v6960, 0.0
  %v7345 = vmax.f32 %v6961, 0.0
  %v7346 = vmax.f32 %v6962, 0.0
  %v7347 = vmax.f32 %v6963, 0.0
  %v7348 = vmax.f32 %v6964, 0.0
  %v7349 = vmax.f32 %v6965, 0.0
  %v7350 = vmax.f32 %v6966, 0.0
  %v7351 = vmax.f32 %v6967, 0.0
  %v7352 = vmax.f32 %v6968, 0.0
  %v7353 = vmax.f32 %v6969, 0.0
  %v7354 = vmax.f32 %v6970, 0.0
  %v7355 = vmax.f32 %v6971, 0.0
  %v7356 = vmax.f32 %v6972, 0.0
  %v7357 = vmax.f32 %v6973, 0.0
  %v7358 = vmax.f32 %v6974, 0.0
  %v7359 = vmax.f32 %v6975, 0.0
  %v7360 = vmax.f32 %v6976, 0.0
  %v7361 = vmax.f32 %v6977, 0.0
  %v7362 = vmax.f32 %v6978, 0.0
  %v7363 = vmax.f32 %v6979, 0.0
  %v7364 = vmax.f32 %v6980, 0.0
  %v7365 = vmax.f32 %v6981, 0.0
  %v7366 = vmax.f32 %v6982, 0.0
  %v7367 = vmax.f32 %v6983, 0.0
  %v7368 = vmax.f32 %v6984, 0.0
  %v7369 = vmax.f32 %v6985, 0.0
  %v7370 = vmax.f32 %v6986, 0.0
  %v7371 = vmax.f32 %v6987, 0.0
  %v7372 = vmax.f32 %v6988, 0.0
  %v7373 = vmax.f32 %v6989, 0.0
  %v7374 = vmax.f32 %v6990, 0.0
  %v7375 = vmax.f32 %v6991, 0.0
  %v7376 = vmax.f32 %v6992, 0.0
  %v7377 = vmax.f32 %v6993, 0.0
  %v7378 = vmax.f32 %v6994, 0.0
  %v7379 = vmax.f32 %v6995, 0.0
  %v7380 = vmax.f32 %v6996, 0.0
  %v7381 = vmax.f32 %v6997, 0.0
  %v7382 = vmax.f32 %v6998, 0.0
  %v7383 = vmax.f32 %v6999, 0.0
  %v7384 = vmax.f32 %v7000, 0.0
  %v7385 = vmax.f32 %v7001, 0.0
  %v7386 = vmax.f32 %v7002, 0.0
  %v7387 = vmax.f32 %v7003, 0.0
  %v7388 = vmax.f32 %v7004, 0.0
  %v7389 = vmax.f32 %v7005, 0.0
  %v7390 = vmax.f32 %v7006, 0.0
  %v7391 = vmax.f32 %v7007, 0.0
  %v7392 = vmax.f32 %v7008, 0.0
  %v7393 = vmax.f32 %v7009, 0.0
  %v7394 = vmax.f32 %v7010, 0.0
  %v7395 = vmax.f32 %v7011, 0.0
  %v7396 = vmax.f32 %v7012, 0.0
  %v7397 = vmax.f32 %v7013, 0.0
  %v7398 = vmax.f32 %v7014, 0.0
  %v7399 = vmax.f32 %v7015, 0.0
  %v7400 = vmax.f32 %v7016, 0.0
  %v7401 = vmax.f32 %v7017, 0.0
  %v7402 = vmax.f32 %v7018, 0.0
  %v7403 = vmax.f32 %v7019, 0.0
  %v7404 = vmax.f32 %v7020, 0.0
  %v7405 = vmax.f32 %v7021, 0.0
  %v7406 = vmax.f32 %v7022, 0.0
  %v7407 = vmax.f32 %v7023, 0.0
  %v7408 = vmax.f32 %v7024, 0.0
  %v7409 = vmax.f32 %v7025, 0.0
  %v7410 = vmax.f32 %v7026, 0.0
  %v7411 = vmax.f32 %v7027, 0.0
  %v7412 = vmax.f32 %v7028, 0.0
  %v7413 = vmax.f32 %v7029, 0.0
  %v7414 = vmax.f32 %v7030, 0.0
  %v7415 = vmax.f32 %v7031, 0.0
  %v7416 = vmax.f32 %v7032, 0.0
  %v7417 = vmax.f32 %v7033, 0.0
  %v7418 = vmax.f32 %v7034, 0.0
  %v7419 = vmax.f32 %v7035, 0.0
  %v7420 = vmax.f32 %v7036, 0.0
  %v7421 = vmax.f32 %v7037, 0.0
  %v7422 = vmax.f32 %v7038, 0.0
  %v7423 = vmax.f32 %v7039, 0.0
  %v7424 = vmax.f32 %v7040, 0.0
  %v7425 = vmax.f32 %v7041, 0.0
  %v7426 = vmax.f32 %v7042, 0.0
  %v7427 = vmax.f32 %v7043, 0.0
  %v7428 = vmax.f32 %v7044, 0.0
  %v7429 = vmax.f32 %v7045, 0.0
  %v7430 = vmax.f32 %v7046, 0.0
  %v7431 = vmax.f32 %v7047, 0.0
  %v7432 = vmax.f32 %v7048, 0.0
  %v7433 = vmax.f32 %v7049, 0.0
  %v7434 = vmax.f32 %v7050, 0.0
  %v7435 = vmax.f32 %v7051, 0.0
  %v7436 = vmax.f32 %v7052, 0.0
  %v7437 = vmax.f32 %v7053, 0.0
  %v7438 = vmax.f32 %v7054, 0.0
  %v7439 = vmax.f32 %v7055, 0.0
  %v7440 = vmax.f32 %v7056, 0.0
  %v7441 = vmax.f32 %v7057, 0.0
  %v7442 = vmax.f32 %v7058, 0.0
  %v7443 = vmax.f32 %v7059, 0.0
  %v7444 = vmax.f32 %v7060, 0.0
  %v7445 = vmax.f32 %v7061, 0.0
  %v7446 = vmax.f32 %v7062, 0.0
  %v7447 = vmax.f32 %v7063, 0.0
  %v7448 = vmax.f32 %v7064, 0.0
  %v7449 = vmax.f32 %v7065, 0.0
  %v7450 = vmax.f32 %v7066, 0.0
  %v7451 = vmax.f32 %v7067, 0.0
  %v7452 = vmax.f32 %v7068, 0.0
  %v7453 = vmax.f32 %v7069, 0.0
  %v7454 = vmax.f32 %v7070, 0.0
  %v7455 = vmax.f32 %v7071, 0.0
  %v7456 = vmax.f32 %v7072, 0.0
  %v7457 = vmax.f32 %v7073, 0.0
  %v7458 = vmax.f32 %v7074, 0.0
  %v7459 = vmax.f32 %v7075, 0.0
  %v7460 = vmax.f32 %v7076, 0.0
  %v7461 = vmax.f32 %v7077, 0.0
  %v7462 = vmax.f32 %v7078, 0.0
  %v7463 = vmax.f32 %v7079, 0.0
  %v7464 = vmax.f32 %v7080, 0.0
  %v7465 = vmax.f32 %v7081, 0.0
  %v7466 = vmax.f32 %v7082, 0.0
  %v7467 = vmax.f32 %v7083, 0.0
  %v7468 = vmax.f32 %v7084, 0.0
  %v7469 = vmax.f32 %v7085, 0.0
  %v7470 = vmax.f32 %v7086, 0.0
  %v7471 = vmax.f32 %v7087, 0.0
  %v7472 = vmax.f32 %v7088, 0.0
  %v7473 = vmax.f32 %v7089, 0.0
  %v7474 = vmax.f32 %v7090, 0.0
  %v7475 = vmax.f32 %v7091, 0.0
  %v7476 = vmax.f32 %v7092, 0.0
  %v7477 = vmax.f32 %v7093, 0.0
  %v7478 = vmax.f32 %v7094, 0.0
  %v7479 = vmax.f32 %v7095, 0.0
  %v7480 = vmax.f32 %v7096, 0.0
  %v7481 = vmax.f32 %v7097, 0.0
  %v7482 = vmax.f32 %v7098, 0.0
  %v7483 = vmax.f32 %v7099, 0.0
  %v7484 = vmax.f32 %v7100, 0.0
  %v7485 = vmax.f32 %v7101, 0.0
  %v7486 = vmax.f32 %v7102, 0.0
  %v7487 = vmax.f32 %v7103, 0.0
  %v7488 = vmax.f32 %v7104, 0.0
  %v7489 = vmax.f32 %v7105, 0.0
  %v7490 = vmax.f32 %v7106, 0.0
  %v7491 = vmax.f32 %v7107, 0.0
  %v7492 = vmax.f32 %v7108, 0.0
  %v7493 = vmax.f32 %v7109, 0.0
  %v7494 = vmax.f32 %v7110, 0.0
  %v7495 = vmax.f32 %v7111, 0.0
  %v7496 = vmax.f32 %v7112, 0.0
  %v7497 = vmax.f32 %v7113, 0.0
  %v7498 = vmax.f32 %v7114, 0.0
  %v7499 = vmax.f32 %v7115, 0.0
  %v7500 = vmax.f32 %v7116, 0.0
  %v7501 = vmax.f32 %v7117, 0.0
  %v7502 = vmax.f32 %v7118, 0.0
  %v7503 = vmax.f32 %v7119, 0.0
  %v7504 = vmax.f32 %v7120, 0.0
  %v7505 = vmax.f32 %v7121, 0.0
  %v7506 = vmax.f32 %v7122, 0.0
  %v7507 = vmax.f32 %v7123, 0.0
  %v7508 = vmax.f32 %v7124, 0.0
  %v7509 = vmax.f32 %v7125, 0.0
  %v7510 = vmax.f32 %v7126, 0.0
  %v7511 = vmax.f32 %v7127, 0.0
  %v7512 = vmax.f32 %v7128, 0.0
  %v7513 = vmax.f32 %v7129, 0.0
  %v7514 = vmax.f32 %v7130, 0.0
  %v7515 = vmax.f32 %v7131, 0.0
  %v7516 = vmax.f32 %v7132, 0.0
  %v7517 = vmax.f32 %v7133, 0.0
  %v7518 = vmax.f32 %v7134, 0.0
  %v7519 = vmax.f32 %v7135, 0.0
  %v7520 = vmax.f32 %v7136, 0.0
  %v7521 = vmax.f32 %v7137, 0.0
  %v7522 = vmax.f32 %v7138, 0.0
  %v7523 = vmax.f32 %v7139, 0.0
  %v7524 = vmax.f32 %v7140, 0.0
  %v7525 = vmax.f32 %v7141, 0.0
  %v7526 = vmax.f32 %v7142, 0.0
  %v7527 = vmax.f32 %v7143, 0.0
  %v7528 = vmax.f32 %v7144, 0.0
  %v7529 = vmax.f32 %v7145, 0.0
  %v7530 = vmax.f32 %v7146, 0.0
  %v7531 = vmax.f32 %v7147, 0.0
  %v7532 = vmax.f32 %v7148, 0.0
  %v7533 = vmax.f32 %v7149, 0.0
  %v7534 = vmax.f32 %v7150, 0.0
  %v7535 = vmax.f32 %v7151, 0.0
  %v7536 = vmax.f32 %v7152, 0.0
  %v7537 = vmax.f32 %v7153, 0.0
  %v7538 = vmax.f32 %v7154, 0.0
  %v7539 = vmax.f32 %v7155, 0.0
  %v7540 = vmax.f32 %v7156, 0.0
  %v7541 = vmax.f32 %v7157, 0.0
  %v7542 = vmax.f32 %v7158, 0.0
  %v7543 = vmax.f32 %v7159, 0.0
  %v7544 = vmax.f32 %v7160, 0.0
  %v7545 = vmax.f32 %v7161, 0.0
  %v7546 = vmax.f32 %v7162, 0.0
  %v7547 = vmax.f32 %v7163, 0.0
  %v7548 = vmax.f32 %v7164, 0.0
  %v7549 = vmax.f32 %v7165, 0.0
  %v7550 = vmax.f32 %v7166, 0.0
  %v7551 = vmax.f32 %v7167, 0.0
  %v7552 = vmax.f32 %v7168, 0.0
  %v7553 = vmax.f32 %v7169, 0.0
  %v7554 = vmax.f32 %v7170, 0.0
  %v7555 = vmax.f32 %v7171, 0.0
  %v7556 = vmax.f32 %v7172, 0.0
  %v7557 = vmax.f32 %v7173, 0.0
  %v7558 = vmax.f32 %v7174, 0.0
  %v7559 = vmax.f32 %v7175, 0.0
  %v7560 = vmax.f32 %v7176, 0.0
  %v7561 = vmax.f32 %v7177, 0.0
  %v7562 = vmax.f32 %v7178, 0.0
  %v7563 = vmax.f32 %v7179, 0.0
  %v7564 = vmax.f32 %v7180, 0.0
  %v7565 = vmax.f32 %v7181, 0.0
  %v7566 = vmax.f32 %v7182, 0.0
  %v7567 = vmax.f32 %v7183, 0.0
  %v7568 = vmax.f32 %v7184, 0.0
  %v7569 = vmax.f32 %v7185, 0.0
  %v7570 = vmax.f32 %v7186, 0.0
  %v7571 = vmax.f32 %v7187, 0.0
  %v7572 = vmax.f32 %v7188, 0.0
  %v7573 = vmax.f32 %v7189, 0.0
  %v7574 = vmax.f32 %v7190, 0.0
  %v7575 = vmax.f32 %v7191, 0.0
  %v7576 = vmax.f32 %v7192, 0.0
  %v7577 = vmax.f32 %v7193, 0.0
  %v7578 = vmax.f32 %v7194, 0.0
  %v7579 = vmax.f32 %v7195, 0.0
  %v7580 = vmax.f32 %v7196, 0.0
  %v7581 = vmax.f32 %v7197, 0.0
  %v7582 = vmax.f32 %v7198, 0.0
  %v7583 = vmax.f32 %v7199, 0.0
  %v7584 = vmax.f32 %v7200, 0.0
  %v7585 = vmax.f32 %v7201, 0.0
  %v7586 = vmax.f32 %v7202, 0.0
  %v7587 = vmax.f32 %v7203, 0.0
  %v7588 = vmax.f32 %v7204, 0.0
  %v7589 = vmax.f32 %v7205, 0.0
  %v7590 = vmax.f32 %v7206, 0.0
  %v7591 = vmax.f32 %v7207, 0.0
  %v7592 = vmax.f32 %v7208, 0.0
  %v7593 = vmax.f32 %v7209, 0.0
  %v7594 = vmax.f32 %v7210, 0.0
  %v7595 = vmax.f32 %v7211, 0.0
  %v7596 = vmax.f32 %v7212, 0.0
  %v7597 = vmax.f32 %v7213, 0.0
  %v7598 = vmax.f32 %v7214, 0.0
  %v7599 = vmax.f32 %v7215, 0.0
  %v7600 = vmax.f32 %v7216, 0.0
  %v7601 = vmax.f32 %v7217, 0.0
  %v7602 = vmax.f32 %v7218, 0.0
  %v7603 = vmax.f32 %v7219, 0.0
  %v7604 = vmax.f32 %v7220, 0.0
  %v7605 = vmax.f32 %v7221, 0.0
  %v7606 = vmax.f32 %v7222, 0.0
  %v7607 = vmax.f32 %v7223, 0.0
  %v7608 = vmax.f32 %v7224, 0.0
  %v7609 = vmax.f32 %v7225, 0.0
  %v7610 = vmax.f32 %v7226, 0.0
  %v7611 = vmax.f32 %v7227, 0.0
  %v7612 = vmax.f32 %v7228, 0.0
  %v7613 = vmax.f32 %v7229, 0.0
  %v7614 = vmax.f32 %v7230, 0.0
  %v7615 = vmax.f32 %v7231, 0.0
  %v7616 = vmax.f32 %v7232, 0.0
  %v7617 = vmax.f32 %v7233, 0.0
  %v7618 = vmax.f32 %v7234, 0.0
  %v7619 = vmax.f32 %v7235, 0.0
  %v7620 = vmax.f32 %v7236, 0.0
  %v7621 = vmax.f32 %v7237, 0.0
  %v7622 = vmax.f32 %v7238, 0.0
  %v7623 = vmax.f32 %v7239, 0.0
  %v7624 = vmax.f32 %v7240, 0.0
  %v7625 = vmax.f32 %v7241, 0.0
  %v7626 = vmax.f32 %v7242, 0.0
  %v7627 = vmax.f32 %v7243, 0.0
  %v7628 = vmax.f32 %v7244, 0.0
  %v7629 = vmax.f32 %v7245, 0.0
  %v7630 = vmax.f32 %v7246, 0.0
  %v7631 = vmax.f32 %v7247, 0.0
  %v7632 = vmax.f32 %v7248, 0.0
  %v7633 = vmax.f32 %v7249, 0.0
  %v7634 = vmax.f32 %v7250, 0.0
  %v7635 = vmax.f32 %v7251, 0.0
  %v7636 = vmax.f32 %v7252, 0.0
  %v7637 = vmax.f32 %v7253, 0.0
  %v7638 = vmax.f32 %v7254, 0.0
  %v7639 = vmax.f32 %v7255, 0.0
  %v7640 = vmax.f32 %v7256, 0.0
  %v7641 = vmax.f32 %v7257, 0.0
  %v7642 = vmax.f32 %v7258, 0.0
  %v7643 = vmax.f32 %v7259, 0.0
  %v7644 = vmax.f32 %v7260, 0.0
  %v7645 = vmax.f32 %v7261, 0.0
  %v7646 = vmax.f32 %v7262, 0.0
  %v7647 = vmax.f32 %v7263, 0.0
  %v7648 = vmax.f32 %v7264, 0.0
  %v7649 = vmax.f32 %v7265, 0.0
  %v7650 = vmax.f32 %v7266, 0.0
  %v7651 = vmax.f32 %v7267, 0.0
  %v7652 = vmax.f32 %v7268, 0.0
  %v7653 = vmax.f32 %v7269, 0.0
  %v7654 = vmax.f32 %v7270, 0.0
  %v7655 = vmax.f32 %v7271, 0.0
  %v7656 = vmax.f32 %v7272, 0.0
  %v7657 = vmax.f32 %v7273, 0.0
  %v7658 = vmax.f32 %v7274, 0.0
  %v7659 = vmax.f32 %v7275, 0.0
  %v7660 = vmax.f32 %v7276, 0.0
  %v7661 = vmax.f32 %v7277, 0.0
  %v7662 = vmax.f32 %v7278, 0.0
  %v7663 = vmax.f32 %v7279, 0.0
  %v7664 = vmax.f32 %v7280, 0.0
  %v7665 = vmax.f32 %v7281, 0.0
  %v7666 = vmax.f32 %v7282, 0.0
  %v7667 = vmax.f32 %v7283, 0.0
  %v7668 = vmax.f32 %v7284, 0.0
  %v7669 = vmax.f32 %v7285, 0.0
  %v7670 = vmax.f32 %v7286, 0.0
  %v7671 = vmax.f32 %v7287, 0.0
  %v7672 = vmax.f32 %v7288, 0.0
  %v7673 = vmax.f32 %v7289, 0.0
  %v7674 = vmax.f32 %v7290, 0.0
  %v7675 = vmax.f32 %v7291, 0.0
  %v7676 = vmax.f32 %v7292, 0.0
  %v7677 = vmax.f32 %v7293, 0.0
  %v7678 = vmax.f32 %v7294, 0.0
  %v7679 = vmax.f32 %v7295, 0.0
  %v7680 = vmax.f32 %v7296, 0.0
  %v7681 = vmax.f32 %v7297, 0.0
  %v7682 = vmax.f32 %v7298, 0.0
  %v7683 = vmax.f32 %v7299, 0.0
  %v7684 = vmax.f32 %v7300, 0.0
  %v7685 = vmax.f32 %v7301, 0.0
  %v7686 = vmax.f32 %v7302, 0.0
  %v7687 = vmax.f32 %v7303, 0.0
  %v7688 = vmax.f32 %v7304, 0.0
  %v7689 = vmax.f32 %v7305, 0.0
  %v7690 = vmax.f32 %v7306, 0.0
  %v7691 = vmax.f32 %v7307, 0.0
  %v7692 = vmax.f32 %v7308, 0.0
  %v7693 = vmax.f32 %v7309, 0.0
  %v7694 = vmax.f32 %v7310, 0.0
  %v7695 = vmax.f32 %v7311, 0.0
  %v7696 = vmax.f32 %v7312, 0.0
  %v7697 = vmax.f32 %v7313, 0.0
  %v7698 = vmax.f32 %v7314, 0.0
  %v7699 = vmax.f32 %v7315, 0.0
  %v7700 = vmax.f32 %v7316, 0.0
  %v7701 = vmax.f32 %v7317, 0.0
  %v7702 = vmax.f32 %v7318, 0.0
  %v7703 = vmax.f32 %v7319, 0.0
  %v7704 = vmax.f32 %v7320, 0.0
  %v7705 = vmax.f32 %v7321, 0.0
  %v7706 = vmax.f32 %v7322, 0.0
  %v7707 = vmax.f32 %v7323, 0.0
  %v7708 = vmax.f32 %v7324, 0.0
  %v7709 = vmax.f32 %v7325, 0.0
  %v7710 = vmax.f32 %v7326, 0.0
  %v7711 = vmax.f32 %v7327, 0.0
  %v7712 = vmax.f32 %v7328, 0.0
  %v7713 = vmax.f32 %v7329, 0.0
  %v7714 = vmax.f32 %v7330, 0.0
  %v7715 = vmax.f32 %v7331, 0.0
  %v7716 = vmax.f32 %v7332, 0.0
  %v7717 = vmax.f32 %v7333, 0.0
  %v7718 = vmax.f32 %v7334, 0.0
  %v7719 = vmax.f32 %v7335, 0.0
  %v7720 = vmax.f32 %v7336, 0.0
  %v7721 = vmax.f32 %v7337, 0.0
  %v7722 = vmax.f32 %v7338, 0.0
  %v7723 = vmax.f32 %v7339, 0.0
  %v7724 = vmax.f32 %v7340, 0.0
  %v7725 = vmax.f32 %v7341, 0.0
  %v7726 = vmax.f32 %v7342, 0.0
  %v7727 = vmax.f32 %v7343, %v7359
  %v7728 = vmax.f32 %v7344, %v7360
  %v7729 = vmax.f32 %v7345, %v7361
  %v7730 = vmax.f32 %v7346, %v7362
  %v7731 = vmax.f32 %v7347, %v7363
  %v7732 = vmax.f32 %v7348, %v7364
  %v7733 = vmax.f32 %v7349, %v7365
  %v7734 = vmax.f32 %v7350, %v7366
  %v7735 = vmax.f32 %v7351, %v7367
  %v7736 = vmax.f32 %v7352, %v7368
  %v7737 = vmax.f32 %v7353, %v7369
  %v7738 = vmax.f32 %v7354, %v7370
  %v7739 = vmax.f32 %v7355, %v7371
  %v7740 = vmax.f32 %v7356, %v7372
  %v7741 = vmax.f32 %v7357, %v7373
  %v7742 = vmax.f32 %v7358, %v7374
  %v7743 = vmax.f32 %v7375, %v7391
  %v7744 = vmax.f32 %v7376, %v7392
  %v7745 = vmax.f32 %v7377, %v7393
  %v7746 = vmax.f32 %v7378, %v7394
  %v7747 = vmax.f32 %v7379, %v7395
  %v7748 = vmax.f32 %v7380, %v7396
  %v7749 = vmax.f32 %v7381, %v7397
  %v7750 = vmax.f32 %v7382, %v7398
  %v7751 = vmax.f32 %v7383, %v7399
  %v7752 = vmax.f32 %v7384, %v7400
  %v7753 = vmax.f32 %v7385, %v7401
  %v7754 = vmax.f32 %v7386, %v7402
  %v7755 = vmax.f32 %v7387, %v7403
  %v7756 = vmax.f32 %v7388, %v7404
  %v7757 = vmax.f32 %v7389, %v7405
  %v7758 = vmax.f32 %v7390, %v7406
  %v7759 = vmax.f32 %v7407, %v7423
  %v7760 = vmax.f32 %v7408, %v7424
  %v7761 = vmax.f32 %v7409, %v7425
  %v7762 = vmax.f32 %v7410, %v7426
  %v7763 = vmax.f32 %v7411, %v7427
  %v7764 = vmax.f32 %v7412, %v7428
  %v7765 = vmax.f32 %v7413, %v7429
  %v7766 = vmax.f32 %v7414, %v7430
  %v7767 = vmax.f32 %v7415, %v7431
  %v7768 = vmax.f32 %v7416, %v7432
  %v7769 = vmax.f32 %v7417, %v7433
  %v7770 = vmax.f32 %v7418, %v7434
  %v7771 = vmax.f32 %v7419, %v7435
  %v7772 = vmax.f32 %v7420, %v7436
  %v7773 = vmax.f32 %v7421, %v7437
  %v7774 = vmax.f32 %v7422, %v7438
  %v7775 = vmax.f32 %v7439, %v7455
  %v7776 = vmax.f32 %v7440, %v7456
  %v7777 = vmax.f32 %v7441, %v7457
  %v7778 = vmax.f32 %v7442, %v7458
  %v7779 = vmax.f32 %v7443, %v7459
  %v7780 = vmax.f32 %v7444, %v7460
  %v7781 = vmax.f32 %v7445, %v7461
  %v7782 = vmax.f32 %v7446, %v7462
  %v7783 = vmax.f32 %v7447, %v7463
  %v7784 = vmax.f32 %v7448, %v7464
  %v7785 = vmax.f32 %v7449, %v7465
  %v7786 = vmax.f32 %v7450, %v7466
  %v7787 = vmax.f32 %v7451, %v7467
  %v7788 = vmax.f32 %v7452, %v7468
  %v7789 = vmax.f32 %v7453, %v7469
  %v7790 = vmax.f32 %v7454, %v7470
  %v7791 = vmax.f32 %v7471, %v7487
  %v7792 = vmax.f32 %v7472, %v7488
  %v7793 = vmax.f32 %v7473, %v7489
  %v7794 = vmax.f32 %v7474, %v7490
  %v7795 = vmax.f32 %v7475, %v7491
  %v7796 = vmax.f32 %v7476, %v7492
  %v7797 = vmax.f32 %v7477, %v7493
  %v7798 = vmax.f32 %v7478, %v7494
  %v7799 = vmax.f32 %v7479, %v7495
  %v7800 = vmax.f32 %v7480, %v7496
  %v7801 = vmax.f32 %v7481, %v7497
  %v7802 = vmax.f32 %v7482, %v7498
  %v7803 = vmax.f32 %v7483, %v7499
  %v7804 = vmax.f32 %v7484, %v7500
  %v7805 = vmax.f32 %v7485, %v7501
  %v7806 = vmax.f32 %v7486, %v7502
  %v7807 = vmax.f32 %v7503, %v7519
  %v7808 = vmax.f32 %v7504, %v7520
  %v7809 = vmax.f32 %v7505, %v7521
  %v7810 = vmax.f32 %v7506, %v7522
  %v7811 = vmax.f32 %v7507, %v7523
  %v7812 = vmax.f32 %v7508, %v7524
  %v7813 = vmax.f32 %v7509, %v7525
  %v7814 = vmax.f32 %v7510, %v7526
  %v7815 = vmax.f32 %v7511, %v7527
  %v7816 = vmax.f32 %v7512, %v7528
  %v7817 = vmax.f32 %v7513, %v7529
  %v7818 = vmax.f32 %v7514, %v7530
  %v7819 = vmax.f32 %v7515, %v7531
  %v7820 = vmax.f32 %v7516, %v7532
  %v7821 = vmax.f32 %v7517, %v7533
  %v7822 = vmax.f32 %v7518, %v7534
  %v7823 = vmax.f32 %v7535, %v7551
  %v7824 = vmax.f32 %v7536, %v7552
  %v7825 = vmax.f32 %v7537, %v7553
  %v7826 = vmax.f32 %v7538, %v7554
  %v7827 = vmax.f32 %v7539, %v7555
  %v7828 = vmax.f32 %v7540, %v7556
  %v7829 = vmax.f32 %v7541, %v7557
  %v7830 = vmax.f32 %v7542, %v7558
  %v7831 = vmax.f32 %v7543, %v7559
  %v7832 = vmax.f32 %v7544, %v7560
  %v7833 = vmax.f32 %v7545, %v7561
  %v7834 = vmax.f32 %v7546, %v7562
  %v7835 = vmax.f32 %v7547, %v7563
  %v7836 = vmax.f32 %v7548, %v7564
  %v7837 = vmax.f32 %v7549, %v7565
  %v7838 = vmax.f32 %v7550, %v7566
  %v7839 = vmax.f32 %v7567, %v7583
  %v7840 = vmax.f32 %v7568, %v7584
  %v7841 = vmax.f32 %v7569, %v7585
  %v7842 = vmax.f32 %v7570, %v7586
  %v7843 = vmax.f32 %v7571, %v7587
  %v7844 = vmax.f32 %v7572, %v7588
  %v7845 = vmax.f32 %v7573, %v7589
  %v7846 = vmax.f32 %v7574, %v7590
  %v7847 = vmax.f32 %v7575, %v7591
  %v7848 = vmax.f32 %v7576, %v7592
  %v7849 = vmax.f32 %v7577, %v7593
  %v7850 = vmax.f32 %v7578, %v7594
  %v7851 = vmax.f32 %v7579, %v7595
  %v7852 = vmax.f32 %v7580, %v7596
  %v7853 = vmax.f32 %v7581, %v7597
  %v7854 = vmax.f32 %v7582, %v7598
  %v7855 = vmax.f32 %v7599, %v7615
  %v7856 = vmax.f32 %v7600, %v7616
  %v7857 = vmax.f32 %v7601, %v7617
  %v7858 = vmax.f32 %v7602, %v7618
  %v7859 = vmax.f32 %v7603, %v7619
  %v7860 = vmax.f32 %v7604, %v7620
  %v7861 = vmax.f32 %v7605, %v7621
  %v7862 = vmax.f32 %v7606, %v7622
  %v7863 = vmax.f32 %v7607, %v7623
  %v7864 = vmax.f32 %v7608, %v7624
  %v7865 = vmax.f32 %v7609, %v7625
  %v7866 = vmax.f32 %v7610, %v7626
  %v7867 = vmax.f32 %v7611, %v7627
  %v7868 = vmax.f32 %v7612, %v7628
  %v7869 = vmax.f32 %v7613, %v7629
  %v7870 = vmax.f32 %v7614, %v7630
  %v7871 = vmax.f32 %v7631, %v7647
  %v7872 = vmax.f32 %v7632, %v7648
  %v7873 = vmax.f32 %v7633, %v7649
  %v7874 = vmax.f32 %v7634, %v7650
  %v7875 = vmax.f32 %v7635, %v7651
  %v7876 = vmax.f32 %v7636, %v7652
  %v7877 = vmax.f32 %v7637, %v7653
  %v7878 = vmax.f32 %v7638, %v7654
  %v7879 = vmax.f32 %v7639, %v7655
  %v7880 = vmax.f32 %v7640, %v7656
  %v7881 = vmax.f32 %v7641, %v7657
  %v7882 = vmax.f32 %v7642, %v7658
  %v7883 = vmax.f32 %v7643, %v7659
  %v7884 = vmax.f32 %v7644, %v7660
  %v7885 = vmax.f32 %v7645, %v7661
  %v7886 = vmax.f32 %v7646, %v7662
  %v7887 = vmax.f32 %v7663, %v7679
  %v7888 = vmax.f32 %v7664, %v7680
  %v7889 = vmax.f32 %v7665, %v7681
  %v7890 = vmax.f32 %v7666, %v7682
  %v7891 = vmax.f32 %v7667, %v7683
  %v7892 = vmax.f32 %v7668, %v7684
  %v7893 = vmax.f32 %v7669, %v7685
  %v7894 = vmax.f32 %v7670, %v7686
  %v7895 = vmax.f32 %v7671, %v7687
  %v7896 = vmax.f32 %v7672, %v7688
  %v7897 = vmax.f32 %v7673, %v7689
  %v7898 = vmax.f32 %v7674, %v7690
  %v7899 = vmax.f32 %v7675, %v7691
  %v7900 = vmax.f32 %v7676, %v7692
  %v7901 = vmax.f32 %v7677, %v7693
  %v7902 = vmax.f32 %v7678, %v7694
  %v7903 = vmax.f32 %v7695, %v7711
  %v7904 = vmax.f32 %v7696, %v7712
  %v7905 = vmax.f32 %v7697, %v7713
  %v7906 = vmax.f32 %v7698, %v7714
  %v7907 = vmax.f32 %v7699, %v7715
  %v7908 = vmax.f32 %v7700, %v7716
  %v7909 = vmax.f32 %v7701, %v7717
  %v7910 = vmax.f32 %v7702, %v7718
  %v7911 = vmax.f32 %v7703, %v7719
  %v7912 = vmax.f32 %v7704, %v7720
  %v7913 = vmax.f32 %v7705, %v7721
  %v7914 = vmax.f32 %v7706, %v7722
  %v7915 = vmax.f32 %v7707, %v7723
  %v7916 = vmax.f32 %v7708, %v7724
  %v7917 = vmax.f32 %v7709, %v7725
  %v7918 = vmax.f32 %v7710, %v7726
  %v7919 = vmax.f32 %v7727, %v7728
  %v7920 = vmax.f32 %v7729, %v7730
  %v7921 = vmax.f32 %v7731, %v7732
  %v7922 = vmax.f32 %v7733, %v7734
  %v7923 = vmax.f32 %v7735, %v7736
  %v7924 = vmax.f32 %v7737, %v7738
  %v7925 = vmax.f32 %v7739, %v7740
  %v7926 = vmax.f32 %v7741, %v7742
  %v7927 = vmax.f32 %v7743, %v7744
  %v7928 = vmax.f32 %v7745, %v7746
  %v7929 = vmax.f32 %v7747, %v7748
  %v7930 = vmax.f32 %v7749, %v7750
  %v7931 = vmax.f32 %v7751, %v7752
  %v7932 = vmax.f32 %v7753, %v7754
  %v7933 = vmax.f32 %v7755, %v7756
  %v7934 = vmax.f32 %v7757, %v7758
  %v7935 = vmax.f32 %v7759, %v7760
  %v7936 = vmax.f32 %v7761, %v7762
  %v7937 = vmax.f32 %v7763, %v7764
  %v7938 = vmax.f32 %v7765, %v7766
  %v7939 = vmax.f32 %v7767, %v7768
  %v7940 = vmax.f32 %v7769, %v7770
  %v7941 = vmax.f32 %v7771, %v7772
  %v7942 = vmax.f32 %v7773, %v7774
  %v7943 = vmax.f32 %v7775, %v7776
  %v7944 = vmax.f32 %v7777, %v7778
  %v7945 = vmax.f32 %v7779, %v7780
  %v7946 = vmax.f32 %v7781, %v7782
  %v7947 = vmax.f32 %v7783, %v7784
  %v7948 = vmax.f32 %v7785, %v7786
  %v7949 = vmax.f32 %v7787, %v7788
  %v7950 = vmax.f32 %v7789, %v7790
  %v7951 = vmax.f32 %v7791, %v7792
  %v7952 = vmax.f32 %v7793, %v7794
  %v7953 = vmax.f32 %v7795, %v7796
  %v7954 = vmax.f32 %v7797, %v7798
  %v7955 = vmax.f32 %v7799, %v7800
  %v7956 = vmax.f32 %v7801, %v7802
  %v7957 = vmax.f32 %v7803, %v7804
  %v7958 = vmax.f32 %v7805, %v7806
  %v7959 = vmax.f32 %v7807, %v7808
  %v7960 = vmax.f32 %v7809, %v7810
  %v7961 = vmax.f32 %v7811, %v7812
  %v7962 = vmax.f32 %v7813, %v7814
  %v7963 = vmax.f32 %v7815, %v7816
  %v7964 = vmax.f32 %v7817, %v7818
  %v7965 = vmax.f32 %v7819, %v7820
  %v7966 = vmax.f32 %v7821, %v7822
  %v7967 = vmax.f32 %v7823, %v7824
  %v7968 = vmax.f32 %v7825, %v7826
  %v7969 = vmax.f32 %v7827, %v7828
  %v7970 = vmax.f32 %v7829, %v7830
  %v7971 = vmax.f32 %v7831, %v7832
  %v7972 = vmax.f32 %v7833, %v7834
  %v7973 = vmax.f32 %v7835, %v7836
  %v7974 = vmax.f32 %v7837, %v7838
  %v7975 = vmax.f32 %v7839, %v7840
  %v7976 = vmax.f32 %v7841, %v7842
  %v7977 = vmax.f32 %v7843, %v7844
  %v7978 = vmax.f32 %v7845, %v7846
  %v7979 = vmax.f32 %v7847, %v7848
  %v7980 = vmax.f32 %v7849, %v7850
  %v7981 = vmax.f32 %v7851, %v7852
  %v7982 = vmax.f32 %v7853, %v7854
  %v7983 = vmax.f32 %v7855, %v7856
  %v7984 = vmax.f32 %v7857, %v7858
  %v7985 = vmax.f32 %v7859, %v7860
  %v7986 = vmax.f32 %v7861, %v7862
  %v7987 = vmax.f32 %v7863, %v7864
  %v7988 = vmax.f32 %v7865, %v7866
  %v7989 = vmax.f32 %v7867, %v7868
  %v7990 = vmax.f32 %v7869, %v7870
  %v7991 = vmax.f32 %v7871, %v7872
  %v7992 = vmax.f32 %v7873, %v7874
  %v7993 = vmax.f32 %v7875, %v7876
  %v7994 = vmax.f32 %v7877, %v7878
  %v7995 = vmax.f32 %v7879, %v7880
  %v7996 = vmax.f32 %v7881, %v7882
  %v7997 = vmax.f32 %v7883, %v7884
  %v7998 = vmax.f32 %v7885, %v7886
  %v7999 = vmax.f32 %v7887, %v7888
  %v8000 = vmax.f32 %v7889, %v7890
  %v8001 = vmax.f32 %v7891, %v7892
  %v8002 = vmax.f32 %v7893, %v7894
  %v8003 = vmax.f32 %v7895, %v7896
  %v8004 = vmax.f32 %v7897, %v7898
  %v8005 = vmax.f32 %v7899, %v7900
  %v8006 = vmax.f32 %v7901, %v7902
  %v8007 = vmax.f32 %v7903, %v7904
  %v8008 = vmax.f32 %v7905, %v7906
  %v8009 = vmax.f32 %v7907, %v7908
  %v8010 = vmax.f32 %v7909, %v7910
  %v8011 = vmax.f32 %v7911, %v7912
  %v8012 = vmax.f32 %v7913, %v7914
  %v8013 = vmax.f32 %v7915, %v7916
  %v8014 = vmax.f32 %v7917, %v7918
  %v8015 = vpack.c.bf16 %v7920, %v7919
  %v8016 = vpack.c.bf16 %v7922, %v7921
  %v8017 = vpack.c.bf16 %v7924, %v7923
  %v8018 = vpack.c.bf16 %v7926, %v7925
  %v8019 = vpack.c.bf16 %v7928, %v7927
  %v8020 = vpack.c.bf16 %v7930, %v7929
  %v8021 = vpack.c.bf16 %v7932, %v7931
  %v8022 = vpack.c.bf16 %v7934, %v7933
  %v8023 = vpack.c.bf16 %v7936, %v7935
  %v8024 = vpack.c.bf16 %v7938, %v7937
  %v8025 = vpack.c.bf16 %v7940, %v7939
  %v8026 = vpack.c.bf16 %v7942, %v7941
  %v8027 = vpack.c.bf16 %v7944, %v7943
  %v8028 = vpack.c.bf16 %v7946, %v7945
  %v8029 = vpack.c.bf16 %v7948, %v7947
  %v8030 = vpack.c.bf16 %v7950, %v7949
  %v8031 = vpack.c.bf16 %v7952, %v7951
  %v8032 = vpack.c.bf16 %v7954, %v7953
  %v8033 = vpack.c.bf16 %v7956, %v7955
  %v8034 = vpack.c.bf16 %v7958, %v7957
  %v8035 = vpack.c.bf16 %v7960, %v7959
  %v8036 = vpack.c.bf16 %v7962, %v7961
  %v8037 = vpack.c.bf16 %v7964, %v7963
  %v8038 = vpack.c.bf16 %v7966, %v7965
  %v8039 = vpack.c.bf16 %v7968, %v7967
  %v8040 = vpack.c.bf16 %v7970, %v7969
  %v8041 = vpack.c.bf16 %v7972, %v7971
  %v8042 = vpack.c.bf16 %v7974, %v7973
  %v8043 = vpack.c.bf16 %v7976, %v7975
  %v8044 = vpack.c.bf16 %v7978, %v7977
  %v8045 = vpack.c.bf16 %v7980, %v7979
  %v8046 = vpack.c.bf16 %v7982, %v7981
  %v8047 = vpack.c.bf16 %v7984, %v7983
  %v8048 = vpack.c.bf16 %v7986, %v7985
  %v8049 = vpack.c.bf16 %v7988, %v7987
  %v8050 = vpack.c.bf16 %v7990, %v7989
  %v8051 = vpack.c.bf16 %v7992, %v7991
  %v8052 = vpack.c.bf16 %v7994, %v7993
  %v8053 = vpack.c.bf16 %v7996, %v7995
  %v8054 = vpack.c.bf16 %v7998, %v7997
  %v8055 = vpack.c.bf16 %v8000, %v7999
  %v8056 = vpack.c.bf16 %v8002, %v8001
  %v8057 = vpack.c.bf16 %v8004, %v8003
  %v8058 = vpack.c.bf16 %v8006, %v8005
  %v8059 = vpack.c.bf16 %v8008, %v8007
  %v8060 = vpack.c.bf16 %v8010, %v8009
  %v8061 = vpack.c.bf16 %v8012, %v8011
  %v8062 = vpack.c.bf16 %v8014, %v8013
  %8063 = vst [vmem:[#allocation2] sm:$0xff] %v8015
  %8064 = vst [vmem:[#allocation2 + $0x8] sm:$0xff] %v8016
  %8065 = vst [vmem:[#allocation2 + $0x10] sm:$0xff] %v8017
  %8066 = vst [vmem:[#allocation2 + $0x18] sm:$0xff] %v8018
  %8067 = vst [vmem:[#allocation2 + $0x20] sm:$0xff] %v8019
  %8068 = vst [vmem:[#allocation2 + $0x28] sm:$0xff] %v8020
  %8069 = vst [vmem:[#allocation2 + $0x30] sm:$0xff] %v8021
  %8070 = vst [vmem:[#allocation2 + $0x38] sm:$0xff] %v8022
  %8071 = vst [vmem:[#allocation2 + $0x40] sm:$0xff] %v8023
  %8072 = vst [vmem:[#allocation2 + $0x48] sm:$0xff] %v8024
  %8073 = vst [vmem:[#allocation2 + $0x50] sm:$0xff] %v8025
  %8074 = vst [vmem:[#allocation2 + $0x58] sm:$0xff] %v8026
  %8075 = vst [vmem:[#allocation2 + $0x60] sm:$0xff] %v8027
  %8076 = vst [vmem:[#allocation2 + $0x68] sm:$0xff] %v8028
  %8077 = vst [vmem:[#allocation2 + $0x70] sm:$0xff] %v8029
  %8078 = vst [vmem:[#allocation2 + $0x78] sm:$0xff] %v8030
  %8079 = vst [vmem:[#allocation2 + $0x80] sm:$0xff] %v8031
  %8080 = vst [vmem:[#allocation2 + $0x88] sm:$0xff] %v8032
  %8081 = vst [vmem:[#allocation2 + $0x90] sm:$0xff] %v8033
  %8082 = vst [vmem:[#allocation2 + $0x98] sm:$0xff] %v8034
  %8083 = vst [vmem:[#allocation2 + $0xa0] sm:$0xff] %v8035
  %8084 = vst [vmem:[#allocation2 + $0xa8] sm:$0xff] %v8036
  %8085 = vst [vmem:[#allocation2 + $0xb0] sm:$0xff] %v8037
  %8086 = vst [vmem:[#allocation2 + $0xb8] sm:$0xff] %v8038
  %8087 = vst [vmem:[#allocation2 + $0xc0] sm:$0xff] %v8039
  %8088 = vst [vmem:[#allocation2 + $0xc8] sm:$0xff] %v8040
  %8089 = vst [vmem:[#allocation2 + $0xd0] sm:$0xff] %v8041
  %8090 = vst [vmem:[#allocation2 + $0xd8] sm:$0xff] %v8042
  %8091 = vst [vmem:[#allocation2 + $0xe0] sm:$0xff] %v8043
  %8092 = vst [vmem:[#allocation2 + $0xe8] sm:$0xff] %v8044
  %8093 = vst [vmem:[#allocation2 + $0xf0] sm:$0xff] %v8045
  %8094 = vst [vmem:[#allocation2 + $0xf8] sm:$0xff] %v8046
  %8095 = vst [vmem:[#allocation2 + $0x100] sm:$0xff] %v8047
  %8096 = vst [vmem:[#allocation2 + $0x108] sm:$0xff] %v8048
  %8097 = vst [vmem:[#allocation2 + $0x110] sm:$0xff] %v8049
  %8098 = vst [vmem:[#allocation2 + $0x118] sm:$0xff] %v8050
  %8099 = vst [vmem:[#allocation2 + $0x120] sm:$0xff] %v8051
  %8100 = vst [vmem:[#allocation2 + $0x128] sm:$0xff] %v8052
  %8101 = vst [vmem:[#allocation2 + $0x130] sm:$0xff] %v8053
  %8102 = vst [vmem:[#allocation2 + $0x138] sm:$0xff] %v8054
  %8103 = vst [vmem:[#allocation2 + $0x140] sm:$0xff] %v8055
  %8104 = vst [vmem:[#allocation2 + $0x148] sm:$0xff] %v8056
  %8105 = vst [vmem:[#allocation2 + $0x150] sm:$0xff] %v8057
  %8106 = vst [vmem:[#allocation2 + $0x158] sm:$0xff] %v8058
  %8107 = vst [vmem:[#allocation2 + $0x160] sm:$0xff] %v8059
  %8108 = vst [vmem:[#allocation2 + $0x168] sm:$0xff] %v8060
  %8109 = vst [vmem:[#allocation2 + $0x170] sm:$0xff] %v8061
  %8110 = vst [vmem:[#allocation2 + $0x178] sm:$0xff] %v8062
  %v8111 = vld [vmem:[#allocation2] sm:$0xff]
  %v8112 = vld [vmem:[#allocation2 + $0x8] sm:$0xff]
  %v8113 = vld [vmem:[#allocation2 + $0x10] sm:$0xff]
  %v8114 = vld [vmem:[#allocation2 + $0x18] sm:$0xff]
  %v8115 = vld [vmem:[#allocation2 + $0x20] sm:$0xff]
  %v8116 = vld [vmem:[#allocation2 + $0x28] sm:$0xff]
  %v8117 = vld [vmem:[#allocation2 + $0x30] sm:$0xff]
  %v8118 = vld [vmem:[#allocation2 + $0x38] sm:$0xff]
  %v8119 = vld [vmem:[#allocation2 + $0x40] sm:$0xff]
  %v8120 = vld [vmem:[#allocation2 + $0x48] sm:$0xff]
  %v8121 = vld [vmem:[#allocation2 + $0x50] sm:$0xff]
  %v8122 = vld [vmem:[#allocation2 + $0x58] sm:$0xff]
  %v8123 = vld [vmem:[#allocation2 + $0x60] sm:$0xff]
  %v8124 = vld [vmem:[#allocation2 + $0x68] sm:$0xff]
  %v8125 = vld [vmem:[#allocation2 + $0x70] sm:$0xff]
  %v8126 = vld [vmem:[#allocation2 + $0x78] sm:$0xff]
  %v8127 = vld [vmem:[#allocation2 + $0x80] sm:$0xff]
  %v8128 = vld [vmem:[#allocation2 + $0x88] sm:$0xff]
  %v8129 = vld [vmem:[#allocation2 + $0x90] sm:$0xff]
  %v8130 = vld [vmem:[#allocation2 + $0x98] sm:$0xff]
  %v8131 = vld [vmem:[#allocation2 + $0xa0] sm:$0xff]
  %v8132 = vld [vmem:[#allocation2 + $0xa8] sm:$0xff]
  %v8133 = vld [vmem:[#allocation2 + $0xb0] sm:$0xff]
  %v8134 = vld [vmem:[#allocation2 + $0xb8] sm:$0xff]
  %v8135 = vld [vmem:[#allocation2 + $0xc0] sm:$0xff]
  %v8136 = vld [vmem:[#allocation2 + $0xc8] sm:$0xff]
  %v8137 = vld [vmem:[#allocation2 + $0xd0] sm:$0xff]
  %v8138 = vld [vmem:[#allocation2 + $0xd8] sm:$0xff]
  %v8139 = vld [vmem:[#allocation2 + $0xe0] sm:$0xff]
  %v8140 = vld [vmem:[#allocation2 + $0xe8] sm:$0xff]
  %v8141 = vld [vmem:[#allocation2 + $0xf0] sm:$0xff]
  %v8142 = vld [vmem:[#allocation2 + $0xf8] sm:$0xff]
  %v8143 = vld [vmem:[%s3] sm:$0xf]
  %v8144 = vld [vmem:[%s3 + $0x4] sm:$0xf]
  %v8145 = vld [vmem:[%s3 + $0x8] sm:$0xf]
  %v8146 = vld [vmem:[%s3 + $0xc] sm:$0xf]
  %v8147 = vld [vmem:[%s3 + $0x10] sm:$0xf]
  %v8148 = vld [vmem:[%s3 + $0x14] sm:$0xf]
  %v8149 = vld [vmem:[%s3 + $0x18] sm:$0xf]
  %v8150 = vld [vmem:[%s3 + $0x1c] sm:$0xf]
  %v8151 = vld [vmem:[%s3 + $0x20] sm:$0xf]
  %v8152 = vld [vmem:[%s3 + $0x24] sm:$0xf]
  %v8153 = vld [vmem:[%s3 + $0x28] sm:$0xf]
  %v8154 = vld [vmem:[%s3 + $0x2c] sm:$0xf]
  %v8155 = vld [vmem:[%s3 + $0x30] sm:$0xf]
  %v8156 = vld [vmem:[%s3 + $0x34] sm:$0xf]
  %v8157 = vld [vmem:[%s3 + $0x38] sm:$0xf]
  %v8158 = vld [vmem:[%s3 + $0x3c] sm:$0xf]
  %s8159 = scalar_lea.vmem [#allocation2], 32
  %v8160 = vld [vmem:[%s8159] sm:$0xff]
  %v8161 = vld [vmem:[%s8159 + $0x8] sm:$0xff]
  %v8162 = vld [vmem:[%s8159 + $0x10] sm:$0xff]
  %v8163 = vld [vmem:[%s8159 + $0x18] sm:$0xff]
  %v8164 = vld [vmem:[%s8159 + $0x20] sm:$0xff]
  %v8165 = vld [vmem:[%s8159 + $0x28] sm:$0xff]
  %v8166 = vld [vmem:[%s8159 + $0x30] sm:$0xff]
  %v8167 = vld [vmem:[%s8159 + $0x38] sm:$0xff]
  %v8168 = vld [vmem:[%s8159 + $0x40] sm:$0xff]
  %v8169 = vld [vmem:[%s8159 + $0x48] sm:$0xff]
  %v8170 = vld [vmem:[%s8159 + $0x50] sm:$0xff]
  %v8171 = vld [vmem:[%s8159 + $0x58] sm:$0xff]
  %v8172 = vld [vmem:[%s8159 + $0x60] sm:$0xff]
  %v8173 = vld [vmem:[%s8159 + $0x68] sm:$0xff]
  %v8174 = vld [vmem:[%s8159 + $0x70] sm:$0xff]
  %v8175 = vld [vmem:[%s8159 + $0x78] sm:$0xff]
  %v8176 = vld [vmem:[%s8159 + $0x80] sm:$0xff]
  %v8177 = vld [vmem:[%s8159 + $0x88] sm:$0xff]
  %v8178 = vld [vmem:[%s8159 + $0x90] sm:$0xff]
  %v8179 = vld [vmem:[%s8159 + $0x98] sm:$0xff]
  %v8180 = vld [vmem:[%s8159 + $0xa0] sm:$0xff]
  %v8181 = vld [vmem:[%s8159 + $0xa8] sm:$0xff]
  %v8182 = vld [vmem:[%s8159 + $0xb0] sm:$0xff]
  %v8183 = vld [vmem:[%s8159 + $0xb8] sm:$0xff]
  %v8184 = vld [vmem:[%s8159 + $0xc0] sm:$0xff]
  %v8185 = vld [vmem:[%s8159 + $0xc8] sm:$0xff]
  %v8186 = vld [vmem:[%s8159 + $0xd0] sm:$0xff]
  %v8187 = vld [vmem:[%s8159 + $0xd8] sm:$0xff]
  %v8188 = vld [vmem:[%s8159 + $0xe0] sm:$0xff]
  %v8189 = vld [vmem:[%s8159 + $0xe8] sm:$0xff]
  %v8190 = vld [vmem:[%s8159 + $0xf0] sm:$0xff]
  %v8191 = vld [vmem:[%s8159 + $0xf8] sm:$0xff]
  %s8192 = scalar_lea.vmem %s3, 64
  %v8193 = vld [vmem:[%s8192] sm:$0xf]
  %v8194 = vld [vmem:[%s8192 + $0x4] sm:$0xf]
  %v8195 = vld [vmem:[%s8192 + $0x8] sm:$0xf]
  %v8196 = vld [vmem:[%s8192 + $0xc] sm:$0xf]
  %v8197 = vld [vmem:[%s8192 + $0x10] sm:$0xf]
  %v8198 = vld [vmem:[%s8192 + $0x14] sm:$0xf]
  %v8199 = vld [vmem:[%s8192 + $0x18] sm:$0xf]
  %v8200 = vld [vmem:[%s8192 + $0x1c] sm:$0xf]
  %v8201 = vld [vmem:[%s8192 + $0x20] sm:$0xf]
  %v8202 = vld [vmem:[%s8192 + $0x24] sm:$0xf]
  %v8203 = vld [vmem:[%s8192 + $0x28] sm:$0xf]
  %v8204 = vld [vmem:[%s8192 + $0x2c] sm:$0xf]
  %v8205 = vld [vmem:[%s8192 + $0x30] sm:$0xf]
  %v8206 = vld [vmem:[%s8192 + $0x34] sm:$0xf]
  %v8207 = vld [vmem:[%s8192 + $0x38] sm:$0xf]
  %v8208 = vld [vmem:[%s8192 + $0x3c] sm:$0xf]
  %v8225 = vunpack.c.l.b16 %v8193
  %v8226 = vunpack.c.l.b16 %v8194
  %v8227 = vunpack.c.l.b16 %v8195
  %v8228 = vunpack.c.l.b16 %v8196
  %v8229 = vunpack.c.l.b16 %v8197
  %v8230 = vunpack.c.l.b16 %v8198
  %v8231 = vunpack.c.l.b16 %v8199
  %v8232 = vunpack.c.l.b16 %v8200
  %v8233 = vunpack.c.l.b16 %v8201
  %v8234 = vunpack.c.l.b16 %v8202
  %v8235 = vunpack.c.l.b16 %v8203
  %v8236 = vunpack.c.l.b16 %v8204
  %v8237 = vunpack.c.l.b16 %v8205
  %v8238 = vunpack.c.l.b16 %v8206
  %v8239 = vunpack.c.l.b16 %v8207
  %v8240 = vunpack.c.l.b16 %v8208
  %v8241 = vpack.c.b16 %v8226, %v8225
  %v8242 = vpack.c.b16 %v8228, %v8227
  %v8243 = vpack.c.b16 %v8230, %v8229
  %v8244 = vpack.c.b16 %v8232, %v8231
  %v8245 = vpack.c.b16 %v8234, %v8233
  %v8246 = vpack.c.b16 %v8236, %v8235
  %v8247 = vpack.c.b16 %v8238, %v8237
  %v8248 = vpack.c.b16 %v8240, %v8239
  %8257 = vmatprep.subr.bf16.mxu0 0
  %8258 = vmatpush1.bf16.msra.mxu0 %v8241
  %8259 = vmatprep.subr.bf16.mxu0 0
  %8260 = vmatpush1.bf16.msra.mxu0 %v8242
  %8261 = vmatprep.subr.bf16.mxu0 0
  %8262 = vmatpush1.bf16.msra.mxu0 %v8243
  %8263 = vmatprep.subr.bf16.mxu0 0
  %8264 = vmatpush1.bf16.msra.mxu0 %v8244
  %8265 = vmatprep.subr.bf16.mxu0 0
  %8266 = vmatpush1.bf16.msra.mxu0 %v8245
  %8267 = vmatprep.subr.bf16.mxu0 0
  %8268 = vmatpush1.bf16.msra.mxu0 %v8246
  %8269 = vmatprep.subr.bf16.mxu0 0
  %8270 = vmatpush1.bf16.msra.mxu0 %v8247
  %8271 = vmatprep.subr.bf16.mxu0 0
  %8272 = vmatpush1.bf16.msra.mxu0 %v8248
  %8273 = vmatprep.subr.bf16.mxu0 0
  %8274 = vmatpush1.bf16.msra.mxu0 0
  %8275 = vmatprep.subr.bf16.mxu0 0
  %8276 = vmatpush1.bf16.msra.mxu0 0
  %8277 = vmatprep.subr.bf16.mxu0 0
  %8278 = vmatpush1.bf16.msra.mxu0 0
  %8279 = vmatprep.subr.bf16.mxu0 0
  %8280 = vmatpush1.bf16.msra.mxu0 0
  %8281 = vmatprep.subr.bf16.mxu0 0
  %8282 = vmatpush1.bf16.msra.mxu0 0
  %8283 = vmatprep.subr.bf16.mxu0 0
  %8284 = vmatpush1.bf16.msra.mxu0 0
  %8285 = vmatprep.subr.bf16.mxu0 0
  %8286 = vmatpush1.bf16.msra.mxu0 0
  %8287 = vmatprep.subr.bf16.mxu0 0
  %8288 = vmatpush1.bf16.msra.mxu0 0
  %8289 = vmatprep.mubr.bf16.mxu0 0
  %8290 = vmatmul.mubr.bf16.gmra.mrb[0].mxu0 %v8160
  %v8291 = vpop.f32.mrb[0].mxu0
  %v8292 = vadd.f32 0.0, %v8291
  %v8293 = vpop.f32.mrb[0].mxu0
  %v8294 = vpop.f32.mrb[0].mxu0
  %v8295 = vadd.f32 0.0, %v8294
  %v8296 = vpop.f32.mrb[0].mxu0
  %8297 = vmatprep.mubr.bf16.mxu0 0
  %8298 = vmatmul.mubr.bf16.gmra.mrb[0].mxu0 %v8161
  %v8299 = vpop.f32.mrb[0].mxu0
  %v8300 = vadd.f32 0.0, %v8299
  %v8301 = vpop.f32.mrb[0].mxu0
  %v8302 = vpop.f32.mrb[0].mxu0
  %v8303 = vadd.f32 0.0, %v8302
  %v8304 = vpop.f32.mrb[0].mxu0
  %8305 = vmatprep.mubr.bf16.mxu0 0
  %8306 = vmatmul.mubr.bf16.gmra.mrb[0].mxu0 %v8162
  %v8307 = vpop.f32.mrb[0].mxu0
  %v8308 = vadd.f32 0.0, %v8307
  %v8309 = vpop.f32.mrb[0].mxu0
  %v8310 = vpop.f32.mrb[0].mxu0
  %v8311 = vadd.f32 0.0, %v8310
  %v8312 = vpop.f32.mrb[0].mxu0
  %8313 = vmatprep.mubr.bf16.mxu0 0
  %8314 = vmatmul.mubr.bf16.gmra.mrb[0].mxu0 %v8163
  %v8315 = vpop.f32.mrb[0].mxu0
  %v8316 = vadd.f32 0.0, %v8315
  %v8317 = vpop.f32.mrb[0].mxu0
  %v8318 = vpop.f32.mrb[0].mxu0
  %v8319 = vadd.f32 0.0, %v8318
  %v8320 = vpop.f32.mrb[0].mxu0
  %8321 = vmatprep.mubr.bf16.mxu0 0
  %8322 = vmatmul.mubr.bf16.gmra.mrb[0].mxu0 %v8164
  %v8323 = vpop.f32.mrb[0].mxu0
  %v8324 = vadd.f32 0.0, %v8323
  %v8325 = vpop.f32.mrb[0].mxu0
  %v8326 = vpop.f32.mrb[0].mxu0
  %v8327 = vadd.f32 0.0, %v8326
  %v8328 = vpop.f32.mrb[0].mxu0
  %8329 = vmatprep.mubr.bf16.mxu0 0
  %8330 = vmatmul.mubr.bf16.gmra.mrb[0].mxu0 %v8165
  %v8331 = vpop.f32.mrb[0].mxu0
  %v8332 = vadd.f32 0.0, %v8331
  %v8333 = vpop.f32.mrb[0].mxu0
  %v8334 = vpop.f32.mrb[0].mxu0
  %v8335 = vadd.f32 0.0, %v8334
  %v8336 = vpop.f32.mrb[0].mxu0
  %8337 = vmatprep.mubr.bf16.mxu0 0
  %8338 = vmatmul.mubr.bf16.gmra.mrb[0].mxu0 %v8166
  %v8339 = vpop.f32.mrb[0].mxu0
  %v8340 = vadd.f32 0.0, %v8339
  %v8341 = vpop.f32.mrb[0].mxu0
  %v8342 = vpop.f32.mrb[0].mxu0
  %v8343 = vadd.f32 0.0, %v8342
  %v8344 = vpop.f32.mrb[0].mxu0
  %8345 = vmatprep.mubr.bf16.mxu0 0
  %8346 = vmatmul.mubr.bf16.gmra.mrb[0].mxu0 %v8167
  %v8347 = vpop.f32.mrb[0].mxu0
  %v8348 = vadd.f32 0.0, %v8347
  %v8349 = vpop.f32.mrb[0].mxu0
  %v8350 = vpop.f32.mrb[0].mxu0
  %v8351 = vadd.f32 0.0, %v8350
  %v8352 = vpop.f32.mrb[0].mxu0
  %8353 = vmatprep.mubr.bf16.mxu0 0
  %8354 = vmatmul.mubr.bf16.gmra.mrb[0].mxu0 %v8168
  %v8355 = vpop.f32.mrb[0].mxu0
  %v8356 = vadd.f32 0.0, %v8355
  %v8357 = vpop.f32.mrb[0].mxu0
  %v8358 = vpop.f32.mrb[0].mxu0
  %v8359 = vadd.f32 0.0, %v8358
  %v8360 = vpop.f32.mrb[0].mxu0
  %8361 = vmatprep.mubr.bf16.mxu0 0
  %8362 = vmatmul.mubr.bf16.gmra.mrb[0].mxu0 %v8169
  %v8363 = vpop.f32.mrb[0].mxu0
  %v8364 = vadd.f32 0.0, %v8363
  %v8365 = vpop.f32.mrb[0].mxu0
  %v8366 = vpop.f32.mrb[0].mxu0
  %v8367 = vadd.f32 0.0, %v8366
  %v8368 = vpop.f32.mrb[0].mxu0
  %8369 = vmatprep.mubr.bf16.mxu0 0
  %8370 = vmatmul.mubr.bf16.gmra.mrb[0].mxu0 %v8170
  %v8371 = vpop.f32.mrb[0].mxu0
  %v8372 = vadd.f32 0.0, %v8371
  %v8373 = vpop.f32.mrb[0].mxu0
  %v8374 = vpop.f32.mrb[0].mxu0
  %v8375 = vadd.f32 0.0, %v8374
  %v8376 = vpop.f32.mrb[0].mxu0
  %8377 = vmatprep.mubr.bf16.mxu0 0
  %8378 = vmatmul.mubr.bf16.gmra.mrb[0].mxu0 %v8171
  %v8379 = vpop.f32.mrb[0].mxu0
  %v8380 = vadd.f32 0.0, %v8379
  %v8381 = vpop.f32.mrb[0].mxu0
  %v8382 = vpop.f32.mrb[0].mxu0
  %v8383 = vadd.f32 0.0, %v8382
  %v8384 = vpop.f32.mrb[0].mxu0
  %8385 = vmatprep.mubr.bf16.mxu0 0
  %8386 = vmatmul.mubr.bf16.gmra.mrb[0].mxu0 %v8172
  %v8387 = vpop.f32.mrb[0].mxu0
  %v8388 = vadd.f32 0.0, %v8387
  %v8389 = vpop.f32.mrb[0].mxu0
  %v8390 = vpop.f32.mrb[0].mxu0
  %v8391 = vadd.f32 0.0, %v8390
  %v8392 = vpop.f32.mrb[0].mxu0
  %8393 = vmatprep.mubr.bf16.mxu0 0
  %8394 = vmatmul.mubr.bf16.gmra.mrb[0].mxu0 %v8173
  %v8395 = vpop.f32.mrb[0].mxu0
  %v8396 = vadd.f32 0.0, %v8395
  %v8397 = vpop.f32.mrb[0].mxu0
  %v8398 = vpop.f32.mrb[0].mxu0
  %v8399 = vadd.f32 0.0, %v8398
  %v8400 = vpop.f32.mrb[0].mxu0
  %8401 = vmatprep.mubr.bf16.mxu0 0
  %8402 = vmatmul.mubr.bf16.gmra.mrb[0].mxu0 %v8174
  %v8403 = vpop.f32.mrb[0].mxu0
  %v8404 = vadd.f32 0.0, %v8403
  %v8405 = vpop.f32.mrb[0].mxu0
  %v8406 = vpop.f32.mrb[0].mxu0
  %v8407 = vadd.f32 0.0, %v8406
  %v8408 = vpop.f32.mrb[0].mxu0
  %8409 = vmatprep.mubr.bf16.mxu0 0
  %8410 = vmatmul.mubr.bf16.gmra.mrb[0].mxu0 %v8175
  %v8411 = vpop.f32.mrb[0].mxu0
  %v8412 = vadd.f32 0.0, %v8411
  %v8413 = vpop.f32.mrb[0].mxu0
  %v8414 = vpop.f32.mrb[0].mxu0
  %v8415 = vadd.f32 0.0, %v8414
  %v8416 = vpop.f32.mrb[0].mxu0
  %8417 = vmatprep.mubr.bf16.mxu0 0
  %8418 = vmatmul.mubr.bf16.gmra.mrb[0].mxu0 %v8176
  %v8419 = vpop.f32.mrb[0].mxu0
  %v8420 = vadd.f32 0.0, %v8419
  %v8421 = vpop.f32.mrb[0].mxu0
  %v8422 = vpop.f32.mrb[0].mxu0
  %v8423 = vadd.f32 0.0, %v8422
  %v8424 = vpop.f32.mrb[0].mxu0
  %8425 = vmatprep.mubr.bf16.mxu0 0
  %8426 = vmatmul.mubr.bf16.gmra.mrb[0].mxu0 %v8177
  %v8427 = vpop.f32.mrb[0].mxu0
  %v8428 = vadd.f32 0.0, %v8427
  %v8429 = vpop.f32.mrb[0].mxu0
  %v8430 = vpop.f32.mrb[0].mxu0
  %v8431 = vadd.f32 0.0, %v8430
  %v8432 = vpop.f32.mrb[0].mxu0
  %8433 = vmatprep.mubr.bf16.mxu0 0
  %8434 = vmatmul.mubr.bf16.gmra.mrb[0].mxu0 %v8178
  %v8435 = vpop.f32.mrb[0].mxu0
  %v8436 = vadd.f32 0.0, %v8435
  %v8437 = vpop.f32.mrb[0].mxu0
  %v8438 = vpop.f32.mrb[0].mxu0
  %v8439 = vadd.f32 0.0, %v8438
  %v8440 = vpop.f32.mrb[0].mxu0
  %8441 = vmatprep.mubr.bf16.mxu0 0
  %8442 = vmatmul.mubr.bf16.gmra.mrb[0].mxu0 %v8179
  %v8443 = vpop.f32.mrb[0].mxu0
  %v8444 = vadd.f32 0.0, %v8443
  %v8445 = vpop.f32.mrb[0].mxu0
  %v8446 = vpop.f32.mrb[0].mxu0
  %v8447 = vadd.f32 0.0, %v8446
  %v8448 = vpop.f32.mrb[0].mxu0
  %8449 = vmatprep.mubr.bf16.mxu0 0
  %8450 = vmatmul.mubr.bf16.gmra.mrb[0].mxu0 %v8180
  %v8451 = vpop.f32.mrb[0].mxu0
  %v8452 = vadd.f32 0.0, %v8451
  %v8453 = vpop.f32.mrb[0].mxu0
  %v8454 = vpop.f32.mrb[0].mxu0
  %v8455 = vadd.f32 0.0, %v8454
  %v8456 = vpop.f32.mrb[0].mxu0
  %8457 = vmatprep.mubr.bf16.mxu0 0
  %8458 = vmatmul.mubr.bf16.gmra.mrb[0].mxu0 %v8181
  %v8459 = vpop.f32.mrb[0].mxu0
  %v8460 = vadd.f32 0.0, %v8459
  %v8461 = vpop.f32.mrb[0].mxu0
  %v8462 = vpop.f32.mrb[0].mxu0
  %v8463 = vadd.f32 0.0, %v8462
  %v8464 = vpop.f32.mrb[0].mxu0
  %8465 = vmatprep.mubr.bf16.mxu0 0
  %8466 = vmatmul.mubr.bf16.gmra.mrb[0].mxu0 %v8182
  %v8467 = vpop.f32.mrb[0].mxu0
  %v8468 = vadd.f32 0.0, %v8467
  %v8469 = vpop.f32.mrb[0].mxu0
  %v8470 = vpop.f32.mrb[0].mxu0
  %v8471 = vadd.f32 0.0, %v8470
  %v8472 = vpop.f32.mrb[0].mxu0
  %8473 = vmatprep.mubr.bf16.mxu0 0
  %8474 = vmatmul.mubr.bf16.gmra.mrb[0].mxu0 %v8183
  %v8475 = vpop.f32.mrb[0].mxu0
  %v8476 = vadd.f32 0.0, %v8475
  %v8477 = vpop.f32.mrb[0].mxu0
  %v8478 = vpop.f32.mrb[0].mxu0
  %v8479 = vadd.f32 0.0, %v8478
  %v8480 = vpop.f32.mrb[0].mxu0
  %8481 = vmatprep.mubr.bf16.mxu0 0
  %8482 = vmatmul.mubr.bf16.gmra.mrb[0].mxu0 %v8184
  %v8483 = vpop.f32.mrb[0].mxu0
  %v8484 = vadd.f32 0.0, %v8483
  %v8485 = vpop.f32.mrb[0].mxu0
  %v8486 = vpop.f32.mrb[0].mxu0
  %v8487 = vadd.f32 0.0, %v8486
  %v8488 = vpop.f32.mrb[0].mxu0
  %8489 = vmatprep.mubr.bf16.mxu0 0
  %8490 = vmatmul.mubr.bf16.gmra.mrb[0].mxu0 %v8185
  %v8491 = vpop.f32.mrb[0].mxu0
  %v8492 = vadd.f32 0.0, %v8491
  %v8493 = vpop.f32.mrb[0].mxu0
  %v8494 = vpop.f32.mrb[0].mxu0
  %v8495 = vadd.f32 0.0, %v8494
  %v8496 = vpop.f32.mrb[0].mxu0
  %8497 = vmatprep.mubr.bf16.mxu0 0
  %8498 = vmatmul.mubr.bf16.gmra.mrb[0].mxu0 %v8186
  %v8499 = vpop.f32.mrb[0].mxu0
  %v8500 = vadd.f32 0.0, %v8499
  %v8501 = vpop.f32.mrb[0].mxu0
  %v8502 = vpop.f32.mrb[0].mxu0
  %v8503 = vadd.f32 0.0, %v8502
  %v8504 = vpop.f32.mrb[0].mxu0
  %8505 = vmatprep.mubr.bf16.mxu0 0
  %8506 = vmatmul.mubr.bf16.gmra.mrb[0].mxu0 %v8187
  %v8507 = vpop.f32.mrb[0].mxu0
  %v8508 = vadd.f32 0.0, %v8507
  %v8509 = vpop.f32.mrb[0].mxu0
  %v8510 = vpop.f32.mrb[0].mxu0
  %v8511 = vadd.f32 0.0, %v8510
  %v8512 = vpop.f32.mrb[0].mxu0
  %8513 = vmatprep.mubr.bf16.mxu0 0
  %8514 = vmatmul.mubr.bf16.gmra.mrb[0].mxu0 %v8188
  %v8515 = vpop.f32.mrb[0].mxu0
  %v8516 = vadd.f32 0.0, %v8515
  %v8517 = vpop.f32.mrb[0].mxu0
  %v8518 = vpop.f32.mrb[0].mxu0
  %v8519 = vadd.f32 0.0, %v8518
  %v8520 = vpop.f32.mrb[0].mxu0
  %8521 = vmatprep.mubr.bf16.mxu0 0
  %8522 = vmatmul.mubr.bf16.gmra.mrb[0].mxu0 %v8189
  %v8523 = vpop.f32.mrb[0].mxu0
  %v8524 = vadd.f32 0.0, %v8523
  %v8525 = vpop.f32.mrb[0].mxu0
  %v8526 = vpop.f32.mrb[0].mxu0
  %v8527 = vadd.f32 0.0, %v8526
  %v8528 = vpop.f32.mrb[0].mxu0
  %8529 = vmatprep.mubr.bf16.mxu0 0
  %8530 = vmatmul.mubr.bf16.gmra.mrb[0].mxu0 %v8190
  %v8531 = vpop.f32.mrb[0].mxu0
  %v8532 = vadd.f32 0.0, %v8531
  %v8533 = vpop.f32.mrb[0].mxu0
  %v8534 = vpop.f32.mrb[0].mxu0
  %v8535 = vadd.f32 0.0, %v8534
  %v8536 = vpop.f32.mrb[0].mxu0
  %8537 = vmatprep.mubr.bf16.mxu0 0
  %8538 = vmatmul.mubr.bf16.gmra.mrb[0].mxu0 %v8191
  %v8539 = vpop.f32.mrb[0].mxu0
  %v8540 = vadd.f32 0.0, %v8539
  %v8541 = vpop.f32.mrb[0].mxu0
  %v8542 = vpop.f32.mrb[0].mxu0
  %v8543 = vadd.f32 0.0, %v8542
  %v8544 = vpop.f32.mrb[0].mxu0
  %8545 = vdwg.mxu0
  %v8562 = vunpack.c.l.b16 %v8143
  %v8563 = vunpack.c.l.b16 %v8144
  %v8564 = vunpack.c.l.b16 %v8145
  %v8565 = vunpack.c.l.b16 %v8146
  %v8566 = vunpack.c.l.b16 %v8147
  %v8567 = vunpack.c.l.b16 %v8148
  %v8568 = vunpack.c.l.b16 %v8149
  %v8569 = vunpack.c.l.b16 %v8150
  %v8570 = vunpack.c.l.b16 %v8151
  %v8571 = vunpack.c.l.b16 %v8152
  %v8572 = vunpack.c.l.b16 %v8153
  %v8573 = vunpack.c.l.b16 %v8154
  %v8574 = vunpack.c.l.b16 %v8155
  %v8575 = vunpack.c.l.b16 %v8156
  %v8576 = vunpack.c.l.b16 %v8157
  %v8577 = vunpack.c.l.b16 %v8158
  %v8578 = vpack.c.b16 %v8563, %v8562
  %v8579 = vpack.c.b16 %v8565, %v8564
  %v8580 = vpack.c.b16 %v8567, %v8566
  %v8581 = vpack.c.b16 %v8569, %v8568
  %v8582 = vpack.c.b16 %v8571, %v8570
  %v8583 = vpack.c.b16 %v8573, %v8572
  %v8584 = vpack.c.b16 %v8575, %v8574
  %v8585 = vpack.c.b16 %v8577, %v8576
  %8594 = vmatprep.subr.bf16.mxu0 0
  %8595 = vmatpush1.bf16.msra.mxu0 %v8578
  %8596 = vmatprep.subr.bf16.mxu0 0
  %8597 = vmatpush1.bf16.msra.mxu0 %v8579
  %8598 = vmatprep.subr.bf16.mxu0 0
  %8599 = vmatpush1.bf16.msra.mxu0 %v8580
  %8600 = vmatprep.subr.bf16.mxu0 0
  %8601 = vmatpush1.bf16.msra.mxu0 %v8581
  %8602 = vmatprep.subr.bf16.mxu0 0
  %8603 = vmatpush1.bf16.msra.mxu0 %v8582
  %8604 = vmatprep.subr.bf16.mxu0 0
  %8605 = vmatpush1.bf16.msra.mxu0 %v8583
  %8606 = vmatprep.subr.bf16.mxu0 0
  %8607 = vmatpush1.bf16.msra.mxu0 %v8584
  %8608 = vmatprep.subr.bf16.mxu0 0
  %8609 = vmatpush1.bf16.msra.mxu0 %v8585
  %8610 = vmatprep.subr.bf16.mxu0 0
  %8611 = vmatpush1.bf16.msra.mxu0 0
  %8612 = vmatprep.subr.bf16.mxu0 0
  %8613 = vmatpush1.bf16.msra.mxu0 0
  %8614 = vmatprep.subr.bf16.mxu0 0
  %8615 = vmatpush1.bf16.msra.mxu0 0
  %8616 = vmatprep.subr.bf16.mxu0 0
  %8617 = vmatpush1.bf16.msra.mxu0 0
  %8618 = vmatprep.subr.bf16.mxu0 0
  %8619 = vmatpush1.bf16.msra.mxu0 0
  %8620 = vmatprep.subr.bf16.mxu0 0
  %8621 = vmatpush1.bf16.msra.mxu0 0
  %8622 = vmatprep.subr.bf16.mxu0 0
  %8623 = vmatpush1.bf16.msra.mxu0 0
  %8624 = vmatprep.subr.bf16.mxu0 0
  %8625 = vmatpush1.bf16.msra.mxu0 0
  %8626 = vmatprep.mubr.bf16.mxu0 0
  %8627 = vmatmul.mubr.bf16.gmra.mrb[0].mxu0 %v8111
  %v8628 = vpop.f32.mrb[0].mxu0
  %v8629 = vadd.f32 %v8292, %v8628
  %v8630 = vpop.f32.mrb[0].mxu0
  %v8631 = vpop.f32.mrb[0].mxu0
  %v8632 = vadd.f32 %v8295, %v8631
  %v8633 = vpop.f32.mrb[0].mxu0
  %8634 = vmatprep.mubr.bf16.mxu0 0
  %8635 = vmatmul.mubr.bf16.gmra.mrb[0].mxu0 %v8112
  %v8636 = vpop.f32.mrb[0].mxu0
  %v8637 = vadd.f32 %v8300, %v8636
  %v8638 = vpop.f32.mrb[0].mxu0
  %v8639 = vpop.f32.mrb[0].mxu0
  %v8640 = vadd.f32 %v8303, %v8639
  %v8641 = vpop.f32.mrb[0].mxu0
  %8642 = vmatprep.mubr.bf16.mxu0 0
  %8643 = vmatmul.mubr.bf16.gmra.mrb[0].mxu0 %v8113
  %v8644 = vpop.f32.mrb[0].mxu0
  %v8645 = vadd.f32 %v8308, %v8644
  %v8646 = vpop.f32.mrb[0].mxu0
  %v8647 = vpop.f32.mrb[0].mxu0
  %v8648 = vadd.f32 %v8311, %v8647
  %v8649 = vpop.f32.mrb[0].mxu0
  %8650 = vmatprep.mubr.bf16.mxu0 0
  %8651 = vmatmul.mubr.bf16.gmra.mrb[0].mxu0 %v8114
  %v8652 = vpop.f32.mrb[0].mxu0
  %v8653 = vadd.f32 %v8316, %v8652
  %v8654 = vpop.f32.mrb[0].mxu0
  %v8655 = vpop.f32.mrb[0].mxu0
  %v8656 = vadd.f32 %v8319, %v8655
  %v8657 = vpop.f32.mrb[0].mxu0
  %8658 = vmatprep.mubr.bf16.mxu0 0
  %8659 = vmatmul.mubr.bf16.gmra.mrb[0].mxu0 %v8115
  %v8660 = vpop.f32.mrb[0].mxu0
  %v8661 = vadd.f32 %v8324, %v8660
  %v8662 = vpop.f32.mrb[0].mxu0
  %v8663 = vpop.f32.mrb[0].mxu0
  %v8664 = vadd.f32 %v8327, %v8663
  %v8665 = vpop.f32.mrb[0].mxu0
  %8666 = vmatprep.mubr.bf16.mxu0 0
  %8667 = vmatmul.mubr.bf16.gmra.mrb[0].mxu0 %v8116
  %v8668 = vpop.f32.mrb[0].mxu0
  %v8669 = vadd.f32 %v8332, %v8668
  %v8670 = vpop.f32.mrb[0].mxu0
  %v8671 = vpop.f32.mrb[0].mxu0
  %v8672 = vadd.f32 %v8335, %v8671
  %v8673 = vpop.f32.mrb[0].mxu0
  %8674 = vmatprep.mubr.bf16.mxu0 0
  %8675 = vmatmul.mubr.bf16.gmra.mrb[0].mxu0 %v8117
  %v8676 = vpop.f32.mrb[0].mxu0
  %v8677 = vadd.f32 %v8340, %v8676
  %v8678 = vpop.f32.mrb[0].mxu0
  %v8679 = vpop.f32.mrb[0].mxu0
  %v8680 = vadd.f32 %v8343, %v8679
  %v8681 = vpop.f32.mrb[0].mxu0
  %8682 = vmatprep.mubr.bf16.mxu0 0
  %8683 = vmatmul.mubr.bf16.gmra.mrb[0].mxu0 %v8118
  %v8684 = vpop.f32.mrb[0].mxu0
  %v8685 = vadd.f32 %v8348, %v8684
  %v8686 = vpop.f32.mrb[0].mxu0
  %v8687 = vpop.f32.mrb[0].mxu0
  %v8688 = vadd.f32 %v8351, %v8687
  %v8689 = vpop.f32.mrb[0].mxu0
  %8690 = vmatprep.mubr.bf16.mxu0 0
  %8691 = vmatmul.mubr.bf16.gmra.mrb[0].mxu0 %v8119
  %v8692 = vpop.f32.mrb[0].mxu0
  %v8693 = vadd.f32 %v8356, %v8692
  %v8694 = vpop.f32.mrb[0].mxu0
  %v8695 = vpop.f32.mrb[0].mxu0
  %v8696 = vadd.f32 %v8359, %v8695
  %v8697 = vpop.f32.mrb[0].mxu0
  %8698 = vmatprep.mubr.bf16.mxu0 0
  %8699 = vmatmul.mubr.bf16.gmra.mrb[0].mxu0 %v8120
  %v8700 = vpop.f32.mrb[0].mxu0
  %v8701 = vadd.f32 %v8364, %v8700
  %v8702 = vpop.f32.mrb[0].mxu0
  %v8703 = vpop.f32.mrb[0].mxu0
  %v8704 = vadd.f32 %v8367, %v8703
  %v8705 = vpop.f32.mrb[0].mxu0
  %8706 = vmatprep.mubr.bf16.mxu0 0
  %8707 = vmatmul.mubr.bf16.gmra.mrb[0].mxu0 %v8121
  %v8708 = vpop.f32.mrb[0].mxu0
  %v8709 = vadd.f32 %v8372, %v8708
  %v8710 = vpop.f32.mrb[0].mxu0
  %v8711 = vpop.f32.mrb[0].mxu0
  %v8712 = vadd.f32 %v8375, %v8711
  %v8713 = vpop.f32.mrb[0].mxu0
  %8714 = vmatprep.mubr.bf16.mxu0 0
  %8715 = vmatmul.mubr.bf16.gmra.mrb[0].mxu0 %v8122
  %v8716 = vpop.f32.mrb[0].mxu0
  %v8717 = vadd.f32 %v8380, %v8716
  %v8718 = vpop.f32.mrb[0].mxu0
  %v8719 = vpop.f32.mrb[0].mxu0
  %v8720 = vadd.f32 %v8383, %v8719
  %v8721 = vpop.f32.mrb[0].mxu0
  %8722 = vmatprep.mubr.bf16.mxu0 0
  %8723 = vmatmul.mubr.bf16.gmra.mrb[0].mxu0 %v8123
  %v8724 = vpop.f32.mrb[0].mxu0
  %v8725 = vadd.f32 %v8388, %v8724
  %v8726 = vpop.f32.mrb[0].mxu0
  %v8727 = vpop.f32.mrb[0].mxu0
  %v8728 = vadd.f32 %v8391, %v8727
  %v8729 = vpop.f32.mrb[0].mxu0
  %8730 = vmatprep.mubr.bf16.mxu0 0
  %8731 = vmatmul.mubr.bf16.gmra.mrb[0].mxu0 %v8124
  %v8732 = vpop.f32.mrb[0].mxu0
  %v8733 = vadd.f32 %v8396, %v8732
  %v8734 = vpop.f32.mrb[0].mxu0
  %v8735 = vpop.f32.mrb[0].mxu0
  %v8736 = vadd.f32 %v8399, %v8735
  %v8737 = vpop.f32.mrb[0].mxu0
  %8738 = vmatprep.mubr.bf16.mxu0 0
  %8739 = vmatmul.mubr.bf16.gmra.mrb[0].mxu0 %v8125
  %v8740 = vpop.f32.mrb[0].mxu0
  %v8741 = vadd.f32 %v8404, %v8740
  %v8742 = vpop.f32.mrb[0].mxu0
  %v8743 = vpop.f32.mrb[0].mxu0
  %v8744 = vadd.f32 %v8407, %v8743
  %v8745 = vpop.f32.mrb[0].mxu0
  %8746 = vmatprep.mubr.bf16.mxu0 0
  %8747 = vmatmul.mubr.bf16.gmra.mrb[0].mxu0 %v8126
  %v8748 = vpop.f32.mrb[0].mxu0
  %v8749 = vadd.f32 %v8412, %v8748
  %v8750 = vpop.f32.mrb[0].mxu0
  %v8751 = vpop.f32.mrb[0].mxu0
  %v8752 = vadd.f32 %v8415, %v8751
  %v8753 = vpop.f32.mrb[0].mxu0
  %8754 = vmatprep.mubr.bf16.mxu0 0
  %8755 = vmatmul.mubr.bf16.gmra.mrb[0].mxu0 %v8127
  %v8756 = vpop.f32.mrb[0].mxu0
  %v8757 = vadd.f32 %v8420, %v8756
  %v8758 = vpop.f32.mrb[0].mxu0
  %v8759 = vpop.f32.mrb[0].mxu0
  %v8760 = vadd.f32 %v8423, %v8759
  %v8761 = vpop.f32.mrb[0].mxu0
  %8762 = vmatprep.mubr.bf16.mxu0 0
  %8763 = vmatmul.mubr.bf16.gmra.mrb[0].mxu0 %v8128
  %v8764 = vpop.f32.mrb[0].mxu0
  %v8765 = vadd.f32 %v8428, %v8764
  %v8766 = vpop.f32.mrb[0].mxu0
  %v8767 = vpop.f32.mrb[0].mxu0
  %v8768 = vadd.f32 %v8431, %v8767
  %v8769 = vpop.f32.mrb[0].mxu0
  %8770 = vmatprep.mubr.bf16.mxu0 0
  %8771 = vmatmul.mubr.bf16.gmra.mrb[0].mxu0 %v8129
  %v8772 = vpop.f32.mrb[0].mxu0
  %v8773 = vadd.f32 %v8436, %v8772
  %v8774 = vpop.f32.mrb[0].mxu0
  %v8775 = vpop.f32.mrb[0].mxu0
  %v8776 = vadd.f32 %v8439, %v8775
  %v8777 = vpop.f32.mrb[0].mxu0
  %8778 = vmatprep.mubr.bf16.mxu0 0
  %8779 = vmatmul.mubr.bf16.gmra.mrb[0].mxu0 %v8130
  %v8780 = vpop.f32.mrb[0].mxu0
  %v8781 = vadd.f32 %v8444, %v8780
  %v8782 = vpop.f32.mrb[0].mxu0
  %v8783 = vpop.f32.mrb[0].mxu0
  %v8784 = vadd.f32 %v8447, %v8783
  %v8785 = vpop.f32.mrb[0].mxu0
  %8786 = vmatprep.mubr.bf16.mxu0 0
  %8787 = vmatmul.mubr.bf16.gmra.mrb[0].mxu0 %v8131
  %v8788 = vpop.f32.mrb[0].mxu0
  %v8789 = vadd.f32 %v8452, %v8788
  %v8790 = vpop.f32.mrb[0].mxu0
  %v8791 = vpop.f32.mrb[0].mxu0
  %v8792 = vadd.f32 %v8455, %v8791
  %v8793 = vpop.f32.mrb[0].mxu0
  %8794 = vmatprep.mubr.bf16.mxu0 0
  %8795 = vmatmul.mubr.bf16.gmra.mrb[0].mxu0 %v8132
  %v8796 = vpop.f32.mrb[0].mxu0
  %v8797 = vadd.f32 %v8460, %v8796
  %v8798 = vpop.f32.mrb[0].mxu0
  %v8799 = vpop.f32.mrb[0].mxu0
  %v8800 = vadd.f32 %v8463, %v8799
  %v8801 = vpop.f32.mrb[0].mxu0
  %8802 = vmatprep.mubr.bf16.mxu0 0
  %8803 = vmatmul.mubr.bf16.gmra.mrb[0].mxu0 %v8133
  %v8804 = vpop.f32.mrb[0].mxu0
  %v8805 = vadd.f32 %v8468, %v8804
  %v8806 = vpop.f32.mrb[0].mxu0
  %v8807 = vpop.f32.mrb[0].mxu0
  %v8808 = vadd.f32 %v8471, %v8807
  %v8809 = vpop.f32.mrb[0].mxu0
  %8810 = vmatprep.mubr.bf16.mxu0 0
  %8811 = vmatmul.mubr.bf16.gmra.mrb[0].mxu0 %v8134
  %v8812 = vpop.f32.mrb[0].mxu0
  %v8813 = vadd.f32 %v8476, %v8812
  %v8814 = vpop.f32.mrb[0].mxu0
  %v8815 = vpop.f32.mrb[0].mxu0
  %v8816 = vadd.f32 %v8479, %v8815
  %v8817 = vpop.f32.mrb[0].mxu0
  %8818 = vmatprep.mubr.bf16.mxu0 0
  %8819 = vmatmul.mubr.bf16.gmra.mrb[0].mxu0 %v8135
  %v8820 = vpop.f32.mrb[0].mxu0
  %v8821 = vadd.f32 %v8484, %v8820
  %v8822 = vpop.f32.mrb[0].mxu0
  %v8823 = vpop.f32.mrb[0].mxu0
  %v8824 = vadd.f32 %v8487, %v8823
  %v8825 = vpop.f32.mrb[0].mxu0
  %8826 = vmatprep.mubr.bf16.mxu0 0
  %8827 = vmatmul.mubr.bf16.gmra.mrb[0].mxu0 %v8136
  %v8828 = vpop.f32.mrb[0].mxu0
  %v8829 = vadd.f32 %v8492, %v8828
  %v8830 = vpop.f32.mrb[0].mxu0
  %v8831 = vpop.f32.mrb[0].mxu0
  %v8832 = vadd.f32 %v8495, %v8831
  %v8833 = vpop.f32.mrb[0].mxu0
  %8834 = vmatprep.mubr.bf16.mxu0 0
  %8835 = vmatmul.mubr.bf16.gmra.mrb[0].mxu0 %v8137
  %v8836 = vpop.f32.mrb[0].mxu0
  %v8837 = vadd.f32 %v8500, %v8836
  %v8838 = vpop.f32.mrb[0].mxu0
  %v8839 = vpop.f32.mrb[0].mxu0
  %v8840 = vadd.f32 %v8503, %v8839
  %v8841 = vpop.f32.mrb[0].mxu0
  %8842 = vmatprep.mubr.bf16.mxu0 0
  %8843 = vmatmul.mubr.bf16.gmra.mrb[0].mxu0 %v8138
  %v8844 = vpop.f32.mrb[0].mxu0
  %v8845 = vadd.f32 %v8508, %v8844
  %v8846 = vpop.f32.mrb[0].mxu0
  %v8847 = vpop.f32.mrb[0].mxu0
  %v8848 = vadd.f32 %v8511, %v8847
  %v8849 = vpop.f32.mrb[0].mxu0
  %8850 = vmatprep.mubr.bf16.mxu0 0
  %8851 = vmatmul.mubr.bf16.gmra.mrb[0].mxu0 %v8139
  %v8852 = vpop.f32.mrb[0].mxu0
  %v8853 = vadd.f32 %v8516, %v8852
  %v8854 = vpop.f32.mrb[0].mxu0
  %v8855 = vpop.f32.mrb[0].mxu0
  %v8856 = vadd.f32 %v8519, %v8855
  %v8857 = vpop.f32.mrb[0].mxu0
  %8858 = vmatprep.mubr.bf16.mxu0 0
  %8859 = vmatmul.mubr.bf16.gmra.mrb[0].mxu0 %v8140
  %v8860 = vpop.f32.mrb[0].mxu0
  %v8861 = vadd.f32 %v8524, %v8860
  %v8862 = vpop.f32.mrb[0].mxu0
  %v8863 = vpop.f32.mrb[0].mxu0
  %v8864 = vadd.f32 %v8527, %v8863
  %v8865 = vpop.f32.mrb[0].mxu0
  %8866 = vmatprep.mubr.bf16.mxu0 0
  %8867 = vmatmul.mubr.bf16.gmra.mrb[0].mxu0 %v8141
  %v8868 = vpop.f32.mrb[0].mxu0
  %v8869 = vadd.f32 %v8532, %v8868
  %v8870 = vpop.f32.mrb[0].mxu0
  %v8871 = vpop.f32.mrb[0].mxu0
  %v8872 = vadd.f32 %v8535, %v8871
  %v8873 = vpop.f32.mrb[0].mxu0
  %8874 = vmatprep.mubr.bf16.mxu0 0
  %8875 = vmatmul.mubr.bf16.gmra.mrb[0].mxu0 %v8142
  %v8876 = vpop.f32.mrb[0].mxu0
  %v8877 = vadd.f32 %v8540, %v8876
  %v8878 = vpop.f32.mrb[0].mxu0
  %v8879 = vpop.f32.mrb[0].mxu0
  %v8880 = vadd.f32 %v8543, %v8879
  %v8881 = vpop.f32.mrb[0].mxu0
  %8882 = vdwg.mxu0
  %s8883 = scalar_lea.vmem [#allocation2], 64
  %v8884 = vld [vmem:[%s8883] sm:$0xff]
  %v8885 = vld [vmem:[%s8883 + $0x8] sm:$0xff]
  %v8886 = vld [vmem:[%s8883 + $0x10] sm:$0xff]
  %v8887 = vld [vmem:[%s8883 + $0x18] sm:$0xff]
  %v8888 = vld [vmem:[%s8883 + $0x20] sm:$0xff]
  %v8889 = vld [vmem:[%s8883 + $0x28] sm:$0xff]
  %v8890 = vld [vmem:[%s8883 + $0x30] sm:$0xff]
  %v8891 = vld [vmem:[%s8883 + $0x38] sm:$0xff]
  %v8892 = vld [vmem:[%s8883 + $0x40] sm:$0xff]
  %v8893 = vld [vmem:[%s8883 + $0x48] sm:$0xff]
  %v8894 = vld [vmem:[%s8883 + $0x50] sm:$0xff]
  %v8895 = vld [vmem:[%s8883 + $0x58] sm:$0xff]
  %v8896 = vld [vmem:[%s8883 + $0x60] sm:$0xff]
  %v8897 = vld [vmem:[%s8883 + $0x68] sm:$0xff]
  %v8898 = vld [vmem:[%s8883 + $0x70] sm:$0xff]
  %v8899 = vld [vmem:[%s8883 + $0x78] sm:$0xff]
  %v8900 = vld [vmem:[%s8883 + $0x80] sm:$0xff]
  %v8901 = vld [vmem:[%s8883 + $0x88] sm:$0xff]
  %v8902 = vld [vmem:[%s8883 + $0x90] sm:$0xff]
  %v8903 = vld [vmem:[%s8883 + $0x98] sm:$0xff]
  %v8904 = vld [vmem:[%s8883 + $0xa0] sm:$0xff]
  %v8905 = vld [vmem:[%s8883 + $0xa8] sm:$0xff]
  %v8906 = vld [vmem:[%s8883 + $0xb0] sm:$0xff]
  %v8907 = vld [vmem:[%s8883 + $0xb8] sm:$0xff]
  %v8908 = vld [vmem:[%s8883 + $0xc0] sm:$0xff]
  %v8909 = vld [vmem:[%s8883 + $0xc8] sm:$0xff]
  %v8910 = vld [vmem:[%s8883 + $0xd0] sm:$0xff]
  %v8911 = vld [vmem:[%s8883 + $0xd8] sm:$0xff]
  %v8912 = vld [vmem:[%s8883 + $0xe0] sm:$0xff]
  %v8913 = vld [vmem:[%s8883 + $0xe8] sm:$0xff]
  %v8914 = vld [vmem:[%s8883 + $0xf0] sm:$0xff]
  %v8915 = vld [vmem:[%s8883 + $0xf8] sm:$0xff]
  %s8916 = scalar_lea.vmem %s3, 128
  %v8917 = vld [vmem:[%s8916] sm:$0xf]
  %v8918 = vld [vmem:[%s8916 + $0x4] sm:$0xf]
  %v8919 = vld [vmem:[%s8916 + $0x8] sm:$0xf]
  %v8920 = vld [vmem:[%s8916 + $0xc] sm:$0xf]
  %v8921 = vld [vmem:[%s8916 + $0x10] sm:$0xf]
  %v8922 = vld [vmem:[%s8916 + $0x14] sm:$0xf]
  %v8923 = vld [vmem:[%s8916 + $0x18] sm:$0xf]
  %v8924 = vld [vmem:[%s8916 + $0x1c] sm:$0xf]
  %v8925 = vld [vmem:[%s8916 + $0x20] sm:$0xf]
  %v8926 = vld [vmem:[%s8916 + $0x24] sm:$0xf]
  %v8927 = vld [vmem:[%s8916 + $0x28] sm:$0xf]
  %v8928 = vld [vmem:[%s8916 + $0x2c] sm:$0xf]
  %v8929 = vld [vmem:[%s8916 + $0x30] sm:$0xf]
  %v8930 = vld [vmem:[%s8916 + $0x34] sm:$0xf]
  %v8931 = vld [vmem:[%s8916 + $0x38] sm:$0xf]
  %v8932 = vld [vmem:[%s8916 + $0x3c] sm:$0xf]
  %v8949 = vunpack.c.l.b16 %v8917
  %v8950 = vunpack.c.l.b16 %v8918
  %v8951 = vunpack.c.l.b16 %v8919
  %v8952 = vunpack.c.l.b16 %v8920
  %v8953 = vunpack.c.l.b16 %v8921
  %v8954 = vunpack.c.l.b16 %v8922
  %v8955 = vunpack.c.l.b16 %v8923
  %v8956 = vunpack.c.l.b16 %v8924
  %v8957 = vunpack.c.l.b16 %v8925
  %v8958 = vunpack.c.l.b16 %v8926
  %v8959 = vunpack.c.l.b16 %v8927
  %v8960 = vunpack.c.l.b16 %v8928
  %v8961 = vunpack.c.l.b16 %v8929
  %v8962 = vunpack.c.l.b16 %v8930
  %v8963 = vunpack.c.l.b16 %v8931
  %v8964 = vunpack.c.l.b16 %v8932
  %v8965 = vpack.c.b16 %v8950, %v8949
  %v8966 = vpack.c.b16 %v8952, %v8951
  %v8967 = vpack.c.b16 %v8954, %v8953
  %v8968 = vpack.c.b16 %v8956, %v8955
  %v8969 = vpack.c.b16 %v8958, %v8957
  %v8970 = vpack.c.b16 %v8960, %v8959
  %v8971 = vpack.c.b16 %v8962, %v8961
  %v8972 = vpack.c.b16 %v8964, %v8963
  %8981 = vmatprep.subr.bf16.mxu0 0
  %8982 = vmatpush1.bf16.msra.mxu0 %v8965
  %8983 = vmatprep.subr.bf16.mxu0 0
  %8984 = vmatpush1.bf16.msra.mxu0 %v8966
  %8985 = vmatprep.subr.bf16.mxu0 0
  %8986 = vmatpush1.bf16.msra.mxu0 %v8967
  %8987 = vmatprep.subr.bf16.mxu0 0
  %8988 = vmatpush1.bf16.msra.mxu0 %v8968
  %8989 = vmatprep.subr.bf16.mxu0 0
  %8990 = vmatpush1.bf16.msra.mxu0 %v8969
  %8991 = vmatprep.subr.bf16.mxu0 0
  %8992 = vmatpush1.bf16.msra.mxu0 %v8970
  %8993 = vmatprep.subr.bf16.mxu0 0
  %8994 = vmatpush1.bf16.msra.mxu0 %v8971
  %8995 = vmatprep.subr.bf16.mxu0 0
  %8996 = vmatpush1.bf16.msra.mxu0 %v8972
  %8997 = vmatprep.subr.bf16.mxu0 0
  %8998 = vmatpush1.bf16.msra.mxu0 0
  %8999 = vmatprep.subr.bf16.mxu0 0
  %9000 = vmatpush1.bf16.msra.mxu0 0
  %9001 = vmatprep.subr.bf16.mxu0 0
  %9002 = vmatpush1.bf16.msra.mxu0 0
  %9003 = vmatprep.subr.bf16.mxu0 0
  %9004 = vmatpush1.bf16.msra.mxu0 0
  %9005 = vmatprep.subr.bf16.mxu0 0
  %9006 = vmatpush1.bf16.msra.mxu0 0
  %9007 = vmatprep.subr.bf16.mxu0 0
  %9008 = vmatpush1.bf16.msra.mxu0 0
  %9009 = vmatprep.subr.bf16.mxu0 0
  %9010 = vmatpush1.bf16.msra.mxu0 0
  %9011 = vmatprep.subr.bf16.mxu0 0
  %9012 = vmatpush1.bf16.msra.mxu0 0
  %9013 = vmatprep.mubr.bf16.mxu0 0
  %9014 = vmatmul.mubr.bf16.gmra.mrb[0].mxu0 %v8884
  %v9015 = vpop.f32.mrb[0].mxu0
  %v9016 = vadd.f32 0.0, %v9015
  %v9017 = vpop.f32.mrb[0].mxu0
  %v9018 = vpop.f32.mrb[0].mxu0
  %v9019 = vadd.f32 0.0, %v9018
  %v9020 = vpop.f32.mrb[0].mxu0
  %9021 = vmatprep.mubr.bf16.mxu0 0
  %9022 = vmatmul.mubr.bf16.gmra.mrb[0].mxu0 %v8885
  %v9023 = vpop.f32.mrb[0].mxu0
  %v9024 = vadd.f32 0.0, %v9023
  %v9025 = vpop.f32.mrb[0].mxu0
  %v9026 = vpop.f32.mrb[0].mxu0
  %v9027 = vadd.f32 0.0, %v9026
  %v9028 = vpop.f32.mrb[0].mxu0
  %9029 = vmatprep.mubr.bf16.mxu0 0
  %9030 = vmatmul.mubr.bf16.gmra.mrb[0].mxu0 %v8886
  %v9031 = vpop.f32.mrb[0].mxu0
  %v9032 = vadd.f32 0.0, %v9031
  %v9033 = vpop.f32.mrb[0].mxu0
  %v9034 = vpop.f32.mrb[0].mxu0
  %v9035 = vadd.f32 0.0, %v9034
  %v9036 = vpop.f32.mrb[0].mxu0
  %9037 = vmatprep.mubr.bf16.mxu0 0
  %9038 = vmatmul.mubr.bf16.gmra.mrb[0].mxu0 %v8887
  %v9039 = vpop.f32.mrb[0].mxu0
  %v9040 = vadd.f32 0.0, %v9039
  %v9041 = vpop.f32.mrb[0].mxu0
  %v9042 = vpop.f32.mrb[0].mxu0
  %v9043 = vadd.f32 0.0, %v9042
  %v9044 = vpop.f32.mrb[0].mxu0
  %9045 = vmatprep.mubr.bf16.mxu0 0
  %9046 = vmatmul.mubr.bf16.gmra.mrb[0].mxu0 %v8888
  %v9047 = vpop.f32.mrb[0].mxu0
  %v9048 = vadd.f32 0.0, %v9047
  %v9049 = vpop.f32.mrb[0].mxu0
  %v9050 = vpop.f32.mrb[0].mxu0
  %v9051 = vadd.f32 0.0, %v9050
  %v9052 = vpop.f32.mrb[0].mxu0
  %9053 = vmatprep.mubr.bf16.mxu0 0
  %9054 = vmatmul.mubr.bf16.gmra.mrb[0].mxu0 %v8889
  %v9055 = vpop.f32.mrb[0].mxu0
  %v9056 = vadd.f32 0.0, %v9055
  %v9057 = vpop.f32.mrb[0].mxu0
  %v9058 = vpop.f32.mrb[0].mxu0
  %v9059 = vadd.f32 0.0, %v9058
  %v9060 = vpop.f32.mrb[0].mxu0
  %9061 = vmatprep.mubr.bf16.mxu0 0
  %9062 = vmatmul.mubr.bf16.gmra.mrb[0].mxu0 %v8890
  %v9063 = vpop.f32.mrb[0].mxu0
  %v9064 = vadd.f32 0.0, %v9063
  %v9065 = vpop.f32.mrb[0].mxu0
  %v9066 = vpop.f32.mrb[0].mxu0
  %v9067 = vadd.f32 0.0, %v9066
  %v9068 = vpop.f32.mrb[0].mxu0
  %9069 = vmatprep.mubr.bf16.mxu0 0
  %9070 = vmatmul.mubr.bf16.gmra.mrb[0].mxu0 %v8891
  %v9071 = vpop.f32.mrb[0].mxu0
  %v9072 = vadd.f32 0.0, %v9071
  %v9073 = vpop.f32.mrb[0].mxu0
  %v9074 = vpop.f32.mrb[0].mxu0
  %v9075 = vadd.f32 0.0, %v9074
  %v9076 = vpop.f32.mrb[0].mxu0
  %9077 = vmatprep.mubr.bf16.mxu0 0
  %9078 = vmatmul.mubr.bf16.gmra.mrb[0].mxu0 %v8892
  %v9079 = vpop.f32.mrb[0].mxu0
  %v9080 = vadd.f32 0.0, %v9079
  %v9081 = vpop.f32.mrb[0].mxu0
  %v9082 = vpop.f32.mrb[0].mxu0
  %v9083 = vadd.f32 0.0, %v9082
  %v9084 = vpop.f32.mrb[0].mxu0
  %9085 = vmatprep.mubr.bf16.mxu0 0
  %9086 = vmatmul.mubr.bf16.gmra.mrb[0].mxu0 %v8893
  %v9087 = vpop.f32.mrb[0].mxu0
  %v9088 = vadd.f32 0.0, %v9087
  %v9089 = vpop.f32.mrb[0].mxu0
  %v9090 = vpop.f32.mrb[0].mxu0
  %v9091 = vadd.f32 0.0, %v9090
  %v9092 = vpop.f32.mrb[0].mxu0
  %9093 = vmatprep.mubr.bf16.mxu0 0
  %9094 = vmatmul.mubr.bf16.gmra.mrb[0].mxu0 %v8894
  %v9095 = vpop.f32.mrb[0].mxu0
  %v9096 = vadd.f32 0.0, %v9095
  %v9097 = vpop.f32.mrb[0].mxu0
  %v9098 = vpop.f32.mrb[0].mxu0
  %v9099 = vadd.f32 0.0, %v9098
  %v9100 = vpop.f32.mrb[0].mxu0
  %9101 = vmatprep.mubr.bf16.mxu0 0
  %9102 = vmatmul.mubr.bf16.gmra.mrb[0].mxu0 %v8895
  %v9103 = vpop.f32.mrb[0].mxu0
  %v9104 = vadd.f32 0.0, %v9103
  %v9105 = vpop.f32.mrb[0].mxu0
  %v9106 = vpop.f32.mrb[0].mxu0
  %v9107 = vadd.f32 0.0, %v9106
  %v9108 = vpop.f32.mrb[0].mxu0
  %9109 = vmatprep.mubr.bf16.mxu0 0
  %9110 = vmatmul.mubr.bf16.gmra.mrb[0].mxu0 %v8896
  %v9111 = vpop.f32.mrb[0].mxu0
  %v9112 = vadd.f32 0.0, %v9111
  %v9113 = vpop.f32.mrb[0].mxu0
  %v9114 = vpop.f32.mrb[0].mxu0
  %v9115 = vadd.f32 0.0, %v9114
  %v9116 = vpop.f32.mrb[0].mxu0
  %9117 = vmatprep.mubr.bf16.mxu0 0
  %9118 = vmatmul.mubr.bf16.gmra.mrb[0].mxu0 %v8897
  %v9119 = vpop.f32.mrb[0].mxu0
  %v9120 = vadd.f32 0.0, %v9119
  %v9121 = vpop.f32.mrb[0].mxu0
  %v9122 = vpop.f32.mrb[0].mxu0
  %v9123 = vadd.f32 0.0, %v9122
  %v9124 = vpop.f32.mrb[0].mxu0
  %9125 = vmatprep.mubr.bf16.mxu0 0
  %9126 = vmatmul.mubr.bf16.gmra.mrb[0].mxu0 %v8898
  %v9127 = vpop.f32.mrb[0].mxu0
  %v9128 = vadd.f32 0.0, %v9127
  %v9129 = vpop.f32.mrb[0].mxu0
  %v9130 = vpop.f32.mrb[0].mxu0
  %v9131 = vadd.f32 0.0, %v9130
  %v9132 = vpop.f32.mrb[0].mxu0
  %9133 = vmatprep.mubr.bf16.mxu0 0
  %9134 = vmatmul.mubr.bf16.gmra.mrb[0].mxu0 %v8899
  %v9135 = vpop.f32.mrb[0].mxu0
  %v9136 = vadd.f32 0.0, %v9135
  %v9137 = vpop.f32.mrb[0].mxu0
  %v9138 = vpop.f32.mrb[0].mxu0
  %v9139 = vadd.f32 0.0, %v9138
  %v9140 = vpop.f32.mrb[0].mxu0
  %9141 = vmatprep.mubr.bf16.mxu0 0
  %9142 = vmatmul.mubr.bf16.gmra.mrb[0].mxu0 %v8900
  %v9143 = vpop.f32.mrb[0].mxu0
  %v9144 = vadd.f32 0.0, %v9143
  %v9145 = vpop.f32.mrb[0].mxu0
  %v9146 = vpop.f32.mrb[0].mxu0
  %v9147 = vadd.f32 0.0, %v9146
  %v9148 = vpop.f32.mrb[0].mxu0
  %9149 = vmatprep.mubr.bf16.mxu0 0
  %9150 = vmatmul.mubr.bf16.gmra.mrb[0].mxu0 %v8901
  %v9151 = vpop.f32.mrb[0].mxu0
  %v9152 = vadd.f32 0.0, %v9151
  %v9153 = vpop.f32.mrb[0].mxu0
  %v9154 = vpop.f32.mrb[0].mxu0
  %v9155 = vadd.f32 0.0, %v9154
  %v9156 = vpop.f32.mrb[0].mxu0
  %9157 = vmatprep.mubr.bf16.mxu0 0
  %9158 = vmatmul.mubr.bf16.gmra.mrb[0].mxu0 %v8902
  %v9159 = vpop.f32.mrb[0].mxu0
  %v9160 = vadd.f32 0.0, %v9159
  %v9161 = vpop.f32.mrb[0].mxu0
  %v9162 = vpop.f32.mrb[0].mxu0
  %v9163 = vadd.f32 0.0, %v9162
  %v9164 = vpop.f32.mrb[0].mxu0
  %9165 = vmatprep.mubr.bf16.mxu0 0
  %9166 = vmatmul.mubr.bf16.gmra.mrb[0].mxu0 %v8903
  %v9167 = vpop.f32.mrb[0].mxu0
  %v9168 = vadd.f32 0.0, %v9167
  %v9169 = vpop.f32.mrb[0].mxu0
  %v9170 = vpop.f32.mrb[0].mxu0
  %v9171 = vadd.f32 0.0, %v9170
  %v9172 = vpop.f32.mrb[0].mxu0
  %9173 = vmatprep.mubr.bf16.mxu0 0
  %9174 = vmatmul.mubr.bf16.gmra.mrb[0].mxu0 %v8904
  %v9175 = vpop.f32.mrb[0].mxu0
  %v9176 = vadd.f32 0.0, %v9175
  %v9177 = vpop.f32.mrb[0].mxu0
  %v9178 = vpop.f32.mrb[0].mxu0
  %v9179 = vadd.f32 0.0, %v9178
  %v9180 = vpop.f32.mrb[0].mxu0
  %9181 = vmatprep.mubr.bf16.mxu0 0
  %9182 = vmatmul.mubr.bf16.gmra.mrb[0].mxu0 %v8905
  %v9183 = vpop.f32.mrb[0].mxu0
  %v9184 = vadd.f32 0.0, %v9183
  %v9185 = vpop.f32.mrb[0].mxu0
  %v9186 = vpop.f32.mrb[0].mxu0
  %v9187 = vadd.f32 0.0, %v9186
  %v9188 = vpop.f32.mrb[0].mxu0
  %9189 = vmatprep.mubr.bf16.mxu0 0
  %9190 = vmatmul.mubr.bf16.gmra.mrb[0].mxu0 %v8906
  %v9191 = vpop.f32.mrb[0].mxu0
  %v9192 = vadd.f32 0.0, %v9191
  %v9193 = vpop.f32.mrb[0].mxu0
  %v9194 = vpop.f32.mrb[0].mxu0
  %v9195 = vadd.f32 0.0, %v9194
  %v9196 = vpop.f32.mrb[0].mxu0
  %9197 = vmatprep.mubr.bf16.mxu0 0
  %9198 = vmatmul.mubr.bf16.gmra.mrb[0].mxu0 %v8907
  %v9199 = vpop.f32.mrb[0].mxu0
  %v9200 = vadd.f32 0.0, %v9199
  %v9201 = vpop.f32.mrb[0].mxu0
  %v9202 = vpop.f32.mrb[0].mxu0
  %v9203 = vadd.f32 0.0, %v9202
  %v9204 = vpop.f32.mrb[0].mxu0
  %9205 = vmatprep.mubr.bf16.mxu0 0
  %9206 = vmatmul.mubr.bf16.gmra.mrb[0].mxu0 %v8908
  %v9207 = vpop.f32.mrb[0].mxu0
  %v9208 = vadd.f32 0.0, %v9207
  %v9209 = vpop.f32.mrb[0].mxu0
  %v9210 = vpop.f32.mrb[0].mxu0
  %v9211 = vadd.f32 0.0, %v9210
  %v9212 = vpop.f32.mrb[0].mxu0
  %9213 = vmatprep.mubr.bf16.mxu0 0
  %9214 = vmatmul.mubr.bf16.gmra.mrb[0].mxu0 %v8909
  %v9215 = vpop.f32.mrb[0].mxu0
  %v9216 = vadd.f32 0.0, %v9215
  %v9217 = vpop.f32.mrb[0].mxu0
  %v9218 = vpop.f32.mrb[0].mxu0
  %v9219 = vadd.f32 0.0, %v9218
  %v9220 = vpop.f32.mrb[0].mxu0
  %9221 = vmatprep.mubr.bf16.mxu0 0
  %9222 = vmatmul.mubr.bf16.gmra.mrb[0].mxu0 %v8910
  %v9223 = vpop.f32.mrb[0].mxu0
  %v9224 = vadd.f32 0.0, %v9223
  %v9225 = vpop.f32.mrb[0].mxu0
  %v9226 = vpop.f32.mrb[0].mxu0
  %v9227 = vadd.f32 0.0, %v9226
  %v9228 = vpop.f32.mrb[0].mxu0
  %9229 = vmatprep.mubr.bf16.mxu0 0
  %9230 = vmatmul.mubr.bf16.gmra.mrb[0].mxu0 %v8911
  %v9231 = vpop.f32.mrb[0].mxu0
  %v9232 = vadd.f32 0.0, %v9231
  %v9233 = vpop.f32.mrb[0].mxu0
  %v9234 = vpop.f32.mrb[0].mxu0
  %v9235 = vadd.f32 0.0, %v9234
  %v9236 = vpop.f32.mrb[0].mxu0
  %9237 = vmatprep.mubr.bf16.mxu0 0
  %9238 = vmatmul.mubr.bf16.gmra.mrb[0].mxu0 %v8912
  %v9239 = vpop.f32.mrb[0].mxu0
  %v9240 = vadd.f32 0.0, %v9239
  %v9241 = vpop.f32.mrb[0].mxu0
  %v9242 = vpop.f32.mrb[0].mxu0
  %v9243 = vadd.f32 0.0, %v9242
  %v9244 = vpop.f32.mrb[0].mxu0
  %9245 = vmatprep.mubr.bf16.mxu0 0
  %9246 = vmatmul.mubr.bf16.gmra.mrb[0].mxu0 %v8913
  %v9247 = vpop.f32.mrb[0].mxu0
  %v9248 = vadd.f32 0.0, %v9247
  %v9249 = vpop.f32.mrb[0].mxu0
  %v9250 = vpop.f32.mrb[0].mxu0
  %v9251 = vadd.f32 0.0, %v9250
  %v9252 = vpop.f32.mrb[0].mxu0
  %9253 = vmatprep.mubr.bf16.mxu0 0
  %9254 = vmatmul.mubr.bf16.gmra.mrb[0].mxu0 %v8914
  %v9255 = vpop.f32.mrb[0].mxu0
  %v9256 = vadd.f32 0.0, %v9255
  %v9257 = vpop.f32.mrb[0].mxu0
  %v9258 = vpop.f32.mrb[0].mxu0
  %v9259 = vadd.f32 0.0, %v9258
  %v9260 = vpop.f32.mrb[0].mxu0
  %9261 = vmatprep.mubr.bf16.mxu0 0
  %9262 = vmatmul.mubr.bf16.gmra.mrb[0].mxu0 %v8915
  %v9263 = vpop.f32.mrb[0].mxu0
  %v9264 = vadd.f32 0.0, %v9263
  %v9265 = vpop.f32.mrb[0].mxu0
  %v9266 = vpop.f32.mrb[0].mxu0
  %v9267 = vadd.f32 0.0, %v9266
  %v9268 = vpop.f32.mrb[0].mxu0
  %9269 = vdwg.mxu0
  %v9270 = vadd.f32 %v8629, %v9016
  %v9271 = vadd.f32 %v8632, %v9019
  %v9272 = vadd.f32 %v8637, %v9024
  %v9273 = vadd.f32 %v8640, %v9027
  %v9274 = vadd.f32 %v8645, %v9032
  %v9275 = vadd.f32 %v8648, %v9035
  %v9276 = vadd.f32 %v8653, %v9040
  %v9277 = vadd.f32 %v8656, %v9043
  %v9278 = vadd.f32 %v8661, %v9048
  %v9279 = vadd.f32 %v8664, %v9051
  %v9280 = vadd.f32 %v8669, %v9056
  %v9281 = vadd.f32 %v8672, %v9059
  %v9282 = vadd.f32 %v8677, %v9064
  %v9283 = vadd.f32 %v8680, %v9067
  %v9284 = vadd.f32 %v8685, %v9072
  %v9285 = vadd.f32 %v8688, %v9075
  %v9286 = vadd.f32 %v8693, %v9080
  %v9287 = vadd.f32 %v8696, %v9083
  %v9288 = vadd.f32 %v8701, %v9088
  %v9289 = vadd.f32 %v8704, %v9091
  %v9290 = vadd.f32 %v8709, %v9096
  %v9291 = vadd.f32 %v8712, %v9099
  %v9292 = vadd.f32 %v8717, %v9104
  %v9293 = vadd.f32 %v8720, %v9107
  %v9294 = vadd.f32 %v8725, %v9112
  %v9295 = vadd.f32 %v8728, %v9115
  %v9296 = vadd.f32 %v8733, %v9120
  %v9297 = vadd.f32 %v8736, %v9123
  %v9298 = vadd.f32 %v8741, %v9128
  %v9299 = vadd.f32 %v8744, %v9131
  %v9300 = vadd.f32 %v8749, %v9136
  %v9301 = vadd.f32 %v8752, %v9139
  %v9302 = vadd.f32 %v8757, %v9144
  %v9303 = vadd.f32 %v8760, %v9147
  %v9304 = vadd.f32 %v8765, %v9152
  %v9305 = vadd.f32 %v8768, %v9155
  %v9306 = vadd.f32 %v8773, %v9160
  %v9307 = vadd.f32 %v8776, %v9163
  %v9308 = vadd.f32 %v8781, %v9168
  %v9309 = vadd.f32 %v8784, %v9171
  %v9310 = vadd.f32 %v8789, %v9176
  %v9311 = vadd.f32 %v8792, %v9179
  %v9312 = vadd.f32 %v8797, %v9184
  %v9313 = vadd.f32 %v8800, %v9187
  %v9314 = vadd.f32 %v8805, %v9192
  %v9315 = vadd.f32 %v8808, %v9195
  %v9316 = vadd.f32 %v8813, %v9200
  %v9317 = vadd.f32 %v8816, %v9203
  %v9318 = vadd.f32 %v8821, %v9208
  %v9319 = vadd.f32 %v8824, %v9211
  %v9320 = vadd.f32 %v8829, %v9216
  %v9321 = vadd.f32 %v8832, %v9219
  %v9322 = vadd.f32 %v8837, %v9224
  %v9323 = vadd.f32 %v8840, %v9227
  %v9324 = vadd.f32 %v8845, %v9232
  %v9325 = vadd.f32 %v8848, %v9235
  %v9326 = vadd.f32 %v8853, %v9240
  %v9327 = vadd.f32 %v8856, %v9243
  %v9328 = vadd.f32 %v8861, %v9248
  %v9329 = vadd.f32 %v8864, %v9251
  %v9330 = vadd.f32 %v8869, %v9256
  %v9331 = vadd.f32 %v8872, %v9259
  %v9332 = vadd.f32 %v8877, %v9264
  %v9333 = vadd.f32 %v8880, %v9267
  %s9334 = scalar_lea.vmem [#allocation2], 96
  %v9335 = vld [vmem:[%s9334] sm:$0xff]
  %v9336 = vld [vmem:[%s9334 + $0x8] sm:$0xff]
  %v9337 = vld [vmem:[%s9334 + $0x10] sm:$0xff]
  %v9338 = vld [vmem:[%s9334 + $0x18] sm:$0xff]
  %v9339 = vld [vmem:[%s9334 + $0x20] sm:$0xff]
  %v9340 = vld [vmem:[%s9334 + $0x28] sm:$0xff]
  %v9341 = vld [vmem:[%s9334 + $0x30] sm:$0xff]
  %v9342 = vld [vmem:[%s9334 + $0x38] sm:$0xff]
  %v9343 = vld [vmem:[%s9334 + $0x40] sm:$0xff]
  %v9344 = vld [vmem:[%s9334 + $0x48] sm:$0xff]
  %v9345 = vld [vmem:[%s9334 + $0x50] sm:$0xff]
  %v9346 = vld [vmem:[%s9334 + $0x58] sm:$0xff]
  %v9347 = vld [vmem:[%s9334 + $0x60] sm:$0xff]
  %v9348 = vld [vmem:[%s9334 + $0x68] sm:$0xff]
  %v9349 = vld [vmem:[%s9334 + $0x70] sm:$0xff]
  %v9350 = vld [vmem:[%s9334 + $0x78] sm:$0xff]
  %v9351 = vld [vmem:[%s9334 + $0x80] sm:$0xff]
  %v9352 = vld [vmem:[%s9334 + $0x88] sm:$0xff]
  %v9353 = vld [vmem:[%s9334 + $0x90] sm:$0xff]
  %v9354 = vld [vmem:[%s9334 + $0x98] sm:$0xff]
  %v9355 = vld [vmem:[%s9334 + $0xa0] sm:$0xff]
  %v9356 = vld [vmem:[%s9334 + $0xa8] sm:$0xff]
  %v9357 = vld [vmem:[%s9334 + $0xb0] sm:$0xff]
  %v9358 = vld [vmem:[%s9334 + $0xb8] sm:$0xff]
  %v9359 = vld [vmem:[%s9334 + $0xc0] sm:$0xff]
  %v9360 = vld [vmem:[%s9334 + $0xc8] sm:$0xff]
  %v9361 = vld [vmem:[%s9334 + $0xd0] sm:$0xff]
  %v9362 = vld [vmem:[%s9334 + $0xd8] sm:$0xff]
  %v9363 = vld [vmem:[%s9334 + $0xe0] sm:$0xff]
  %v9364 = vld [vmem:[%s9334 + $0xe8] sm:$0xff]
  %v9365 = vld [vmem:[%s9334 + $0xf0] sm:$0xff]
  %v9366 = vld [vmem:[%s9334 + $0xf8] sm:$0xff]
  %s9367 = scalar_lea.vmem %s3, 192
  %v9368 = vld [vmem:[%s9367] sm:$0xf]
  %v9369 = vld [vmem:[%s9367 + $0x4] sm:$0xf]
  %v9370 = vld [vmem:[%s9367 + $0x8] sm:$0xf]
  %v9371 = vld [vmem:[%s9367 + $0xc] sm:$0xf]
  %v9372 = vld [vmem:[%s9367 + $0x10] sm:$0xf]
  %v9373 = vld [vmem:[%s9367 + $0x14] sm:$0xf]
  %v9374 = vld [vmem:[%s9367 + $0x18] sm:$0xf]
  %v9375 = vld [vmem:[%s9367 + $0x1c] sm:$0xf]
  %v9376 = vld [vmem:[%s9367 + $0x20] sm:$0xf]
  %v9377 = vld [vmem:[%s9367 + $0x24] sm:$0xf]
  %v9378 = vld [vmem:[%s9367 + $0x28] sm:$0xf]
  %v9379 = vld [vmem:[%s9367 + $0x2c] sm:$0xf]
  %v9380 = vld [vmem:[%s9367 + $0x30] sm:$0xf]
  %v9381 = vld [vmem:[%s9367 + $0x34] sm:$0xf]
  %v9382 = vld [vmem:[%s9367 + $0x38] sm:$0xf]
  %v9383 = vld [vmem:[%s9367 + $0x3c] sm:$0xf]
  %v9400 = vunpack.c.l.b16 %v9368
  %v9401 = vunpack.c.l.b16 %v9369
  %v9402 = vunpack.c.l.b16 %v9370
  %v9403 = vunpack.c.l.b16 %v9371
  %v9404 = vunpack.c.l.b16 %v9372
  %v9405 = vunpack.c.l.b16 %v9373
  %v9406 = vunpack.c.l.b16 %v9374
  %v9407 = vunpack.c.l.b16 %v9375
  %v9408 = vunpack.c.l.b16 %v9376
  %v9409 = vunpack.c.l.b16 %v9377
  %v9410 = vunpack.c.l.b16 %v9378
  %v9411 = vunpack.c.l.b16 %v9379
  %v9412 = vunpack.c.l.b16 %v9380
  %v9413 = vunpack.c.l.b16 %v9381
  %v9414 = vunpack.c.l.b16 %v9382
  %v9415 = vunpack.c.l.b16 %v9383
  %v9416 = vpack.c.b16 %v9401, %v9400
  %v9417 = vpack.c.b16 %v9403, %v9402
  %v9418 = vpack.c.b16 %v9405, %v9404
  %v9419 = vpack.c.b16 %v9407, %v9406
  %v9420 = vpack.c.b16 %v9409, %v9408
  %v9421 = vpack.c.b16 %v9411, %v9410
  %v9422 = vpack.c.b16 %v9413, %v9412
  %v9423 = vpack.c.b16 %v9415, %v9414
  %9432 = vmatprep.subr.bf16.mxu0 0
  %9433 = vmatpush1.bf16.msra.mxu0 %v9416
  %9434 = vmatprep.subr.bf16.mxu0 0
  %9435 = vmatpush1.bf16.msra.mxu0 %v9417
  %9436 = vmatprep.subr.bf16.mxu0 0
  %9437 = vmatpush1.bf16.msra.mxu0 %v9418
  %9438 = vmatprep.subr.bf16.mxu0 0
  %9439 = vmatpush1.bf16.msra.mxu0 %v9419
  %9440 = vmatprep.subr.bf16.mxu0 0
  %9441 = vmatpush1.bf16.msra.mxu0 %v9420
  %9442 = vmatprep.subr.bf16.mxu0 0
  %9443 = vmatpush1.bf16.msra.mxu0 %v9421
  %9444 = vmatprep.subr.bf16.mxu0 0
  %9445 = vmatpush1.bf16.msra.mxu0 %v9422
  %9446 = vmatprep.subr.bf16.mxu0 0
  %9447 = vmatpush1.bf16.msra.mxu0 %v9423
  %9448 = vmatprep.subr.bf16.mxu0 0
  %9449 = vmatpush1.bf16.msra.mxu0 0
  %9450 = vmatprep.subr.bf16.mxu0 0
  %9451 = vmatpush1.bf16.msra.mxu0 0
  %9452 = vmatprep.subr.bf16.mxu0 0
  %9453 = vmatpush1.bf16.msra.mxu0 0
  %9454 = vmatprep.subr.bf16.mxu0 0
  %9455 = vmatpush1.bf16.msra.mxu0 0
  %9456 = vmatprep.subr.bf16.mxu0 0
  %9457 = vmatpush1.bf16.msra.mxu0 0
  %9458 = vmatprep.subr.bf16.mxu0 0
  %9459 = vmatpush1.bf16.msra.mxu0 0
  %9460 = vmatprep.subr.bf16.mxu0 0
  %9461 = vmatpush1.bf16.msra.mxu0 0
  %9462 = vmatprep.subr.bf16.mxu0 0
  %9463 = vmatpush1.bf16.msra.mxu0 0
  %9464 = vmatprep.mubr.bf16.mxu0 0
  %9465 = vmatmul.mubr.bf16.gmra.mrb[0].mxu0 %v9335
  %v9466 = vpop.f32.mrb[0].mxu0
  %v9467 = vadd.f32 0.0, %v9466
  %v9468 = vpop.f32.mrb[0].mxu0
  %v9469 = vpop.f32.mrb[0].mxu0
  %v9470 = vadd.f32 0.0, %v9469
  %v9471 = vpop.f32.mrb[0].mxu0
  %9472 = vmatprep.mubr.bf16.mxu0 0
  %9473 = vmatmul.mubr.bf16.gmra.mrb[0].mxu0 %v9336
  %v9474 = vpop.f32.mrb[0].mxu0
  %v9475 = vadd.f32 0.0, %v9474
  %v9476 = vpop.f32.mrb[0].mxu0
  %v9477 = vpop.f32.mrb[0].mxu0
  %v9478 = vadd.f32 0.0, %v9477
  %v9479 = vpop.f32.mrb[0].mxu0
  %9480 = vmatprep.mubr.bf16.mxu0 0
  %9481 = vmatmul.mubr.bf16.gmra.mrb[0].mxu0 %v9337
  %v9482 = vpop.f32.mrb[0].mxu0
  %v9483 = vadd.f32 0.0, %v9482
  %v9484 = vpop.f32.mrb[0].mxu0
  %v9485 = vpop.f32.mrb[0].mxu0
  %v9486 = vadd.f32 0.0, %v9485
  %v9487 = vpop.f32.mrb[0].mxu0
  %9488 = vmatprep.mubr.bf16.mxu0 0
  %9489 = vmatmul.mubr.bf16.gmra.mrb[0].mxu0 %v9338
  %v9490 = vpop.f32.mrb[0].mxu0
  %v9491 = vadd.f32 0.0, %v9490
  %v9492 = vpop.f32.mrb[0].mxu0
  %v9493 = vpop.f32.mrb[0].mxu0
  %v9494 = vadd.f32 0.0, %v9493
  %v9495 = vpop.f32.mrb[0].mxu0
  %9496 = vmatprep.mubr.bf16.mxu0 0
  %9497 = vmatmul.mubr.bf16.gmra.mrb[0].mxu0 %v9339
  %v9498 = vpop.f32.mrb[0].mxu0
  %v9499 = vadd.f32 0.0, %v9498
  %v9500 = vpop.f32.mrb[0].mxu0
  %v9501 = vpop.f32.mrb[0].mxu0
  %v9502 = vadd.f32 0.0, %v9501
  %v9503 = vpop.f32.mrb[0].mxu0
  %9504 = vmatprep.mubr.bf16.mxu0 0
  %9505 = vmatmul.mubr.bf16.gmra.mrb[0].mxu0 %v9340
  %v9506 = vpop.f32.mrb[0].mxu0
  %v9507 = vadd.f32 0.0, %v9506
  %v9508 = vpop.f32.mrb[0].mxu0
  %v9509 = vpop.f32.mrb[0].mxu0
  %v9510 = vadd.f32 0.0, %v9509
  %v9511 = vpop.f32.mrb[0].mxu0
  %9512 = vmatprep.mubr.bf16.mxu0 0
  %9513 = vmatmul.mubr.bf16.gmra.mrb[0].mxu0 %v9341
  %v9514 = vpop.f32.mrb[0].mxu0
  %v9515 = vadd.f32 0.0, %v9514
  %v9516 = vpop.f32.mrb[0].mxu0
  %v9517 = vpop.f32.mrb[0].mxu0
  %v9518 = vadd.f32 0.0, %v9517
  %v9519 = vpop.f32.mrb[0].mxu0
  %9520 = vmatprep.mubr.bf16.mxu0 0
  %9521 = vmatmul.mubr.bf16.gmra.mrb[0].mxu0 %v9342
  %v9522 = vpop.f32.mrb[0].mxu0
  %v9523 = vadd.f32 0.0, %v9522
  %v9524 = vpop.f32.mrb[0].mxu0
  %v9525 = vpop.f32.mrb[0].mxu0
  %v9526 = vadd.f32 0.0, %v9525
  %v9527 = vpop.f32.mrb[0].mxu0
  %9528 = vmatprep.mubr.bf16.mxu0 0
  %9529 = vmatmul.mubr.bf16.gmra.mrb[0].mxu0 %v9343
  %v9530 = vpop.f32.mrb[0].mxu0
  %v9531 = vadd.f32 0.0, %v9530
  %v9532 = vpop.f32.mrb[0].mxu0
  %v9533 = vpop.f32.mrb[0].mxu0
  %v9534 = vadd.f32 0.0, %v9533
  %v9535 = vpop.f32.mrb[0].mxu0
  %9536 = vmatprep.mubr.bf16.mxu0 0
  %9537 = vmatmul.mubr.bf16.gmra.mrb[0].mxu0 %v9344
  %v9538 = vpop.f32.mrb[0].mxu0
  %v9539 = vadd.f32 0.0, %v9538
  %v9540 = vpop.f32.mrb[0].mxu0
  %v9541 = vpop.f32.mrb[0].mxu0
  %v9542 = vadd.f32 0.0, %v9541
  %v9543 = vpop.f32.mrb[0].mxu0
  %9544 = vmatprep.mubr.bf16.mxu0 0
  %9545 = vmatmul.mubr.bf16.gmra.mrb[0].mxu0 %v9345
  %v9546 = vpop.f32.mrb[0].mxu0
  %v9547 = vadd.f32 0.0, %v9546
  %v9548 = vpop.f32.mrb[0].mxu0
  %v9549 = vpop.f32.mrb[0].mxu0
  %v9550 = vadd.f32 0.0, %v9549
  %v9551 = vpop.f32.mrb[0].mxu0
  %9552 = vmatprep.mubr.bf16.mxu0 0
  %9553 = vmatmul.mubr.bf16.gmra.mrb[0].mxu0 %v9346
  %v9554 = vpop.f32.mrb[0].mxu0
  %v9555 = vadd.f32 0.0, %v9554
  %v9556 = vpop.f32.mrb[0].mxu0
  %v9557 = vpop.f32.mrb[0].mxu0
  %v9558 = vadd.f32 0.0, %v9557
  %v9559 = vpop.f32.mrb[0].mxu0
  %9560 = vmatprep.mubr.bf16.mxu0 0
  %9561 = vmatmul.mubr.bf16.gmra.mrb[0].mxu0 %v9347
  %v9562 = vpop.f32.mrb[0].mxu0
  %v9563 = vadd.f32 0.0, %v9562
  %v9564 = vpop.f32.mrb[0].mxu0
  %v9565 = vpop.f32.mrb[0].mxu0
  %v9566 = vadd.f32 0.0, %v9565
  %v9567 = vpop.f32.mrb[0].mxu0
  %9568 = vmatprep.mubr.bf16.mxu0 0
  %9569 = vmatmul.mubr.bf16.gmra.mrb[0].mxu0 %v9348
  %v9570 = vpop.f32.mrb[0].mxu0
  %v9571 = vadd.f32 0.0, %v9570
  %v9572 = vpop.f32.mrb[0].mxu0
  %v9573 = vpop.f32.mrb[0].mxu0
  %v9574 = vadd.f32 0.0, %v9573
  %v9575 = vpop.f32.mrb[0].mxu0
  %9576 = vmatprep.mubr.bf16.mxu0 0
  %9577 = vmatmul.mubr.bf16.gmra.mrb[0].mxu0 %v9349
  %v9578 = vpop.f32.mrb[0].mxu0
  %v9579 = vadd.f32 0.0, %v9578
  %v9580 = vpop.f32.mrb[0].mxu0
  %v9581 = vpop.f32.mrb[0].mxu0
  %v9582 = vadd.f32 0.0, %v9581
  %v9583 = vpop.f32.mrb[0].mxu0
  %9584 = vmatprep.mubr.bf16.mxu0 0
  %9585 = vmatmul.mubr.bf16.gmra.mrb[0].mxu0 %v9350
  %v9586 = vpop.f32.mrb[0].mxu0
  %v9587 = vadd.f32 0.0, %v9586
  %v9588 = vpop.f32.mrb[0].mxu0
  %v9589 = vpop.f32.mrb[0].mxu0
  %v9590 = vadd.f32 0.0, %v9589
  %v9591 = vpop.f32.mrb[0].mxu0
  %9592 = vmatprep.mubr.bf16.mxu0 0
  %9593 = vmatmul.mubr.bf16.gmra.mrb[0].mxu0 %v9351
  %v9594 = vpop.f32.mrb[0].mxu0
  %v9595 = vadd.f32 0.0, %v9594
  %v9596 = vpop.f32.mrb[0].mxu0
  %v9597 = vpop.f32.mrb[0].mxu0
  %v9598 = vadd.f32 0.0, %v9597
  %v9599 = vpop.f32.mrb[0].mxu0
  %9600 = vmatprep.mubr.bf16.mxu0 0
  %9601 = vmatmul.mubr.bf16.gmra.mrb[0].mxu0 %v9352
  %v9602 = vpop.f32.mrb[0].mxu0
  %v9603 = vadd.f32 0.0, %v9602
  %v9604 = vpop.f32.mrb[0].mxu0
  %v9605 = vpop.f32.mrb[0].mxu0
  %v9606 = vadd.f32 0.0, %v9605
  %v9607 = vpop.f32.mrb[0].mxu0
  %9608 = vmatprep.mubr.bf16.mxu0 0
  %9609 = vmatmul.mubr.bf16.gmra.mrb[0].mxu0 %v9353
  %v9610 = vpop.f32.mrb[0].mxu0
  %v9611 = vadd.f32 0.0, %v9610
  %v9612 = vpop.f32.mrb[0].mxu0
  %v9613 = vpop.f32.mrb[0].mxu0
  %v9614 = vadd.f32 0.0, %v9613
  %v9615 = vpop.f32.mrb[0].mxu0
  %9616 = vmatprep.mubr.bf16.mxu0 0
  %9617 = vmatmul.mubr.bf16.gmra.mrb[0].mxu0 %v9354
  %v9618 = vpop.f32.mrb[0].mxu0
  %v9619 = vadd.f32 0.0, %v9618
  %v9620 = vpop.f32.mrb[0].mxu0
  %v9621 = vpop.f32.mrb[0].mxu0
  %v9622 = vadd.f32 0.0, %v9621
  %v9623 = vpop.f32.mrb[0].mxu0
  %9624 = vmatprep.mubr.bf16.mxu0 0
  %9625 = vmatmul.mubr.bf16.gmra.mrb[0].mxu0 %v9355
  %v9626 = vpop.f32.mrb[0].mxu0
  %v9627 = vadd.f32 0.0, %v9626
  %v9628 = vpop.f32.mrb[0].mxu0
  %v9629 = vpop.f32.mrb[0].mxu0
  %v9630 = vadd.f32 0.0, %v9629
  %v9631 = vpop.f32.mrb[0].mxu0
  %9632 = vmatprep.mubr.bf16.mxu0 0
  %9633 = vmatmul.mubr.bf16.gmra.mrb[0].mxu0 %v9356
  %v9634 = vpop.f32.mrb[0].mxu0
  %v9635 = vadd.f32 0.0, %v9634
  %v9636 = vpop.f32.mrb[0].mxu0
  %v9637 = vpop.f32.mrb[0].mxu0
  %v9638 = vadd.f32 0.0, %v9637
  %v9639 = vpop.f32.mrb[0].mxu0
  %9640 = vmatprep.mubr.bf16.mxu0 0
  %9641 = vmatmul.mubr.bf16.gmra.mrb[0].mxu0 %v9357
  %v9642 = vpop.f32.mrb[0].mxu0
  %v9643 = vadd.f32 0.0, %v9642
  %v9644 = vpop.f32.mrb[0].mxu0
  %v9645 = vpop.f32.mrb[0].mxu0
  %v9646 = vadd.f32 0.0, %v9645
  %v9647 = vpop.f32.mrb[0].mxu0
  %9648 = vmatprep.mubr.bf16.mxu0 0
  %9649 = vmatmul.mubr.bf16.gmra.mrb[0].mxu0 %v9358
  %v9650 = vpop.f32.mrb[0].mxu0
  %v9651 = vadd.f32 0.0, %v9650
  %v9652 = vpop.f32.mrb[0].mxu0
  %v9653 = vpop.f32.mrb[0].mxu0
  %v9654 = vadd.f32 0.0, %v9653
  %v9655 = vpop.f32.mrb[0].mxu0
  %9656 = vmatprep.mubr.bf16.mxu0 0
  %9657 = vmatmul.mubr.bf16.gmra.mrb[0].mxu0 %v9359
  %v9658 = vpop.f32.mrb[0].mxu0
  %v9659 = vadd.f32 0.0, %v9658
  %v9660 = vpop.f32.mrb[0].mxu0
  %v9661 = vpop.f32.mrb[0].mxu0
  %v9662 = vadd.f32 0.0, %v9661
  %v9663 = vpop.f32.mrb[0].mxu0
  %9664 = vmatprep.mubr.bf16.mxu0 0
  %9665 = vmatmul.mubr.bf16.gmra.mrb[0].mxu0 %v9360
  %v9666 = vpop.f32.mrb[0].mxu0
  %v9667 = vadd.f32 0.0, %v9666
  %v9668 = vpop.f32.mrb[0].mxu0
  %v9669 = vpop.f32.mrb[0].mxu0
  %v9670 = vadd.f32 0.0, %v9669
  %v9671 = vpop.f32.mrb[0].mxu0
  %9672 = vmatprep.mubr.bf16.mxu0 0
  %9673 = vmatmul.mubr.bf16.gmra.mrb[0].mxu0 %v9361
  %v9674 = vpop.f32.mrb[0].mxu0
  %v9675 = vadd.f32 0.0, %v9674
  %v9676 = vpop.f32.mrb[0].mxu0
  %v9677 = vpop.f32.mrb[0].mxu0
  %v9678 = vadd.f32 0.0, %v9677
  %v9679 = vpop.f32.mrb[0].mxu0
  %9680 = vmatprep.mubr.bf16.mxu0 0
  %9681 = vmatmul.mubr.bf16.gmra.mrb[0].mxu0 %v9362
  %v9682 = vpop.f32.mrb[0].mxu0
  %v9683 = vadd.f32 0.0, %v9682
  %v9684 = vpop.f32.mrb[0].mxu0
  %v9685 = vpop.f32.mrb[0].mxu0
  %v9686 = vadd.f32 0.0, %v9685
  %v9687 = vpop.f32.mrb[0].mxu0
  %9688 = vmatprep.mubr.bf16.mxu0 0
  %9689 = vmatmul.mubr.bf16.gmra.mrb[0].mxu0 %v9363
  %v9690 = vpop.f32.mrb[0].mxu0
  %v9691 = vadd.f32 0.0, %v9690
  %v9692 = vpop.f32.mrb[0].mxu0
  %v9693 = vpop.f32.mrb[0].mxu0
  %v9694 = vadd.f32 0.0, %v9693
  %v9695 = vpop.f32.mrb[0].mxu0
  %9696 = vmatprep.mubr.bf16.mxu0 0
  %9697 = vmatmul.mubr.bf16.gmra.mrb[0].mxu0 %v9364
  %v9698 = vpop.f32.mrb[0].mxu0
  %v9699 = vadd.f32 0.0, %v9698
  %v9700 = vpop.f32.mrb[0].mxu0
  %v9701 = vpop.f32.mrb[0].mxu0
  %v9702 = vadd.f32 0.0, %v9701
  %v9703 = vpop.f32.mrb[0].mxu0
  %9704 = vmatprep.mubr.bf16.mxu0 0
  %9705 = vmatmul.mubr.bf16.gmra.mrb[0].mxu0 %v9365
  %v9706 = vpop.f32.mrb[0].mxu0
  %v9707 = vadd.f32 0.0, %v9706
  %v9708 = vpop.f32.mrb[0].mxu0
  %v9709 = vpop.f32.mrb[0].mxu0
  %v9710 = vadd.f32 0.0, %v9709
  %v9711 = vpop.f32.mrb[0].mxu0
  %9712 = vmatprep.mubr.bf16.mxu0 0
  %9713 = vmatmul.mubr.bf16.gmra.mrb[0].mxu0 %v9366
  %v9714 = vpop.f32.mrb[0].mxu0
  %v9715 = vadd.f32 0.0, %v9714
  %v9716 = vpop.f32.mrb[0].mxu0
  %v9717 = vpop.f32.mrb[0].mxu0
  %v9718 = vadd.f32 0.0, %v9717
  %v9719 = vpop.f32.mrb[0].mxu0
  %9720 = vdwg.mxu0
  %v9721 = vadd.f32 %v9270, %v9467
  %v9722 = vadd.f32 %v9271, %v9470
  %v9723 = vadd.f32 %v9272, %v9475
  %v9724 = vadd.f32 %v9273, %v9478
  %v9725 = vadd.f32 %v9274, %v9483
  %v9726 = vadd.f32 %v9275, %v9486
  %v9727 = vadd.f32 %v9276, %v9491
  %v9728 = vadd.f32 %v9277, %v9494
  %v9729 = vadd.f32 %v9278, %v9499
  %v9730 = vadd.f32 %v9279, %v9502
  %v9731 = vadd.f32 %v9280, %v9507
  %v9732 = vadd.f32 %v9281, %v9510
  %v9733 = vadd.f32 %v9282, %v9515
  %v9734 = vadd.f32 %v9283, %v9518
  %v9735 = vadd.f32 %v9284, %v9523
  %v9736 = vadd.f32 %v9285, %v9526
  %v9737 = vadd.f32 %v9286, %v9531
  %v9738 = vadd.f32 %v9287, %v9534
  %v9739 = vadd.f32 %v9288, %v9539
  %v9740 = vadd.f32 %v9289, %v9542
  %v9741 = vadd.f32 %v9290, %v9547
  %v9742 = vadd.f32 %v9291, %v9550
  %v9743 = vadd.f32 %v9292, %v9555
  %v9744 = vadd.f32 %v9293, %v9558
  %v9745 = vadd.f32 %v9294, %v9563
  %v9746 = vadd.f32 %v9295, %v9566
  %v9747 = vadd.f32 %v9296, %v9571
  %v9748 = vadd.f32 %v9297, %v9574
  %v9749 = vadd.f32 %v9298, %v9579
  %v9750 = vadd.f32 %v9299, %v9582
  %v9751 = vadd.f32 %v9300, %v9587
  %v9752 = vadd.f32 %v9301, %v9590
  %v9753 = vadd.f32 %v9302, %v9595
  %v9754 = vadd.f32 %v9303, %v9598
  %v9755 = vadd.f32 %v9304, %v9603
  %v9756 = vadd.f32 %v9305, %v9606
  %v9757 = vadd.f32 %v9306, %v9611
  %v9758 = vadd.f32 %v9307, %v9614
  %v9759 = vadd.f32 %v9308, %v9619
  %v9760 = vadd.f32 %v9309, %v9622
  %v9761 = vadd.f32 %v9310, %v9627
  %v9762 = vadd.f32 %v9311, %v9630
  %v9763 = vadd.f32 %v9312, %v9635
  %v9764 = vadd.f32 %v9313, %v9638
  %v9765 = vadd.f32 %v9314, %v9643
  %v9766 = vadd.f32 %v9315, %v9646
  %v9767 = vadd.f32 %v9316, %v9651
  %v9768 = vadd.f32 %v9317, %v9654
  %v9769 = vadd.f32 %v9318, %v9659
  %v9770 = vadd.f32 %v9319, %v9662
  %v9771 = vadd.f32 %v9320, %v9667
  %v9772 = vadd.f32 %v9321, %v9670
  %v9773 = vadd.f32 %v9322, %v9675
  %v9774 = vadd.f32 %v9323, %v9678
  %v9775 = vadd.f32 %v9324, %v9683
  %v9776 = vadd.f32 %v9325, %v9686
  %v9777 = vadd.f32 %v9326, %v9691
  %v9778 = vadd.f32 %v9327, %v9694
  %v9779 = vadd.f32 %v9328, %v9699
  %v9780 = vadd.f32 %v9329, %v9702
  %v9781 = vadd.f32 %v9330, %v9707
  %v9782 = vadd.f32 %v9331, %v9710
  %v9783 = vadd.f32 %v9332, %v9715
  %v9784 = vadd.f32 %v9333, %v9718
  %s9785 = scalar_lea.vmem [#allocation2], 128
  %v9786 = vld [vmem:[%s9785] sm:$0xff]
  %v9787 = vld [vmem:[%s9785 + $0x8] sm:$0xff]
  %v9788 = vld [vmem:[%s9785 + $0x10] sm:$0xff]
  %v9789 = vld [vmem:[%s9785 + $0x18] sm:$0xff]
  %v9790 = vld [vmem:[%s9785 + $0x20] sm:$0xff]
  %v9791 = vld [vmem:[%s9785 + $0x28] sm:$0xff]
  %v9792 = vld [vmem:[%s9785 + $0x30] sm:$0xff]
  %v9793 = vld [vmem:[%s9785 + $0x38] sm:$0xff]
  %v9794 = vld [vmem:[%s9785 + $0x40] sm:$0xff]
  %v9795 = vld [vmem:[%s9785 + $0x48] sm:$0xff]
  %v9796 = vld [vmem:[%s9785 + $0x50] sm:$0xff]
  %v9797 = vld [vmem:[%s9785 + $0x58] sm:$0xff]
  %v9798 = vld [vmem:[%s9785 + $0x60] sm:$0xff]
  %v9799 = vld [vmem:[%s9785 + $0x68] sm:$0xff]
  %v9800 = vld [vmem:[%s9785 + $0x70] sm:$0xff]
  %v9801 = vld [vmem:[%s9785 + $0x78] sm:$0xff]
  %v9802 = vld [vmem:[%s9785 + $0x80] sm:$0xff]
  %v9803 = vld [vmem:[%s9785 + $0x88] sm:$0xff]
  %v9804 = vld [vmem:[%s9785 + $0x90] sm:$0xff]
  %v9805 = vld [vmem:[%s9785 + $0x98] sm:$0xff]
  %v9806 = vld [vmem:[%s9785 + $0xa0] sm:$0xff]
  %v9807 = vld [vmem:[%s9785 + $0xa8] sm:$0xff]
  %v9808 = vld [vmem:[%s9785 + $0xb0] sm:$0xff]
  %v9809 = vld [vmem:[%s9785 + $0xb8] sm:$0xff]
  %v9810 = vld [vmem:[%s9785 + $0xc0] sm:$0xff]
  %v9811 = vld [vmem:[%s9785 + $0xc8] sm:$0xff]
  %v9812 = vld [vmem:[%s9785 + $0xd0] sm:$0xff]
  %v9813 = vld [vmem:[%s9785 + $0xd8] sm:$0xff]
  %v9814 = vld [vmem:[%s9785 + $0xe0] sm:$0xff]
  %v9815 = vld [vmem:[%s9785 + $0xe8] sm:$0xff]
  %v9816 = vld [vmem:[%s9785 + $0xf0] sm:$0xff]
  %v9817 = vld [vmem:[%s9785 + $0xf8] sm:$0xff]
  %s9818 = scalar_lea.vmem %s3, 256
  %v9819 = vld [vmem:[%s9818] sm:$0xf]
  %v9820 = vld [vmem:[%s9818 + $0x4] sm:$0xf]
  %v9821 = vld [vmem:[%s9818 + $0x8] sm:$0xf]
  %v9822 = vld [vmem:[%s9818 + $0xc] sm:$0xf]
  %v9823 = vld [vmem:[%s9818 + $0x10] sm:$0xf]
  %v9824 = vld [vmem:[%s9818 + $0x14] sm:$0xf]
  %v9825 = vld [vmem:[%s9818 + $0x18] sm:$0xf]
  %v9826 = vld [vmem:[%s9818 + $0x1c] sm:$0xf]
  %v9827 = vld [vmem:[%s9818 + $0x20] sm:$0xf]
  %v9828 = vld [vmem:[%s9818 + $0x24] sm:$0xf]
  %v9829 = vld [vmem:[%s9818 + $0x28] sm:$0xf]
  %v9830 = vld [vmem:[%s9818 + $0x2c] sm:$0xf]
  %v9831 = vld [vmem:[%s9818 + $0x30] sm:$0xf]
  %v9832 = vld [vmem:[%s9818 + $0x34] sm:$0xf]
  %v9833 = vld [vmem:[%s9818 + $0x38] sm:$0xf]
  %v9834 = vld [vmem:[%s9818 + $0x3c] sm:$0xf]
  %v9851 = vunpack.c.l.b16 %v9819
  %v9852 = vunpack.c.l.b16 %v9820
  %v9853 = vunpack.c.l.b16 %v9821
  %v9854 = vunpack.c.l.b16 %v9822
  %v9855 = vunpack.c.l.b16 %v9823
  %v9856 = vunpack.c.l.b16 %v9824
  %v9857 = vunpack.c.l.b16 %v9825
  %v9858 = vunpack.c.l.b16 %v9826
  %v9859 = vunpack.c.l.b16 %v9827
  %v9860 = vunpack.c.l.b16 %v9828
  %v9861 = vunpack.c.l.b16 %v9829
  %v9862 = vunpack.c.l.b16 %v9830
  %v9863 = vunpack.c.l.b16 %v9831
  %v9864 = vunpack.c.l.b16 %v9832
  %v9865 = vunpack.c.l.b16 %v9833
  %v9866 = vunpack.c.l.b16 %v9834
  %v9867 = vpack.c.b16 %v9852, %v9851
  %v9868 = vpack.c.b16 %v9854, %v9853
  %v9869 = vpack.c.b16 %v9856, %v9855
  %v9870 = vpack.c.b16 %v9858, %v9857
  %v9871 = vpack.c.b16 %v9860, %v9859
  %v9872 = vpack.c.b16 %v9862, %v9861
  %v9873 = vpack.c.b16 %v9864, %v9863
  %v9874 = vpack.c.b16 %v9866, %v9865
  %9883 = vmatprep.subr.bf16.mxu0 0
  %9884 = vmatpush1.bf16.msra.mxu0 %v9867
  %9885 = vmatprep.subr.bf16.mxu0 0
  %9886 = vmatpush1.bf16.msra.mxu0 %v9868
  %9887 = vmatprep.subr.bf16.mxu0 0
  %9888 = vmatpush1.bf16.msra.mxu0 %v9869
  %9889 = vmatprep.subr.bf16.mxu0 0
  %9890 = vmatpush1.bf16.msra.mxu0 %v9870
  %9891 = vmatprep.subr.bf16.mxu0 0
  %9892 = vmatpush1.bf16.msra.mxu0 %v9871
  %9893 = vmatprep.subr.bf16.mxu0 0
  %9894 = vmatpush1.bf16.msra.mxu0 %v9872
  %9895 = vmatprep.subr.bf16.mxu0 0
  %9896 = vmatpush1.bf16.msra.mxu0 %v9873
  %9897 = vmatprep.subr.bf16.mxu0 0
  %9898 = vmatpush1.bf16.msra.mxu0 %v9874
  %9899 = vmatprep.subr.bf16.mxu0 0
  %9900 = vmatpush1.bf16.msra.mxu0 0
  %9901 = vmatprep.subr.bf16.mxu0 0
  %9902 = vmatpush1.bf16.msra.mxu0 0
  %9903 = vmatprep.subr.bf16.mxu0 0
  %9904 = vmatpush1.bf16.msra.mxu0 0
  %9905 = vmatprep.subr.bf16.mxu0 0
  %9906 = vmatpush1.bf16.msra.mxu0 0
  %9907 = vmatprep.subr.bf16.mxu0 0
  %9908 = vmatpush1.bf16.msra.mxu0 0
  %9909 = vmatprep.subr.bf16.mxu0 0
  %9910 = vmatpush1.bf16.msra.mxu0 0
  %9911 = vmatprep.subr.bf16.mxu0 0
  %9912 = vmatpush1.bf16.msra.mxu0 0
  %9913 = vmatprep.subr.bf16.mxu0 0
  %9914 = vmatpush1.bf16.msra.mxu0 0
  %9915 = vmatprep.mubr.bf16.mxu0 0
  %9916 = vmatmul.mubr.bf16.gmra.mrb[0].mxu0 %v9786
  %v9917 = vpop.f32.mrb[0].mxu0
  %v9918 = vadd.f32 0.0, %v9917
  %v9919 = vpop.f32.mrb[0].mxu0
  %v9920 = vpop.f32.mrb[0].mxu0
  %v9921 = vadd.f32 0.0, %v9920
  %v9922 = vpop.f32.mrb[0].mxu0
  %9923 = vmatprep.mubr.bf16.mxu0 0
  %9924 = vmatmul.mubr.bf16.gmra.mrb[0].mxu0 %v9787
  %v9925 = vpop.f32.mrb[0].mxu0
  %v9926 = vadd.f32 0.0, %v9925
  %v9927 = vpop.f32.mrb[0].mxu0
  %v9928 = vpop.f32.mrb[0].mxu0
  %v9929 = vadd.f32 0.0, %v9928
  %v9930 = vpop.f32.mrb[0].mxu0
  %9931 = vmatprep.mubr.bf16.mxu0 0
  %9932 = vmatmul.mubr.bf16.gmra.mrb[0].mxu0 %v9788
  %v9933 = vpop.f32.mrb[0].mxu0
  %v9934 = vadd.f32 0.0, %v9933
  %v9935 = vpop.f32.mrb[0].mxu0
  %v9936 = vpop.f32.mrb[0].mxu0
  %v9937 = vadd.f32 0.0, %v9936
  %v9938 = vpop.f32.mrb[0].mxu0
  %9939 = vmatprep.mubr.bf16.mxu0 0
  %9940 = vmatmul.mubr.bf16.gmra.mrb[0].mxu0 %v9789
  %v9941 = vpop.f32.mrb[0].mxu0
  %v9942 = vadd.f32 0.0, %v9941
  %v9943 = vpop.f32.mrb[0].mxu0
  %v9944 = vpop.f32.mrb[0].mxu0
  %v9945 = vadd.f32 0.0, %v9944
  %v9946 = vpop.f32.mrb[0].mxu0
  %9947 = vmatprep.mubr.bf16.mxu0 0
  %9948 = vmatmul.mubr.bf16.gmra.mrb[0].mxu0 %v9790
  %v9949 = vpop.f32.mrb[0].mxu0
  %v9950 = vadd.f32 0.0, %v9949
  %v9951 = vpop.f32.mrb[0].mxu0
  %v9952 = vpop.f32.mrb[0].mxu0
  %v9953 = vadd.f32 0.0, %v9952
  %v9954 = vpop.f32.mrb[0].mxu0
  %9955 = vmatprep.mubr.bf16.mxu0 0
  %9956 = vmatmul.mubr.bf16.gmra.mrb[0].mxu0 %v9791
  %v9957 = vpop.f32.mrb[0].mxu0
  %v9958 = vadd.f32 0.0, %v9957
  %v9959 = vpop.f32.mrb[0].mxu0
  %v9960 = vpop.f32.mrb[0].mxu0
  %v9961 = vadd.f32 0.0, %v9960
  %v9962 = vpop.f32.mrb[0].mxu0
  %9963 = vmatprep.mubr.bf16.mxu0 0
  %9964 = vmatmul.mubr.bf16.gmra.mrb[0].mxu0 %v9792
  %v9965 = vpop.f32.mrb[0].mxu0
  %v9966 = vadd.f32 0.0, %v9965
  %v9967 = vpop.f32.mrb[0].mxu0
  %v9968 = vpop.f32.mrb[0].mxu0
  %v9969 = vadd.f32 0.0, %v9968
  %v9970 = vpop.f32.mrb[0].mxu0
  %9971 = vmatprep.mubr.bf16.mxu0 0
  %9972 = vmatmul.mubr.bf16.gmra.mrb[0].mxu0 %v9793
  %v9973 = vpop.f32.mrb[0].mxu0
  %v9974 = vadd.f32 0.0, %v9973
  %v9975 = vpop.f32.mrb[0].mxu0
  %v9976 = vpop.f32.mrb[0].mxu0
  %v9977 = vadd.f32 0.0, %v9976
  %v9978 = vpop.f32.mrb[0].mxu0
  %9979 = vmatprep.mubr.bf16.mxu0 0
  %9980 = vmatmul.mubr.bf16.gmra.mrb[0].mxu0 %v9794
  %v9981 = vpop.f32.mrb[0].mxu0
  %v9982 = vadd.f32 0.0, %v9981
  %v9983 = vpop.f32.mrb[0].mxu0
  %v9984 = vpop.f32.mrb[0].mxu0
  %v9985 = vadd.f32 0.0, %v9984
  %v9986 = vpop.f32.mrb[0].mxu0
  %9987 = vmatprep.mubr.bf16.mxu0 0
  %9988 = vmatmul.mubr.bf16.gmra.mrb[0].mxu0 %v9795
  %v9989 = vpop.f32.mrb[0].mxu0
  %v9990 = vadd.f32 0.0, %v9989
  %v9991 = vpop.f32.mrb[0].mxu0
  %v9992 = vpop.f32.mrb[0].mxu0
  %v9993 = vadd.f32 0.0, %v9992
  %v9994 = vpop.f32.mrb[0].mxu0
  %9995 = vmatprep.mubr.bf16.mxu0 0
  %9996 = vmatmul.mubr.bf16.gmra.mrb[0].mxu0 %v9796
  %v9997 = vpop.f32.mrb[0].mxu0
  %v9998 = vadd.f32 0.0, %v9997
  %v9999 = vpop.f32.mrb[0].mxu0
  %v10000 = vpop.f32.mrb[0].mxu0
  %v10001 = vadd.f32 0.0, %v10000
  %v10002 = vpop.f32.mrb[0].mxu0
  %10003 = vmatprep.mubr.bf16.mxu0 0
  %10004 = vmatmul.mubr.bf16.gmra.mrb[0].mxu0 %v9797
  %v10005 = vpop.f32.mrb[0].mxu0
  %v10006 = vadd.f32 0.0, %v10005
  %v10007 = vpop.f32.mrb[0].mxu0
  %v10008 = vpop.f32.mrb[0].mxu0
  %v10009 = vadd.f32 0.0, %v10008
  %v10010 = vpop.f32.mrb[0].mxu0
  %10011 = vmatprep.mubr.bf16.mxu0 0
  %10012 = vmatmul.mubr.bf16.gmra.mrb[0].mxu0 %v9798
  %v10013 = vpop.f32.mrb[0].mxu0
  %v10014 = vadd.f32 0.0, %v10013
  %v10015 = vpop.f32.mrb[0].mxu0
  %v10016 = vpop.f32.mrb[0].mxu0
  %v10017 = vadd.f32 0.0, %v10016
  %v10018 = vpop.f32.mrb[0].mxu0
  %10019 = vmatprep.mubr.bf16.mxu0 0
  %10020 = vmatmul.mubr.bf16.gmra.mrb[0].mxu0 %v9799
  %v10021 = vpop.f32.mrb[0].mxu0
  %v10022 = vadd.f32 0.0, %v10021
  %v10023 = vpop.f32.mrb[0].mxu0
  %v10024 = vpop.f32.mrb[0].mxu0
  %v10025 = vadd.f32 0.0, %v10024
  %v10026 = vpop.f32.mrb[0].mxu0
  %10027 = vmatprep.mubr.bf16.mxu0 0
  %10028 = vmatmul.mubr.bf16.gmra.mrb[0].mxu0 %v9800
  %v10029 = vpop.f32.mrb[0].mxu0
  %v10030 = vadd.f32 0.0, %v10029
  %v10031 = vpop.f32.mrb[0].mxu0
  %v10032 = vpop.f32.mrb[0].mxu0
  %v10033 = vadd.f32 0.0, %v10032
  %v10034 = vpop.f32.mrb[0].mxu0
  %10035 = vmatprep.mubr.bf16.mxu0 0
  %10036 = vmatmul.mubr.bf16.gmra.mrb[0].mxu0 %v9801
  %v10037 = vpop.f32.mrb[0].mxu0
  %v10038 = vadd.f32 0.0, %v10037
  %v10039 = vpop.f32.mrb[0].mxu0
  %v10040 = vpop.f32.mrb[0].mxu0
  %v10041 = vadd.f32 0.0, %v10040
  %v10042 = vpop.f32.mrb[0].mxu0
  %10043 = vmatprep.mubr.bf16.mxu0 0
  %10044 = vmatmul.mubr.bf16.gmra.mrb[0].mxu0 %v9802
  %v10045 = vpop.f32.mrb[0].mxu0
  %v10046 = vadd.f32 0.0, %v10045
  %v10047 = vpop.f32.mrb[0].mxu0
  %v10048 = vpop.f32.mrb[0].mxu0
  %v10049 = vadd.f32 0.0, %v10048
  %v10050 = vpop.f32.mrb[0].mxu0
  %10051 = vmatprep.mubr.bf16.mxu0 0
  %10052 = vmatmul.mubr.bf16.gmra.mrb[0].mxu0 %v9803
  %v10053 = vpop.f32.mrb[0].mxu0
  %v10054 = vadd.f32 0.0, %v10053
  %v10055 = vpop.f32.mrb[0].mxu0
  %v10056 = vpop.f32.mrb[0].mxu0
  %v10057 = vadd.f32 0.0, %v10056
  %v10058 = vpop.f32.mrb[0].mxu0
  %10059 = vmatprep.mubr.bf16.mxu0 0
  %10060 = vmatmul.mubr.bf16.gmra.mrb[0].mxu0 %v9804
  %v10061 = vpop.f32.mrb[0].mxu0
  %v10062 = vadd.f32 0.0, %v10061
  %v10063 = vpop.f32.mrb[0].mxu0
  %v10064 = vpop.f32.mrb[0].mxu0
  %v10065 = vadd.f32 0.0, %v10064
  %v10066 = vpop.f32.mrb[0].mxu0
  %10067 = vmatprep.mubr.bf16.mxu0 0
  %10068 = vmatmul.mubr.bf16.gmra.mrb[0].mxu0 %v9805
  %v10069 = vpop.f32.mrb[0].mxu0
  %v10070 = vadd.f32 0.0, %v10069
  %v10071 = vpop.f32.mrb[0].mxu0
  %v10072 = vpop.f32.mrb[0].mxu0
  %v10073 = vadd.f32 0.0, %v10072
  %v10074 = vpop.f32.mrb[0].mxu0
  %10075 = vmatprep.mubr.bf16.mxu0 0
  %10076 = vmatmul.mubr.bf16.gmra.mrb[0].mxu0 %v9806
  %v10077 = vpop.f32.mrb[0].mxu0
  %v10078 = vadd.f32 0.0, %v10077
  %v10079 = vpop.f32.mrb[0].mxu0
  %v10080 = vpop.f32.mrb[0].mxu0
  %v10081 = vadd.f32 0.0, %v10080
  %v10082 = vpop.f32.mrb[0].mxu0
  %10083 = vmatprep.mubr.bf16.mxu0 0
  %10084 = vmatmul.mubr.bf16.gmra.mrb[0].mxu0 %v9807
  %v10085 = vpop.f32.mrb[0].mxu0
  %v10086 = vadd.f32 0.0, %v10085
  %v10087 = vpop.f32.mrb[0].mxu0
  %v10088 = vpop.f32.mrb[0].mxu0
  %v10089 = vadd.f32 0.0, %v10088
  %v10090 = vpop.f32.mrb[0].mxu0
  %10091 = vmatprep.mubr.bf16.mxu0 0
  %10092 = vmatmul.mubr.bf16.gmra.mrb[0].mxu0 %v9808
  %v10093 = vpop.f32.mrb[0].mxu0
  %v10094 = vadd.f32 0.0, %v10093
  %v10095 = vpop.f32.mrb[0].mxu0
  %v10096 = vpop.f32.mrb[0].mxu0
  %v10097 = vadd.f32 0.0, %v10096
  %v10098 = vpop.f32.mrb[0].mxu0
  %10099 = vmatprep.mubr.bf16.mxu0 0
  %10100 = vmatmul.mubr.bf16.gmra.mrb[0].mxu0 %v9809
  %v10101 = vpop.f32.mrb[0].mxu0
  %v10102 = vadd.f32 0.0, %v10101
  %v10103 = vpop.f32.mrb[0].mxu0
  %v10104 = vpop.f32.mrb[0].mxu0
  %v10105 = vadd.f32 0.0, %v10104
  %v10106 = vpop.f32.mrb[0].mxu0
  %10107 = vmatprep.mubr.bf16.mxu0 0
  %10108 = vmatmul.mubr.bf16.gmra.mrb[0].mxu0 %v9810
  %v10109 = vpop.f32.mrb[0].mxu0
  %v10110 = vadd.f32 0.0, %v10109
  %v10111 = vpop.f32.mrb[0].mxu0
  %v10112 = vpop.f32.mrb[0].mxu0
  %v10113 = vadd.f32 0.0, %v10112
  %v10114 = vpop.f32.mrb[0].mxu0
  %10115 = vmatprep.mubr.bf16.mxu0 0
  %10116 = vmatmul.mubr.bf16.gmra.mrb[0].mxu0 %v9811
  %v10117 = vpop.f32.mrb[0].mxu0
  %v10118 = vadd.f32 0.0, %v10117
  %v10119 = vpop.f32.mrb[0].mxu0
  %v10120 = vpop.f32.mrb[0].mxu0
  %v10121 = vadd.f32 0.0, %v10120
  %v10122 = vpop.f32.mrb[0].mxu0
  %10123 = vmatprep.mubr.bf16.mxu0 0
  %10124 = vmatmul.mubr.bf16.gmra.mrb[0].mxu0 %v9812
  %v10125 = vpop.f32.mrb[0].mxu0
  %v10126 = vadd.f32 0.0, %v10125
  %v10127 = vpop.f32.mrb[0].mxu0
  %v10128 = vpop.f32.mrb[0].mxu0
  %v10129 = vadd.f32 0.0, %v10128
  %v10130 = vpop.f32.mrb[0].mxu0
  %10131 = vmatprep.mubr.bf16.mxu0 0
  %10132 = vmatmul.mubr.bf16.gmra.mrb[0].mxu0 %v9813
  %v10133 = vpop.f32.mrb[0].mxu0
  %v10134 = vadd.f32 0.0, %v10133
  %v10135 = vpop.f32.mrb[0].mxu0
  %v10136 = vpop.f32.mrb[0].mxu0
  %v10137 = vadd.f32 0.0, %v10136
  %v10138 = vpop.f32.mrb[0].mxu0
  %10139 = vmatprep.mubr.bf16.mxu0 0
  %10140 = vmatmul.mubr.bf16.gmra.mrb[0].mxu0 %v9814
  %v10141 = vpop.f32.mrb[0].mxu0
  %v10142 = vadd.f32 0.0, %v10141
  %v10143 = vpop.f32.mrb[0].mxu0
  %v10144 = vpop.f32.mrb[0].mxu0
  %v10145 = vadd.f32 0.0, %v10144
  %v10146 = vpop.f32.mrb[0].mxu0
  %10147 = vmatprep.mubr.bf16.mxu0 0
  %10148 = vmatmul.mubr.bf16.gmra.mrb[0].mxu0 %v9815
  %v10149 = vpop.f32.mrb[0].mxu0
  %v10150 = vadd.f32 0.0, %v10149
  %v10151 = vpop.f32.mrb[0].mxu0
  %v10152 = vpop.f32.mrb[0].mxu0
  %v10153 = vadd.f32 0.0, %v10152
  %v10154 = vpop.f32.mrb[0].mxu0
  %10155 = vmatprep.mubr.bf16.mxu0 0
  %10156 = vmatmul.mubr.bf16.gmra.mrb[0].mxu0 %v9816
  %v10157 = vpop.f32.mrb[0].mxu0
  %v10158 = vadd.f32 0.0, %v10157
  %v10159 = vpop.f32.mrb[0].mxu0
  %v10160 = vpop.f32.mrb[0].mxu0
  %v10161 = vadd.f32 0.0, %v10160
  %v10162 = vpop.f32.mrb[0].mxu0
  %10163 = vmatprep.mubr.bf16.mxu0 0
  %10164 = vmatmul.mubr.bf16.gmra.mrb[0].mxu0 %v9817
  %v10165 = vpop.f32.mrb[0].mxu0
  %v10166 = vadd.f32 0.0, %v10165
  %v10167 = vpop.f32.mrb[0].mxu0
  %v10168 = vpop.f32.mrb[0].mxu0
  %v10169 = vadd.f32 0.0, %v10168
  %v10170 = vpop.f32.mrb[0].mxu0
  %10171 = vdwg.mxu0
  %v10172 = vadd.f32 %v9721, %v9918
  %v10173 = vadd.f32 %v9722, %v9921
  %v10174 = vadd.f32 %v9723, %v9926
  %v10175 = vadd.f32 %v9724, %v9929
  %v10176 = vadd.f32 %v9725, %v9934
  %v10177 = vadd.f32 %v9726, %v9937
  %v10178 = vadd.f32 %v9727, %v9942
  %v10179 = vadd.f32 %v9728, %v9945
  %v10180 = vadd.f32 %v9729, %v9950
  %v10181 = vadd.f32 %v9730, %v9953
  %v10182 = vadd.f32 %v9731, %v9958
  %v10183 = vadd.f32 %v9732, %v9961
  %v10184 = vadd.f32 %v9733, %v9966
  %v10185 = vadd.f32 %v9734, %v9969
  %v10186 = vadd.f32 %v9735, %v9974
  %v10187 = vadd.f32 %v9736, %v9977
  %v10188 = vadd.f32 %v9737, %v9982
  %v10189 = vadd.f32 %v9738, %v9985
  %v10190 = vadd.f32 %v9739, %v9990
  %v10191 = vadd.f32 %v9740, %v9993
  %v10192 = vadd.f32 %v9741, %v9998
  %v10193 = vadd.f32 %v9742, %v10001
  %v10194 = vadd.f32 %v9743, %v10006
  %v10195 = vadd.f32 %v9744, %v10009
  %v10196 = vadd.f32 %v9745, %v10014
  %v10197 = vadd.f32 %v9746, %v10017
  %v10198 = vadd.f32 %v9747, %v10022
  %v10199 = vadd.f32 %v9748, %v10025
  %v10200 = vadd.f32 %v9749, %v10030
  %v10201 = vadd.f32 %v9750, %v10033
  %v10202 = vadd.f32 %v9751, %v10038
  %v10203 = vadd.f32 %v9752, %v10041
  %v10204 = vadd.f32 %v9753, %v10046
  %v10205 = vadd.f32 %v9754, %v10049
  %v10206 = vadd.f32 %v9755, %v10054
  %v10207 = vadd.f32 %v9756, %v10057
  %v10208 = vadd.f32 %v9757, %v10062
  %v10209 = vadd.f32 %v9758, %v10065
  %v10210 = vadd.f32 %v9759, %v10070
  %v10211 = vadd.f32 %v9760, %v10073
  %v10212 = vadd.f32 %v9761, %v10078
  %v10213 = vadd.f32 %v9762, %v10081
  %v10214 = vadd.f32 %v9763, %v10086
  %v10215 = vadd.f32 %v9764, %v10089
  %v10216 = vadd.f32 %v9765, %v10094
  %v10217 = vadd.f32 %v9766, %v10097
  %v10218 = vadd.f32 %v9767, %v10102
  %v10219 = vadd.f32 %v9768, %v10105
  %v10220 = vadd.f32 %v9769, %v10110
  %v10221 = vadd.f32 %v9770, %v10113
  %v10222 = vadd.f32 %v9771, %v10118
  %v10223 = vadd.f32 %v9772, %v10121
  %v10224 = vadd.f32 %v9773, %v10126
  %v10225 = vadd.f32 %v9774, %v10129
  %v10226 = vadd.f32 %v9775, %v10134
  %v10227 = vadd.f32 %v9776, %v10137
  %v10228 = vadd.f32 %v9777, %v10142
  %v10229 = vadd.f32 %v9778, %v10145
  %v10230 = vadd.f32 %v9779, %v10150
  %v10231 = vadd.f32 %v9780, %v10153
  %v10232 = vadd.f32 %v9781, %v10158
  %v10233 = vadd.f32 %v9782, %v10161
  %v10234 = vadd.f32 %v9783, %v10166
  %v10235 = vadd.f32 %v9784, %v10169
  %v10236 = vld [vmem:[%s4] sm:$0x1]
  %v10238 = vlaneseq
  %v10239 = vshrl.u32 %v10238, 7
  %v10240 = vsub.s32 0, %v10239
  %v10241 = vrot.slane %v10236, %v10240
  %v10243 = vadd.f32 %v10172, %v10241
  %v10244 = vadd.f32 %v10173, %v10241
  %v10245 = vadd.f32 %v10174, %v10241
  %v10246 = vadd.f32 %v10175, %v10241
  %v10247 = vadd.f32 %v10176, %v10241
  %v10248 = vadd.f32 %v10177, %v10241
  %v10249 = vadd.f32 %v10178, %v10241
  %v10250 = vadd.f32 %v10179, %v10241
  %v10251 = vadd.f32 %v10180, %v10241
  %v10252 = vadd.f32 %v10181, %v10241
  %v10253 = vadd.f32 %v10182, %v10241
  %v10254 = vadd.f32 %v10183, %v10241
  %v10255 = vadd.f32 %v10184, %v10241
  %v10256 = vadd.f32 %v10185, %v10241
  %v10257 = vadd.f32 %v10186, %v10241
  %v10258 = vadd.f32 %v10187, %v10241
  %v10259 = vadd.f32 %v10188, %v10241
  %v10260 = vadd.f32 %v10189, %v10241
  %v10261 = vadd.f32 %v10190, %v10241
  %v10262 = vadd.f32 %v10191, %v10241
  %v10263 = vadd.f32 %v10192, %v10241
  %v10264 = vadd.f32 %v10193, %v10241
  %v10265 = vadd.f32 %v10194, %v10241
  %v10266 = vadd.f32 %v10195, %v10241
  %v10267 = vadd.f32 %v10196, %v10241
  %v10268 = vadd.f32 %v10197, %v10241
  %v10269 = vadd.f32 %v10198, %v10241
  %v10270 = vadd.f32 %v10199, %v10241
  %v10271 = vadd.f32 %v10200, %v10241
  %v10272 = vadd.f32 %v10201, %v10241
  %v10273 = vadd.f32 %v10202, %v10241
  %v10274 = vadd.f32 %v10203, %v10241
  %v10275 = vadd.f32 %v10204, %v10241
  %v10276 = vadd.f32 %v10205, %v10241
  %v10277 = vadd.f32 %v10206, %v10241
  %v10278 = vadd.f32 %v10207, %v10241
  %v10279 = vadd.f32 %v10208, %v10241
  %v10280 = vadd.f32 %v10209, %v10241
  %v10281 = vadd.f32 %v10210, %v10241
  %v10282 = vadd.f32 %v10211, %v10241
  %v10283 = vadd.f32 %v10212, %v10241
  %v10284 = vadd.f32 %v10213, %v10241
  %v10285 = vadd.f32 %v10214, %v10241
  %v10286 = vadd.f32 %v10215, %v10241
  %v10287 = vadd.f32 %v10216, %v10241
  %v10288 = vadd.f32 %v10217, %v10241
  %v10289 = vadd.f32 %v10218, %v10241
  %v10290 = vadd.f32 %v10219, %v10241
  %v10291 = vadd.f32 %v10220, %v10241
  %v10292 = vadd.f32 %v10221, %v10241
  %v10293 = vadd.f32 %v10222, %v10241
  %v10294 = vadd.f32 %v10223, %v10241
  %v10295 = vadd.f32 %v10224, %v10241
  %v10296 = vadd.f32 %v10225, %v10241
  %v10297 = vadd.f32 %v10226, %v10241
  %v10298 = vadd.f32 %v10227, %v10241
  %v10299 = vadd.f32 %v10228, %v10241
  %v10300 = vadd.f32 %v10229, %v10241
  %v10301 = vadd.f32 %v10230, %v10241
  %v10302 = vadd.f32 %v10231, %v10241
  %v10303 = vadd.f32 %v10232, %v10241
  %v10304 = vadd.f32 %v10233, %v10241
  %v10305 = vadd.f32 %v10234, %v10241
  %v10306 = vadd.f32 %v10235, %v10241
  %v10307 = vmax.f32 %v10243, 0.0
  %v10308 = vmax.f32 %v10244, 0.0
  %v10309 = vmax.f32 %v10245, 0.0
  %v10310 = vmax.f32 %v10246, 0.0
  %v10311 = vmax.f32 %v10247, 0.0
  %v10312 = vmax.f32 %v10248, 0.0
  %v10313 = vmax.f32 %v10249, 0.0
  %v10314 = vmax.f32 %v10250, 0.0
  %v10315 = vmax.f32 %v10251, 0.0
  %v10316 = vmax.f32 %v10252, 0.0
  %v10317 = vmax.f32 %v10253, 0.0
  %v10318 = vmax.f32 %v10254, 0.0
  %v10319 = vmax.f32 %v10255, 0.0
  %v10320 = vmax.f32 %v10256, 0.0
  %v10321 = vmax.f32 %v10257, 0.0
  %v10322 = vmax.f32 %v10258, 0.0
  %v10323 = vmax.f32 %v10259, 0.0
  %v10324 = vmax.f32 %v10260, 0.0
  %v10325 = vmax.f32 %v10261, 0.0
  %v10326 = vmax.f32 %v10262, 0.0
  %v10327 = vmax.f32 %v10263, 0.0
  %v10328 = vmax.f32 %v10264, 0.0
  %v10329 = vmax.f32 %v10265, 0.0
  %v10330 = vmax.f32 %v10266, 0.0
  %v10331 = vmax.f32 %v10267, 0.0
  %v10332 = vmax.f32 %v10268, 0.0
  %v10333 = vmax.f32 %v10269, 0.0
  %v10334 = vmax.f32 %v10270, 0.0
  %v10335 = vmax.f32 %v10271, 0.0
  %v10336 = vmax.f32 %v10272, 0.0
  %v10337 = vmax.f32 %v10273, 0.0
  %v10338 = vmax.f32 %v10274, 0.0
  %v10339 = vmax.f32 %v10275, 0.0
  %v10340 = vmax.f32 %v10276, 0.0
  %v10341 = vmax.f32 %v10277, 0.0
  %v10342 = vmax.f32 %v10278, 0.0
  %v10343 = vmax.f32 %v10279, 0.0
  %v10344 = vmax.f32 %v10280, 0.0
  %v10345 = vmax.f32 %v10281, 0.0
  %v10346 = vmax.f32 %v10282, 0.0
  %v10347 = vmax.f32 %v10283, 0.0
  %v10348 = vmax.f32 %v10284, 0.0
  %v10349 = vmax.f32 %v10285, 0.0
  %v10350 = vmax.f32 %v10286, 0.0
  %v10351 = vmax.f32 %v10287, 0.0
  %v10352 = vmax.f32 %v10288, 0.0
  %v10353 = vmax.f32 %v10289, 0.0
  %v10354 = vmax.f32 %v10290, 0.0
  %v10355 = vmax.f32 %v10291, 0.0
  %v10356 = vmax.f32 %v10292, 0.0
  %v10357 = vmax.f32 %v10293, 0.0
  %v10358 = vmax.f32 %v10294, 0.0
  %v10359 = vmax.f32 %v10295, 0.0
  %v10360 = vmax.f32 %v10296, 0.0
  %v10361 = vmax.f32 %v10297, 0.0
  %v10362 = vmax.f32 %v10298, 0.0
  %v10363 = vmax.f32 %v10299, 0.0
  %v10364 = vmax.f32 %v10300, 0.0
  %v10365 = vmax.f32 %v10301, 0.0
  %v10366 = vmax.f32 %v10302, 0.0
  %v10367 = vmax.f32 %v10303, 0.0
  %v10368 = vmax.f32 %v10304, 0.0
  %v10369 = vmax.f32 %v10305, 0.0
  %v10370 = vmax.f32 %v10306, 0.0
  %v10371 = vmax.f32 %v10307, %v10315
  %v10372 = vmax.f32 %v10308, %v10316
  %v10373 = vmax.f32 %v10309, %v10317
  %v10374 = vmax.f32 %v10310, %v10318
  %v10375 = vmax.f32 %v10311, %v10319
  %v10376 = vmax.f32 %v10312, %v10320
  %v10377 = vmax.f32 %v10313, %v10321
  %v10378 = vmax.f32 %v10314, %v10322
  %v10379 = vmax.f32 %v10323, %v10331
  %v10380 = vmax.f32 %v10324, %v10332
  %v10381 = vmax.f32 %v10325, %v10333
  %v10382 = vmax.f32 %v10326, %v10334
  %v10383 = vmax.f32 %v10327, %v10335
  %v10384 = vmax.f32 %v10328, %v10336
  %v10385 = vmax.f32 %v10329, %v10337
  %v10386 = vmax.f32 %v10330, %v10338
  %v10387 = vmax.f32 %v10339, %v10347
  %v10388 = vmax.f32 %v10340, %v10348
  %v10389 = vmax.f32 %v10341, %v10349
  %v10390 = vmax.f32 %v10342, %v10350
  %v10391 = vmax.f32 %v10343, %v10351
  %v10392 = vmax.f32 %v10344, %v10352
  %v10393 = vmax.f32 %v10345, %v10353
  %v10394 = vmax.f32 %v10346, %v10354
  %v10395 = vmax.f32 %v10355, %v10363
  %v10396 = vmax.f32 %v10356, %v10364
  %v10397 = vmax.f32 %v10357, %v10365
  %v10398 = vmax.f32 %v10358, %v10366
  %v10399 = vmax.f32 %v10359, %v10367
  %v10400 = vmax.f32 %v10360, %v10368
  %v10401 = vmax.f32 %v10361, %v10369
  %v10402 = vmax.f32 %v10362, %v10370
  %10435 = vrot.lane.b32.xlu0 %v10371, 64
  %v10436 = vpop.permute.xlu0 %10435
  %10437 = vrot.lane.b32.xlu0 %v10372, 64
  %v10438 = vpop.permute.xlu0 %10437
  %10439 = vrot.lane.b32.xlu0 %v10373, 64
  %v10440 = vpop.permute.xlu0 %10439
  %10441 = vrot.lane.b32.xlu0 %v10374, 64
  %v10442 = vpop.permute.xlu0 %10441
  %10443 = vrot.lane.b32.xlu0 %v10375, 64
  %v10444 = vpop.permute.xlu0 %10443
  %10445 = vrot.lane.b32.xlu0 %v10376, 64
  %v10446 = vpop.permute.xlu0 %10445
  %10447 = vrot.lane.b32.xlu0 %v10377, 64
  %v10448 = vpop.permute.xlu0 %10447
  %10449 = vrot.lane.b32.xlu0 %v10378, 64
  %v10450 = vpop.permute.xlu0 %10449
  %10451 = vrot.lane.b32.xlu0 %v10379, 64
  %v10452 = vpop.permute.xlu0 %10451
  %10453 = vrot.lane.b32.xlu0 %v10380, 64
  %v10454 = vpop.permute.xlu0 %10453
  %10455 = vrot.lane.b32.xlu0 %v10381, 64
  %v10456 = vpop.permute.xlu0 %10455
  %10457 = vrot.lane.b32.xlu0 %v10382, 64
  %v10458 = vpop.permute.xlu0 %10457
  %10459 = vrot.lane.b32.xlu0 %v10383, 64
  %v10460 = vpop.permute.xlu0 %10459
  %10461 = vrot.lane.b32.xlu0 %v10384, 64
  %v10462 = vpop.permute.xlu0 %10461
  %10463 = vrot.lane.b32.xlu0 %v10385, 64
  %v10464 = vpop.permute.xlu0 %10463
  %10465 = vrot.lane.b32.xlu0 %v10386, 64
  %v10466 = vpop.permute.xlu0 %10465
  %10467 = vrot.lane.b32.xlu0 %v10387, 64
  %v10468 = vpop.permute.xlu0 %10467
  %10469 = vrot.lane.b32.xlu0 %v10388, 64
  %v10470 = vpop.permute.xlu0 %10469
  %10471 = vrot.lane.b32.xlu0 %v10389, 64
  %v10472 = vpop.permute.xlu0 %10471
  %10473 = vrot.lane.b32.xlu0 %v10390, 64
  %v10474 = vpop.permute.xlu0 %10473
  %10475 = vrot.lane.b32.xlu0 %v10391, 64
  %v10476 = vpop.permute.xlu0 %10475
  %10477 = vrot.lane.b32.xlu0 %v10392, 64
  %v10478 = vpop.permute.xlu0 %10477
  %10479 = vrot.lane.b32.xlu0 %v10393, 64
  %v10480 = vpop.permute.xlu0 %10479
  %10481 = vrot.lane.b32.xlu0 %v10394, 64
  %v10482 = vpop.permute.xlu0 %10481
  %10483 = vrot.lane.b32.xlu0 %v10395, 64
  %v10484 = vpop.permute.xlu0 %10483
  %10485 = vrot.lane.b32.xlu0 %v10396, 64
  %v10486 = vpop.permute.xlu0 %10485
  %10487 = vrot.lane.b32.xlu0 %v10397, 64
  %v10488 = vpop.permute.xlu0 %10487
  %10489 = vrot.lane.b32.xlu0 %v10398, 64
  %v10490 = vpop.permute.xlu0 %10489
  %10491 = vrot.lane.b32.xlu0 %v10399, 64
  %v10492 = vpop.permute.xlu0 %10491
  %10493 = vrot.lane.b32.xlu0 %v10400, 64
  %v10494 = vpop.permute.xlu0 %10493
  %10495 = vrot.lane.b32.xlu0 %v10401, 64
  %v10496 = vpop.permute.xlu0 %10495
  %10497 = vrot.lane.b32.xlu0 %v10402, 64
  %v10498 = vpop.permute.xlu0 %10497
  %v10531 = vmax.f32 %v10371, %v10436
  %v10532 = vmax.f32 %v10372, %v10438
  %v10533 = vmax.f32 %v10373, %v10440
  %v10534 = vmax.f32 %v10374, %v10442
  %v10535 = vmax.f32 %v10375, %v10444
  %v10536 = vmax.f32 %v10376, %v10446
  %v10537 = vmax.f32 %v10377, %v10448
  %v10538 = vmax.f32 %v10378, %v10450
  %v10539 = vmax.f32 %v10379, %v10452
  %v10540 = vmax.f32 %v10380, %v10454
  %v10541 = vmax.f32 %v10381, %v10456
  %v10542 = vmax.f32 %v10382, %v10458
  %v10543 = vmax.f32 %v10383, %v10460
  %v10544 = vmax.f32 %v10384, %v10462
  %v10545 = vmax.f32 %v10385, %v10464
  %v10546 = vmax.f32 %v10386, %v10466
  %v10547 = vmax.f32 %v10387, %v10468
  %v10548 = vmax.f32 %v10388, %v10470
  %v10549 = vmax.f32 %v10389, %v10472
  %v10550 = vmax.f32 %v10390, %v10474
  %v10551 = vmax.f32 %v10391, %v10476
  %v10552 = vmax.f32 %v10392, %v10478
  %v10553 = vmax.f32 %v10393, %v10480
  %v10554 = vmax.f32 %v10394, %v10482
  %v10555 = vmax.f32 %v10395, %v10484
  %v10556 = vmax.f32 %v10396, %v10486
  %v10557 = vmax.f32 %v10397, %v10488
  %v10558 = vmax.f32 %v10398, %v10490
  %v10559 = vmax.f32 %v10399, %v10492
  %v10560 = vmax.f32 %v10400, %v10494
  %v10561 = vmax.f32 %v10401, %v10496
  %v10562 = vmax.f32 %v10402, %v10498
  %10571 = vrot.lane.b32.xlu0 %v10539, 64
  %v10572 = vpop.permute.xlu0 %10571
  %10573 = vrot.lane.b32.xlu0 %v10540, 64
  %v10574 = vpop.permute.xlu0 %10573
  %10575 = vrot.lane.b32.xlu0 %v10541, 64
  %v10576 = vpop.permute.xlu0 %10575
  %10577 = vrot.lane.b32.xlu0 %v10542, 64
  %v10578 = vpop.permute.xlu0 %10577
  %10579 = vrot.lane.b32.xlu0 %v10543, 64
  %v10580 = vpop.permute.xlu0 %10579
  %10581 = vrot.lane.b32.xlu0 %v10544, 64
  %v10582 = vpop.permute.xlu0 %10581
  %10583 = vrot.lane.b32.xlu0 %v10545, 64
  %v10584 = vpop.permute.xlu0 %10583
  %10585 = vrot.lane.b32.xlu0 %v10546, 64
  %v10586 = vpop.permute.xlu0 %10585
  %10603 = vrot.lane.b32.xlu0 %v10555, 64
  %v10604 = vpop.permute.xlu0 %10603
  %10605 = vrot.lane.b32.xlu0 %v10556, 64
  %v10606 = vpop.permute.xlu0 %10605
  %10607 = vrot.lane.b32.xlu0 %v10557, 64
  %v10608 = vpop.permute.xlu0 %10607
  %10609 = vrot.lane.b32.xlu0 %v10558, 64
  %v10610 = vpop.permute.xlu0 %10609
  %10611 = vrot.lane.b32.xlu0 %v10559, 64
  %v10612 = vpop.permute.xlu0 %10611
  %10613 = vrot.lane.b32.xlu0 %v10560, 64
  %v10614 = vpop.permute.xlu0 %10613
  %10615 = vrot.lane.b32.xlu0 %v10561, 64
  %v10616 = vpop.permute.xlu0 %10615
  %10617 = vrot.lane.b32.xlu0 %v10562, 64
  %v10618 = vpop.permute.xlu0 %10617
  %vm10627 = vcmask 523264
  %v10628 = vsel %vm10627, %v10531, %v10572
  %v10629 = vsel %vm10627, %v10532, %v10574
  %v10630 = vsel %vm10627, %v10533, %v10576
  %v10631 = vsel %vm10627, %v10534, %v10578
  %v10632 = vsel %vm10627, %v10535, %v10580
  %v10633 = vsel %vm10627, %v10536, %v10582
  %v10634 = vsel %vm10627, %v10537, %v10584
  %v10635 = vsel %vm10627, %v10538, %v10586
  %v10636 = vsel %vm10627, %v10547, %v10604
  %v10637 = vsel %vm10627, %v10548, %v10606
  %v10638 = vsel %vm10627, %v10549, %v10608
  %v10639 = vsel %vm10627, %v10550, %v10610
  %v10640 = vsel %vm10627, %v10551, %v10612
  %v10641 = vsel %vm10627, %v10552, %v10614
  %v10642 = vsel %vm10627, %v10553, %v10616
  %v10643 = vsel %vm10627, %v10554, %v10618
  %v10644 = vpack.c.bf16 %v10629, %v10628
  %v10645 = vpack.c.bf16 %v10637, %v10636
  %v10646 = vpack.c.bf16 %v10631, %v10630
  %v10647 = vpack.c.bf16 %v10639, %v10638
  %v10648 = vpack.c.bf16 %v10633, %v10632
  %v10649 = vpack.c.bf16 %v10641, %v10640
  %v10650 = vpack.c.bf16 %v10635, %v10634
  %v10651 = vpack.c.bf16 %v10643, %v10642
  %v10652 = vld [vmem:[%s5] sm:$0xf]
  %v10653 = vld [vmem:[%s5 + $0x4] sm:$0xf]
  %v10654 = vld [vmem:[%s5 + $0x8] sm:$0xf]
  %v10655 = vld [vmem:[%s5 + $0xc] sm:$0xf]
  %v10656 = vld [vmem:[%s5 + $0x10] sm:$0xf]
  %v10657 = vld [vmem:[%s5 + $0x14] sm:$0xf]
  %v10658 = vld [vmem:[%s5 + $0x18] sm:$0xf]
  %v10659 = vld [vmem:[%s5 + $0x1c] sm:$0xf]
  %v10660 = vld [vmem:[%s5 + $0x20] sm:$0xf]
  %v10661 = vld [vmem:[%s5 + $0x24] sm:$0xf]
  %v10662 = vld [vmem:[%s5 + $0x28] sm:$0xf]
  %v10663 = vld [vmem:[%s5 + $0x2c] sm:$0xf]
  %v10664 = vld [vmem:[%s5 + $0x30] sm:$0xf]
  %v10665 = vld [vmem:[%s5 + $0x34] sm:$0xf]
  %v10666 = vld [vmem:[%s5 + $0x38] sm:$0xf]
  %v10667 = vld [vmem:[%s5 + $0x3c] sm:$0xf]
  %v10668 = vld [vmem:[%s5 + $0x40] sm:$0xf]
  %v10669 = vld [vmem:[%s5 + $0x44] sm:$0xf]
  %v10670 = vld [vmem:[%s5 + $0x48] sm:$0xf]
  %v10671 = vld [vmem:[%s5 + $0x4c] sm:$0xf]
  %v10672 = vld [vmem:[%s5 + $0x50] sm:$0xf]
  %v10673 = vld [vmem:[%s5 + $0x54] sm:$0xf]
  %v10674 = vld [vmem:[%s5 + $0x58] sm:$0xf]
  %v10675 = vld [vmem:[%s5 + $0x5c] sm:$0xf]
  %v10676 = vld [vmem:[%s5 + $0x60] sm:$0xf]
  %v10677 = vld [vmem:[%s5 + $0x64] sm:$0xf]
  %v10678 = vld [vmem:[%s5 + $0x68] sm:$0xf]
  %v10679 = vld [vmem:[%s5 + $0x6c] sm:$0xf]
  %v10680 = vld [vmem:[%s5 + $0x70] sm:$0xf]
  %v10681 = vld [vmem:[%s5 + $0x74] sm:$0xf]
  %v10682 = vld [vmem:[%s5 + $0x78] sm:$0xf]
  %v10683 = vld [vmem:[%s5 + $0x7c] sm:$0xf]
  %v10684 = vld [vmem:[%s6] sm:$0x1]
  %v10686 = vlaneseq
  %v10687 = vshrl.u32 %v10686, 7
  %v10688 = vsub.s32 0, %v10687
  %v10689 = vrot.slane %v10684, %v10688
  %v10723 = vunpack.c.l.b16 %v10652
  %v10724 = vunpack.c.l.b16 %v10653
  %v10725 = vunpack.c.l.b16 %v10654
  %v10726 = vunpack.c.l.b16 %v10655
  %v10727 = vunpack.c.l.b16 %v10656
  %v10728 = vunpack.c.l.b16 %v10657
  %v10729 = vunpack.c.l.b16 %v10658
  %v10730 = vunpack.c.l.b16 %v10659
  %v10731 = vunpack.c.l.b16 %v10660
  %v10732 = vunpack.c.l.b16 %v10661
  %v10733 = vunpack.c.l.b16 %v10662
  %v10734 = vunpack.c.l.b16 %v10663
  %v10735 = vunpack.c.l.b16 %v10664
  %v10736 = vunpack.c.l.b16 %v10665
  %v10737 = vunpack.c.l.b16 %v10666
  %v10738 = vunpack.c.l.b16 %v10667
  %v10739 = vunpack.c.l.b16 %v10668
  %v10740 = vunpack.c.l.b16 %v10669
  %v10741 = vunpack.c.l.b16 %v10670
  %v10742 = vunpack.c.l.b16 %v10671
  %v10743 = vunpack.c.l.b16 %v10672
  %v10744 = vunpack.c.l.b16 %v10673
  %v10745 = vunpack.c.l.b16 %v10674
  %v10746 = vunpack.c.l.b16 %v10675
  %v10747 = vunpack.c.l.b16 %v10676
  %v10748 = vunpack.c.l.b16 %v10677
  %v10749 = vunpack.c.l.b16 %v10678
  %v10750 = vunpack.c.l.b16 %v10679
  %v10751 = vunpack.c.l.b16 %v10680
  %v10752 = vunpack.c.l.b16 %v10681
  %v10753 = vunpack.c.l.b16 %v10682
  %v10754 = vunpack.c.l.b16 %v10683
  %v10755 = vpack.c.b16 %v10724, %v10723
  %v10756 = vpack.c.b16 %v10726, %v10725
  %v10757 = vpack.c.b16 %v10728, %v10727
  %v10758 = vpack.c.b16 %v10730, %v10729
  %v10759 = vpack.c.b16 %v10732, %v10731
  %v10760 = vpack.c.b16 %v10734, %v10733
  %v10761 = vpack.c.b16 %v10736, %v10735
  %v10762 = vpack.c.b16 %v10738, %v10737
  %v10763 = vpack.c.b16 %v10740, %v10739
  %v10764 = vpack.c.b16 %v10742, %v10741
  %v10765 = vpack.c.b16 %v10744, %v10743
  %v10766 = vpack.c.b16 %v10746, %v10745
  %v10767 = vpack.c.b16 %v10748, %v10747
  %v10768 = vpack.c.b16 %v10750, %v10749
  %v10769 = vpack.c.b16 %v10752, %v10751
  %v10770 = vpack.c.b16 %v10754, %v10753
  %10787 = vmatprep.subr.bf16.mxu0 0
  %10788 = vmatpush1.bf16.msra.mxu0 %v10755
  %10789 = vmatprep.subr.bf16.mxu0 0
  %10790 = vmatpush1.bf16.msra.mxu0 %v10756
  %10791 = vmatprep.subr.bf16.mxu0 0
  %10792 = vmatpush1.bf16.msra.mxu0 %v10757
  %10793 = vmatprep.subr.bf16.mxu0 0
  %10794 = vmatpush1.bf16.msra.mxu0 %v10758
  %10795 = vmatprep.subr.bf16.mxu0 0
  %10796 = vmatpush1.bf16.msra.mxu0 %v10759
  %10797 = vmatprep.subr.bf16.mxu0 0
  %10798 = vmatpush1.bf16.msra.mxu0 %v10760
  %10799 = vmatprep.subr.bf16.mxu0 0
  %10800 = vmatpush1.bf16.msra.mxu0 %v10761
  %10801 = vmatprep.subr.bf16.mxu0 0
  %10802 = vmatpush1.bf16.msra.mxu0 %v10762
  %10803 = vmatprep.subr.bf16.mxu0 0
  %10804 = vmatpush1.bf16.msra.mxu0 %v10763
  %10805 = vmatprep.subr.bf16.mxu0 0
  %10806 = vmatpush1.bf16.msra.mxu0 %v10764
  %10807 = vmatprep.subr.bf16.mxu0 0
  %10808 = vmatpush1.bf16.msra.mxu0 %v10765
  %10809 = vmatprep.subr.bf16.mxu0 0
  %10810 = vmatpush1.bf16.msra.mxu0 %v10766
  %10811 = vmatprep.subr.bf16.mxu0 0
  %10812 = vmatpush1.bf16.msra.mxu0 %v10767
  %10813 = vmatprep.subr.bf16.mxu0 0
  %10814 = vmatpush1.bf16.msra.mxu0 %v10768
  %10815 = vmatprep.subr.bf16.mxu0 0
  %10816 = vmatpush1.bf16.msra.mxu0 %v10769
  %10817 = vmatprep.subr.bf16.mxu0 0
  %10818 = vmatpush1.bf16.msra.mxu0 %v10770
  %10819 = vmatprep.mubr.bf16.mxu0 %v10645
  %10820 = vmatmul.mubr.bf16.gmra.mrb[0].mxu0 %v10644
  %v10821 = vpop.f32.mrb[0].mxu0
  %v10822 = vadd.f32 %v10689, %v10821
  %v10823 = vpop.f32.mrb[0].mxu0
  %v10824 = vpop.f32.mrb[0].mxu0
  %v10825 = vadd.f32 %v10689, %v10824
  %v10826 = vpop.f32.mrb[0].mxu0
  %10827 = vmatprep.mubr.bf16.mxu0 %v10647
  %10828 = vmatmul.mubr.bf16.gmra.mrb[0].mxu0 %v10646
  %v10829 = vpop.f32.mrb[0].mxu0
  %v10830 = vadd.f32 %v10689, %v10829
  %v10831 = vpop.f32.mrb[0].mxu0
  %v10832 = vpop.f32.mrb[0].mxu0
  %v10833 = vadd.f32 %v10689, %v10832
  %v10834 = vpop.f32.mrb[0].mxu0
  %10835 = vmatprep.mubr.bf16.mxu0 %v10649
  %10836 = vmatmul.mubr.bf16.gmra.mrb[0].mxu0 %v10648
  %v10837 = vpop.f32.mrb[0].mxu0
  %v10838 = vadd.f32 %v10689, %v10837
  %v10839 = vpop.f32.mrb[0].mxu0
  %v10840 = vpop.f32.mrb[0].mxu0
  %v10841 = vadd.f32 %v10689, %v10840
  %v10842 = vpop.f32.mrb[0].mxu0
  %10843 = vmatprep.mubr.bf16.mxu0 %v10651
  %10844 = vmatmul.mubr.bf16.gmra.mrb[0].mxu0 %v10650
  %v10845 = vpop.f32.mrb[0].mxu0
  %v10846 = vadd.f32 %v10689, %v10845
  %v10847 = vpop.f32.mrb[0].mxu0
  %v10848 = vpop.f32.mrb[0].mxu0
  %v10849 = vadd.f32 %v10689, %v10848
  %v10850 = vpop.f32.mrb[0].mxu0
  %10851 = vdwg.mxu0
  %v10852 = vmax.f32 %v10822, 0.0
  %v10853 = vmax.f32 %v10825, 0.0
  %v10854 = vmax.f32 %v10830, 0.0
  %v10855 = vmax.f32 %v10833, 0.0
  %v10856 = vmax.f32 %v10838, 0.0
  %v10857 = vmax.f32 %v10841, 0.0
  %v10858 = vmax.f32 %v10846, 0.0
  %v10859 = vmax.f32 %v10849, 0.0
  %v10860 = vpack.c.bf16 %v10853, %v10852
  %v10861 = vpack.c.bf16 %v10855, %v10854
  %v10862 = vpack.c.bf16 %v10857, %v10856
  %v10863 = vpack.c.bf16 %v10859, %v10858
  %v10864 = vld [vmem:[%s7] sm:$0xf]
  %v10865 = vld [vmem:[%s7 + $0x4] sm:$0xf]
  %v10866 = vld [vmem:[%s7 + $0x8] sm:$0xf]
  %v10867 = vld [vmem:[%s7 + $0xc] sm:$0xf]
  %v10868 = vld [vmem:[%s7 + $0x10] sm:$0xf]
  %v10869 = vld [vmem:[%s7 + $0x14] sm:$0xf]
  %v10870 = vld [vmem:[%s7 + $0x18] sm:$0xf]
  %v10871 = vld [vmem:[%s7 + $0x1c] sm:$0xf]
  %v10872 = vld [vmem:[%s7 + $0x20] sm:$0xf]
  %v10873 = vld [vmem:[%s7 + $0x24] sm:$0xf]
  %v10874 = vld [vmem:[%s7 + $0x28] sm:$0xf]
  %v10875 = vld [vmem:[%s7 + $0x2c] sm:$0xf]
  %v10876 = vld [vmem:[%s7 + $0x30] sm:$0xf]
  %v10877 = vld [vmem:[%s7 + $0x34] sm:$0xf]
  %v10878 = vld [vmem:[%s7 + $0x38] sm:$0xf]
  %v10879 = vld [vmem:[%s7 + $0x3c] sm:$0xf]
  %v10880 = vld [vmem:[%s8] sm:$0x1]
  %v10882 = vlaneseq
  %v10883 = vshrl.u32 %v10882, 7
  %v10884 = vsub.s32 0, %v10883
  %v10885 = vrot.slane %v10880, %v10884
  %v10903 = vunpack.c.l.b16 %v10864
  %v10904 = vunpack.c.l.b16 %v10865
  %v10905 = vunpack.c.l.b16 %v10866
  %v10906 = vunpack.c.l.b16 %v10867
  %v10907 = vunpack.c.l.b16 %v10868
  %v10908 = vunpack.c.l.b16 %v10869
  %v10909 = vunpack.c.l.b16 %v10870
  %v10910 = vunpack.c.l.b16 %v10871
  %v10911 = vunpack.c.l.b16 %v10872
  %v10912 = vunpack.c.l.b16 %v10873
  %v10913 = vunpack.c.l.b16 %v10874
  %v10914 = vunpack.c.l.b16 %v10875
  %v10915 = vunpack.c.l.b16 %v10876
  %v10916 = vunpack.c.l.b16 %v10877
  %v10917 = vunpack.c.l.b16 %v10878
  %v10918 = vunpack.c.l.b16 %v10879
  %v10919 = vpack.c.b16 %v10904, %v10903
  %v10920 = vpack.c.b16 %v10906, %v10905
  %v10921 = vpack.c.b16 %v10908, %v10907
  %v10922 = vpack.c.b16 %v10910, %v10909
  %v10923 = vpack.c.b16 %v10912, %v10911
  %v10924 = vpack.c.b16 %v10914, %v10913
  %v10925 = vpack.c.b16 %v10916, %v10915
  %v10926 = vpack.c.b16 %v10918, %v10917
  %10935 = vmatprep.subr.bf16.mxu0 0
  %10936 = vmatpush1.bf16.msra.mxu0 %v10919
  %10937 = vmatprep.subr.bf16.mxu0 0
  %10938 = vmatpush1.bf16.msra.mxu0 %v10920
  %10939 = vmatprep.subr.bf16.mxu0 0
  %10940 = vmatpush1.bf16.msra.mxu0 %v10921
  %10941 = vmatprep.subr.bf16.mxu0 0
  %10942 = vmatpush1.bf16.msra.mxu0 %v10922
  %10943 = vmatprep.subr.bf16.mxu0 0
  %10944 = vmatpush1.bf16.msra.mxu0 %v10923
  %10945 = vmatprep.subr.bf16.mxu0 0
  %10946 = vmatpush1.bf16.msra.mxu0 %v10924
  %10947 = vmatprep.subr.bf16.mxu0 0
  %10948 = vmatpush1.bf16.msra.mxu0 %v10925
  %10949 = vmatprep.subr.bf16.mxu0 0
  %10950 = vmatpush1.bf16.msra.mxu0 %v10926
  %10951 = vmatprep.subr.bf16.mxu0 0
  %10952 = vmatpush1.bf16.msra.mxu0 0
  %10953 = vmatprep.subr.bf16.mxu0 0
  %10954 = vmatpush1.bf16.msra.mxu0 0
  %10955 = vmatprep.subr.bf16.mxu0 0
  %10956 = vmatpush1.bf16.msra.mxu0 0
  %10957 = vmatprep.subr.bf16.mxu0 0
  %10958 = vmatpush1.bf16.msra.mxu0 0
  %10959 = vmatprep.subr.bf16.mxu0 0
  %10960 = vmatpush1.bf16.msra.mxu0 0
  %10961 = vmatprep.subr.bf16.mxu0 0
  %10962 = vmatpush1.bf16.msra.mxu0 0
  %10963 = vmatprep.subr.bf16.mxu0 0
  %10964 = vmatpush1.bf16.msra.mxu0 0
  %10965 = vmatprep.subr.bf16.mxu0 0
  %10966 = vmatpush1.bf16.msra.mxu0 0
  %10967 = vmatprep.mubr.bf16.mxu0 0
  %10968 = vmatmul.mubr.bf16.gmra.mrb[0].mxu0 %v10860
  %v10969 = vpop.f32.mrb[0].mxu0
  %v10970 = vadd.f32 %v10885, %v10969
  %v10971 = vpop.f32.mrb[0].mxu0
  %v10972 = vpop.f32.mrb[0].mxu0
  %v10973 = vadd.f32 %v10885, %v10972
  %v10974 = vpop.f32.mrb[0].mxu0
  %10975 = vmatprep.mubr.bf16.mxu0 0
  %10976 = vmatmul.mubr.bf16.gmra.mrb[0].mxu0 %v10861
  %v10977 = vpop.f32.mrb[0].mxu0
  %v10978 = vadd.f32 %v10885, %v10977
  %v10979 = vpop.f32.mrb[0].mxu0
  %v10980 = vpop.f32.mrb[0].mxu0
  %v10981 = vadd.f32 %v10885, %v10980
  %v10982 = vpop.f32.mrb[0].mxu0
  %10983 = vmatprep.mubr.bf16.mxu0 0
  %10984 = vmatmul.mubr.bf16.gmra.mrb[0].mxu0 %v10862
  %v10985 = vpop.f32.mrb[0].mxu0
  %v10986 = vadd.f32 %v10885, %v10985
  %v10987 = vpop.f32.mrb[0].mxu0
  %v10988 = vpop.f32.mrb[0].mxu0
  %v10989 = vadd.f32 %v10885, %v10988
  %v10990 = vpop.f32.mrb[0].mxu0
  %10991 = vmatprep.mubr.bf16.mxu0 0
  %10992 = vmatmul.mubr.bf16.gmra.mrb[0].mxu0 %v10863
  %v10993 = vpop.f32.mrb[0].mxu0
  %v10994 = vadd.f32 %v10885, %v10993
  %v10995 = vpop.f32.mrb[0].mxu0
  %v10996 = vpop.f32.mrb[0].mxu0
  %v10997 = vadd.f32 %v10885, %v10996
  %v10998 = vpop.f32.mrb[0].mxu0
  %10999 = vdwg.mxu0
  %v11000 = vmax.f32 %v10970, 0.0
  %v11001 = vmax.f32 %v10973, 0.0
  %v11002 = vmax.f32 %v10978, 0.0
  %v11003 = vmax.f32 %v10981, 0.0
  %v11004 = vmax.f32 %v10986, 0.0
  %v11005 = vmax.f32 %v10989, 0.0
  %v11006 = vmax.f32 %v10994, 0.0
  %v11007 = vmax.f32 %v10997, 0.0
  %11008 = vst [vmem:[%s9] sm:$0xff] %v11000
  %11009 = vst [vmem:[%s9 + $0x8] sm:$0xff] %v11001
  %11010 = vst [vmem:[%s9 + $0x10] sm:$0xff] %v11002
  %11011 = vst [vmem:[%s9 + $0x18] sm:$0xff] %v11003
  %11012 = vst [vmem:[%s9 + $0x20] sm:$0xff] %v11004
  %11013 = vst [vmem:[%s9 + $0x28] sm:$0xff] %v11005
  %11014 = vst [vmem:[%s9 + $0x30] sm:$0xff] %v11006
  %11015 = vst [vmem:[%s9 + $0x38] sm:$0xff] %v11007
  // Predicated region
  $region38: #{lenet_variant_forward.1} parent=0 // pred_check
    _
  $region39: #{lenet_variant_forward.1} parent=0 // pred_check_branch
    %11017 = sbr.rel (0) target = $region41
  $region40: #{lenet_variant_forward.1} parent=0 // pred_region
    _
  $region41: #{lenet_variant_forward.1} parent=0 // pred_fallthru
    _
  // Predicated region
  $region42: #{lenet_variant_forward.1} parent=0 // pred_check
    _
  $region43: #{lenet_variant_forward.1} parent=0 // pred_check_branch
    %11019 = sbr.rel (0) target = $region45
  $region44: #{lenet_variant_forward.1} parent=0 // pred_region
    _
  $region45: #{lenet_variant_forward.1} parent=0 // pred_fallthru
    _

</llo_original>
